<compile_context>
chip_gen: v6e
topology: v6e:2x2x1
jax: 0.10.0
libtpu: 0.0.40
codegen_flags: <defaults>
</compile_context>

<pallas_src>
import math

import jax
import jax.numpy as jnp
from jax.experimental import pallas as pl
from jax.experimental.pallas import tpu as pltpu

NF = 256          # self.nf in the PyTorch module
HALF = NF // 2    # 128


def _silu(x):
    return x * jax.nn.sigmoid(x)


def _bf16(x):
    return x.astype(jnp.bfloat16)


def _f32(x):
    return x.astype(jnp.float32)


def score_eigen_kernel(t_ref, freqs_ref, la_ref,
                       w0_ref, b0_ref,        # Linear(256, 512)
                       w1_ref, b1_ref,        # Linear(512, 512)
                       w2_ref, b2_ref,        # Linear(N,   512)
                       w3_ref, b3_ref,        # Linear(512, 512)
                       wm0_hbm, bm0_ref,      # MLP Linear(512, 1024)  (weight in HBM)
                       wm1_hbm, bm1_ref,      # MLP Linear(1024, 1024) (weight in HBM)
                       wm2_ref, bm2_ref,      # MLP Linear(1024, 128)
                       w4_ref, b4_ref,        # Linear(128, 128)
                       w5_ref, b5_ref,        # Linear(128, N)
                       out_ref,
                       wm0_vmem, wm1_vmem, dma_sem):
    # Kick off the large MLP weight DMAs immediately so they overlap the
    # sin/cos (EUP) work and the first four (small) matmuls below.
    cp0 = pltpu.make_async_copy(wm0_hbm, wm0_vmem, dma_sem.at[0])
    cp1 = pltpu.make_async_copy(wm1_hbm, wm1_vmem, dma_sem.at[1])
    cp0.start()
    cp1.start()

    # --- timestep embedding: temb = [sin(t*f), cos(t*f)]  (B, 256) ---
    arg = t_ref[...] * freqs_ref[...]          # (B, 128) via broadcast, f32
    sin_p = _bf16(jnp.sin(arg))
    cos_p = _bf16(jnp.cos(arg))

    # temb @ W0 == sin_p @ W0[:128] + cos_p @ W0[128:]   (avoids lane concat)
    t0 = (jnp.dot(sin_p, w0_ref[:HALF, :], preferred_element_type=jnp.float32)
          + jnp.dot(cos_p, w0_ref[HALF:, :], preferred_element_type=jnp.float32)
          + _f32(b0_ref[...]))
    # temb = Linear1(SiLU(temb))
    t1 = jnp.dot(_bf16(_silu(t0)), w1_ref[...],
                 preferred_element_type=jnp.float32) + _f32(b1_ref[...])

    # --- eigenvalue branch ---
    la = _bf16(la_ref[...])
    l0 = jnp.dot(la, w2_ref[...],
                 preferred_element_type=jnp.float32) + _f32(b2_ref[...])
    l1 = jnp.dot(_bf16(l0), w3_ref[...],
                 preferred_element_type=jnp.float32) + _f32(b3_ref[...])

    emb = _bf16(l1 + t1)                       # residual add in f32, cast at dot

    # --- final_with_eigen MLP (3 layers, SiLU between, no act on last) ---
    cp0.wait()                                 # wm0 now resident in VMEM
    h = _silu(jnp.dot(emb, wm0_vmem[...],
                      preferred_element_type=jnp.float32) + _f32(bm0_ref[...]))
    cp1.wait()                                 # wm1 now resident in VMEM
    h = _silu(jnp.dot(_bf16(h), wm1_vmem[...],
                      preferred_element_type=jnp.float32) + _f32(bm1_ref[...]))
    h = jnp.dot(_bf16(h), wm2_ref[...],
                preferred_element_type=jnp.float32) + _f32(bm2_ref[...])

    # --- two plain output linears ---
    h = jnp.dot(_bf16(h), w4_ref[...],
                preferred_element_type=jnp.float32) + _f32(b4_ref[...])
    out_ref[...] = jnp.dot(_bf16(h), w5_ref[...],
                           preferred_element_type=jnp.float32) + _f32(b5_ref[...])


def score_network_test_eigen(la, t, params):
    """Pallas wrapper.  la: (B, N) float32, t: (B,) float32."""
    B, N = la.shape
    scale = math.log(10000.0) / (HALF - 1)
    freqs = jnp.exp(jnp.arange(HALF, dtype=jnp.float32) * -scale).reshape(1, HALF)
    t_col = t.astype(jnp.float32).reshape(B, 1)

    # bf16 weights/biases: ~2x less HBM traffic; dots still accumulate in f32.
    params_bf16 = tuple(p.astype(jnp.bfloat16) for p in params)

    inputs = (t_col, freqs, la.astype(jnp.float32)) + params_bf16

    vmem_spec = pl.BlockSpec(memory_space=pltpu.MemorySpace.VMEM)
    hbm_spec = pl.BlockSpec(memory_space=pl.ANY)

    in_specs = [vmem_spec] * len(inputs)
    WM0_IDX = 3 + 2 * 4        # position of wm0 in `inputs`
    WM1_IDX = WM0_IDX + 2      # position of wm1 in `inputs`
    in_specs[WM0_IDX] = hbm_spec   # stays in HBM; manual overlapped DMA
    in_specs[WM1_IDX] = hbm_spec

    return pl.pallas_call(
        score_eigen_kernel,
        out_shape=jax.ShapeDtypeStruct((B, N), jnp.float32),
        in_specs=in_specs,
        out_specs=vmem_spec,
        scratch_shapes=[
            pltpu.VMEM((2 * NF, 4 * NF), jnp.bfloat16),   # wm0 staging (512,1024)
            pltpu.VMEM((4 * NF, 4 * NF), jnp.bfloat16),   # wm1 staging (1024,1024)
            pltpu.SemaphoreType.DMA((2,)),
        ],
        compiler_params=pltpu.CompilerParams(
            vmem_limit_bytes=32 * 1024 * 1024),           # fits v7x's 64 MiB/TC
    )(*inputs)


# -------------------- deterministic parameter init --------------------
def init_linear(key, fan_in, fan_out):
    """PyTorch nn.Linear default init: U(-1/sqrt(fan_in), 1/sqrt(fan_in))."""
    kw, kb = jax.random.split(key)
    bound = 1.0 / math.sqrt(fan_in)
    W = jax.random.uniform(kw, (fan_in, fan_out), jnp.float32, -bound, bound)
    b = jax.random.uniform(kb, (1, fan_out), jnp.float32, -bound, bound)
    return W, b


def make_params(key, max_node_num):
    shapes = [
        (NF, 2 * NF),            # emb_modules[0]: Linear(256, 512)
        (2 * NF, 2 * NF),        # emb_modules[1]: Linear(512, 512)
        (max_node_num, 2 * NF),  # emb_modules[2]: Linear(N, 512)
        (2 * NF, 2 * NF),        # emb_modules[3]: Linear(512, 512)
        (2 * NF, 4 * NF),        # MLP linear 0:   Linear(512, 1024)
        (4 * NF, 4 * NF),        # MLP linear 1:   Linear(1024, 1024)
        (4 * NF, NF // 2),       # MLP linear 2:   Linear(1024, 128)
        (NF // 2, NF // 2),      # emb_modules[4]: Linear(128, 128)
        (NF // 2, max_node_num), # emb_modules[5]: Linear(128, N)
    ]
    params = []
    keys = jax.random.split(key, len(shapes))
    for k, (fi, fo) in zip(keys, shapes):
        W, b = init_linear(k, fi, fo)
        params.extend([W, b])
    return tuple(params)


# ------------- pure-JAX reference mirroring the kernel's bf16 math -------------
def reference_forward(la, t, params):
    (w0, b0, w1, b1, w2, b2, w3, b3,
     wm0, bm0, wm1, bm1, wm2, bm2, w4, b4, w5, b5) = [
        p.astype(jnp.bfloat16) for p in params]

    def dot(x, w):
        return jnp.dot(x.astype(jnp.bfloat16), w,
                       preferred_element_type=jnp.float32)

    scale = math.log(10000.0) / (HALF - 1)
    freqs = jnp.exp(jnp.arange(HALF, dtype=jnp.float32) * -scale)
    arg = t.astype(jnp.float32)[:, None] * freqs[None, :]
    temb = jnp.concatenate([jnp.sin(arg), jnp.cos(arg)], axis=1)   # (B, 256)

    temb = dot(temb, w0) + _f32(b0)
    temb = dot(_silu(temb), w1) + _f32(b1)
    la_emb = dot(la, w2) + _f32(b2)
    la_emb = dot(la_emb, w3) + _f32(b3)
    emb = la_emb + temb
    emb = _silu(dot(emb, wm0) + _f32(bm0))
    emb = _silu(dot(emb, wm1) + _f32(bm1))
    emb = dot(emb, wm2) + _f32(bm2)
    emb = dot(emb, w4) + _f32(b4)
    emb = dot(emb, w5) + _f32(b5)
    return emb


if __name__ == "__main__":
    key = jax.random.PRNGKey(0)
    k_params, k_la, k_t = jax.random.split(key, 3)

    B = 4
    MAX_NODE_NUM = 16

    params = make_params(k_params, MAX_NODE_NUM)
    la = jax.random.normal(k_la, (B, MAX_NODE_NUM), jnp.float32)
    t = jax.random.uniform(k_t, (B,), jnp.float32) * 999.0

    out = score_network_test_eigen(la, t, params)
    out = jax.block_until_ready(out)

    ref = reference_forward(la, t, params)
    assert out.shape == (B, MAX_NODE_NUM)
    # bf16 weights: compare against the matching bf16-weight reference.
    assert jnp.allclose(out, ref, rtol=2e-2, atol=2e-2), (
        f"max abs err {jnp.max(jnp.abs(out - ref))}")

    print("KERNEL_OK")
</pallas_src>

<mosaic_0001>
module attributes {stable_mosaic.version = 11 : i64} {
  func.func @score_eigen_kernel(%arg0: memref<4x1xf32, #tpu.memory_space<vmem>>, %arg1: memref<1x128xf32, #tpu.memory_space<vmem>>, %arg2: memref<4x16xf32, #tpu.memory_space<vmem>>, %arg3: memref<256x512xbf16, #tpu.memory_space<vmem>>, %arg4: memref<1x512xbf16, #tpu.memory_space<vmem>>, %arg5: memref<512x512xbf16, #tpu.memory_space<vmem>>, %arg6: memref<1x512xbf16, #tpu.memory_space<vmem>>, %arg7: memref<16x512xbf16, #tpu.memory_space<vmem>>, %arg8: memref<1x512xbf16, #tpu.memory_space<vmem>>, %arg9: memref<512x512xbf16, #tpu.memory_space<vmem>>, %arg10: memref<1x512xbf16, #tpu.memory_space<vmem>>, %arg11: memref<512x1024xbf16, #tpu.memory_space<any>>, %arg12: memref<1x1024xbf16, #tpu.memory_space<vmem>>, %arg13: memref<1024x1024xbf16, #tpu.memory_space<any>>, %arg14: memref<1x1024xbf16, #tpu.memory_space<vmem>>, %arg15: memref<1024x128xbf16, #tpu.memory_space<vmem>>, %arg16: memref<1x128xbf16, #tpu.memory_space<vmem>>, %arg17: memref<128x128xbf16, #tpu.memory_space<vmem>>, %arg18: memref<1x128xbf16, #tpu.memory_space<vmem>>, %arg19: memref<128x16xbf16, #tpu.memory_space<vmem>>, %arg20: memref<1x16xbf16, #tpu.memory_space<vmem>>, %arg21: memref<4x16xf32, #tpu.memory_space<vmem>>, %arg22: memref<512x1024xbf16, #tpu.memory_space<vmem>>, %arg23: memref<1024x1024xbf16, #tpu.memory_space<vmem>>, %arg24: memref<2x!tpu.dma_semaphore, #tpu.memory_space<semaphore_mem>>) attributes {dimension_semantics = [], scalar_prefetch = 0 : i64, scratch_operands = 3 : i64, tpu.core_type = #tpu.core_type<tc>} {
    %c0_i32 = arith.constant 0 : i32
    %0 = tpu.memref_slice %arg24[%c0_i32] : memref<2x!tpu.dma_semaphore, #tpu.memory_space<semaphore_mem>> -> memref<1x!tpu.dma_semaphore, #tpu.memory_space<semaphore_mem>>
    %1 = tpu.memref_squeeze %0 : memref<1x!tpu.dma_semaphore, #tpu.memory_space<semaphore_mem>> -> memref<!tpu.dma_semaphore, #tpu.memory_space<semaphore_mem>>
    tpu.enqueue_dma source(%arg11 : memref<512x1024xbf16, #tpu.memory_space<any>>) target(%arg22 : memref<512x1024xbf16, #tpu.memory_space<vmem>>) target_semaphore(%1 : memref<!tpu.dma_semaphore, #tpu.memory_space<semaphore_mem>>)
    %c1_i32 = arith.constant 1 : i32
    %2 = tpu.memref_slice %arg24[%c1_i32] : memref<2x!tpu.dma_semaphore, #tpu.memory_space<semaphore_mem>> -> memref<1x!tpu.dma_semaphore, #tpu.memory_space<semaphore_mem>>
    %3 = tpu.memref_squeeze %2 : memref<1x!tpu.dma_semaphore, #tpu.memory_space<semaphore_mem>> -> memref<!tpu.dma_semaphore, #tpu.memory_space<semaphore_mem>>
    tpu.enqueue_dma source(%arg13 : memref<1024x1024xbf16, #tpu.memory_space<any>>) target(%arg23 : memref<1024x1024xbf16, #tpu.memory_space<vmem>>) target_semaphore(%3 : memref<!tpu.dma_semaphore, #tpu.memory_space<semaphore_mem>>)
    %c0 = arith.constant 0 : index
    %c0_0 = arith.constant 0 : index
    %4 = vector.load %arg0[%c0, %c0_0] : memref<4x1xf32, #tpu.memory_space<vmem>>, vector<4x1xf32>
    %c0_1 = arith.constant 0 : index
    %c0_2 = arith.constant 0 : index
    %5 = vector.load %arg1[%c0_1, %c0_2] : memref<1x128xf32, #tpu.memory_space<vmem>>, vector<1x128xf32>
    %6 = vector.broadcast %4 : vector<4x1xf32> to vector<4x128xf32>
    %7 = vector.broadcast %5 : vector<1x128xf32> to vector<4x128xf32>
    %8 = arith.mulf %6, %7 : vector<4x128xf32>
    %9 = math.sin %8 : vector<4x128xf32>
    %10 = arith.truncf %9 : vector<4x128xf32> to vector<4x128xbf16>
    %11 = math.cos %8 : vector<4x128xf32>
    %12 = arith.truncf %11 : vector<4x128xf32> to vector<4x128xbf16>
    %c0_3 = arith.constant 0 : index
    %c0_4 = arith.constant 0 : index
    %13 = vector.load %arg3[%c0_3, %c0_4] : memref<256x512xbf16, #tpu.memory_space<vmem>>, vector<128x512xbf16>
    %cst = arith.constant dense<0.000000e+00> : vector<4x512xf32>
    %14 = tpu.matmul %10, %13, %cst {dimension_numbers = #tpu.dot_dimension_numbers<[1], [0], [0], [1], [0, 0, 1, 1], [], []>} : vector<4x128xbf16>, vector<128x512xbf16>, vector<4x512xf32> -> vector<4x512xf32>
    %c128 = arith.constant 128 : index
    %c0_5 = arith.constant 0 : index
    %15 = vector.load %arg3[%c128, %c0_5] : memref<256x512xbf16, #tpu.memory_space<vmem>>, vector<128x512xbf16>
    %cst_6 = arith.constant dense<0.000000e+00> : vector<4x512xf32>
    %16 = tpu.matmul %12, %15, %cst_6 {dimension_numbers = #tpu.dot_dimension_numbers<[1], [0], [0], [1], [0, 0, 1, 1], [], []>} : vector<4x128xbf16>, vector<128x512xbf16>, vector<4x512xf32> -> vector<4x512xf32>
    %17 = arith.addf %14, %16 : vector<4x512xf32>
    %c0_7 = arith.constant 0 : index
    %c0_8 = arith.constant 0 : index
    %18 = vector.load %arg4[%c0_7, %c0_8] : memref<1x512xbf16, #tpu.memory_space<vmem>>, vector<1x512xbf16>
    %19 = arith.extf %18 : vector<1x512xbf16> to vector<1x512xf32>
    %20 = vector.broadcast %19 : vector<1x512xf32> to vector<4x512xf32>
    %21 = arith.addf %17, %20 : vector<4x512xf32>
    %22 = arith.negf %21 : vector<4x512xf32>
    %23 = math.exp %22 : vector<4x512xf32>
    %cst_9 = arith.constant 1.000000e+00 : f32
    %24 = vector.broadcast %cst_9 : f32 to vector<4x512xf32>
    %25 = arith.addf %24, %23 : vector<4x512xf32>
    %26 = arith.divf %24, %25 : vector<4x512xf32>
    %27 = arith.mulf %21, %26 : vector<4x512xf32>
    %28 = arith.truncf %27 : vector<4x512xf32> to vector<4x512xbf16>
    %c0_10 = arith.constant 0 : index
    %c0_11 = arith.constant 0 : index
    %29 = vector.load %arg5[%c0_10, %c0_11] : memref<512x512xbf16, #tpu.memory_space<vmem>>, vector<512x512xbf16>
    %cst_12 = arith.constant dense<0.000000e+00> : vector<4x512xf32>
    %30 = tpu.matmul %28, %29, %cst_12 {dimension_numbers = #tpu.dot_dimension_numbers<[1], [0], [0], [1], [0, 0, 1, 1], [], []>} : vector<4x512xbf16>, vector<512x512xbf16>, vector<4x512xf32> -> vector<4x512xf32>
    %c0_13 = arith.constant 0 : index
    %c0_14 = arith.constant 0 : index
    %31 = vector.load %arg6[%c0_13, %c0_14] : memref<1x512xbf16, #tpu.memory_space<vmem>>, vector<1x512xbf16>
    %32 = arith.extf %31 : vector<1x512xbf16> to vector<1x512xf32>
    %33 = vector.broadcast %32 : vector<1x512xf32> to vector<4x512xf32>
    %34 = arith.addf %30, %33 : vector<4x512xf32>
    %c0_15 = arith.constant 0 : index
    %c0_16 = arith.constant 0 : index
    %35 = vector.load %arg2[%c0_15, %c0_16] : memref<4x16xf32, #tpu.memory_space<vmem>>, vector<4x16xf32>
    %36 = arith.truncf %35 : vector<4x16xf32> to vector<4x16xbf16>
    %c0_17 = arith.constant 0 : index
    %c0_18 = arith.constant 0 : index
    %37 = vector.load %arg7[%c0_17, %c0_18] : memref<16x512xbf16, #tpu.memory_space<vmem>>, vector<16x512xbf16>
    %cst_19 = arith.constant dense<0.000000e+00> : vector<4x512xf32>
    %38 = tpu.matmul %36, %37, %cst_19 {dimension_numbers = #tpu.dot_dimension_numbers<[1], [0], [0], [1], [0, 0, 1, 1], [], []>} : vector<4x16xbf16>, vector<16x512xbf16>, vector<4x512xf32> -> vector<4x512xf32>
    %c0_20 = arith.constant 0 : index
    %c0_21 = arith.constant 0 : index
    %39 = vector.load %arg8[%c0_20, %c0_21] : memref<1x512xbf16, #tpu.memory_space<vmem>>, vector<1x512xbf16>
    %40 = arith.extf %39 : vector<1x512xbf16> to vector<1x512xf32>
    %41 = vector.broadcast %40 : vector<1x512xf32> to vector<4x512xf32>
    %42 = arith.addf %38, %41 : vector<4x512xf32>
    %43 = arith.truncf %42 : vector<4x512xf32> to vector<4x512xbf16>
    %c0_22 = arith.constant 0 : index
    %c0_23 = arith.constant 0 : index
    %44 = vector.load %arg9[%c0_22, %c0_23] : memref<512x512xbf16, #tpu.memory_space<vmem>>, vector<512x512xbf16>
    %cst_24 = arith.constant dense<0.000000e+00> : vector<4x512xf32>
    %45 = tpu.matmul %43, %44, %cst_24 {dimension_numbers = #tpu.dot_dimension_numbers<[1], [0], [0], [1], [0, 0, 1, 1], [], []>} : vector<4x512xbf16>, vector<512x512xbf16>, vector<4x512xf32> -> vector<4x512xf32>
    %c0_25 = arith.constant 0 : index
    %c0_26 = arith.constant 0 : index
    %46 = vector.load %arg10[%c0_25, %c0_26] : memref<1x512xbf16, #tpu.memory_space<vmem>>, vector<1x512xbf16>
    %47 = arith.extf %46 : vector<1x512xbf16> to vector<1x512xf32>
    %48 = vector.broadcast %47 : vector<1x512xf32> to vector<4x512xf32>
    %49 = arith.addf %45, %48 : vector<4x512xf32>
    %50 = arith.addf %49, %34 : vector<4x512xf32>
    %51 = arith.truncf %50 : vector<4x512xf32> to vector<4x512xbf16>
    %c0_i32_27 = arith.constant 0 : i32
    %52 = tpu.memref_slice %arg24[%c0_i32_27] : memref<2x!tpu.dma_semaphore, #tpu.memory_space<semaphore_mem>> -> memref<1x!tpu.dma_semaphore, #tpu.memory_space<semaphore_mem>>
    %53 = tpu.memref_squeeze %52 : memref<1x!tpu.dma_semaphore, #tpu.memory_space<semaphore_mem>> -> memref<!tpu.dma_semaphore, #tpu.memory_space<semaphore_mem>>
    tpu.wait_dma2 semaphore(%53 : memref<!tpu.dma_semaphore, #tpu.memory_space<semaphore_mem>>) src(%arg11 : memref<512x1024xbf16, #tpu.memory_space<any>>) dst(%arg22 : memref<512x1024xbf16, #tpu.memory_space<vmem>>)
    %c0_28 = arith.constant 0 : index
    %c0_29 = arith.constant 0 : index
    %54 = vector.load %arg22[%c0_28, %c0_29] : memref<512x1024xbf16, #tpu.memory_space<vmem>>, vector<512x1024xbf16>
    %cst_30 = arith.constant dense<0.000000e+00> : vector<4x1024xf32>
    %55 = tpu.matmul %51, %54, %cst_30 {dimension_numbers = #tpu.dot_dimension_numbers<[1], [0], [0], [1], [0, 0, 1, 1], [], []>} : vector<4x512xbf16>, vector<512x1024xbf16>, vector<4x1024xf32> -> vector<4x1024xf32>
    %c0_31 = arith.constant 0 : index
    %c0_32 = arith.constant 0 : index
    %56 = vector.load %arg12[%c0_31, %c0_32] : memref<1x1024xbf16, #tpu.memory_space<vmem>>, vector<1x1024xbf16>
    %57 = arith.extf %56 : vector<1x1024xbf16> to vector<1x1024xf32>
    %58 = vector.broadcast %57 : vector<1x1024xf32> to vector<4x1024xf32>
    %59 = arith.addf %55, %58 : vector<4x1024xf32>
    %60 = arith.negf %59 : vector<4x1024xf32>
    %61 = math.exp %60 : vector<4x1024xf32>
    %cst_33 = arith.constant 1.000000e+00 : f32
    %62 = vector.broadcast %cst_33 : f32 to vector<4x1024xf32>
    %63 = arith.addf %62, %61 : vector<4x1024xf32>
    %64 = arith.divf %62, %63 : vector<4x1024xf32>
    %65 = arith.mulf %59, %64 : vector<4x1024xf32>
    %c1_i32_34 = arith.constant 1 : i32
    %66 = tpu.memref_slice %arg24[%c1_i32_34] : memref<2x!tpu.dma_semaphore, #tpu.memory_space<semaphore_mem>> -> memref<1x!tpu.dma_semaphore, #tpu.memory_space<semaphore_mem>>
    %67 = tpu.memref_squeeze %66 : memref<1x!tpu.dma_semaphore, #tpu.memory_space<semaphore_mem>> -> memref<!tpu.dma_semaphore, #tpu.memory_space<semaphore_mem>>
    tpu.wait_dma2 semaphore(%67 : memref<!tpu.dma_semaphore, #tpu.memory_space<semaphore_mem>>) src(%arg13 : memref<1024x1024xbf16, #tpu.memory_space<any>>) dst(%arg23 : memref<1024x1024xbf16, #tpu.memory_space<vmem>>)
    %68 = arith.truncf %65 : vector<4x1024xf32> to vector<4x1024xbf16>
    %c0_35 = arith.constant 0 : index
    %c0_36 = arith.constant 0 : index
    %69 = vector.load %arg23[%c0_35, %c0_36] : memref<1024x1024xbf16, #tpu.memory_space<vmem>>, vector<1024x1024xbf16>
    %cst_37 = arith.constant dense<0.000000e+00> : vector<4x1024xf32>
    %70 = tpu.matmul %68, %69, %cst_37 {dimension_numbers = #tpu.dot_dimension_numbers<[1], [0], [0], [1], [0, 0, 1, 1], [], []>} : vector<4x1024xbf16>, vector<1024x1024xbf16>, vector<4x1024xf32> -> vector<4x1024xf32>
    %c0_38 = arith.constant 0 : index
    %c0_39 = arith.constant 0 : index
    %71 = vector.load %arg14[%c0_38, %c0_39] : memref<1x1024xbf16, #tpu.memory_space<vmem>>, vector<1x1024xbf16>
    %72 = arith.extf %71 : vector<1x1024xbf16> to vector<1x1024xf32>
    %73 = vector.broadcast %72 : vector<1x1024xf32> to vector<4x1024xf32>
    %74 = arith.addf %70, %73 : vector<4x1024xf32>
    %75 = arith.negf %74 : vector<4x1024xf32>
    %76 = math.exp %75 : vector<4x1024xf32>
    %cst_40 = arith.constant 1.000000e+00 : f32
    %77 = vector.broadcast %cst_40 : f32 to vector<4x1024xf32>
    %78 = arith.addf %77, %76 : vector<4x1024xf32>
    %79 = arith.divf %77, %78 : vector<4x1024xf32>
    %80 = arith.mulf %74, %79 : vector<4x1024xf32>
    %81 = arith.truncf %80 : vector<4x1024xf32> to vector<4x1024xbf16>
    %c0_41 = arith.constant 0 : index
    %c0_42 = arith.constant 0 : index
    %82 = vector.load %arg15[%c0_41, %c0_42] : memref<1024x128xbf16, #tpu.memory_space<vmem>>, vector<1024x128xbf16>
    %cst_43 = arith.constant dense<0.000000e+00> : vector<4x128xf32>
    %83 = tpu.matmul %81, %82, %cst_43 {dimension_numbers = #tpu.dot_dimension_numbers<[1], [0], [0], [1], [0, 0, 1, 1], [], []>} : vector<4x1024xbf16>, vector<1024x128xbf16>, vector<4x128xf32> -> vector<4x128xf32>
    %c0_44 = arith.constant 0 : index
    %c0_45 = arith.constant 0 : index
    %84 = vector.load %arg16[%c0_44, %c0_45] : memref<1x128xbf16, #tpu.memory_space<vmem>>, vector<1x128xbf16>
    %85 = arith.extf %84 : vector<1x128xbf16> to vector<1x128xf32>
    %86 = vector.broadcast %85 : vector<1x128xf32> to vector<4x128xf32>
    %87 = arith.addf %83, %86 : vector<4x128xf32>
    %88 = arith.truncf %87 : vector<4x128xf32> to vector<4x128xbf16>
    %c0_46 = arith.constant 0 : index
    %c0_47 = arith.constant 0 : index
    %89 = vector.load %arg17[%c0_46, %c0_47] : memref<128x128xbf16, #tpu.memory_space<vmem>>, vector<128x128xbf16>
    %cst_48 = arith.constant dense<0.000000e+00> : vector<4x128xf32>
    %90 = tpu.matmul %88, %89, %cst_48 {dimension_numbers = #tpu.dot_dimension_numbers<[1], [0], [0], [1], [0, 0, 1, 1], [], []>} : vector<4x128xbf16>, vector<128x128xbf16>, vector<4x128xf32> -> vector<4x128xf32>
    %c0_49 = arith.constant 0 : index
    %c0_50 = arith.constant 0 : index
    %91 = vector.load %arg18[%c0_49, %c0_50] : memref<1x128xbf16, #tpu.memory_space<vmem>>, vector<1x128xbf16>
    %92 = arith.extf %91 : vector<1x128xbf16> to vector<1x128xf32>
    %93 = vector.broadcast %92 : vector<1x128xf32> to vector<4x128xf32>
    %94 = arith.addf %90, %93 : vector<4x128xf32>
    %95 = arith.truncf %94 : vector<4x128xf32> to vector<4x128xbf16>
    %c0_51 = arith.constant 0 : index
    %c0_52 = arith.constant 0 : index
    %96 = vector.load %arg19[%c0_51, %c0_52] : memref<128x16xbf16, #tpu.memory_space<vmem>>, vector<128x16xbf16>
    %cst_53 = arith.constant dense<0.000000e+00> : vector<4x16xf32>
    %97 = tpu.matmul %95, %96, %cst_53 {dimension_numbers = #tpu.dot_dimension_numbers<[1], [0], [0], [1], [0, 0, 1, 1], [], []>} : vector<4x128xbf16>, vector<128x16xbf16>, vector<4x16xf32> -> vector<4x16xf32>
    %c0_54 = arith.constant 0 : index
    %c0_55 = arith.constant 0 : index
    %98 = vector.load %arg20[%c0_54, %c0_55] : memref<1x16xbf16, #tpu.memory_space<vmem>>, vector<1x16xbf16>
    %99 = arith.extf %98 : vector<1x16xbf16> to vector<1x16xf32>
    %100 = vector.broadcast %99 : vector<1x16xf32> to vector<4x16xf32>
    %101 = arith.addf %97, %100 : vector<4x16xf32>
    %c0_56 = arith.constant 0 : index
    %c0_57 = arith.constant 0 : index
    %102 = vector.load %arg21[%c0_56, %c0_57] : memref<4x16xf32, #tpu.memory_space<vmem>>, vector<4x16xf32>
    tpu.vector_store %arg21[%c0_56, %c0_57], %101 {strides = array<i32>} : memref<4x16xf32, #tpu.memory_space<vmem>>, vector<4x16xf32>,
    return
  }
}

</mosaic_0001>

<llo_original>
// kernel: tpu_custom_call.1
$region0: #{tpu_custom_call.1}
  #allocation0 [shape = 'u32[]', space=smem, size = 0x4, offset = 0x4, fixed_abs, tag = 'smem constant byte address 0x4 - core index']
  #allocation1 [shape = 'u32[144,128]{1,0:T(1,128)}', space=vmem, size = 0x12000, scoped, tag = 'internal scratch']
  #allocation2 [shape = 'bf16[512,1024]{1,0:T(8,128)(2,1)}', space=vmem, size = 0x100000, scoped, tag = 'scratch operand']
  #allocation3 [shape = 'bf16[1024,1024]{1,0:T(8,128)(2,1)}', space=vmem, size = 0x200000, scoped, tag = 'scratch operand']
  #allocation4 [shape = 's32[2]{0}', space=sflag, size = 0x8, scoped, tag = 'scratch operand']
  #allocation33 [shape = 's32[]', space=sflag, size = 0x4, offset = 0, fixed_abs, tag = 'sflag constant byte address 0x0 - dummy sync flag']
  #allocation34 [shape = 's32[]', space=sflag, size = 0x4, offset = 0, fixed_abs, tag = 'sflag constant byte address 0x0 - dummy sync flag']
  #allocation35 [shape = 'u32[]', space=smem, size = 0x4, offset = 0x44, fixed_abs, tag = 'smem constant byte address 0x44 - assertion arg 0']
  #allocation36 [shape = 'u32[]', space=smem, size = 0x4, offset = 0x48, fixed_abs, tag = 'smem constant byte address 0x48 - assertion arg 1']
  #allocation37 [shape = 's32[]', space=sflag, size = 0x4, offset = 0, fixed_abs, tag = 'sflag constant byte address 0x0 - dummy sync flag']
  #allocation38 [shape = 's32[]', space=sflag, size = 0x4, offset = 0, fixed_abs, tag = 'sflag constant byte address 0x0 - dummy sync flag']
  %s0 = inlined_call_operand.vmem [shape: f32[4,1], index: 0, kind: input, shape index: {}]
  %s1 = inlined_call_operand.hbm [shape: f32[1,128], index: 1, kind: input, shape index: {}]
  %s2 = inlined_call_operand.hbm [shape: f32[4,16], index: 2, kind: input, shape index: {}]
  %s3 = inlined_call_operand.hbm [shape: bf16[256,512], index: 3, kind: input, shape index: {}]
  %s4 = inlined_call_operand.hbm [shape: bf16[1,512], index: 4, kind: input, shape index: {}]
  %s5 = inlined_call_operand.hbm [shape: bf16[512,512], index: 5, kind: input, shape index: {}]
  %s6 = inlined_call_operand.hbm [shape: bf16[1,512], index: 6, kind: input, shape index: {}]
  %s7 = inlined_call_operand.hbm [shape: bf16[16,512], index: 7, kind: input, shape index: {}]
  %s8 = inlined_call_operand.hbm [shape: bf16[1,512], index: 8, kind: input, shape index: {}]
  %s9 = inlined_call_operand.hbm [shape: bf16[512,512], index: 9, kind: input, shape index: {}]
  %s10 = inlined_call_operand.hbm [shape: bf16[1,512], index: 10, kind: input, shape index: {}]
  %s11 = inlined_call_operand.hbm [shape: bf16[512,1024], index: 11, kind: input, shape index: {}]
  %s12 = inlined_call_operand.hbm [shape: bf16[1,1024], index: 12, kind: input, shape index: {}]
  %s13 = inlined_call_operand.hbm [shape: bf16[1024,1024], index: 13, kind: input, shape index: {}]
  %s14 = inlined_call_operand.hbm [shape: bf16[1,1024], index: 14, kind: input, shape index: {}]
  %s15 = inlined_call_operand.hbm [shape: bf16[1024,128], index: 15, kind: input, shape index: {}]
  %s16 = inlined_call_operand.hbm [shape: bf16[1,128], index: 16, kind: input, shape index: {}]
  %s17 = inlined_call_operand.hbm [shape: bf16[128,128], index: 17, kind: input, shape index: {}]
  %s18 = inlined_call_operand.hbm [shape: bf16[1,128], index: 18, kind: input, shape index: {}]
  %s19 = inlined_call_operand.vmem [shape: bf16[128,16], index: 19, kind: input, shape index: {}]
  %s20 = inlined_call_operand.hbm [shape: bf16[1,16], index: 20, kind: input, shape index: {}]
  %s21 = inlined_call_operand.hbm [shape: f32[4,16], index: 21, kind: output, shape index: {}]
  %s22 = sld [smem:[#allocation0]]
  $region162: #{tpu_custom_call.1} parent=0
    _
  %s24 = ssub.s32 1, %s22
  %s25 = scalar_select 0, %s24, %s22
  $region1: #{tpu_custom_call.1} parent=0
    #allocation5 [shape = 'u8[512]{0}', space=vmem, size = 0x400, scoped, tag = 'input window, operand 1, single buffered']
    #allocation6 [shape = 's32[1]{0}', space=sflag, size = 0x4, scoped, tag = 'scoped memory for tpu_custom_call.1']
    #allocation7 [shape = 's32[1]{0}', space=sflag, size = 0x4, scoped, tag = 'scoped memory for tpu_custom_call.1']
    #allocation8 [shape = 'u8[2048]{0}', space=vmem, size = 0x800, scoped, tag = 'input window, operand 2, single buffered']
    #allocation9 [shape = 's32[1]{0}', space=sflag, size = 0x4, scoped, tag = 'scoped memory for tpu_custom_call.1']
    #allocation10 [shape = 'u8[262144]{0}', space=vmem, size = 0x40000, scoped, tag = 'input window, operand 3, single buffered']
    #allocation11 [shape = 'u8[2048]{0}', space=vmem, size = 0x800, scoped, tag = 'input window, operand 4, single buffered']
    #allocation12 [shape = 's32[1]{0}', space=sflag, size = 0x4, scoped, tag = 'scoped memory for tpu_custom_call.1']
    #allocation13 [shape = 'u8[524288]{0}', space=vmem, size = 0x80000, scoped, tag = 'input window, operand 5, single buffered']
    #allocation14 [shape = 'u8[2048]{0}', space=vmem, size = 0x800, scoped, tag = 'input window, operand 6, single buffered']
    #allocation15 [shape = 's32[1]{0}', space=sflag, size = 0x4, scoped, tag = 'scoped memory for tpu_custom_call.1']
    #allocation16 [shape = 'u8[16384]{0}', space=vmem, size = 0x4000, scoped, tag = 'input window, operand 7, single buffered']
    #allocation17 [shape = 'u8[2048]{0}', space=vmem, size = 0x800, scoped, tag = 'input window, operand 8, single buffered']
    #allocation18 [shape = 's32[1]{0}', space=sflag, size = 0x4, scoped, tag = 'scoped memory for tpu_custom_call.1']
    #allocation19 [shape = 'u8[524288]{0}', space=vmem, size = 0x80000, scoped, tag = 'input window, operand 9, single buffered']
    #allocation20 [shape = 'u8[2048]{0}', space=vmem, size = 0x800, scoped, tag = 'input window, operand 10, single buffered']
    #allocation21 [shape = 's32[1]{0}', space=sflag, size = 0x4, scoped, tag = 'scoped memory for tpu_custom_call.1']
    #allocation22 [shape = 'u8[4096]{0}', space=vmem, size = 0x1000, scoped, tag = 'input window, operand 12, single buffered']
    #allocation23 [shape = 'u8[4096]{0}', space=vmem, size = 0x1000, scoped, tag = 'input window, operand 14, single buffered']
    #allocation24 [shape = 's32[1]{0}', space=sflag, size = 0x4, scoped, tag = 'scoped memory for tpu_custom_call.1']
    #allocation25 [shape = 'u8[262144]{0}', space=vmem, size = 0x40000, scoped, tag = 'input window, operand 15, single buffered']
    #allocation26 [shape = 'u8[512]{0}', space=vmem, size = 0x400, scoped, tag = 'input window, operand 16, single buffered']
    #allocation27 [shape = 's32[1]{0}', space=sflag, size = 0x4, scoped, tag = 'scoped memory for tpu_custom_call.1']
    #allocation28 [shape = 'u8[32768]{0}', space=vmem, size = 0x8000, scoped, tag = 'input window, operand 17, single buffered']
    #allocation29 [shape = 'u8[512]{0}', space=vmem, size = 0x400, scoped, tag = 'input window, operand 18, single buffered']
    #allocation30 [shape = 's32[1]{0}', space=sflag, size = 0x4, scoped, tag = 'scoped memory for tpu_custom_call.1']
    #allocation31 [shape = 'u8[512]{0}', space=vmem, size = 0x400, scoped, tag = 'input window, operand 20, single buffered']
    #allocation32 [shape = 'u8[2048]{0}', space=vmem, size = 0x800, scoped, tag = 'output window, operand 0, single buffered']
    %26 = vsyncpa [#allocation6], 0
    %27 = vsyncpa [#allocation9], 0
    %28 = vsyncpa [#allocation12], 0
    %29 = vsyncpa [#allocation15], 0
    %30 = vsyncpa [#allocation18], 0
    %31 = vsyncpa [#allocation21], 0
    %32 = vsyncpa [#allocation24], 0
    %33 = vsyncpa [#allocation27], 0
    %34 = vsyncpa [#allocation30], 0
    %35 = vsyncpa [#allocation7], 0
    // Predicated region
    $region2: #{tpu_custom_call.1} parent=1 // pred_check
      _
    $region3: #{tpu_custom_call.1} parent=1 // pred_check_branch
      %37 = sbr.rel (0) target = $region5
    $region4: #{tpu_custom_call.1} parent=1 // pred_region
      _
    $region5: #{tpu_custom_call.1} parent=1 // pred_fallthru
      _
    // Predicated region
    $region6: #{tpu_custom_call.1} parent=1 // pred_check
      _
    $region7: #{tpu_custom_call.1} parent=1 // pred_check_branch
      %39 = sbr.rel (0) target = $region9
    $region8: #{tpu_custom_call.1} parent=1 // pred_region
      %s41 = ssub.s32 16, 16
      %42 = vsyncadd [#allocation6], %s41
      %s44 = sshll.u32 [#allocation5], 4
      %s45 = int_to_ptr.vmem [resolvable:$true] %s44
      %47 = dma.hbm_to_vmem [thread:$0]  %s1, 16, %s45, [#allocation6]
    $region9: #{tpu_custom_call.1} parent=1 // pred_fallthru
      _
    // Predicated region
    $region10: #{tpu_custom_call.1} parent=1 // pred_check
      _
    $region11: #{tpu_custom_call.1} parent=1 // pred_check_branch
      %49 = sbr.rel (0) target = $region13
    $region12: #{tpu_custom_call.1} parent=1 // pred_region
      %s51 = ssub.s32 64, 64
      %52 = vsyncadd [#allocation9], %s51
      %s54 = sshll.u32 [#allocation8], 4
      %s55 = int_to_ptr.vmem [resolvable:$true] %s54
      %57 = dma.hbm_to_vmem [thread:$0]  %s2, 64, %s55, [#allocation9]
    $region13: #{tpu_custom_call.1} parent=1 // pred_fallthru
      _
    // Predicated region
    $region14: #{tpu_custom_call.1} parent=1 // pred_check
      _
    $region15: #{tpu_custom_call.1} parent=1 // pred_check_branch
      %59 = sbr.rel (0) target = $region17
    $region16: #{tpu_custom_call.1} parent=1 // pred_region
      %s61 = ssub.s32 8192, 8192
      %62 = vsyncadd [#allocation9], %s61
      %s63 = sshll.u32 [#allocation10], 4
      %s64 = int_to_ptr.vmem [resolvable:$true] %s63
      %69 = dma.hbm_to_vmem [thread:$0]  %s3, 8192, %s64, [#allocation9], 256, 256, 16
    $region17: #{tpu_custom_call.1} parent=1 // pred_fallthru
      _
    // Predicated region
    $region18: #{tpu_custom_call.1} parent=1 // pred_check
      _
    $region19: #{tpu_custom_call.1} parent=1 // pred_check_branch
      %71 = sbr.rel (0) target = $region21
    $region20: #{tpu_custom_call.1} parent=1 // pred_region
      %s73 = ssub.s32 64, 64
      %74 = vsyncadd [#allocation12], %s73
      %s76 = sshll.u32 [#allocation11], 4
      %s77 = int_to_ptr.vmem [resolvable:$true] %s76
      %79 = dma.hbm_to_vmem [thread:$0]  %s4, 64, %s77, [#allocation12]
    $region21: #{tpu_custom_call.1} parent=1 // pred_fallthru
      _
    // Predicated region
    $region22: #{tpu_custom_call.1} parent=1 // pred_check
      _
    $region23: #{tpu_custom_call.1} parent=1 // pred_check_branch
      %81 = sbr.rel (0) target = $region25
    $region24: #{tpu_custom_call.1} parent=1 // pred_region
      %s83 = ssub.s32 16384, 16384
      %84 = vsyncadd [#allocation12], %s83
      %s85 = sshll.u32 [#allocation13], 4
      %s86 = int_to_ptr.vmem [resolvable:$true] %s85
      %91 = dma.hbm_to_vmem [thread:$0]  %s5, 16384, %s86, [#allocation12], 256, 256, 16
    $region25: #{tpu_custom_call.1} parent=1 // pred_fallthru
      _
    // Predicated region
    $region26: #{tpu_custom_call.1} parent=1 // pred_check
      _
    $region27: #{tpu_custom_call.1} parent=1 // pred_check_branch
      %93 = sbr.rel (0) target = $region29
    $region28: #{tpu_custom_call.1} parent=1 // pred_region
      %s95 = ssub.s32 64, 64
      %96 = vsyncadd [#allocation15], %s95
      %s98 = sshll.u32 [#allocation14], 4
      %s99 = int_to_ptr.vmem [resolvable:$true] %s98
      %101 = dma.hbm_to_vmem [thread:$0]  %s6, 64, %s99, [#allocation15]
    $region29: #{tpu_custom_call.1} parent=1 // pred_fallthru
      _
    // Predicated region
    $region30: #{tpu_custom_call.1} parent=1 // pred_check
      _
    $region31: #{tpu_custom_call.1} parent=1 // pred_check_branch
      %103 = sbr.rel (0) target = $region33
    $region32: #{tpu_custom_call.1} parent=1 // pred_region
      %s105 = ssub.s32 512, 512
      %106 = vsyncadd [#allocation15], %s105
      %s107 = sshll.u32 [#allocation16], 4
      %s108 = int_to_ptr.vmem [resolvable:$true] %s107
      %113 = dma.hbm_to_vmem [thread:$0]  %s7, 512, %s108, [#allocation15], 256, 256, 16
    $region33: #{tpu_custom_call.1} parent=1 // pred_fallthru
      _
    // Predicated region
    $region34: #{tpu_custom_call.1} parent=1 // pred_check
      _
    $region35: #{tpu_custom_call.1} parent=1 // pred_check_branch
      %115 = sbr.rel (0) target = $region37
    $region36: #{tpu_custom_call.1} parent=1 // pred_region
      %s117 = ssub.s32 64, 64
      %118 = vsyncadd [#allocation18], %s117
      %s120 = sshll.u32 [#allocation17], 4
      %s121 = int_to_ptr.vmem [resolvable:$true] %s120
      %123 = dma.hbm_to_vmem [thread:$0]  %s8, 64, %s121, [#allocation18]
    $region37: #{tpu_custom_call.1} parent=1 // pred_fallthru
      _
    // Predicated region
    $region38: #{tpu_custom_call.1} parent=1 // pred_check
      _
    $region39: #{tpu_custom_call.1} parent=1 // pred_check_branch
      %125 = sbr.rel (0) target = $region41
    $region40: #{tpu_custom_call.1} parent=1 // pred_region
      %s127 = ssub.s32 16384, 16384
      %128 = vsyncadd [#allocation18], %s127
      %s129 = sshll.u32 [#allocation19], 4
      %s130 = int_to_ptr.vmem [resolvable:$true] %s129
      %135 = dma.hbm_to_vmem [thread:$0]  %s9, 16384, %s130, [#allocation18], 256, 256, 16
    $region41: #{tpu_custom_call.1} parent=1 // pred_fallthru
      _
    // Predicated region
    $region42: #{tpu_custom_call.1} parent=1 // pred_check
      _
    $region43: #{tpu_custom_call.1} parent=1 // pred_check_branch
      %137 = sbr.rel (0) target = $region45
    $region44: #{tpu_custom_call.1} parent=1 // pred_region
      %s139 = ssub.s32 64, 64
      %140 = vsyncadd [#allocation21], %s139
      %s142 = sshll.u32 [#allocation20], 4
      %s143 = int_to_ptr.vmem [resolvable:$true] %s142
      %145 = dma.hbm_to_vmem [thread:$0]  %s10, 64, %s143, [#allocation21]
    $region45: #{tpu_custom_call.1} parent=1 // pred_fallthru
      _
    // Predicated region
    $region46: #{tpu_custom_call.1} parent=1 // pred_check
      _
    $region47: #{tpu_custom_call.1} parent=1 // pred_check_branch
      %147 = sbr.rel (0) target = $region49
    $region48: #{tpu_custom_call.1} parent=1 // pred_region
      %s149 = ssub.s32 128, 128
      %150 = vsyncadd [#allocation21], %s149
      %s152 = sshll.u32 [#allocation22], 4
      %s153 = int_to_ptr.vmem [resolvable:$true] %s152
      %155 = dma.hbm_to_vmem [thread:$0]  %s12, 128, %s153, [#allocation21]
    $region49: #{tpu_custom_call.1} parent=1 // pred_fallthru
      _
    // Predicated region
    $region50: #{tpu_custom_call.1} parent=1 // pred_check
      _
    $region51: #{tpu_custom_call.1} parent=1 // pred_check_branch
      %157 = sbr.rel (0) target = $region53
    $region52: #{tpu_custom_call.1} parent=1 // pred_region
      %s159 = ssub.s32 128, 128
      %160 = vsyncadd [#allocation24], %s159
      %s162 = sshll.u32 [#allocation23], 4
      %s163 = int_to_ptr.vmem [resolvable:$true] %s162
      %165 = dma.hbm_to_vmem [thread:$0]  %s14, 128, %s163, [#allocation24]
    $region53: #{tpu_custom_call.1} parent=1 // pred_fallthru
      _
    // Predicated region
    $region54: #{tpu_custom_call.1} parent=1 // pred_check
      _
    $region55: #{tpu_custom_call.1} parent=1 // pred_check_branch
      %167 = sbr.rel (0) target = $region57
    $region56: #{tpu_custom_call.1} parent=1 // pred_region
      %s169 = ssub.s32 8192, 8192
      %170 = vsyncadd [#allocation24], %s169
      %s171 = sshll.u32 [#allocation25], 4
      %s172 = int_to_ptr.vmem [resolvable:$true] %s171
      %177 = dma.hbm_to_vmem [thread:$0]  %s15, 8192, %s172, [#allocation24], 64, 64, 4
    $region57: #{tpu_custom_call.1} parent=1 // pred_fallthru
      _
    // Predicated region
    $region58: #{tpu_custom_call.1} parent=1 // pred_check
      _
    $region59: #{tpu_custom_call.1} parent=1 // pred_check_branch
      %179 = sbr.rel (0) target = $region61
    $region60: #{tpu_custom_call.1} parent=1 // pred_region
      %s181 = ssub.s32 16, 16
      %182 = vsyncadd [#allocation27], %s181
      %s184 = sshll.u32 [#allocation26], 4
      %s185 = int_to_ptr.vmem [resolvable:$true] %s184
      %187 = dma.hbm_to_vmem [thread:$0]  %s16, 16, %s185, [#allocation27]
    $region61: #{tpu_custom_call.1} parent=1 // pred_fallthru
      _
    // Predicated region
    $region62: #{tpu_custom_call.1} parent=1 // pred_check
      _
    $region63: #{tpu_custom_call.1} parent=1 // pred_check_branch
      %189 = sbr.rel (0) target = $region65
    $region64: #{tpu_custom_call.1} parent=1 // pred_region
      %s191 = ssub.s32 1024, 1024
      %192 = vsyncadd [#allocation27], %s191
      %s193 = sshll.u32 [#allocation28], 4
      %s194 = int_to_ptr.vmem [resolvable:$true] %s193
      %199 = dma.hbm_to_vmem [thread:$0]  %s17, 1024, %s194, [#allocation27], 64, 64, 4
    $region65: #{tpu_custom_call.1} parent=1 // pred_fallthru
      _
    // Predicated region
    $region66: #{tpu_custom_call.1} parent=1 // pred_check
      _
    $region67: #{tpu_custom_call.1} parent=1 // pred_check_branch
      %201 = sbr.rel (0) target = $region69
    $region68: #{tpu_custom_call.1} parent=1 // pred_region
      %s203 = ssub.s32 16, 16
      %204 = vsyncadd [#allocation30], %s203
      %s206 = sshll.u32 [#allocation29], 4
      %s207 = int_to_ptr.vmem [resolvable:$true] %s206
      %209 = dma.hbm_to_vmem [thread:$0]  %s18, 16, %s207, [#allocation30]
    $region69: #{tpu_custom_call.1} parent=1 // pred_fallthru
      _
    // Predicated region
    $region70: #{tpu_custom_call.1} parent=1 // pred_check
      _
    $region71: #{tpu_custom_call.1} parent=1 // pred_check_branch
      %211 = sbr.rel (0) target = $region73
    $region72: #{tpu_custom_call.1} parent=1 // pred_region
      _
    $region73: #{tpu_custom_call.1} parent=1 // pred_fallthru
      _
    // Predicated region
    $region74: #{tpu_custom_call.1} parent=1 // pred_check
      _
    $region75: #{tpu_custom_call.1} parent=1 // pred_check_branch
      %213 = sbr.rel (0) target = $region77
    $region76: #{tpu_custom_call.1} parent=1 // pred_region
      %s215 = ssub.s32 16, 16
      %216 = vsyncadd [#allocation30], %s215
      %s218 = sshll.u32 [#allocation31], 4
      %s219 = int_to_ptr.vmem [resolvable:$true] %s218
      %221 = dma.hbm_to_vmem [thread:$0]  %s20, 16, %s219, [#allocation30]
    $region77: #{tpu_custom_call.1} parent=1 // pred_fallthru
      _
    // Predicated region
    $region78: #{tpu_custom_call.1} parent=1 // pred_check
      _
    $region79: #{tpu_custom_call.1} parent=1 // pred_check_branch
      %223 = sbr.rel (0) target = $region81
    $region80: #{tpu_custom_call.1} parent=1 // pred_region
      %224 = dma.done [#allocation6], 16
    $region81: #{tpu_custom_call.1} parent=1 // pred_fallthru
      _
    // Predicated region
    $region82: #{tpu_custom_call.1} parent=1 // pred_check
      _
    $region83: #{tpu_custom_call.1} parent=1 // pred_check_branch
      %226 = sbr.rel (0) target = $region85
    $region84: #{tpu_custom_call.1} parent=1 // pred_region
      %227 = dma.done [#allocation9], 64
    $region85: #{tpu_custom_call.1} parent=1 // pred_fallthru
      _
    // Predicated region
    $region86: #{tpu_custom_call.1} parent=1 // pred_check
      _
    $region87: #{tpu_custom_call.1} parent=1 // pred_check_branch
      %229 = sbr.rel (0) target = $region89
    $region88: #{tpu_custom_call.1} parent=1 // pred_region
      %230 = dma.done [#allocation9], 8192
    $region89: #{tpu_custom_call.1} parent=1 // pred_fallthru
      _
    // Predicated region
    $region90: #{tpu_custom_call.1} parent=1 // pred_check
      _
    $region91: #{tpu_custom_call.1} parent=1 // pred_check_branch
      %232 = sbr.rel (0) target = $region93
    $region92: #{tpu_custom_call.1} parent=1 // pred_region
      %233 = dma.done [#allocation12], 64
    $region93: #{tpu_custom_call.1} parent=1 // pred_fallthru
      _
    // Predicated region
    $region94: #{tpu_custom_call.1} parent=1 // pred_check
      _
    $region95: #{tpu_custom_call.1} parent=1 // pred_check_branch
      %235 = sbr.rel (0) target = $region97
    $region96: #{tpu_custom_call.1} parent=1 // pred_region
      %236 = dma.done [#allocation12], 16384
    $region97: #{tpu_custom_call.1} parent=1 // pred_fallthru
      _
    // Predicated region
    $region98: #{tpu_custom_call.1} parent=1 // pred_check
      _
    $region99: #{tpu_custom_call.1} parent=1 // pred_check_branch
      %238 = sbr.rel (0) target = $region101
    $region100: #{tpu_custom_call.1} parent=1 // pred_region
      %239 = dma.done [#allocation15], 64
    $region101: #{tpu_custom_call.1} parent=1 // pred_fallthru
      _
    // Predicated region
    $region102: #{tpu_custom_call.1} parent=1 // pred_check
      _
    $region103: #{tpu_custom_call.1} parent=1 // pred_check_branch
      %241 = sbr.rel (0) target = $region105
    $region104: #{tpu_custom_call.1} parent=1 // pred_region
      %242 = dma.done [#allocation15], 512
    $region105: #{tpu_custom_call.1} parent=1 // pred_fallthru
      _
    // Predicated region
    $region106: #{tpu_custom_call.1} parent=1 // pred_check
      _
    $region107: #{tpu_custom_call.1} parent=1 // pred_check_branch
      %244 = sbr.rel (0) target = $region109
    $region108: #{tpu_custom_call.1} parent=1 // pred_region
      %245 = dma.done [#allocation18], 64
    $region109: #{tpu_custom_call.1} parent=1 // pred_fallthru
      _
    // Predicated region
    $region110: #{tpu_custom_call.1} parent=1 // pred_check
      _
    $region111: #{tpu_custom_call.1} parent=1 // pred_check_branch
      %247 = sbr.rel (0) target = $region113
    $region112: #{tpu_custom_call.1} parent=1 // pred_region
      %248 = dma.done [#allocation18], 16384
    $region113: #{tpu_custom_call.1} parent=1 // pred_fallthru
      _
    // Predicated region
    $region114: #{tpu_custom_call.1} parent=1 // pred_check
      _
    $region115: #{tpu_custom_call.1} parent=1 // pred_check_branch
      %250 = sbr.rel (0) target = $region117
    $region116: #{tpu_custom_call.1} parent=1 // pred_region
      %251 = dma.done [#allocation21], 64
    $region117: #{tpu_custom_call.1} parent=1 // pred_fallthru
      _
    // Predicated region
    $region118: #{tpu_custom_call.1} parent=1 // pred_check
      _
    $region119: #{tpu_custom_call.1} parent=1 // pred_check_branch
      %253 = sbr.rel (0) target = $region121
    $region120: #{tpu_custom_call.1} parent=1 // pred_region
      %254 = dma.done [#allocation21], 128
    $region121: #{tpu_custom_call.1} parent=1 // pred_fallthru
      _
    // Predicated region
    $region122: #{tpu_custom_call.1} parent=1 // pred_check
      _
    $region123: #{tpu_custom_call.1} parent=1 // pred_check_branch
      %256 = sbr.rel (0) target = $region125
    $region124: #{tpu_custom_call.1} parent=1 // pred_region
      %257 = dma.done [#allocation24], 128
    $region125: #{tpu_custom_call.1} parent=1 // pred_fallthru
      _
    // Predicated region
    $region126: #{tpu_custom_call.1} parent=1 // pred_check
      _
    $region127: #{tpu_custom_call.1} parent=1 // pred_check_branch
      %259 = sbr.rel (0) target = $region129
    $region128: #{tpu_custom_call.1} parent=1 // pred_region
      %260 = dma.done [#allocation24], 8192
    $region129: #{tpu_custom_call.1} parent=1 // pred_fallthru
      _
    // Predicated region
    $region130: #{tpu_custom_call.1} parent=1 // pred_check
      _
    $region131: #{tpu_custom_call.1} parent=1 // pred_check_branch
      %262 = sbr.rel (0) target = $region133
    $region132: #{tpu_custom_call.1} parent=1 // pred_region
      %263 = dma.done [#allocation27], 16
    $region133: #{tpu_custom_call.1} parent=1 // pred_fallthru
      _
    // Predicated region
    $region134: #{tpu_custom_call.1} parent=1 // pred_check
      _
    $region135: #{tpu_custom_call.1} parent=1 // pred_check_branch
      %265 = sbr.rel (0) target = $region137
    $region136: #{tpu_custom_call.1} parent=1 // pred_region
      %266 = dma.done [#allocation27], 1024
    $region137: #{tpu_custom_call.1} parent=1 // pred_fallthru
      _
    // Predicated region
    $region138: #{tpu_custom_call.1} parent=1 // pred_check
      _
    $region139: #{tpu_custom_call.1} parent=1 // pred_check_branch
      %268 = sbr.rel (0) target = $region141
    $region140: #{tpu_custom_call.1} parent=1 // pred_region
      %269 = dma.done [#allocation30], 16
    $region141: #{tpu_custom_call.1} parent=1 // pred_fallthru
      _
    // Predicated region
    $region142: #{tpu_custom_call.1} parent=1 // pred_check
      _
    $region143: #{tpu_custom_call.1} parent=1 // pred_check_branch
      %271 = sbr.rel (0) target = $region145
    $region144: #{tpu_custom_call.1} parent=1 // pred_region
      %272 = dma.done [#allocation30], 16
    $region145: #{tpu_custom_call.1} parent=1 // pred_fallthru
      _
    // Predicated region
    $region146: #{tpu_custom_call.1} parent=1 // pred_check
      _
    $region147: #{tpu_custom_call.1} parent=1 // pred_check_branch
      %275 = sbr.rel target = $region149
    $region148: #{tpu_custom_call.1} parent=1 // pred_region
      %276 = sst [smem:[#allocation35]] [#allocation34]
      %277 = sst [smem:[#allocation36]] [#allocation33]
    $region149: #{tpu_custom_call.1} parent=1 // pred_fallthru
      _
    %279 = shalt.err (0)
    %s281 = sshll.u32 [#allocation2], 4
    %s282 = int_to_ptr.vmem [resolvable:$true] %s281
    %284 = dma.hbm_to_vmem [thread:$0]  %s11, 32768, %s282, [#allocation4]
    %s285 = scalar_lea.sflag [#allocation4], 1
    // Predicated region
    $region150: #{tpu_custom_call.1} parent=1 // pred_check
      _
    $region151: #{tpu_custom_call.1} parent=1 // pred_check_branch
      %287 = sbr.rel target = $region153
    $region152: #{tpu_custom_call.1} parent=1 // pred_region
      %288 = sst [smem:[#allocation35]] [#allocation38]
      %289 = sst [smem:[#allocation36]] [#allocation37]
    $region153: #{tpu_custom_call.1} parent=1 // pred_fallthru
      _
    %291 = shalt.err (0)
    %s293 = sshll.u32 [#allocation3], 4
    %s294 = int_to_ptr.vmem [resolvable:$true] %s293
    %296 = dma.hbm_to_vmem [thread:$0]  %s13, 65536, %s294, %s285
    %v297 = vld [vmem:[%s0] sm:$0xf]
    %v298 = vld [vmem:[#allocation5] sm:$0x1]
    %300 = vset.pattern.permute.xlu0 0
    %301 = vperm.xlu0 %300, %v297
    %v302 = vpop.permute.xlu0 %301
    %v305 = vlaneseq
    %v306 = vshrl.u32 %v305, 7
    %v307 = vsub.s32 0, %v306
    %v308 = vrot.slane %v298, %v307
    %v310 = vmul.f32 %v302, %v308
    %v311 = vand.u32 2147483647, %v310
    %vm312 = vcmp.le.f32.partialorder %v311, 0.7853982
    %vm313 = vcmp.lt.s32.totalorder %v310, 0
    %v314 = vand.u32 %v310, 2139095040
    %v315 = vshrl.u32 %v314, 23
    %v316 = vsub.s32 %v315, 127
    %v317 = vand.u32 2147483647, %v310
    %v318 = vand.u32 %v317, 8388607
    %v319 = vor.u32 %v318, 8388608
    %v320 = vsub.s32 0, %v319
    %v321 = vadd.s32 %v316, 1
    %vm322 = vcmp.gt.s32.totalorder %v321, 0
    %v323 = vsel %vm322, %v321, 0
    %v324 = vshrl.u32 %v323, 5
    %v325 = vand.u32 %v323, 31
    %v326 = vsub.s32 32, %v325
    %v327 = vshrl.u32 683565275, %v326
    %v328 = vshll.u32 683565275, %v325
    %v329 = vshrl.u32 2475754826, %v326
    %v330 = vor.u32 %v328, %v329
    %v331 = vshll.u32 2475754826, %v325
    %v332 = vshrl.u32 2131351028, %v326
    %v333 = vor.u32 %v331, %v332
    %v334 = vshll.u32 2131351028, %v325
    %v335 = vshrl.u32 2102212464, %v326
    %v336 = vor.u32 %v334, %v335
    %v337 = vshll.u32 2102212464, %v325
    %v338 = vshrl.u32 920167782, %v326
    %v339 = vor.u32 %v337, %v338
    %v340 = vshll.u32 920167782, %v325
    %v341 = vshrl.u32 1326507024, %v326
    %v342 = vor.u32 %v340, %v341
    %vm343 = vcmp.lt.s32.totalorder %v324, 1
    %vm344 = vcmp.lt.s32.totalorder %v324, 2
    %vm345 = vcmp.lt.s32.totalorder %v324, 3
    %vm346 = vcmp.lt.s32.totalorder %v324, 4
    %v347 = vsel %vm343, %v327, %v330
    %v348 = vsel %vm346, %v336, 2102212464
    %v349 = vsel %vm345, %v333, %v348
    %v350 = vsel %vm344, %v347, %v349
    %v351 = vsel %vm343, %v330, %v333
    %v352 = vsel %vm346, %v339, 920167782
    %v353 = vsel %vm345, %v336, %v352
    %v354 = vsel %vm344, %v351, %v353
    %v355 = vsel %vm343, %v333, %v336
    %v356 = vsel %vm346, %v342, 1326507024
    %v357 = vsel %vm345, %v339, %v356
    %v358 = vsel %vm344, %v355, %v357
    %v359 = vshll.u32 %v319, 8
    %v360 = vmul.u32.u64.compose %v359, %v358
    %v361 = vextract.low.u32 %v360
    %v362 = vextract.high.u32 %v360
    %v363 = vmul.u32.u64.compose %v359, %v354
    %v364 = vextract.low.u32 %v363
    %v365 = vextract.high.u32 %v363
    %v366 = vmul.u32 %v359, %v350
    %v367 = vadd.s32 %v362, %v364
    %vm368 = vc.u32 %v362, %v364
    %v369 = vadd.s32 %v365, 1
    %v370 = vsel %vm368, %v369, %v365
    %v371 = vadd.s32 %v366, %v370
    %v372 = vadd.s32 %v371, 536870912
    %v373 = vshrl.u32 %v372, 30
    %v374 = vshll.u32 %v373, 30
    %v375 = vsub.s32 %v371, %v374
    %vm376 = vcmp.lt.s32.totalorder %v375, 0
    %v377 = vsub.s32 0, %v375
    %v378 = vsel %vm376, %v377, %v375
    %v379 = vclz %v378
    %v380 = vsub.s32 %v379, 2
    %vm381 = vcmp.gt.s32.totalorder 0, %v380
    %v382 = vsel %vm381, 0, %v380
    %v383 = vsub.s32 32, %v382
    %v384 = vshll.u32 %v375, %v382
    %v385 = vshrl.u32 %v367, %v383
    %v386 = vor.u32 %v384, %v385
    %v387 = vsub.s32 4294967266, %v382
    %v388 = vadd.s32 %v387, 127
    %v389 = vshll.u32 %v388, 23
    %v390 = vor.u32 4788187, %v389
    %v391 = vand.u32 2147483647, %v390
    %v393 = vcvt.s32.f32 %v386
    %v394 = vmul.f32 %v393, %v391
    %v395 = vxor.u32 %v394, 2147483648
    %v396 = vsel %vm313, %v395, %v394
    %v397 = vsub.s32 4, %v373
    %v398 = vsel %vm313, %v397, %v373
    %v399 = vsel %vm312, %v310, %v396
    %v400 = vsel %vm312, 0, %v398
    %v401 = vcosq.f32.pop %v399
    %v402 = vsinq.f32.pop %v399
    %vm403 = vweird.f32 %v310
    %v404 = vadd.s32 %v400, 3
    %v405 = vand.u32 %v404, 3
    %vm406 = vcmp.lt.s32.totalorder %v405, 2
    %vm407 = vcmp.eq.s32.totalorder %v405, 0
    %v408 = vxor.u32 %v402, 2147483648
    %v409 = vsel %vm407, %v401, %v408
    %vm410 = vcmp.eq.s32.totalorder %v405, 2
    %v411 = vxor.u32 %v401, 2147483648
    %v412 = vsel %vm410, %v411, %v402
    %v413 = vsel %vm406, %v409, %v412
    %v414 = vsel %vm403, nan, %v413
    %v415 = vpack.c.bf16 %v414, %v414
    %v416 = vand.u32 2147483647, %v310
    %vm417 = vcmp.le.f32.partialorder %v416, 0.7853982
    %vm418 = vcmp.lt.s32.totalorder %v310, 0
    %v419 = vand.u32 %v310, 2139095040
    %v420 = vshrl.u32 %v419, 23
    %v421 = vsub.s32 %v420, 127
    %v422 = vand.u32 2147483647, %v310
    %v423 = vand.u32 %v422, 8388607
    %v424 = vor.u32 %v423, 8388608
    %v425 = vsub.s32 0, %v424
    %v426 = vadd.s32 %v421, 1
    %vm427 = vcmp.gt.s32.totalorder %v426, 0
    %v428 = vsel %vm427, %v426, 0
    %v429 = vshrl.u32 %v428, 5
    %v430 = vand.u32 %v428, 31
    %v431 = vsub.s32 32, %v430
    %v432 = vshrl.u32 683565275, %v431
    %v433 = vshll.u32 683565275, %v430
    %v434 = vshrl.u32 2475754826, %v431
    %v435 = vor.u32 %v433, %v434
    %v436 = vshll.u32 2475754826, %v430
    %v437 = vshrl.u32 2131351028, %v431
    %v438 = vor.u32 %v436, %v437
    %v439 = vshll.u32 2131351028, %v430
    %v440 = vshrl.u32 2102212464, %v431
    %v441 = vor.u32 %v439, %v440
    %v442 = vshll.u32 2102212464, %v430
    %v443 = vshrl.u32 920167782, %v431
    %v444 = vor.u32 %v442, %v443
    %v445 = vshll.u32 920167782, %v430
    %v446 = vshrl.u32 1326507024, %v431
    %v447 = vor.u32 %v445, %v446
    %vm448 = vcmp.lt.s32.totalorder %v429, 1
    %vm449 = vcmp.lt.s32.totalorder %v429, 2
    %vm450 = vcmp.lt.s32.totalorder %v429, 3
    %vm451 = vcmp.lt.s32.totalorder %v429, 4
    %v452 = vsel %vm448, %v432, %v435
    %v453 = vsel %vm451, %v441, 2102212464
    %v454 = vsel %vm450, %v438, %v453
    %v455 = vsel %vm449, %v452, %v454
    %v456 = vsel %vm448, %v435, %v438
    %v457 = vsel %vm451, %v444, 920167782
    %v458 = vsel %vm450, %v441, %v457
    %v459 = vsel %vm449, %v456, %v458
    %v460 = vsel %vm448, %v438, %v441
    %v461 = vsel %vm451, %v447, 1326507024
    %v462 = vsel %vm450, %v444, %v461
    %v463 = vsel %vm449, %v460, %v462
    %v464 = vshll.u32 %v424, 8
    %v465 = vmul.u32.u64.compose %v464, %v463
    %v466 = vextract.low.u32 %v465
    %v467 = vextract.high.u32 %v465
    %v468 = vmul.u32.u64.compose %v464, %v459
    %v469 = vextract.low.u32 %v468
    %v470 = vextract.high.u32 %v468
    %v471 = vmul.u32 %v464, %v455
    %v472 = vadd.s32 %v467, %v469
    %vm473 = vc.u32 %v467, %v469
    %v474 = vadd.s32 %v470, 1
    %v475 = vsel %vm473, %v474, %v470
    %v476 = vadd.s32 %v471, %v475
    %v477 = vadd.s32 %v476, 536870912
    %v478 = vshrl.u32 %v477, 30
    %v479 = vshll.u32 %v478, 30
    %v480 = vsub.s32 %v476, %v479
    %vm481 = vcmp.lt.s32.totalorder %v480, 0
    %v482 = vsub.s32 0, %v480
    %v483 = vsel %vm481, %v482, %v480
    %v484 = vclz %v483
    %v485 = vsub.s32 %v484, 2
    %vm486 = vcmp.gt.s32.totalorder 0, %v485
    %v487 = vsel %vm486, 0, %v485
    %v488 = vsub.s32 32, %v487
    %v489 = vshll.u32 %v480, %v487
    %v490 = vshrl.u32 %v472, %v488
    %v491 = vor.u32 %v489, %v490
    %v492 = vsub.s32 4294967266, %v487
    %v493 = vadd.s32 %v492, 127
    %v494 = vshll.u32 %v493, 23
    %v495 = vor.u32 4788187, %v494
    %v496 = vand.u32 2147483647, %v495
    %v498 = vcvt.s32.f32 %v491
    %v499 = vmul.f32 %v498, %v496
    %v500 = vxor.u32 %v499, 2147483648
    %v501 = vsel %vm418, %v500, %v499
    %v502 = vsub.s32 4, %v478
    %v503 = vsel %vm418, %v502, %v478
    %v504 = vsel %vm417, %v310, %v501
    %v505 = vsel %vm417, 0, %v503
    %v506 = vcosq.f32.pop %v504
    %v507 = vsinq.f32.pop %v504
    %vm508 = vweird.f32 %v310
    %v509 = vand.u32 %v505, 3
    %vm510 = vcmp.lt.s32.totalorder %v509, 2
    %vm511 = vcmp.eq.s32.totalorder %v509, 0
    %v512 = vxor.u32 %v507, 2147483648
    %v513 = vsel %vm511, %v506, %v512
    %vm514 = vcmp.eq.s32.totalorder %v509, 2
    %v515 = vxor.u32 %v506, 2147483648
    %v516 = vsel %vm514, %v515, %v507
    %v517 = vsel %vm510, %v513, %v516
    %v518 = vsel %vm508, nan, %v517
    %v519 = vpack.c.bf16 %v518, %v518
    %v520 = vld [vmem:[#allocation10] sm:$0xff]
    %v521 = vld [vmem:[#allocation10 + $0x8] sm:$0xff]
    %v522 = vld [vmem:[#allocation10 + $0x10] sm:$0xff]
    %v523 = vld [vmem:[#allocation10 + $0x18] sm:$0xff]
    %v524 = vld [vmem:[#allocation10 + $0x20] sm:$0xff]
    %v525 = vld [vmem:[#allocation10 + $0x28] sm:$0xff]
    %v526 = vld [vmem:[#allocation10 + $0x30] sm:$0xff]
    %v527 = vld [vmem:[#allocation10 + $0x38] sm:$0xff]
    %v528 = vld [vmem:[#allocation10 + $0x40] sm:$0xff]
    %v529 = vld [vmem:[#allocation10 + $0x48] sm:$0xff]
    %v530 = vld [vmem:[#allocation10 + $0x50] sm:$0xff]
    %v531 = vld [vmem:[#allocation10 + $0x58] sm:$0xff]
    %v532 = vld [vmem:[#allocation10 + $0x60] sm:$0xff]
    %v533 = vld [vmem:[#allocation10 + $0x68] sm:$0xff]
    %v534 = vld [vmem:[#allocation10 + $0x70] sm:$0xff]
    %v535 = vld [vmem:[#allocation10 + $0x78] sm:$0xff]
    %v536 = vld [vmem:[#allocation10 + $0x80] sm:$0xff]
    %v537 = vld [vmem:[#allocation10 + $0x88] sm:$0xff]
    %v538 = vld [vmem:[#allocation10 + $0x90] sm:$0xff]
    %v539 = vld [vmem:[#allocation10 + $0x98] sm:$0xff]
    %v540 = vld [vmem:[#allocation10 + $0xa0] sm:$0xff]
    %v541 = vld [vmem:[#allocation10 + $0xa8] sm:$0xff]
    %v542 = vld [vmem:[#allocation10 + $0xb0] sm:$0xff]
    %v543 = vld [vmem:[#allocation10 + $0xb8] sm:$0xff]
    %v544 = vld [vmem:[#allocation10 + $0xc0] sm:$0xff]
    %v545 = vld [vmem:[#allocation10 + $0xc8] sm:$0xff]
    %v546 = vld [vmem:[#allocation10 + $0xd0] sm:$0xff]
    %v547 = vld [vmem:[#allocation10 + $0xd8] sm:$0xff]
    %v548 = vld [vmem:[#allocation10 + $0xe0] sm:$0xff]
    %v549 = vld [vmem:[#allocation10 + $0xe8] sm:$0xff]
    %v550 = vld [vmem:[#allocation10 + $0xf0] sm:$0xff]
    %v551 = vld [vmem:[#allocation10 + $0xf8] sm:$0xff]
    %v552 = vld [vmem:[#allocation10 + $0x100] sm:$0xff]
    %v553 = vld [vmem:[#allocation10 + $0x108] sm:$0xff]
    %v554 = vld [vmem:[#allocation10 + $0x110] sm:$0xff]
    %v555 = vld [vmem:[#allocation10 + $0x118] sm:$0xff]
    %v556 = vld [vmem:[#allocation10 + $0x120] sm:$0xff]
    %v557 = vld [vmem:[#allocation10 + $0x128] sm:$0xff]
    %v558 = vld [vmem:[#allocation10 + $0x130] sm:$0xff]
    %v559 = vld [vmem:[#allocation10 + $0x138] sm:$0xff]
    %v560 = vld [vmem:[#allocation10 + $0x140] sm:$0xff]
    %v561 = vld [vmem:[#allocation10 + $0x148] sm:$0xff]
    %v562 = vld [vmem:[#allocation10 + $0x150] sm:$0xff]
    %v563 = vld [vmem:[#allocation10 + $0x158] sm:$0xff]
    %v564 = vld [vmem:[#allocation10 + $0x160] sm:$0xff]
    %v565 = vld [vmem:[#allocation10 + $0x168] sm:$0xff]
    %v566 = vld [vmem:[#allocation10 + $0x170] sm:$0xff]
    %v567 = vld [vmem:[#allocation10 + $0x178] sm:$0xff]
    %v568 = vld [vmem:[#allocation10 + $0x180] sm:$0xff]
    %v569 = vld [vmem:[#allocation10 + $0x188] sm:$0xff]
    %v570 = vld [vmem:[#allocation10 + $0x190] sm:$0xff]
    %v571 = vld [vmem:[#allocation10 + $0x198] sm:$0xff]
    %v572 = vld [vmem:[#allocation10 + $0x1a0] sm:$0xff]
    %v573 = vld [vmem:[#allocation10 + $0x1a8] sm:$0xff]
    %v574 = vld [vmem:[#allocation10 + $0x1b0] sm:$0xff]
    %v575 = vld [vmem:[#allocation10 + $0x1b8] sm:$0xff]
    %v576 = vld [vmem:[#allocation10 + $0x1c0] sm:$0xff]
    %v577 = vld [vmem:[#allocation10 + $0x1c8] sm:$0xff]
    %v578 = vld [vmem:[#allocation10 + $0x1d0] sm:$0xff]
    %v579 = vld [vmem:[#allocation10 + $0x1d8] sm:$0xff]
    %v580 = vld [vmem:[#allocation10 + $0x1e0] sm:$0xff]
    %v581 = vld [vmem:[#allocation10 + $0x1e8] sm:$0xff]
    %v582 = vld [vmem:[#allocation10 + $0x1f0] sm:$0xff]
    %v583 = vld [vmem:[#allocation10 + $0x1f8] sm:$0xff]
    %v616 = vunpack.c.l.b16 %v552
    %v617 = vunpack.c.h.b16 %v552
    %v618 = vunpack.c.l.b16 %v553
    %v619 = vunpack.c.h.b16 %v553
    %v620 = vunpack.c.l.b16 %v554
    %v621 = vunpack.c.h.b16 %v554
    %v622 = vunpack.c.l.b16 %v555
    %v623 = vunpack.c.h.b16 %v555
    %v624 = vunpack.c.l.b16 %v556
    %v625 = vunpack.c.h.b16 %v556
    %v626 = vunpack.c.l.b16 %v557
    %v627 = vunpack.c.h.b16 %v557
    %v628 = vunpack.c.l.b16 %v558
    %v629 = vunpack.c.h.b16 %v558
    %v630 = vunpack.c.l.b16 %v559
    %v631 = vunpack.c.h.b16 %v559
    %v632 = vunpack.c.l.b16 %v560
    %v633 = vunpack.c.h.b16 %v560
    %v634 = vunpack.c.l.b16 %v561
    %v635 = vunpack.c.h.b16 %v561
    %v636 = vunpack.c.l.b16 %v562
    %v637 = vunpack.c.h.b16 %v562
    %v638 = vunpack.c.l.b16 %v563
    %v639 = vunpack.c.h.b16 %v563
    %v640 = vunpack.c.l.b16 %v564
    %v641 = vunpack.c.h.b16 %v564
    %v642 = vunpack.c.l.b16 %v565
    %v643 = vunpack.c.h.b16 %v565
    %v644 = vunpack.c.l.b16 %v566
    %v645 = vunpack.c.h.b16 %v566
    %v646 = vunpack.c.l.b16 %v567
    %v647 = vunpack.c.h.b16 %v567
    %v648 = vunpack.c.l.b16 %v568
    %v649 = vunpack.c.h.b16 %v568
    %v650 = vunpack.c.l.b16 %v569
    %v651 = vunpack.c.h.b16 %v569
    %v652 = vunpack.c.l.b16 %v570
    %v653 = vunpack.c.h.b16 %v570
    %v654 = vunpack.c.l.b16 %v571
    %v655 = vunpack.c.h.b16 %v571
    %v656 = vunpack.c.l.b16 %v572
    %v657 = vunpack.c.h.b16 %v572
    %v658 = vunpack.c.l.b16 %v573
    %v659 = vunpack.c.h.b16 %v573
    %v660 = vunpack.c.l.b16 %v574
    %v661 = vunpack.c.h.b16 %v574
    %v662 = vunpack.c.l.b16 %v575
    %v663 = vunpack.c.h.b16 %v575
    %v664 = vunpack.c.l.b16 %v576
    %v665 = vunpack.c.h.b16 %v576
    %v666 = vunpack.c.l.b16 %v577
    %v667 = vunpack.c.h.b16 %v577
    %v668 = vunpack.c.l.b16 %v578
    %v669 = vunpack.c.h.b16 %v578
    %v670 = vunpack.c.l.b16 %v579
    %v671 = vunpack.c.h.b16 %v579
    %v672 = vunpack.c.l.b16 %v580
    %v673 = vunpack.c.h.b16 %v580
    %v674 = vunpack.c.l.b16 %v581
    %v675 = vunpack.c.h.b16 %v581
    %v676 = vunpack.c.l.b16 %v582
    %v677 = vunpack.c.h.b16 %v582
    %v678 = vunpack.c.l.b16 %v583
    %v679 = vunpack.c.h.b16 %v583
    %v680 = vpack.c.b16 %v620, %v616
    %v681 = vpack.c.b16 %v621, %v617
    %v682 = vpack.c.b16 %v622, %v618
    %v683 = vpack.c.b16 %v623, %v619
    %v684 = vpack.c.b16 %v628, %v624
    %v685 = vpack.c.b16 %v629, %v625
    %v686 = vpack.c.b16 %v630, %v626
    %v687 = vpack.c.b16 %v631, %v627
    %v688 = vpack.c.b16 %v636, %v632
    %v689 = vpack.c.b16 %v637, %v633
    %v690 = vpack.c.b16 %v638, %v634
    %v691 = vpack.c.b16 %v639, %v635
    %v692 = vpack.c.b16 %v644, %v640
    %v693 = vpack.c.b16 %v645, %v641
    %v694 = vpack.c.b16 %v646, %v642
    %v695 = vpack.c.b16 %v647, %v643
    %v696 = vpack.c.b16 %v652, %v648
    %v697 = vpack.c.b16 %v653, %v649
    %v698 = vpack.c.b16 %v654, %v650
    %v699 = vpack.c.b16 %v655, %v651
    %v700 = vpack.c.b16 %v660, %v656
    %v701 = vpack.c.b16 %v661, %v657
    %v702 = vpack.c.b16 %v662, %v658
    %v703 = vpack.c.b16 %v663, %v659
    %v704 = vpack.c.b16 %v668, %v664
    %v705 = vpack.c.b16 %v669, %v665
    %v706 = vpack.c.b16 %v670, %v666
    %v707 = vpack.c.b16 %v671, %v667
    %v708 = vpack.c.b16 %v676, %v672
    %v709 = vpack.c.b16 %v677, %v673
    %v710 = vpack.c.b16 %v678, %v674
    %v711 = vpack.c.b16 %v679, %v675
    %744 = vmatprep.subr.bf16.mxu0 %v709
    %745 = vmatpush1.bf16.msra.mxu0 %v708
    %746 = vmatprep.subr.bf16.mxu0 %v705
    %747 = vmatpush1.bf16.msra.mxu0 %v704
    %748 = vmatprep.subr.bf16.mxu0 %v701
    %749 = vmatpush1.bf16.msra.mxu0 %v700
    %750 = vmatprep.subr.bf16.mxu0 %v697
    %751 = vmatpush1.bf16.msra.mxu0 %v696
    %752 = vmatprep.subr.bf16.mxu0 %v693
    %753 = vmatpush1.bf16.msra.mxu0 %v692
    %754 = vmatprep.subr.bf16.mxu0 %v689
    %755 = vmatpush1.bf16.msra.mxu0 %v688
    %756 = vmatprep.subr.bf16.mxu0 %v685
    %757 = vmatpush1.bf16.msra.mxu0 %v684
    %758 = vmatprep.subr.bf16.mxu0 %v681
    %759 = vmatpush1.bf16.msra.mxu0 %v680
    %760 = vmatprep.subr.bf16.mxu0 0
    %761 = vmatpush2.bf16.msra.mxu0 0
    %762 = vmatprep.subr.bf16.mxu0 0
    %763 = vmatpush2.bf16.msra.mxu0 0
    %764 = vmatprep.subr.bf16.mxu0 0
    %765 = vmatpush2.bf16.msra.mxu0 0
    %766 = vmatprep.subr.bf16.mxu0 0
    %767 = vmatpush2.bf16.msra.mxu0 0
    %768 = vmatprep.subr.bf16.mxu0 0
    %769 = vmatpush2.bf16.msra.mxu0 0
    %770 = vmatprep.subr.bf16.mxu0 0
    %771 = vmatpush2.bf16.msra.mxu0 0
    %772 = vmatprep.subr.bf16.mxu0 0
    %773 = vmatpush2.bf16.msra.mxu0 0
    %774 = vmatprep.subr.bf16.mxu0 0
    %775 = vmatpush2.bf16.msra.mxu0 0
    %776 = vmatprep.mubr.bf16.mxu0 0
    %777 = vmatmul.mubr.bf16.gmra.mxu0 %v519
    %v778 = vpop.f32.mrf.mxu0
    %v779 = vadd.f32 0.0, %v778
    %v780 = vpop.f32.mrf.mxu0
    %v781 = vadd.f32 0.0, %v780
    %v782 = vpop.f32.mrf.mxu0
    %v783 = vpop.f32.mrf.mxu0
    %784 = vdwg.mxu0
    %785 = vmatprep.subr.bf16.mxu0 %v711
    %786 = vmatpush1.bf16.msra.mxu0 %v710
    %787 = vmatprep.subr.bf16.mxu0 %v707
    %788 = vmatpush1.bf16.msra.mxu0 %v706
    %789 = vmatprep.subr.bf16.mxu0 %v703
    %790 = vmatpush1.bf16.msra.mxu0 %v702
    %791 = vmatprep.subr.bf16.mxu0 %v699
    %792 = vmatpush1.bf16.msra.mxu0 %v698
    %793 = vmatprep.subr.bf16.mxu0 %v695
    %794 = vmatpush1.bf16.msra.mxu0 %v694
    %795 = vmatprep.subr.bf16.mxu0 %v691
    %796 = vmatpush1.bf16.msra.mxu0 %v690
    %797 = vmatprep.subr.bf16.mxu0 %v687
    %798 = vmatpush1.bf16.msra.mxu0 %v686
    %799 = vmatprep.subr.bf16.mxu0 %v683
    %800 = vmatpush1.bf16.msra.mxu0 %v682
    %801 = vmatprep.subr.bf16.mxu0 0
    %802 = vmatpush2.bf16.msra.mxu0 0
    %803 = vmatprep.subr.bf16.mxu0 0
    %804 = vmatpush2.bf16.msra.mxu0 0
    %805 = vmatprep.subr.bf16.mxu0 0
    %806 = vmatpush2.bf16.msra.mxu0 0
    %807 = vmatprep.subr.bf16.mxu0 0
    %808 = vmatpush2.bf16.msra.mxu0 0
    %809 = vmatprep.subr.bf16.mxu0 0
    %810 = vmatpush2.bf16.msra.mxu0 0
    %811 = vmatprep.subr.bf16.mxu0 0
    %812 = vmatpush2.bf16.msra.mxu0 0
    %813 = vmatprep.subr.bf16.mxu0 0
    %814 = vmatpush2.bf16.msra.mxu0 0
    %815 = vmatprep.subr.bf16.mxu0 0
    %816 = vmatpush2.bf16.msra.mxu0 0
    %817 = vmatprep.mubr.bf16.mxu0 0
    %818 = vmatmul.mubr.bf16.gmra.mxu0 %v519
    %v819 = vpop.f32.mrf.mxu0
    %v820 = vadd.f32 0.0, %v819
    %v821 = vpop.f32.mrf.mxu0
    %v822 = vadd.f32 0.0, %v821
    %v823 = vpop.f32.mrf.mxu0
    %v824 = vpop.f32.mrf.mxu0
    %825 = vdwg.mxu0
    %v858 = vunpack.c.l.b16 %v520
    %v859 = vunpack.c.h.b16 %v520
    %v860 = vunpack.c.l.b16 %v521
    %v861 = vunpack.c.h.b16 %v521
    %v862 = vunpack.c.l.b16 %v522
    %v863 = vunpack.c.h.b16 %v522
    %v864 = vunpack.c.l.b16 %v523
    %v865 = vunpack.c.h.b16 %v523
    %v866 = vunpack.c.l.b16 %v524
    %v867 = vunpack.c.h.b16 %v524
    %v868 = vunpack.c.l.b16 %v525
    %v869 = vunpack.c.h.b16 %v525
    %v870 = vunpack.c.l.b16 %v526
    %v871 = vunpack.c.h.b16 %v526
    %v872 = vunpack.c.l.b16 %v527
    %v873 = vunpack.c.h.b16 %v527
    %v874 = vunpack.c.l.b16 %v528
    %v875 = vunpack.c.h.b16 %v528
    %v876 = vunpack.c.l.b16 %v529
    %v877 = vunpack.c.h.b16 %v529
    %v878 = vunpack.c.l.b16 %v530
    %v879 = vunpack.c.h.b16 %v530
    %v880 = vunpack.c.l.b16 %v531
    %v881 = vunpack.c.h.b16 %v531
    %v882 = vunpack.c.l.b16 %v532
    %v883 = vunpack.c.h.b16 %v532
    %v884 = vunpack.c.l.b16 %v533
    %v885 = vunpack.c.h.b16 %v533
    %v886 = vunpack.c.l.b16 %v534
    %v887 = vunpack.c.h.b16 %v534
    %v888 = vunpack.c.l.b16 %v535
    %v889 = vunpack.c.h.b16 %v535
    %v890 = vunpack.c.l.b16 %v536
    %v891 = vunpack.c.h.b16 %v536
    %v892 = vunpack.c.l.b16 %v537
    %v893 = vunpack.c.h.b16 %v537
    %v894 = vunpack.c.l.b16 %v538
    %v895 = vunpack.c.h.b16 %v538
    %v896 = vunpack.c.l.b16 %v539
    %v897 = vunpack.c.h.b16 %v539
    %v898 = vunpack.c.l.b16 %v540
    %v899 = vunpack.c.h.b16 %v540
    %v900 = vunpack.c.l.b16 %v541
    %v901 = vunpack.c.h.b16 %v541
    %v902 = vunpack.c.l.b16 %v542
    %v903 = vunpack.c.h.b16 %v542
    %v904 = vunpack.c.l.b16 %v543
    %v905 = vunpack.c.h.b16 %v543
    %v906 = vunpack.c.l.b16 %v544
    %v907 = vunpack.c.h.b16 %v544
    %v908 = vunpack.c.l.b16 %v545
    %v909 = vunpack.c.h.b16 %v545
    %v910 = vunpack.c.l.b16 %v546
    %v911 = vunpack.c.h.b16 %v546
    %v912 = vunpack.c.l.b16 %v547
    %v913 = vunpack.c.h.b16 %v547
    %v914 = vunpack.c.l.b16 %v548
    %v915 = vunpack.c.h.b16 %v548
    %v916 = vunpack.c.l.b16 %v549
    %v917 = vunpack.c.h.b16 %v549
    %v918 = vunpack.c.l.b16 %v550
    %v919 = vunpack.c.h.b16 %v550
    %v920 = vunpack.c.l.b16 %v551
    %v921 = vunpack.c.h.b16 %v551
    %v922 = vpack.c.b16 %v862, %v858
    %v923 = vpack.c.b16 %v863, %v859
    %v924 = vpack.c.b16 %v864, %v860
    %v925 = vpack.c.b16 %v865, %v861
    %v926 = vpack.c.b16 %v870, %v866
    %v927 = vpack.c.b16 %v871, %v867
    %v928 = vpack.c.b16 %v872, %v868
    %v929 = vpack.c.b16 %v873, %v869
    %v930 = vpack.c.b16 %v878, %v874
    %v931 = vpack.c.b16 %v879, %v875
    %v932 = vpack.c.b16 %v880, %v876
    %v933 = vpack.c.b16 %v881, %v877
    %v934 = vpack.c.b16 %v886, %v882
    %v935 = vpack.c.b16 %v887, %v883
    %v936 = vpack.c.b16 %v888, %v884
    %v937 = vpack.c.b16 %v889, %v885
    %v938 = vpack.c.b16 %v894, %v890
    %v939 = vpack.c.b16 %v895, %v891
    %v940 = vpack.c.b16 %v896, %v892
    %v941 = vpack.c.b16 %v897, %v893
    %v942 = vpack.c.b16 %v902, %v898
    %v943 = vpack.c.b16 %v903, %v899
    %v944 = vpack.c.b16 %v904, %v900
    %v945 = vpack.c.b16 %v905, %v901
    %v946 = vpack.c.b16 %v910, %v906
    %v947 = vpack.c.b16 %v911, %v907
    %v948 = vpack.c.b16 %v912, %v908
    %v949 = vpack.c.b16 %v913, %v909
    %v950 = vpack.c.b16 %v918, %v914
    %v951 = vpack.c.b16 %v919, %v915
    %v952 = vpack.c.b16 %v920, %v916
    %v953 = vpack.c.b16 %v921, %v917
    %986 = vmatprep.subr.bf16.mxu0 %v951
    %987 = vmatpush1.bf16.msra.mxu0 %v950
    %988 = vmatprep.subr.bf16.mxu0 %v947
    %989 = vmatpush1.bf16.msra.mxu0 %v946
    %990 = vmatprep.subr.bf16.mxu0 %v943
    %991 = vmatpush1.bf16.msra.mxu0 %v942
    %992 = vmatprep.subr.bf16.mxu0 %v939
    %993 = vmatpush1.bf16.msra.mxu0 %v938
    %994 = vmatprep.subr.bf16.mxu0 %v935
    %995 = vmatpush1.bf16.msra.mxu0 %v934
    %996 = vmatprep.subr.bf16.mxu0 %v931
    %997 = vmatpush1.bf16.msra.mxu0 %v930
    %998 = vmatprep.subr.bf16.mxu0 %v927
    %999 = vmatpush1.bf16.msra.mxu0 %v926
    %1000 = vmatprep.subr.bf16.mxu0 %v923
    %1001 = vmatpush1.bf16.msra.mxu0 %v922
    %1002 = vmatprep.subr.bf16.mxu0 0
    %1003 = vmatpush2.bf16.msra.mxu0 0
    %1004 = vmatprep.subr.bf16.mxu0 0
    %1005 = vmatpush2.bf16.msra.mxu0 0
    %1006 = vmatprep.subr.bf16.mxu0 0
    %1007 = vmatpush2.bf16.msra.mxu0 0
    %1008 = vmatprep.subr.bf16.mxu0 0
    %1009 = vmatpush2.bf16.msra.mxu0 0
    %1010 = vmatprep.subr.bf16.mxu0 0
    %1011 = vmatpush2.bf16.msra.mxu0 0
    %1012 = vmatprep.subr.bf16.mxu0 0
    %1013 = vmatpush2.bf16.msra.mxu0 0
    %1014 = vmatprep.subr.bf16.mxu0 0
    %1015 = vmatpush2.bf16.msra.mxu0 0
    %1016 = vmatprep.subr.bf16.mxu0 0
    %1017 = vmatpush2.bf16.msra.mxu0 0
    %1018 = vmatprep.mubr.bf16.mxu0 0
    %1019 = vmatmul.mubr.bf16.gmra.mxu0 %v415
    %v1020 = vpop.f32.mrf.mxu0
    %v1021 = vadd.f32 %v779, %v1020
    %v1022 = vpop.f32.mrf.mxu0
    %v1023 = vadd.f32 %v781, %v1022
    %v1024 = vpop.f32.mrf.mxu0
    %v1025 = vpop.f32.mrf.mxu0
    %1026 = vdwg.mxu0
    %1027 = vmatprep.subr.bf16.mxu0 %v953
    %1028 = vmatpush1.bf16.msra.mxu0 %v952
    %1029 = vmatprep.subr.bf16.mxu0 %v949
    %1030 = vmatpush1.bf16.msra.mxu0 %v948
    %1031 = vmatprep.subr.bf16.mxu0 %v945
    %1032 = vmatpush1.bf16.msra.mxu0 %v944
    %1033 = vmatprep.subr.bf16.mxu0 %v941
    %1034 = vmatpush1.bf16.msra.mxu0 %v940
    %1035 = vmatprep.subr.bf16.mxu0 %v937
    %1036 = vmatpush1.bf16.msra.mxu0 %v936
    %1037 = vmatprep.subr.bf16.mxu0 %v933
    %1038 = vmatpush1.bf16.msra.mxu0 %v932
    %1039 = vmatprep.subr.bf16.mxu0 %v929
    %1040 = vmatpush1.bf16.msra.mxu0 %v928
    %1041 = vmatprep.subr.bf16.mxu0 %v925
    %1042 = vmatpush1.bf16.msra.mxu0 %v924
    %1043 = vmatprep.subr.bf16.mxu0 0
    %1044 = vmatpush2.bf16.msra.mxu0 0
    %1045 = vmatprep.subr.bf16.mxu0 0
    %1046 = vmatpush2.bf16.msra.mxu0 0
    %1047 = vmatprep.subr.bf16.mxu0 0
    %1048 = vmatpush2.bf16.msra.mxu0 0
    %1049 = vmatprep.subr.bf16.mxu0 0
    %1050 = vmatpush2.bf16.msra.mxu0 0
    %1051 = vmatprep.subr.bf16.mxu0 0
    %1052 = vmatpush2.bf16.msra.mxu0 0
    %1053 = vmatprep.subr.bf16.mxu0 0
    %1054 = vmatpush2.bf16.msra.mxu0 0
    %1055 = vmatprep.subr.bf16.mxu0 0
    %1056 = vmatpush2.bf16.msra.mxu0 0
    %1057 = vmatprep.subr.bf16.mxu0 0
    %1058 = vmatpush2.bf16.msra.mxu0 0
    %1059 = vmatprep.mubr.bf16.mxu0 0
    %1060 = vmatmul.mubr.bf16.gmra.mxu0 %v415
    %v1061 = vpop.f32.mrf.mxu0
    %v1062 = vadd.f32 %v820, %v1061
    %v1063 = vpop.f32.mrf.mxu0
    %v1064 = vadd.f32 %v822, %v1063
    %v1065 = vpop.f32.mrf.mxu0
    %v1066 = vpop.f32.mrf.mxu0
    %1067 = vdwg.mxu0
    %v1068 = vld [vmem:[#allocation11] sm:$0xf]
    %v1069 = vunpack.c.l.bf16 %v1068
    %v1071 = vlaneseq
    %v1072 = vshrl.u32 %v1071, 7
    %v1073 = vsub.s32 0, %v1072
    %v1074 = vrot.slane %v1069, %v1073
    %v1075 = vlaneseq
    %v1076 = vshrl.u32 %v1075, 7
    %v1077 = vsub.s32 2, %v1076
    %v1078 = vrot.slane %v1069, %v1077
    %v1079 = vlaneseq
    %v1080 = vshrl.u32 %v1079, 7
    %v1081 = vsub.s32 4, %v1080
    %v1082 = vrot.slane %v1069, %v1081
    %v1083 = vlaneseq
    %v1084 = vshrl.u32 %v1083, 7
    %v1085 = vsub.s32 6, %v1084
    %v1086 = vrot.slane %v1069, %v1085
    %v1091 = vlaneseq
    %v1092 = vshrl.u32 %v1091, 7
    %v1093 = vsub.s32 0, %v1092
    %v1094 = vrot.slane %v1074, %v1093
    %v1095 = vlaneseq
    %v1096 = vshrl.u32 %v1095, 7
    %v1097 = vsub.s32 0, %v1096
    %v1098 = vrot.slane %v1078, %v1097
    %v1099 = vlaneseq
    %v1100 = vshrl.u32 %v1099, 7
    %v1101 = vsub.s32 0, %v1100
    %v1102 = vrot.slane %v1082, %v1101
    %v1103 = vlaneseq
    %v1104 = vshrl.u32 %v1103, 7
    %v1105 = vsub.s32 0, %v1104
    %v1106 = vrot.slane %v1086, %v1105
    %v1107 = vadd.f32 %v1021, %v1094
    %v1108 = vadd.f32 %v1023, %v1098
    %v1109 = vadd.f32 %v1062, %v1102
    %v1110 = vadd.f32 %v1064, %v1106
    %v1111 = vxor.u32 %v1107, 2147483648
    %v1112 = vxor.u32 %v1108, 2147483648
    %v1113 = vxor.u32 %v1109, 2147483648
    %v1114 = vxor.u32 %v1110, 2147483648
    %v1115 = vmul.f32 %v1111, 1.442695
    %v1116 = vpow.pop %v1115
    %v1117 = vmul.f32 %v1112, 1.442695
    %v1118 = vpow.pop %v1117
    %v1119 = vmul.f32 %v1113, 1.442695
    %v1120 = vpow.pop %v1119
    %v1121 = vmul.f32 %v1114, 1.442695
    %v1122 = vpow.pop %v1121
    %v1123 = vadd.f32 %v1116, 1.0
    %v1124 = vadd.f32 %v1118, 1.0
    %v1125 = vadd.f32 %v1120, 1.0
    %v1126 = vadd.f32 %v1122, 1.0
    %v1127 = vrcp.pop %v1123
    %v1128 = vmul.f32 1.0, %v1127
    %v1129 = vrcp.pop %v1124
    %v1130 = vmul.f32 1.0, %v1129
    %v1131 = vrcp.pop %v1125
    %v1132 = vmul.f32 1.0, %v1131
    %v1133 = vrcp.pop %v1126
    %v1134 = vmul.f32 1.0, %v1133
    %v1135 = vmul.f32 %v1107, %v1128
    %v1136 = vmul.f32 %v1108, %v1130
    %v1137 = vmul.f32 %v1109, %v1132
    %v1138 = vmul.f32 %v1110, %v1134
    %v1139 = vpack.c.bf16 %v1135, %v1135
    %v1140 = vpack.c.bf16 %v1136, %v1136
    %v1141 = vpack.c.bf16 %v1137, %v1137
    %v1142 = vpack.c.bf16 %v1138, %v1138
    %v1143 = vld [vmem:[#allocation13] sm:$0xff]
    %v1144 = vld [vmem:[#allocation13 + $0x8] sm:$0xff]
    %v1145 = vld [vmem:[#allocation13 + $0x10] sm:$0xff]
    %v1146 = vld [vmem:[#allocation13 + $0x18] sm:$0xff]
    %v1147 = vld [vmem:[#allocation13 + $0x20] sm:$0xff]
    %v1148 = vld [vmem:[#allocation13 + $0x28] sm:$0xff]
    %v1149 = vld [vmem:[#allocation13 + $0x30] sm:$0xff]
    %v1150 = vld [vmem:[#allocation13 + $0x38] sm:$0xff]
    %v1151 = vld [vmem:[#allocation13 + $0x40] sm:$0xff]
    %v1152 = vld [vmem:[#allocation13 + $0x48] sm:$0xff]
    %v1153 = vld [vmem:[#allocation13 + $0x50] sm:$0xff]
    %v1154 = vld [vmem:[#allocation13 + $0x58] sm:$0xff]
    %v1155 = vld [vmem:[#allocation13 + $0x60] sm:$0xff]
    %v1156 = vld [vmem:[#allocation13 + $0x68] sm:$0xff]
    %v1157 = vld [vmem:[#allocation13 + $0x70] sm:$0xff]
    %v1158 = vld [vmem:[#allocation13 + $0x78] sm:$0xff]
    %v1159 = vld [vmem:[#allocation13 + $0x80] sm:$0xff]
    %v1160 = vld [vmem:[#allocation13 + $0x88] sm:$0xff]
    %v1161 = vld [vmem:[#allocation13 + $0x90] sm:$0xff]
    %v1162 = vld [vmem:[#allocation13 + $0x98] sm:$0xff]
    %v1163 = vld [vmem:[#allocation13 + $0xa0] sm:$0xff]
    %v1164 = vld [vmem:[#allocation13 + $0xa8] sm:$0xff]
    %v1165 = vld [vmem:[#allocation13 + $0xb0] sm:$0xff]
    %v1166 = vld [vmem:[#allocation13 + $0xb8] sm:$0xff]
    %v1167 = vld [vmem:[#allocation13 + $0xc0] sm:$0xff]
    %v1168 = vld [vmem:[#allocation13 + $0xc8] sm:$0xff]
    %v1169 = vld [vmem:[#allocation13 + $0xd0] sm:$0xff]
    %v1170 = vld [vmem:[#allocation13 + $0xd8] sm:$0xff]
    %v1171 = vld [vmem:[#allocation13 + $0xe0] sm:$0xff]
    %v1172 = vld [vmem:[#allocation13 + $0xe8] sm:$0xff]
    %v1173 = vld [vmem:[#allocation13 + $0xf0] sm:$0xff]
    %v1174 = vld [vmem:[#allocation13 + $0xf8] sm:$0xff]
    %v1175 = vld [vmem:[#allocation13 + $0x100] sm:$0xff]
    %v1176 = vld [vmem:[#allocation13 + $0x108] sm:$0xff]
    %v1177 = vld [vmem:[#allocation13 + $0x110] sm:$0xff]
    %v1178 = vld [vmem:[#allocation13 + $0x118] sm:$0xff]
    %v1179 = vld [vmem:[#allocation13 + $0x120] sm:$0xff]
    %v1180 = vld [vmem:[#allocation13 + $0x128] sm:$0xff]
    %v1181 = vld [vmem:[#allocation13 + $0x130] sm:$0xff]
    %v1182 = vld [vmem:[#allocation13 + $0x138] sm:$0xff]
    %v1183 = vld [vmem:[#allocation13 + $0x140] sm:$0xff]
    %v1184 = vld [vmem:[#allocation13 + $0x148] sm:$0xff]
    %v1185 = vld [vmem:[#allocation13 + $0x150] sm:$0xff]
    %v1186 = vld [vmem:[#allocation13 + $0x158] sm:$0xff]
    %v1187 = vld [vmem:[#allocation13 + $0x160] sm:$0xff]
    %v1188 = vld [vmem:[#allocation13 + $0x168] sm:$0xff]
    %v1189 = vld [vmem:[#allocation13 + $0x170] sm:$0xff]
    %v1190 = vld [vmem:[#allocation13 + $0x178] sm:$0xff]
    %v1191 = vld [vmem:[#allocation13 + $0x180] sm:$0xff]
    %v1192 = vld [vmem:[#allocation13 + $0x188] sm:$0xff]
    %v1193 = vld [vmem:[#allocation13 + $0x190] sm:$0xff]
    %v1194 = vld [vmem:[#allocation13 + $0x198] sm:$0xff]
    %v1195 = vld [vmem:[#allocation13 + $0x1a0] sm:$0xff]
    %v1196 = vld [vmem:[#allocation13 + $0x1a8] sm:$0xff]
    %v1197 = vld [vmem:[#allocation13 + $0x1b0] sm:$0xff]
    %v1198 = vld [vmem:[#allocation13 + $0x1b8] sm:$0xff]
    %v1199 = vld [vmem:[#allocation13 + $0x1c0] sm:$0xff]
    %v1200 = vld [vmem:[#allocation13 + $0x1c8] sm:$0xff]
    %v1201 = vld [vmem:[#allocation13 + $0x1d0] sm:$0xff]
    %v1202 = vld [vmem:[#allocation13 + $0x1d8] sm:$0xff]
    %v1203 = vld [vmem:[#allocation13 + $0x1e0] sm:$0xff]
    %v1204 = vld [vmem:[#allocation13 + $0x1e8] sm:$0xff]
    %v1205 = vld [vmem:[#allocation13 + $0x1f0] sm:$0xff]
    %v1206 = vld [vmem:[#allocation13 + $0x1f8] sm:$0xff]
    %v1207 = vld [vmem:[#allocation13 + $0x200] sm:$0xff]
    %v1208 = vld [vmem:[#allocation13 + $0x208] sm:$0xff]
    %v1209 = vld [vmem:[#allocation13 + $0x210] sm:$0xff]
    %v1210 = vld [vmem:[#allocation13 + $0x218] sm:$0xff]
    %v1211 = vld [vmem:[#allocation13 + $0x220] sm:$0xff]
    %v1212 = vld [vmem:[#allocation13 + $0x228] sm:$0xff]
    %v1213 = vld [vmem:[#allocation13 + $0x230] sm:$0xff]
    %v1214 = vld [vmem:[#allocation13 + $0x238] sm:$0xff]
    %v1215 = vld [vmem:[#allocation13 + $0x240] sm:$0xff]
    %v1216 = vld [vmem:[#allocation13 + $0x248] sm:$0xff]
    %v1217 = vld [vmem:[#allocation13 + $0x250] sm:$0xff]
    %v1218 = vld [vmem:[#allocation13 + $0x258] sm:$0xff]
    %v1219 = vld [vmem:[#allocation13 + $0x260] sm:$0xff]
    %v1220 = vld [vmem:[#allocation13 + $0x268] sm:$0xff]
    %v1221 = vld [vmem:[#allocation13 + $0x270] sm:$0xff]
    %v1222 = vld [vmem:[#allocation13 + $0x278] sm:$0xff]
    %v1223 = vld [vmem:[#allocation13 + $0x280] sm:$0xff]
    %v1224 = vld [vmem:[#allocation13 + $0x288] sm:$0xff]
    %v1225 = vld [vmem:[#allocation13 + $0x290] sm:$0xff]
    %v1226 = vld [vmem:[#allocation13 + $0x298] sm:$0xff]
    %v1227 = vld [vmem:[#allocation13 + $0x2a0] sm:$0xff]
    %v1228 = vld [vmem:[#allocation13 + $0x2a8] sm:$0xff]
    %v1229 = vld [vmem:[#allocation13 + $0x2b0] sm:$0xff]
    %v1230 = vld [vmem:[#allocation13 + $0x2b8] sm:$0xff]
    %v1231 = vld [vmem:[#allocation13 + $0x2c0] sm:$0xff]
    %v1232 = vld [vmem:[#allocation13 + $0x2c8] sm:$0xff]
    %v1233 = vld [vmem:[#allocation13 + $0x2d0] sm:$0xff]
    %v1234 = vld [vmem:[#allocation13 + $0x2d8] sm:$0xff]
    %v1235 = vld [vmem:[#allocation13 + $0x2e0] sm:$0xff]
    %v1236 = vld [vmem:[#allocation13 + $0x2e8] sm:$0xff]
    %v1237 = vld [vmem:[#allocation13 + $0x2f0] sm:$0xff]
    %v1238 = vld [vmem:[#allocation13 + $0x2f8] sm:$0xff]
    %v1239 = vld [vmem:[#allocation13 + $0x300] sm:$0xff]
    %v1240 = vld [vmem:[#allocation13 + $0x308] sm:$0xff]
    %v1241 = vld [vmem:[#allocation13 + $0x310] sm:$0xff]
    %v1242 = vld [vmem:[#allocation13 + $0x318] sm:$0xff]
    %v1243 = vld [vmem:[#allocation13 + $0x320] sm:$0xff]
    %v1244 = vld [vmem:[#allocation13 + $0x328] sm:$0xff]
    %v1245 = vld [vmem:[#allocation13 + $0x330] sm:$0xff]
    %v1246 = vld [vmem:[#allocation13 + $0x338] sm:$0xff]
    %v1247 = vld [vmem:[#allocation13 + $0x340] sm:$0xff]
    %v1248 = vld [vmem:[#allocation13 + $0x348] sm:$0xff]
    %v1249 = vld [vmem:[#allocation13 + $0x350] sm:$0xff]
    %v1250 = vld [vmem:[#allocation13 + $0x358] sm:$0xff]
    %v1251 = vld [vmem:[#allocation13 + $0x360] sm:$0xff]
    %v1252 = vld [vmem:[#allocation13 + $0x368] sm:$0xff]
    %v1253 = vld [vmem:[#allocation13 + $0x370] sm:$0xff]
    %v1254 = vld [vmem:[#allocation13 + $0x378] sm:$0xff]
    %v1255 = vld [vmem:[#allocation13 + $0x380] sm:$0xff]
    %v1256 = vld [vmem:[#allocation13 + $0x388] sm:$0xff]
    %v1257 = vld [vmem:[#allocation13 + $0x390] sm:$0xff]
    %v1258 = vld [vmem:[#allocation13 + $0x398] sm:$0xff]
    %v1259 = vld [vmem:[#allocation13 + $0x3a0] sm:$0xff]
    %v1260 = vld [vmem:[#allocation13 + $0x3a8] sm:$0xff]
    %v1261 = vld [vmem:[#allocation13 + $0x3b0] sm:$0xff]
    %v1262 = vld [vmem:[#allocation13 + $0x3b8] sm:$0xff]
    %v1263 = vld [vmem:[#allocation13 + $0x3c0] sm:$0xff]
    %v1264 = vld [vmem:[#allocation13 + $0x3c8] sm:$0xff]
    %v1265 = vld [vmem:[#allocation13 + $0x3d0] sm:$0xff]
    %v1266 = vld [vmem:[#allocation13 + $0x3d8] sm:$0xff]
    %v1267 = vld [vmem:[#allocation13 + $0x3e0] sm:$0xff]
    %v1268 = vld [vmem:[#allocation13 + $0x3e8] sm:$0xff]
    %v1269 = vld [vmem:[#allocation13 + $0x3f0] sm:$0xff]
    %v1270 = vld [vmem:[#allocation13 + $0x3f8] sm:$0xff]
    %v1271 = vld [vmem:[#allocation14] sm:$0xf]
    %v1272 = vunpack.c.l.bf16 %v1271
    %v1274 = vlaneseq
    %v1275 = vshrl.u32 %v1274, 7
    %v1276 = vsub.s32 0, %v1275
    %v1277 = vrot.slane %v1272, %v1276
    %v1278 = vlaneseq
    %v1279 = vshrl.u32 %v1278, 7
    %v1280 = vsub.s32 2, %v1279
    %v1281 = vrot.slane %v1272, %v1280
    %v1282 = vlaneseq
    %v1283 = vshrl.u32 %v1282, 7
    %v1284 = vsub.s32 4, %v1283
    %v1285 = vrot.slane %v1272, %v1284
    %v1286 = vlaneseq
    %v1287 = vshrl.u32 %v1286, 7
    %v1288 = vsub.s32 6, %v1287
    %v1289 = vrot.slane %v1272, %v1288
    %v1294 = vlaneseq
    %v1295 = vshrl.u32 %v1294, 7
    %v1296 = vsub.s32 0, %v1295
    %v1297 = vrot.slane %v1277, %v1296
    %v1298 = vlaneseq
    %v1299 = vshrl.u32 %v1298, 7
    %v1300 = vsub.s32 0, %v1299
    %v1301 = vrot.slane %v1281, %v1300
    %v1302 = vlaneseq
    %v1303 = vshrl.u32 %v1302, 7
    %v1304 = vsub.s32 0, %v1303
    %v1305 = vrot.slane %v1285, %v1304
    %v1306 = vlaneseq
    %v1307 = vshrl.u32 %v1306, 7
    %v1308 = vsub.s32 0, %v1307
    %v1309 = vrot.slane %v1289, %v1308
    %v1438 = vunpack.c.l.b16 %v1143
    %v1439 = vunpack.c.h.b16 %v1143
    %v1440 = vunpack.c.l.b16 %v1144
    %v1441 = vunpack.c.h.b16 %v1144
    %v1442 = vunpack.c.l.b16 %v1145
    %v1443 = vunpack.c.h.b16 %v1145
    %v1444 = vunpack.c.l.b16 %v1146
    %v1445 = vunpack.c.h.b16 %v1146
    %v1446 = vunpack.c.l.b16 %v1147
    %v1447 = vunpack.c.h.b16 %v1147
    %v1448 = vunpack.c.l.b16 %v1148
    %v1449 = vunpack.c.h.b16 %v1148
    %v1450 = vunpack.c.l.b16 %v1149
    %v1451 = vunpack.c.h.b16 %v1149
    %v1452 = vunpack.c.l.b16 %v1150
    %v1453 = vunpack.c.h.b16 %v1150
    %v1454 = vunpack.c.l.b16 %v1151
    %v1455 = vunpack.c.h.b16 %v1151
    %v1456 = vunpack.c.l.b16 %v1152
    %v1457 = vunpack.c.h.b16 %v1152
    %v1458 = vunpack.c.l.b16 %v1153
    %v1459 = vunpack.c.h.b16 %v1153
    %v1460 = vunpack.c.l.b16 %v1154
    %v1461 = vunpack.c.h.b16 %v1154
    %v1462 = vunpack.c.l.b16 %v1155
    %v1463 = vunpack.c.h.b16 %v1155
    %v1464 = vunpack.c.l.b16 %v1156
    %v1465 = vunpack.c.h.b16 %v1156
    %v1466 = vunpack.c.l.b16 %v1157
    %v1467 = vunpack.c.h.b16 %v1157
    %v1468 = vunpack.c.l.b16 %v1158
    %v1469 = vunpack.c.h.b16 %v1158
    %v1470 = vunpack.c.l.b16 %v1159
    %v1471 = vunpack.c.h.b16 %v1159
    %v1472 = vunpack.c.l.b16 %v1160
    %v1473 = vunpack.c.h.b16 %v1160
    %v1474 = vunpack.c.l.b16 %v1161
    %v1475 = vunpack.c.h.b16 %v1161
    %v1476 = vunpack.c.l.b16 %v1162
    %v1477 = vunpack.c.h.b16 %v1162
    %v1478 = vunpack.c.l.b16 %v1163
    %v1479 = vunpack.c.h.b16 %v1163
    %v1480 = vunpack.c.l.b16 %v1164
    %v1481 = vunpack.c.h.b16 %v1164
    %v1482 = vunpack.c.l.b16 %v1165
    %v1483 = vunpack.c.h.b16 %v1165
    %v1484 = vunpack.c.l.b16 %v1166
    %v1485 = vunpack.c.h.b16 %v1166
    %v1486 = vunpack.c.l.b16 %v1167
    %v1487 = vunpack.c.h.b16 %v1167
    %v1488 = vunpack.c.l.b16 %v1168
    %v1489 = vunpack.c.h.b16 %v1168
    %v1490 = vunpack.c.l.b16 %v1169
    %v1491 = vunpack.c.h.b16 %v1169
    %v1492 = vunpack.c.l.b16 %v1170
    %v1493 = vunpack.c.h.b16 %v1170
    %v1494 = vunpack.c.l.b16 %v1171
    %v1495 = vunpack.c.h.b16 %v1171
    %v1496 = vunpack.c.l.b16 %v1172
    %v1497 = vunpack.c.h.b16 %v1172
    %v1498 = vunpack.c.l.b16 %v1173
    %v1499 = vunpack.c.h.b16 %v1173
    %v1500 = vunpack.c.l.b16 %v1174
    %v1501 = vunpack.c.h.b16 %v1174
    %v1502 = vunpack.c.l.b16 %v1175
    %v1503 = vunpack.c.h.b16 %v1175
    %v1504 = vunpack.c.l.b16 %v1176
    %v1505 = vunpack.c.h.b16 %v1176
    %v1506 = vunpack.c.l.b16 %v1177
    %v1507 = vunpack.c.h.b16 %v1177
    %v1508 = vunpack.c.l.b16 %v1178
    %v1509 = vunpack.c.h.b16 %v1178
    %v1510 = vunpack.c.l.b16 %v1179
    %v1511 = vunpack.c.h.b16 %v1179
    %v1512 = vunpack.c.l.b16 %v1180
    %v1513 = vunpack.c.h.b16 %v1180
    %v1514 = vunpack.c.l.b16 %v1181
    %v1515 = vunpack.c.h.b16 %v1181
    %v1516 = vunpack.c.l.b16 %v1182
    %v1517 = vunpack.c.h.b16 %v1182
    %v1518 = vunpack.c.l.b16 %v1183
    %v1519 = vunpack.c.h.b16 %v1183
    %v1520 = vunpack.c.l.b16 %v1184
    %v1521 = vunpack.c.h.b16 %v1184
    %v1522 = vunpack.c.l.b16 %v1185
    %v1523 = vunpack.c.h.b16 %v1185
    %v1524 = vunpack.c.l.b16 %v1186
    %v1525 = vunpack.c.h.b16 %v1186
    %v1526 = vunpack.c.l.b16 %v1187
    %v1527 = vunpack.c.h.b16 %v1187
    %v1528 = vunpack.c.l.b16 %v1188
    %v1529 = vunpack.c.h.b16 %v1188
    %v1530 = vunpack.c.l.b16 %v1189
    %v1531 = vunpack.c.h.b16 %v1189
    %v1532 = vunpack.c.l.b16 %v1190
    %v1533 = vunpack.c.h.b16 %v1190
    %v1534 = vunpack.c.l.b16 %v1191
    %v1535 = vunpack.c.h.b16 %v1191
    %v1536 = vunpack.c.l.b16 %v1192
    %v1537 = vunpack.c.h.b16 %v1192
    %v1538 = vunpack.c.l.b16 %v1193
    %v1539 = vunpack.c.h.b16 %v1193
    %v1540 = vunpack.c.l.b16 %v1194
    %v1541 = vunpack.c.h.b16 %v1194
    %v1542 = vunpack.c.l.b16 %v1195
    %v1543 = vunpack.c.h.b16 %v1195
    %v1544 = vunpack.c.l.b16 %v1196
    %v1545 = vunpack.c.h.b16 %v1196
    %v1546 = vunpack.c.l.b16 %v1197
    %v1547 = vunpack.c.h.b16 %v1197
    %v1548 = vunpack.c.l.b16 %v1198
    %v1549 = vunpack.c.h.b16 %v1198
    %v1550 = vunpack.c.l.b16 %v1199
    %v1551 = vunpack.c.h.b16 %v1199
    %v1552 = vunpack.c.l.b16 %v1200
    %v1553 = vunpack.c.h.b16 %v1200
    %v1554 = vunpack.c.l.b16 %v1201
    %v1555 = vunpack.c.h.b16 %v1201
    %v1556 = vunpack.c.l.b16 %v1202
    %v1557 = vunpack.c.h.b16 %v1202
    %v1558 = vunpack.c.l.b16 %v1203
    %v1559 = vunpack.c.h.b16 %v1203
    %v1560 = vunpack.c.l.b16 %v1204
    %v1561 = vunpack.c.h.b16 %v1204
    %v1562 = vunpack.c.l.b16 %v1205
    %v1563 = vunpack.c.h.b16 %v1205
    %v1564 = vunpack.c.l.b16 %v1206
    %v1565 = vunpack.c.h.b16 %v1206
    %v1566 = vunpack.c.l.b16 %v1207
    %v1567 = vunpack.c.h.b16 %v1207
    %v1568 = vunpack.c.l.b16 %v1208
    %v1569 = vunpack.c.h.b16 %v1208
    %v1570 = vunpack.c.l.b16 %v1209
    %v1571 = vunpack.c.h.b16 %v1209
    %v1572 = vunpack.c.l.b16 %v1210
    %v1573 = vunpack.c.h.b16 %v1210
    %v1574 = vunpack.c.l.b16 %v1211
    %v1575 = vunpack.c.h.b16 %v1211
    %v1576 = vunpack.c.l.b16 %v1212
    %v1577 = vunpack.c.h.b16 %v1212
    %v1578 = vunpack.c.l.b16 %v1213
    %v1579 = vunpack.c.h.b16 %v1213
    %v1580 = vunpack.c.l.b16 %v1214
    %v1581 = vunpack.c.h.b16 %v1214
    %v1582 = vunpack.c.l.b16 %v1215
    %v1583 = vunpack.c.h.b16 %v1215
    %v1584 = vunpack.c.l.b16 %v1216
    %v1585 = vunpack.c.h.b16 %v1216
    %v1586 = vunpack.c.l.b16 %v1217
    %v1587 = vunpack.c.h.b16 %v1217
    %v1588 = vunpack.c.l.b16 %v1218
    %v1589 = vunpack.c.h.b16 %v1218
    %v1590 = vunpack.c.l.b16 %v1219
    %v1591 = vunpack.c.h.b16 %v1219
    %v1592 = vunpack.c.l.b16 %v1220
    %v1593 = vunpack.c.h.b16 %v1220
    %v1594 = vunpack.c.l.b16 %v1221
    %v1595 = vunpack.c.h.b16 %v1221
    %v1596 = vunpack.c.l.b16 %v1222
    %v1597 = vunpack.c.h.b16 %v1222
    %v1598 = vunpack.c.l.b16 %v1223
    %v1599 = vunpack.c.h.b16 %v1223
    %v1600 = vunpack.c.l.b16 %v1224
    %v1601 = vunpack.c.h.b16 %v1224
    %v1602 = vunpack.c.l.b16 %v1225
    %v1603 = vunpack.c.h.b16 %v1225
    %v1604 = vunpack.c.l.b16 %v1226
    %v1605 = vunpack.c.h.b16 %v1226
    %v1606 = vunpack.c.l.b16 %v1227
    %v1607 = vunpack.c.h.b16 %v1227
    %v1608 = vunpack.c.l.b16 %v1228
    %v1609 = vunpack.c.h.b16 %v1228
    %v1610 = vunpack.c.l.b16 %v1229
    %v1611 = vunpack.c.h.b16 %v1229
    %v1612 = vunpack.c.l.b16 %v1230
    %v1613 = vunpack.c.h.b16 %v1230
    %v1614 = vunpack.c.l.b16 %v1231
    %v1615 = vunpack.c.h.b16 %v1231
    %v1616 = vunpack.c.l.b16 %v1232
    %v1617 = vunpack.c.h.b16 %v1232
    %v1618 = vunpack.c.l.b16 %v1233
    %v1619 = vunpack.c.h.b16 %v1233
    %v1620 = vunpack.c.l.b16 %v1234
    %v1621 = vunpack.c.h.b16 %v1234
    %v1622 = vunpack.c.l.b16 %v1235
    %v1623 = vunpack.c.h.b16 %v1235
    %v1624 = vunpack.c.l.b16 %v1236
    %v1625 = vunpack.c.h.b16 %v1236
    %v1626 = vunpack.c.l.b16 %v1237
    %v1627 = vunpack.c.h.b16 %v1237
    %v1628 = vunpack.c.l.b16 %v1238
    %v1629 = vunpack.c.h.b16 %v1238
    %v1630 = vunpack.c.l.b16 %v1239
    %v1631 = vunpack.c.h.b16 %v1239
    %v1632 = vunpack.c.l.b16 %v1240
    %v1633 = vunpack.c.h.b16 %v1240
    %v1634 = vunpack.c.l.b16 %v1241
    %v1635 = vunpack.c.h.b16 %v1241
    %v1636 = vunpack.c.l.b16 %v1242
    %v1637 = vunpack.c.h.b16 %v1242
    %v1638 = vunpack.c.l.b16 %v1243
    %v1639 = vunpack.c.h.b16 %v1243
    %v1640 = vunpack.c.l.b16 %v1244
    %v1641 = vunpack.c.h.b16 %v1244
    %v1642 = vunpack.c.l.b16 %v1245
    %v1643 = vunpack.c.h.b16 %v1245
    %v1644 = vunpack.c.l.b16 %v1246
    %v1645 = vunpack.c.h.b16 %v1246
    %v1646 = vunpack.c.l.b16 %v1247
    %v1647 = vunpack.c.h.b16 %v1247
    %v1648 = vunpack.c.l.b16 %v1248
    %v1649 = vunpack.c.h.b16 %v1248
    %v1650 = vunpack.c.l.b16 %v1249
    %v1651 = vunpack.c.h.b16 %v1249
    %v1652 = vunpack.c.l.b16 %v1250
    %v1653 = vunpack.c.h.b16 %v1250
    %v1654 = vunpack.c.l.b16 %v1251
    %v1655 = vunpack.c.h.b16 %v1251
    %v1656 = vunpack.c.l.b16 %v1252
    %v1657 = vunpack.c.h.b16 %v1252
    %v1658 = vunpack.c.l.b16 %v1253
    %v1659 = vunpack.c.h.b16 %v1253
    %v1660 = vunpack.c.l.b16 %v1254
    %v1661 = vunpack.c.h.b16 %v1254
    %v1662 = vunpack.c.l.b16 %v1255
    %v1663 = vunpack.c.h.b16 %v1255
    %v1664 = vunpack.c.l.b16 %v1256
    %v1665 = vunpack.c.h.b16 %v1256
    %v1666 = vunpack.c.l.b16 %v1257
    %v1667 = vunpack.c.h.b16 %v1257
    %v1668 = vunpack.c.l.b16 %v1258
    %v1669 = vunpack.c.h.b16 %v1258
    %v1670 = vunpack.c.l.b16 %v1259
    %v1671 = vunpack.c.h.b16 %v1259
    %v1672 = vunpack.c.l.b16 %v1260
    %v1673 = vunpack.c.h.b16 %v1260
    %v1674 = vunpack.c.l.b16 %v1261
    %v1675 = vunpack.c.h.b16 %v1261
    %v1676 = vunpack.c.l.b16 %v1262
    %v1677 = vunpack.c.h.b16 %v1262
    %v1678 = vunpack.c.l.b16 %v1263
    %v1679 = vunpack.c.h.b16 %v1263
    %v1680 = vunpack.c.l.b16 %v1264
    %v1681 = vunpack.c.h.b16 %v1264
    %v1682 = vunpack.c.l.b16 %v1265
    %v1683 = vunpack.c.h.b16 %v1265
    %v1684 = vunpack.c.l.b16 %v1266
    %v1685 = vunpack.c.h.b16 %v1266
    %v1686 = vunpack.c.l.b16 %v1267
    %v1687 = vunpack.c.h.b16 %v1267
    %v1688 = vunpack.c.l.b16 %v1268
    %v1689 = vunpack.c.h.b16 %v1268
    %v1690 = vunpack.c.l.b16 %v1269
    %v1691 = vunpack.c.h.b16 %v1269
    %v1692 = vunpack.c.l.b16 %v1270
    %v1693 = vunpack.c.h.b16 %v1270
    %v1694 = vpack.c.b16 %v1442, %v1438
    %v1695 = vpack.c.b16 %v1443, %v1439
    %v1696 = vpack.c.b16 %v1444, %v1440
    %v1697 = vpack.c.b16 %v1445, %v1441
    %v1698 = vpack.c.b16 %v1450, %v1446
    %v1699 = vpack.c.b16 %v1451, %v1447
    %v1700 = vpack.c.b16 %v1452, %v1448
    %v1701 = vpack.c.b16 %v1453, %v1449
    %v1702 = vpack.c.b16 %v1458, %v1454
    %v1703 = vpack.c.b16 %v1459, %v1455
    %v1704 = vpack.c.b16 %v1460, %v1456
    %v1705 = vpack.c.b16 %v1461, %v1457
    %v1706 = vpack.c.b16 %v1466, %v1462
    %v1707 = vpack.c.b16 %v1467, %v1463
    %v1708 = vpack.c.b16 %v1468, %v1464
    %v1709 = vpack.c.b16 %v1469, %v1465
    %v1710 = vpack.c.b16 %v1474, %v1470
    %v1711 = vpack.c.b16 %v1475, %v1471
    %v1712 = vpack.c.b16 %v1476, %v1472
    %v1713 = vpack.c.b16 %v1477, %v1473
    %v1714 = vpack.c.b16 %v1482, %v1478
    %v1715 = vpack.c.b16 %v1483, %v1479
    %v1716 = vpack.c.b16 %v1484, %v1480
    %v1717 = vpack.c.b16 %v1485, %v1481
    %v1718 = vpack.c.b16 %v1490, %v1486
    %v1719 = vpack.c.b16 %v1491, %v1487
    %v1720 = vpack.c.b16 %v1492, %v1488
    %v1721 = vpack.c.b16 %v1493, %v1489
    %v1722 = vpack.c.b16 %v1498, %v1494
    %v1723 = vpack.c.b16 %v1499, %v1495
    %v1724 = vpack.c.b16 %v1500, %v1496
    %v1725 = vpack.c.b16 %v1501, %v1497
    %v1726 = vpack.c.b16 %v1506, %v1502
    %v1727 = vpack.c.b16 %v1507, %v1503
    %v1728 = vpack.c.b16 %v1508, %v1504
    %v1729 = vpack.c.b16 %v1509, %v1505
    %v1730 = vpack.c.b16 %v1514, %v1510
    %v1731 = vpack.c.b16 %v1515, %v1511
    %v1732 = vpack.c.b16 %v1516, %v1512
    %v1733 = vpack.c.b16 %v1517, %v1513
    %v1734 = vpack.c.b16 %v1522, %v1518
    %v1735 = vpack.c.b16 %v1523, %v1519
    %v1736 = vpack.c.b16 %v1524, %v1520
    %v1737 = vpack.c.b16 %v1525, %v1521
    %v1738 = vpack.c.b16 %v1530, %v1526
    %v1739 = vpack.c.b16 %v1531, %v1527
    %v1740 = vpack.c.b16 %v1532, %v1528
    %v1741 = vpack.c.b16 %v1533, %v1529
    %v1742 = vpack.c.b16 %v1538, %v1534
    %v1743 = vpack.c.b16 %v1539, %v1535
    %v1744 = vpack.c.b16 %v1540, %v1536
    %v1745 = vpack.c.b16 %v1541, %v1537
    %v1746 = vpack.c.b16 %v1546, %v1542
    %v1747 = vpack.c.b16 %v1547, %v1543
    %v1748 = vpack.c.b16 %v1548, %v1544
    %v1749 = vpack.c.b16 %v1549, %v1545
    %v1750 = vpack.c.b16 %v1554, %v1550
    %v1751 = vpack.c.b16 %v1555, %v1551
    %v1752 = vpack.c.b16 %v1556, %v1552
    %v1753 = vpack.c.b16 %v1557, %v1553
    %v1754 = vpack.c.b16 %v1562, %v1558
    %v1755 = vpack.c.b16 %v1563, %v1559
    %v1756 = vpack.c.b16 %v1564, %v1560
    %v1757 = vpack.c.b16 %v1565, %v1561
    %v1758 = vpack.c.b16 %v1570, %v1566
    %v1759 = vpack.c.b16 %v1571, %v1567
    %v1760 = vpack.c.b16 %v1572, %v1568
    %v1761 = vpack.c.b16 %v1573, %v1569
    %v1762 = vpack.c.b16 %v1578, %v1574
    %v1763 = vpack.c.b16 %v1579, %v1575
    %v1764 = vpack.c.b16 %v1580, %v1576
    %v1765 = vpack.c.b16 %v1581, %v1577
    %v1766 = vpack.c.b16 %v1586, %v1582
    %v1767 = vpack.c.b16 %v1587, %v1583
    %v1768 = vpack.c.b16 %v1588, %v1584
    %v1769 = vpack.c.b16 %v1589, %v1585
    %v1770 = vpack.c.b16 %v1594, %v1590
    %v1771 = vpack.c.b16 %v1595, %v1591
    %v1772 = vpack.c.b16 %v1596, %v1592
    %v1773 = vpack.c.b16 %v1597, %v1593
    %v1774 = vpack.c.b16 %v1602, %v1598
    %v1775 = vpack.c.b16 %v1603, %v1599
    %v1776 = vpack.c.b16 %v1604, %v1600
    %v1777 = vpack.c.b16 %v1605, %v1601
    %v1778 = vpack.c.b16 %v1610, %v1606
    %v1779 = vpack.c.b16 %v1611, %v1607
    %v1780 = vpack.c.b16 %v1612, %v1608
    %v1781 = vpack.c.b16 %v1613, %v1609
    %v1782 = vpack.c.b16 %v1618, %v1614
    %v1783 = vpack.c.b16 %v1619, %v1615
    %v1784 = vpack.c.b16 %v1620, %v1616
    %v1785 = vpack.c.b16 %v1621, %v1617
    %v1786 = vpack.c.b16 %v1626, %v1622
    %v1787 = vpack.c.b16 %v1627, %v1623
    %v1788 = vpack.c.b16 %v1628, %v1624
    %v1789 = vpack.c.b16 %v1629, %v1625
    %v1790 = vpack.c.b16 %v1634, %v1630
    %v1791 = vpack.c.b16 %v1635, %v1631
    %v1792 = vpack.c.b16 %v1636, %v1632
    %v1793 = vpack.c.b16 %v1637, %v1633
    %v1794 = vpack.c.b16 %v1642, %v1638
    %v1795 = vpack.c.b16 %v1643, %v1639
    %v1796 = vpack.c.b16 %v1644, %v1640
    %v1797 = vpack.c.b16 %v1645, %v1641
    %v1798 = vpack.c.b16 %v1650, %v1646
    %v1799 = vpack.c.b16 %v1651, %v1647
    %v1800 = vpack.c.b16 %v1652, %v1648
    %v1801 = vpack.c.b16 %v1653, %v1649
    %v1802 = vpack.c.b16 %v1658, %v1654
    %v1803 = vpack.c.b16 %v1659, %v1655
    %v1804 = vpack.c.b16 %v1660, %v1656
    %v1805 = vpack.c.b16 %v1661, %v1657
    %v1806 = vpack.c.b16 %v1666, %v1662
    %v1807 = vpack.c.b16 %v1667, %v1663
    %v1808 = vpack.c.b16 %v1668, %v1664
    %v1809 = vpack.c.b16 %v1669, %v1665
    %v1810 = vpack.c.b16 %v1674, %v1670
    %v1811 = vpack.c.b16 %v1675, %v1671
    %v1812 = vpack.c.b16 %v1676, %v1672
    %v1813 = vpack.c.b16 %v1677, %v1673
    %v1814 = vpack.c.b16 %v1682, %v1678
    %v1815 = vpack.c.b16 %v1683, %v1679
    %v1816 = vpack.c.b16 %v1684, %v1680
    %v1817 = vpack.c.b16 %v1685, %v1681
    %v1818 = vpack.c.b16 %v1690, %v1686
    %v1819 = vpack.c.b16 %v1691, %v1687
    %v1820 = vpack.c.b16 %v1692, %v1688
    %v1821 = vpack.c.b16 %v1693, %v1689
    %1950 = vmatprep.subr.bf16.mxu0 %v1723
    %1951 = vmatpush1.bf16.msra.mxu0 %v1722
    %1952 = vmatprep.subr.bf16.mxu0 %v1719
    %1953 = vmatpush1.bf16.msra.mxu0 %v1718
    %1954 = vmatprep.subr.bf16.mxu0 %v1715
    %1955 = vmatpush1.bf16.msra.mxu0 %v1714
    %1956 = vmatprep.subr.bf16.mxu0 %v1711
    %1957 = vmatpush1.bf16.msra.mxu0 %v1710
    %1958 = vmatprep.subr.bf16.mxu0 %v1707
    %1959 = vmatpush1.bf16.msra.mxu0 %v1706
    %1960 = vmatprep.subr.bf16.mxu0 %v1703
    %1961 = vmatpush1.bf16.msra.mxu0 %v1702
    %1962 = vmatprep.subr.bf16.mxu0 %v1699
    %1963 = vmatpush1.bf16.msra.mxu0 %v1698
    %1964 = vmatprep.subr.bf16.mxu0 %v1695
    %1965 = vmatpush1.bf16.msra.mxu0 %v1694
    %1966 = vmatprep.subr.bf16.mxu0 %v1755
    %1967 = vmatpush2.bf16.msra.mxu0 %v1754
    %1968 = vmatprep.subr.bf16.mxu0 %v1751
    %1969 = vmatpush2.bf16.msra.mxu0 %v1750
    %1970 = vmatprep.subr.bf16.mxu0 %v1747
    %1971 = vmatpush2.bf16.msra.mxu0 %v1746
    %1972 = vmatprep.subr.bf16.mxu0 %v1743
    %1973 = vmatpush2.bf16.msra.mxu0 %v1742
    %1974 = vmatprep.subr.bf16.mxu0 %v1739
    %1975 = vmatpush2.bf16.msra.mxu0 %v1738
    %1976 = vmatprep.subr.bf16.mxu0 %v1735
    %1977 = vmatpush2.bf16.msra.mxu0 %v1734
    %1978 = vmatprep.subr.bf16.mxu0 %v1731
    %1979 = vmatpush2.bf16.msra.mxu0 %v1730
    %1980 = vmatprep.subr.bf16.mxu0 %v1727
    %1981 = vmatpush2.bf16.msra.mxu0 %v1726
    %1982 = vmatprep.mubr.bf16.mxu0 %v1140
    %1983 = vmatmul.mubr.bf16.gmra.mxu0 %v1139
    %v1984 = vpop.f32.mrf.mxu0
    %v1985 = vadd.f32 %v1297, %v1984
    %v1986 = vpop.f32.mrf.mxu0
    %v1987 = vadd.f32 %v1301, %v1986
    %v1988 = vpop.f32.mrf.mxu0
    %v1989 = vpop.f32.mrf.mxu0
    %1990 = vdwg.mxu0
    %1991 = vmatprep.subr.bf16.mxu0 %v1787
    %1992 = vmatpush1.bf16.msra.mxu0 %v1786
    %1993 = vmatprep.subr.bf16.mxu0 %v1783
    %1994 = vmatpush1.bf16.msra.mxu0 %v1782
    %1995 = vmatprep.subr.bf16.mxu0 %v1779
    %1996 = vmatpush1.bf16.msra.mxu0 %v1778
    %1997 = vmatprep.subr.bf16.mxu0 %v1775
    %1998 = vmatpush1.bf16.msra.mxu0 %v1774
    %1999 = vmatprep.subr.bf16.mxu0 %v1771
    %2000 = vmatpush1.bf16.msra.mxu0 %v1770
    %2001 = vmatprep.subr.bf16.mxu0 %v1767
    %2002 = vmatpush1.bf16.msra.mxu0 %v1766
    %2003 = vmatprep.subr.bf16.mxu0 %v1763
    %2004 = vmatpush1.bf16.msra.mxu0 %v1762
    %2005 = vmatprep.subr.bf16.mxu0 %v1759
    %2006 = vmatpush1.bf16.msra.mxu0 %v1758
    %2007 = vmatprep.subr.bf16.mxu0 %v1819
    %2008 = vmatpush2.bf16.msra.mxu0 %v1818
    %2009 = vmatprep.subr.bf16.mxu0 %v1815
    %2010 = vmatpush2.bf16.msra.mxu0 %v1814
    %2011 = vmatprep.subr.bf16.mxu0 %v1811
    %2012 = vmatpush2.bf16.msra.mxu0 %v1810
    %2013 = vmatprep.subr.bf16.mxu0 %v1807
    %2014 = vmatpush2.bf16.msra.mxu0 %v1806
    %2015 = vmatprep.subr.bf16.mxu0 %v1803
    %2016 = vmatpush2.bf16.msra.mxu0 %v1802
    %2017 = vmatprep.subr.bf16.mxu0 %v1799
    %2018 = vmatpush2.bf16.msra.mxu0 %v1798
    %2019 = vmatprep.subr.bf16.mxu0 %v1795
    %2020 = vmatpush2.bf16.msra.mxu0 %v1794
    %2021 = vmatprep.subr.bf16.mxu0 %v1791
    %2022 = vmatpush2.bf16.msra.mxu0 %v1790
    %2023 = vmatprep.mubr.bf16.mxu0 %v1142
    %2024 = vmatmul.mubr.bf16.gmra.mxu0 %v1141
    %v2025 = vpop.f32.mrf.mxu0
    %v2026 = vadd.f32 %v1985, %v2025
    %v2027 = vpop.f32.mrf.mxu0
    %v2028 = vadd.f32 %v1987, %v2027
    %v2029 = vpop.f32.mrf.mxu0
    %v2030 = vpop.f32.mrf.mxu0
    %2031 = vdwg.mxu0
    %2032 = vmatprep.subr.bf16.mxu0 %v1725
    %2033 = vmatpush1.bf16.msra.mxu0 %v1724
    %2034 = vmatprep.subr.bf16.mxu0 %v1721
    %2035 = vmatpush1.bf16.msra.mxu0 %v1720
    %2036 = vmatprep.subr.bf16.mxu0 %v1717
    %2037 = vmatpush1.bf16.msra.mxu0 %v1716
    %2038 = vmatprep.subr.bf16.mxu0 %v1713
    %2039 = vmatpush1.bf16.msra.mxu0 %v1712
    %2040 = vmatprep.subr.bf16.mxu0 %v1709
    %2041 = vmatpush1.bf16.msra.mxu0 %v1708
    %2042 = vmatprep.subr.bf16.mxu0 %v1705
    %2043 = vmatpush1.bf16.msra.mxu0 %v1704
    %2044 = vmatprep.subr.bf16.mxu0 %v1701
    %2045 = vmatpush1.bf16.msra.mxu0 %v1700
    %2046 = vmatprep.subr.bf16.mxu0 %v1697
    %2047 = vmatpush1.bf16.msra.mxu0 %v1696
    %2048 = vmatprep.subr.bf16.mxu0 %v1757
    %2049 = vmatpush2.bf16.msra.mxu0 %v1756
    %2050 = vmatprep.subr.bf16.mxu0 %v1753
    %2051 = vmatpush2.bf16.msra.mxu0 %v1752
    %2052 = vmatprep.subr.bf16.mxu0 %v1749
    %2053 = vmatpush2.bf16.msra.mxu0 %v1748
    %2054 = vmatprep.subr.bf16.mxu0 %v1745
    %2055 = vmatpush2.bf16.msra.mxu0 %v1744
    %2056 = vmatprep.subr.bf16.mxu0 %v1741
    %2057 = vmatpush2.bf16.msra.mxu0 %v1740
    %2058 = vmatprep.subr.bf16.mxu0 %v1737
    %2059 = vmatpush2.bf16.msra.mxu0 %v1736
    %2060 = vmatprep.subr.bf16.mxu0 %v1733
    %2061 = vmatpush2.bf16.msra.mxu0 %v1732
    %2062 = vmatprep.subr.bf16.mxu0 %v1729
    %2063 = vmatpush2.bf16.msra.mxu0 %v1728
    %2064 = vmatprep.mubr.bf16.mxu0 %v1140
    %2065 = vmatmul.mubr.bf16.gmra.mxu0 %v1139
    %v2066 = vpop.f32.mrf.mxu0
    %v2067 = vadd.f32 %v1305, %v2066
    %v2068 = vpop.f32.mrf.mxu0
    %v2069 = vadd.f32 %v1309, %v2068
    %v2070 = vpop.f32.mrf.mxu0
    %v2071 = vpop.f32.mrf.mxu0
    %2072 = vdwg.mxu0
    %2073 = vmatprep.subr.bf16.mxu0 %v1789
    %2074 = vmatpush1.bf16.msra.mxu0 %v1788
    %2075 = vmatprep.subr.bf16.mxu0 %v1785
    %2076 = vmatpush1.bf16.msra.mxu0 %v1784
    %2077 = vmatprep.subr.bf16.mxu0 %v1781
    %2078 = vmatpush1.bf16.msra.mxu0 %v1780
    %2079 = vmatprep.subr.bf16.mxu0 %v1777
    %2080 = vmatpush1.bf16.msra.mxu0 %v1776
    %2081 = vmatprep.subr.bf16.mxu0 %v1773
    %2082 = vmatpush1.bf16.msra.mxu0 %v1772
    %2083 = vmatprep.subr.bf16.mxu0 %v1769
    %2084 = vmatpush1.bf16.msra.mxu0 %v1768
    %2085 = vmatprep.subr.bf16.mxu0 %v1765
    %2086 = vmatpush1.bf16.msra.mxu0 %v1764
    %2087 = vmatprep.subr.bf16.mxu0 %v1761
    %2088 = vmatpush1.bf16.msra.mxu0 %v1760
    %2089 = vmatprep.subr.bf16.mxu0 %v1821
    %2090 = vmatpush2.bf16.msra.mxu0 %v1820
    %2091 = vmatprep.subr.bf16.mxu0 %v1817
    %2092 = vmatpush2.bf16.msra.mxu0 %v1816
    %2093 = vmatprep.subr.bf16.mxu0 %v1813
    %2094 = vmatpush2.bf16.msra.mxu0 %v1812
    %2095 = vmatprep.subr.bf16.mxu0 %v1809
    %2096 = vmatpush2.bf16.msra.mxu0 %v1808
    %2097 = vmatprep.subr.bf16.mxu0 %v1805
    %2098 = vmatpush2.bf16.msra.mxu0 %v1804
    %2099 = vmatprep.subr.bf16.mxu0 %v1801
    %2100 = vmatpush2.bf16.msra.mxu0 %v1800
    %2101 = vmatprep.subr.bf16.mxu0 %v1797
    %2102 = vmatpush2.bf16.msra.mxu0 %v1796
    %2103 = vmatprep.subr.bf16.mxu0 %v1793
    %2104 = vmatpush2.bf16.msra.mxu0 %v1792
    %2105 = vmatprep.mubr.bf16.mxu0 %v1142
    %2106 = vmatmul.mubr.bf16.gmra.mxu0 %v1141
    %v2107 = vpop.f32.mrf.mxu0
    %v2108 = vadd.f32 %v2067, %v2107
    %v2109 = vpop.f32.mrf.mxu0
    %v2110 = vadd.f32 %v2069, %v2109
    %v2111 = vpop.f32.mrf.mxu0
    %v2112 = vpop.f32.mrf.mxu0
    %2113 = vdwg.mxu0
    %v2114 = vld [vmem:[#allocation8] sm:$0xf]
    %v2115 = vpack.c.bf16 %v2114, %v2114
    %v2116 = vld [vmem:[#allocation16] sm:$0xff]
    %v2117 = vld [vmem:[#allocation16 + $0x8] sm:$0xff]
    %v2118 = vld [vmem:[#allocation16 + $0x10] sm:$0xff]
    %v2119 = vld [vmem:[#allocation16 + $0x18] sm:$0xff]
    %v2120 = vld [vmem:[#allocation17] sm:$0xf]
    %v2121 = vunpack.c.l.bf16 %v2120
    %v2123 = vlaneseq
    %v2124 = vshrl.u32 %v2123, 7
    %v2125 = vsub.s32 0, %v2124
    %v2126 = vrot.slane %v2121, %v2125
    %v2127 = vlaneseq
    %v2128 = vshrl.u32 %v2127, 7
    %v2129 = vsub.s32 2, %v2128
    %v2130 = vrot.slane %v2121, %v2129
    %v2131 = vlaneseq
    %v2132 = vshrl.u32 %v2131, 7
    %v2133 = vsub.s32 4, %v2132
    %v2134 = vrot.slane %v2121, %v2133
    %v2135 = vlaneseq
    %v2136 = vshrl.u32 %v2135, 7
    %v2137 = vsub.s32 6, %v2136
    %v2138 = vrot.slane %v2121, %v2137
    %v2143 = vlaneseq
    %v2144 = vshrl.u32 %v2143, 7
    %v2145 = vsub.s32 0, %v2144
    %v2146 = vrot.slane %v2126, %v2145
    %v2147 = vlaneseq
    %v2148 = vshrl.u32 %v2147, 7
    %v2149 = vsub.s32 0, %v2148
    %v2150 = vrot.slane %v2130, %v2149
    %v2151 = vlaneseq
    %v2152 = vshrl.u32 %v2151, 7
    %v2153 = vsub.s32 0, %v2152
    %v2154 = vrot.slane %v2134, %v2153
    %v2155 = vlaneseq
    %v2156 = vshrl.u32 %v2155, 7
    %v2157 = vsub.s32 0, %v2156
    %v2158 = vrot.slane %v2138, %v2157
    %v2163 = vunpack.c.l.b16 %v2116
    %v2164 = vunpack.c.h.b16 %v2116
    %v2165 = vunpack.c.l.b16 %v2117
    %v2166 = vunpack.c.h.b16 %v2117
    %v2167 = vunpack.c.l.b16 %v2118
    %v2168 = vunpack.c.h.b16 %v2118
    %v2169 = vunpack.c.l.b16 %v2119
    %v2170 = vunpack.c.h.b16 %v2119
    %v2171 = vpack.c.b16 %v2167, %v2163
    %v2172 = vpack.c.b16 %v2168, %v2164
    %v2173 = vpack.c.b16 %v2169, %v2165
    %v2174 = vpack.c.b16 %v2170, %v2166
    %vm2179 = vcmask 130048
    %v2181 = vsel %vm2179, %v2115, 0
    %2183 = vmatprep.subr.bf16.mxu0 0
    %2184 = vmatpush1.bf16.msra.mxu0 0
    %2185 = vmatprep.subr.bf16.mxu0 0
    %2186 = vmatpush1.bf16.msra.mxu0 0
    %2187 = vmatprep.subr.bf16.mxu0 0
    %2188 = vmatpush1.bf16.msra.mxu0 0
    %2189 = vmatprep.subr.bf16.mxu0 0
    %2190 = vmatpush1.bf16.msra.mxu0 0
    %2191 = vmatprep.subr.bf16.mxu0 0
    %2192 = vmatpush1.bf16.msra.mxu0 0
    %2193 = vmatprep.subr.bf16.mxu0 0
    %2194 = vmatpush1.bf16.msra.mxu0 0
    %2195 = vmatprep.subr.bf16.mxu0 0
    %2196 = vmatpush1.bf16.msra.mxu0 0
    %2197 = vmatprep.subr.bf16.mxu0 %v2172
    %2198 = vmatpush1.bf16.msra.mxu0 %v2171
    %2199 = vmatprep.subr.bf16.mxu0 0
    %2200 = vmatpush2.bf16.msra.mxu0 0
    %2201 = vmatprep.subr.bf16.mxu0 0
    %2202 = vmatpush2.bf16.msra.mxu0 0
    %2203 = vmatprep.subr.bf16.mxu0 0
    %2204 = vmatpush2.bf16.msra.mxu0 0
    %2205 = vmatprep.subr.bf16.mxu0 0
    %2206 = vmatpush2.bf16.msra.mxu0 0
    %2207 = vmatprep.subr.bf16.mxu0 0
    %2208 = vmatpush2.bf16.msra.mxu0 0
    %2209 = vmatprep.subr.bf16.mxu0 0
    %2210 = vmatpush2.bf16.msra.mxu0 0
    %2211 = vmatprep.subr.bf16.mxu0 0
    %2212 = vmatpush2.bf16.msra.mxu0 0
    %2213 = vmatprep.subr.bf16.mxu0 0
    %2214 = vmatpush2.bf16.msra.mxu0 0
    %2215 = vmatprep.mubr.bf16.mxu0 0
    %2216 = vmatmul.mubr.bf16.gmra.mxu0 %v2181
    %v2217 = vpop.f32.mrf.mxu0
    %v2218 = vadd.f32 %v2146, %v2217
    %v2219 = vpop.f32.mrf.mxu0
    %v2220 = vadd.f32 %v2150, %v2219
    %v2221 = vpop.f32.mrf.mxu0
    %v2222 = vpop.f32.mrf.mxu0
    %2223 = vdwg.mxu0
    %2224 = vmatprep.subr.bf16.mxu0 0
    %2225 = vmatpush1.bf16.msra.mxu0 0
    %2226 = vmatprep.subr.bf16.mxu0 0
    %2227 = vmatpush1.bf16.msra.mxu0 0
    %2228 = vmatprep.subr.bf16.mxu0 0
    %2229 = vmatpush1.bf16.msra.mxu0 0
    %2230 = vmatprep.subr.bf16.mxu0 0
    %2231 = vmatpush1.bf16.msra.mxu0 0
    %2232 = vmatprep.subr.bf16.mxu0 0
    %2233 = vmatpush1.bf16.msra.mxu0 0
    %2234 = vmatprep.subr.bf16.mxu0 0
    %2235 = vmatpush1.bf16.msra.mxu0 0
    %2236 = vmatprep.subr.bf16.mxu0 0
    %2237 = vmatpush1.bf16.msra.mxu0 0
    %2238 = vmatprep.subr.bf16.mxu0 %v2174
    %2239 = vmatpush1.bf16.msra.mxu0 %v2173
    %2240 = vmatprep.subr.bf16.mxu0 0
    %2241 = vmatpush2.bf16.msra.mxu0 0
    %2242 = vmatprep.subr.bf16.mxu0 0
    %2243 = vmatpush2.bf16.msra.mxu0 0
    %2244 = vmatprep.subr.bf16.mxu0 0
    %2245 = vmatpush2.bf16.msra.mxu0 0
    %2246 = vmatprep.subr.bf16.mxu0 0
    %2247 = vmatpush2.bf16.msra.mxu0 0
    %2248 = vmatprep.subr.bf16.mxu0 0
    %2249 = vmatpush2.bf16.msra.mxu0 0
    %2250 = vmatprep.subr.bf16.mxu0 0
    %2251 = vmatpush2.bf16.msra.mxu0 0
    %2252 = vmatprep.subr.bf16.mxu0 0
    %2253 = vmatpush2.bf16.msra.mxu0 0
    %2254 = vmatprep.subr.bf16.mxu0 0
    %2255 = vmatpush2.bf16.msra.mxu0 0
    %2256 = vmatprep.mubr.bf16.mxu0 0
    %2257 = vmatmul.mubr.bf16.gmra.mxu0 %v2181
    %v2258 = vpop.f32.mrf.mxu0
    %v2259 = vadd.f32 %v2154, %v2258
    %v2260 = vpop.f32.mrf.mxu0
    %v2261 = vadd.f32 %v2158, %v2260
    %v2262 = vpop.f32.mrf.mxu0
    %v2263 = vpop.f32.mrf.mxu0
    %2264 = vdwg.mxu0
    %v2265 = vpack.c.bf16 %v2218, %v2218
    %v2266 = vpack.c.bf16 %v2220, %v2220
    %v2267 = vpack.c.bf16 %v2259, %v2259
    %v2268 = vpack.c.bf16 %v2261, %v2261
    %v2269 = vld [vmem:[#allocation19] sm:$0xff]
    %v2270 = vld [vmem:[#allocation19 + $0x8] sm:$0xff]
    %v2271 = vld [vmem:[#allocation19 + $0x10] sm:$0xff]
    %v2272 = vld [vmem:[#allocation19 + $0x18] sm:$0xff]
    %v2273 = vld [vmem:[#allocation19 + $0x20] sm:$0xff]
    %v2274 = vld [vmem:[#allocation19 + $0x28] sm:$0xff]
    %v2275 = vld [vmem:[#allocation19 + $0x30] sm:$0xff]
    %v2276 = vld [vmem:[#allocation19 + $0x38] sm:$0xff]
    %v2277 = vld [vmem:[#allocation19 + $0x40] sm:$0xff]
    %v2278 = vld [vmem:[#allocation19 + $0x48] sm:$0xff]
    %v2279 = vld [vmem:[#allocation19 + $0x50] sm:$0xff]
    %v2280 = vld [vmem:[#allocation19 + $0x58] sm:$0xff]
    %v2281 = vld [vmem:[#allocation19 + $0x60] sm:$0xff]
    %v2282 = vld [vmem:[#allocation19 + $0x68] sm:$0xff]
    %v2283 = vld [vmem:[#allocation19 + $0x70] sm:$0xff]
    %v2284 = vld [vmem:[#allocation19 + $0x78] sm:$0xff]
    %v2285 = vld [vmem:[#allocation19 + $0x80] sm:$0xff]
    %v2286 = vld [vmem:[#allocation19 + $0x88] sm:$0xff]
    %v2287 = vld [vmem:[#allocation19 + $0x90] sm:$0xff]
    %v2288 = vld [vmem:[#allocation19 + $0x98] sm:$0xff]
    %v2289 = vld [vmem:[#allocation19 + $0xa0] sm:$0xff]
    %v2290 = vld [vmem:[#allocation19 + $0xa8] sm:$0xff]
    %v2291 = vld [vmem:[#allocation19 + $0xb0] sm:$0xff]
    %v2292 = vld [vmem:[#allocation19 + $0xb8] sm:$0xff]
    %v2293 = vld [vmem:[#allocation19 + $0xc0] sm:$0xff]
    %v2294 = vld [vmem:[#allocation19 + $0xc8] sm:$0xff]
    %v2295 = vld [vmem:[#allocation19 + $0xd0] sm:$0xff]
    %v2296 = vld [vmem:[#allocation19 + $0xd8] sm:$0xff]
    %v2297 = vld [vmem:[#allocation19 + $0xe0] sm:$0xff]
    %v2298 = vld [vmem:[#allocation19 + $0xe8] sm:$0xff]
    %v2299 = vld [vmem:[#allocation19 + $0xf0] sm:$0xff]
    %v2300 = vld [vmem:[#allocation19 + $0xf8] sm:$0xff]
    %v2301 = vld [vmem:[#allocation19 + $0x100] sm:$0xff]
    %v2302 = vld [vmem:[#allocation19 + $0x108] sm:$0xff]
    %v2303 = vld [vmem:[#allocation19 + $0x110] sm:$0xff]
    %v2304 = vld [vmem:[#allocation19 + $0x118] sm:$0xff]
    %v2305 = vld [vmem:[#allocation19 + $0x120] sm:$0xff]
    %v2306 = vld [vmem:[#allocation19 + $0x128] sm:$0xff]
    %v2307 = vld [vmem:[#allocation19 + $0x130] sm:$0xff]
    %v2308 = vld [vmem:[#allocation19 + $0x138] sm:$0xff]
    %v2309 = vld [vmem:[#allocation19 + $0x140] sm:$0xff]
    %v2310 = vld [vmem:[#allocation19 + $0x148] sm:$0xff]
    %v2311 = vld [vmem:[#allocation19 + $0x150] sm:$0xff]
    %v2312 = vld [vmem:[#allocation19 + $0x158] sm:$0xff]
    %v2313 = vld [vmem:[#allocation19 + $0x160] sm:$0xff]
    %v2314 = vld [vmem:[#allocation19 + $0x168] sm:$0xff]
    %v2315 = vld [vmem:[#allocation19 + $0x170] sm:$0xff]
    %v2316 = vld [vmem:[#allocation19 + $0x178] sm:$0xff]
    %v2317 = vld [vmem:[#allocation19 + $0x180] sm:$0xff]
    %v2318 = vld [vmem:[#allocation19 + $0x188] sm:$0xff]
    %v2319 = vld [vmem:[#allocation19 + $0x190] sm:$0xff]
    %v2320 = vld [vmem:[#allocation19 + $0x198] sm:$0xff]
    %v2321 = vld [vmem:[#allocation19 + $0x1a0] sm:$0xff]
    %v2322 = vld [vmem:[#allocation19 + $0x1a8] sm:$0xff]
    %v2323 = vld [vmem:[#allocation19 + $0x1b0] sm:$0xff]
    %v2324 = vld [vmem:[#allocation19 + $0x1b8] sm:$0xff]
    %v2325 = vld [vmem:[#allocation19 + $0x1c0] sm:$0xff]
    %v2326 = vld [vmem:[#allocation19 + $0x1c8] sm:$0xff]
    %v2327 = vld [vmem:[#allocation19 + $0x1d0] sm:$0xff]
    %v2328 = vld [vmem:[#allocation19 + $0x1d8] sm:$0xff]
    %v2329 = vld [vmem:[#allocation19 + $0x1e0] sm:$0xff]
    %v2330 = vld [vmem:[#allocation19 + $0x1e8] sm:$0xff]
    %v2331 = vld [vmem:[#allocation19 + $0x1f0] sm:$0xff]
    %v2332 = vld [vmem:[#allocation19 + $0x1f8] sm:$0xff]
    %v2333 = vld [vmem:[#allocation19 + $0x200] sm:$0xff]
    %v2334 = vld [vmem:[#allocation19 + $0x208] sm:$0xff]
    %v2335 = vld [vmem:[#allocation19 + $0x210] sm:$0xff]
    %v2336 = vld [vmem:[#allocation19 + $0x218] sm:$0xff]
    %v2337 = vld [vmem:[#allocation19 + $0x220] sm:$0xff]
    %v2338 = vld [vmem:[#allocation19 + $0x228] sm:$0xff]
    %v2339 = vld [vmem:[#allocation19 + $0x230] sm:$0xff]
    %v2340 = vld [vmem:[#allocation19 + $0x238] sm:$0xff]
    %v2341 = vld [vmem:[#allocation19 + $0x240] sm:$0xff]
    %v2342 = vld [vmem:[#allocation19 + $0x248] sm:$0xff]
    %v2343 = vld [vmem:[#allocation19 + $0x250] sm:$0xff]
    %v2344 = vld [vmem:[#allocation19 + $0x258] sm:$0xff]
    %v2345 = vld [vmem:[#allocation19 + $0x260] sm:$0xff]
    %v2346 = vld [vmem:[#allocation19 + $0x268] sm:$0xff]
    %v2347 = vld [vmem:[#allocation19 + $0x270] sm:$0xff]
    %v2348 = vld [vmem:[#allocation19 + $0x278] sm:$0xff]
    %v2349 = vld [vmem:[#allocation19 + $0x280] sm:$0xff]
    %v2350 = vld [vmem:[#allocation19 + $0x288] sm:$0xff]
    %v2351 = vld [vmem:[#allocation19 + $0x290] sm:$0xff]
    %v2352 = vld [vmem:[#allocation19 + $0x298] sm:$0xff]
    %v2353 = vld [vmem:[#allocation19 + $0x2a0] sm:$0xff]
    %v2354 = vld [vmem:[#allocation19 + $0x2a8] sm:$0xff]
    %v2355 = vld [vmem:[#allocation19 + $0x2b0] sm:$0xff]
    %v2356 = vld [vmem:[#allocation19 + $0x2b8] sm:$0xff]
    %v2357 = vld [vmem:[#allocation19 + $0x2c0] sm:$0xff]
    %v2358 = vld [vmem:[#allocation19 + $0x2c8] sm:$0xff]
    %v2359 = vld [vmem:[#allocation19 + $0x2d0] sm:$0xff]
    %v2360 = vld [vmem:[#allocation19 + $0x2d8] sm:$0xff]
    %v2361 = vld [vmem:[#allocation19 + $0x2e0] sm:$0xff]
    %v2362 = vld [vmem:[#allocation19 + $0x2e8] sm:$0xff]
    %v2363 = vld [vmem:[#allocation19 + $0x2f0] sm:$0xff]
    %v2364 = vld [vmem:[#allocation19 + $0x2f8] sm:$0xff]
    %v2365 = vld [vmem:[#allocation19 + $0x300] sm:$0xff]
    %v2366 = vld [vmem:[#allocation19 + $0x308] sm:$0xff]
    %v2367 = vld [vmem:[#allocation19 + $0x310] sm:$0xff]
    %v2368 = vld [vmem:[#allocation19 + $0x318] sm:$0xff]
    %v2369 = vld [vmem:[#allocation19 + $0x320] sm:$0xff]
    %v2370 = vld [vmem:[#allocation19 + $0x328] sm:$0xff]
    %v2371 = vld [vmem:[#allocation19 + $0x330] sm:$0xff]
    %v2372 = vld [vmem:[#allocation19 + $0x338] sm:$0xff]
    %v2373 = vld [vmem:[#allocation19 + $0x340] sm:$0xff]
    %v2374 = vld [vmem:[#allocation19 + $0x348] sm:$0xff]
    %v2375 = vld [vmem:[#allocation19 + $0x350] sm:$0xff]
    %v2376 = vld [vmem:[#allocation19 + $0x358] sm:$0xff]
    %v2377 = vld [vmem:[#allocation19 + $0x360] sm:$0xff]
    %v2378 = vld [vmem:[#allocation19 + $0x368] sm:$0xff]
    %v2379 = vld [vmem:[#allocation19 + $0x370] sm:$0xff]
    %v2380 = vld [vmem:[#allocation19 + $0x378] sm:$0xff]
    %v2381 = vld [vmem:[#allocation19 + $0x380] sm:$0xff]
    %v2382 = vld [vmem:[#allocation19 + $0x388] sm:$0xff]
    %v2383 = vld [vmem:[#allocation19 + $0x390] sm:$0xff]
    %v2384 = vld [vmem:[#allocation19 + $0x398] sm:$0xff]
    %v2385 = vld [vmem:[#allocation19 + $0x3a0] sm:$0xff]
    %v2386 = vld [vmem:[#allocation19 + $0x3a8] sm:$0xff]
    %v2387 = vld [vmem:[#allocation19 + $0x3b0] sm:$0xff]
    %v2388 = vld [vmem:[#allocation19 + $0x3b8] sm:$0xff]
    %v2389 = vld [vmem:[#allocation19 + $0x3c0] sm:$0xff]
    %v2390 = vld [vmem:[#allocation19 + $0x3c8] sm:$0xff]
    %v2391 = vld [vmem:[#allocation19 + $0x3d0] sm:$0xff]
    %v2392 = vld [vmem:[#allocation19 + $0x3d8] sm:$0xff]
    %v2393 = vld [vmem:[#allocation19 + $0x3e0] sm:$0xff]
    %v2394 = vld [vmem:[#allocation19 + $0x3e8] sm:$0xff]
    %v2395 = vld [vmem:[#allocation19 + $0x3f0] sm:$0xff]
    %v2396 = vld [vmem:[#allocation19 + $0x3f8] sm:$0xff]
    %v2397 = vld [vmem:[#allocation20] sm:$0xf]
    %v2398 = vunpack.c.l.bf16 %v2397
    %v2400 = vlaneseq
    %v2401 = vshrl.u32 %v2400, 7
    %v2402 = vsub.s32 0, %v2401
    %v2403 = vrot.slane %v2398, %v2402
    %v2404 = vlaneseq
    %v2405 = vshrl.u32 %v2404, 7
    %v2406 = vsub.s32 2, %v2405
    %v2407 = vrot.slane %v2398, %v2406
    %v2408 = vlaneseq
    %v2409 = vshrl.u32 %v2408, 7
    %v2410 = vsub.s32 4, %v2409
    %v2411 = vrot.slane %v2398, %v2410
    %v2412 = vlaneseq
    %v2413 = vshrl.u32 %v2412, 7
    %v2414 = vsub.s32 6, %v2413
    %v2415 = vrot.slane %v2398, %v2414
    %v2420 = vlaneseq
    %v2421 = vshrl.u32 %v2420, 7
    %v2422 = vsub.s32 0, %v2421
    %v2423 = vrot.slane %v2403, %v2422
    %v2424 = vlaneseq
    %v2425 = vshrl.u32 %v2424, 7
    %v2426 = vsub.s32 0, %v2425
    %v2427 = vrot.slane %v2407, %v2426
    %v2428 = vlaneseq
    %v2429 = vshrl.u32 %v2428, 7
    %v2430 = vsub.s32 0, %v2429
    %v2431 = vrot.slane %v2411, %v2430
    %v2432 = vlaneseq
    %v2433 = vshrl.u32 %v2432, 7
    %v2434 = vsub.s32 0, %v2433
    %v2435 = vrot.slane %v2415, %v2434
    %v2564 = vunpack.c.l.b16 %v2269
    %v2565 = vunpack.c.h.b16 %v2269
    %v2566 = vunpack.c.l.b16 %v2270
    %v2567 = vunpack.c.h.b16 %v2270
    %v2568 = vunpack.c.l.b16 %v2271
    %v2569 = vunpack.c.h.b16 %v2271
    %v2570 = vunpack.c.l.b16 %v2272
    %v2571 = vunpack.c.h.b16 %v2272
    %v2572 = vunpack.c.l.b16 %v2273
    %v2573 = vunpack.c.h.b16 %v2273
    %v2574 = vunpack.c.l.b16 %v2274
    %v2575 = vunpack.c.h.b16 %v2274
    %v2576 = vunpack.c.l.b16 %v2275
    %v2577 = vunpack.c.h.b16 %v2275
    %v2578 = vunpack.c.l.b16 %v2276
    %v2579 = vunpack.c.h.b16 %v2276
    %v2580 = vunpack.c.l.b16 %v2277
    %v2581 = vunpack.c.h.b16 %v2277
    %v2582 = vunpack.c.l.b16 %v2278
    %v2583 = vunpack.c.h.b16 %v2278
    %v2584 = vunpack.c.l.b16 %v2279
    %v2585 = vunpack.c.h.b16 %v2279
    %v2586 = vunpack.c.l.b16 %v2280
    %v2587 = vunpack.c.h.b16 %v2280
    %v2588 = vunpack.c.l.b16 %v2281
    %v2589 = vunpack.c.h.b16 %v2281
    %v2590 = vunpack.c.l.b16 %v2282
    %v2591 = vunpack.c.h.b16 %v2282
    %v2592 = vunpack.c.l.b16 %v2283
    %v2593 = vunpack.c.h.b16 %v2283
    %v2594 = vunpack.c.l.b16 %v2284
    %v2595 = vunpack.c.h.b16 %v2284
    %v2596 = vunpack.c.l.b16 %v2285
    %v2597 = vunpack.c.h.b16 %v2285
    %v2598 = vunpack.c.l.b16 %v2286
    %v2599 = vunpack.c.h.b16 %v2286
    %v2600 = vunpack.c.l.b16 %v2287
    %v2601 = vunpack.c.h.b16 %v2287
    %v2602 = vunpack.c.l.b16 %v2288
    %v2603 = vunpack.c.h.b16 %v2288
    %v2604 = vunpack.c.l.b16 %v2289
    %v2605 = vunpack.c.h.b16 %v2289
    %v2606 = vunpack.c.l.b16 %v2290
    %v2607 = vunpack.c.h.b16 %v2290
    %v2608 = vunpack.c.l.b16 %v2291
    %v2609 = vunpack.c.h.b16 %v2291
    %v2610 = vunpack.c.l.b16 %v2292
    %v2611 = vunpack.c.h.b16 %v2292
    %v2612 = vunpack.c.l.b16 %v2293
    %v2613 = vunpack.c.h.b16 %v2293
    %v2614 = vunpack.c.l.b16 %v2294
    %v2615 = vunpack.c.h.b16 %v2294
    %v2616 = vunpack.c.l.b16 %v2295
    %v2617 = vunpack.c.h.b16 %v2295
    %v2618 = vunpack.c.l.b16 %v2296
    %v2619 = vunpack.c.h.b16 %v2296
    %v2620 = vunpack.c.l.b16 %v2297
    %v2621 = vunpack.c.h.b16 %v2297
    %v2622 = vunpack.c.l.b16 %v2298
    %v2623 = vunpack.c.h.b16 %v2298
    %v2624 = vunpack.c.l.b16 %v2299
    %v2625 = vunpack.c.h.b16 %v2299
    %v2626 = vunpack.c.l.b16 %v2300
    %v2627 = vunpack.c.h.b16 %v2300
    %v2628 = vunpack.c.l.b16 %v2301
    %v2629 = vunpack.c.h.b16 %v2301
    %v2630 = vunpack.c.l.b16 %v2302
    %v2631 = vunpack.c.h.b16 %v2302
    %v2632 = vunpack.c.l.b16 %v2303
    %v2633 = vunpack.c.h.b16 %v2303
    %v2634 = vunpack.c.l.b16 %v2304
    %v2635 = vunpack.c.h.b16 %v2304
    %v2636 = vunpack.c.l.b16 %v2305
    %v2637 = vunpack.c.h.b16 %v2305
    %v2638 = vunpack.c.l.b16 %v2306
    %v2639 = vunpack.c.h.b16 %v2306
    %v2640 = vunpack.c.l.b16 %v2307
    %v2641 = vunpack.c.h.b16 %v2307
    %v2642 = vunpack.c.l.b16 %v2308
    %v2643 = vunpack.c.h.b16 %v2308
    %v2644 = vunpack.c.l.b16 %v2309
    %v2645 = vunpack.c.h.b16 %v2309
    %v2646 = vunpack.c.l.b16 %v2310
    %v2647 = vunpack.c.h.b16 %v2310
    %v2648 = vunpack.c.l.b16 %v2311
    %v2649 = vunpack.c.h.b16 %v2311
    %v2650 = vunpack.c.l.b16 %v2312
    %v2651 = vunpack.c.h.b16 %v2312
    %v2652 = vunpack.c.l.b16 %v2313
    %v2653 = vunpack.c.h.b16 %v2313
    %v2654 = vunpack.c.l.b16 %v2314
    %v2655 = vunpack.c.h.b16 %v2314
    %v2656 = vunpack.c.l.b16 %v2315
    %v2657 = vunpack.c.h.b16 %v2315
    %v2658 = vunpack.c.l.b16 %v2316
    %v2659 = vunpack.c.h.b16 %v2316
    %v2660 = vunpack.c.l.b16 %v2317
    %v2661 = vunpack.c.h.b16 %v2317
    %v2662 = vunpack.c.l.b16 %v2318
    %v2663 = vunpack.c.h.b16 %v2318
    %v2664 = vunpack.c.l.b16 %v2319
    %v2665 = vunpack.c.h.b16 %v2319
    %v2666 = vunpack.c.l.b16 %v2320
    %v2667 = vunpack.c.h.b16 %v2320
    %v2668 = vunpack.c.l.b16 %v2321
    %v2669 = vunpack.c.h.b16 %v2321
    %v2670 = vunpack.c.l.b16 %v2322
    %v2671 = vunpack.c.h.b16 %v2322
    %v2672 = vunpack.c.l.b16 %v2323
    %v2673 = vunpack.c.h.b16 %v2323
    %v2674 = vunpack.c.l.b16 %v2324
    %v2675 = vunpack.c.h.b16 %v2324
    %v2676 = vunpack.c.l.b16 %v2325
    %v2677 = vunpack.c.h.b16 %v2325
    %v2678 = vunpack.c.l.b16 %v2326
    %v2679 = vunpack.c.h.b16 %v2326
    %v2680 = vunpack.c.l.b16 %v2327
    %v2681 = vunpack.c.h.b16 %v2327
    %v2682 = vunpack.c.l.b16 %v2328
    %v2683 = vunpack.c.h.b16 %v2328
    %v2684 = vunpack.c.l.b16 %v2329
    %v2685 = vunpack.c.h.b16 %v2329
    %v2686 = vunpack.c.l.b16 %v2330
    %v2687 = vunpack.c.h.b16 %v2330
    %v2688 = vunpack.c.l.b16 %v2331
    %v2689 = vunpack.c.h.b16 %v2331
    %v2690 = vunpack.c.l.b16 %v2332
    %v2691 = vunpack.c.h.b16 %v2332
    %v2692 = vunpack.c.l.b16 %v2333
    %v2693 = vunpack.c.h.b16 %v2333
    %v2694 = vunpack.c.l.b16 %v2334
    %v2695 = vunpack.c.h.b16 %v2334
    %v2696 = vunpack.c.l.b16 %v2335
    %v2697 = vunpack.c.h.b16 %v2335
    %v2698 = vunpack.c.l.b16 %v2336
    %v2699 = vunpack.c.h.b16 %v2336
    %v2700 = vunpack.c.l.b16 %v2337
    %v2701 = vunpack.c.h.b16 %v2337
    %v2702 = vunpack.c.l.b16 %v2338
    %v2703 = vunpack.c.h.b16 %v2338
    %v2704 = vunpack.c.l.b16 %v2339
    %v2705 = vunpack.c.h.b16 %v2339
    %v2706 = vunpack.c.l.b16 %v2340
    %v2707 = vunpack.c.h.b16 %v2340
    %v2708 = vunpack.c.l.b16 %v2341
    %v2709 = vunpack.c.h.b16 %v2341
    %v2710 = vunpack.c.l.b16 %v2342
    %v2711 = vunpack.c.h.b16 %v2342
    %v2712 = vunpack.c.l.b16 %v2343
    %v2713 = vunpack.c.h.b16 %v2343
    %v2714 = vunpack.c.l.b16 %v2344
    %v2715 = vunpack.c.h.b16 %v2344
    %v2716 = vunpack.c.l.b16 %v2345
    %v2717 = vunpack.c.h.b16 %v2345
    %v2718 = vunpack.c.l.b16 %v2346
    %v2719 = vunpack.c.h.b16 %v2346
    %v2720 = vunpack.c.l.b16 %v2347
    %v2721 = vunpack.c.h.b16 %v2347
    %v2722 = vunpack.c.l.b16 %v2348
    %v2723 = vunpack.c.h.b16 %v2348
    %v2724 = vunpack.c.l.b16 %v2349
    %v2725 = vunpack.c.h.b16 %v2349
    %v2726 = vunpack.c.l.b16 %v2350
    %v2727 = vunpack.c.h.b16 %v2350
    %v2728 = vunpack.c.l.b16 %v2351
    %v2729 = vunpack.c.h.b16 %v2351
    %v2730 = vunpack.c.l.b16 %v2352
    %v2731 = vunpack.c.h.b16 %v2352
    %v2732 = vunpack.c.l.b16 %v2353
    %v2733 = vunpack.c.h.b16 %v2353
    %v2734 = vunpack.c.l.b16 %v2354
    %v2735 = vunpack.c.h.b16 %v2354
    %v2736 = vunpack.c.l.b16 %v2355
    %v2737 = vunpack.c.h.b16 %v2355
    %v2738 = vunpack.c.l.b16 %v2356
    %v2739 = vunpack.c.h.b16 %v2356
    %v2740 = vunpack.c.l.b16 %v2357
    %v2741 = vunpack.c.h.b16 %v2357
    %v2742 = vunpack.c.l.b16 %v2358
    %v2743 = vunpack.c.h.b16 %v2358
    %v2744 = vunpack.c.l.b16 %v2359
    %v2745 = vunpack.c.h.b16 %v2359
    %v2746 = vunpack.c.l.b16 %v2360
    %v2747 = vunpack.c.h.b16 %v2360
    %v2748 = vunpack.c.l.b16 %v2361
    %v2749 = vunpack.c.h.b16 %v2361
    %v2750 = vunpack.c.l.b16 %v2362
    %v2751 = vunpack.c.h.b16 %v2362
    %v2752 = vunpack.c.l.b16 %v2363
    %v2753 = vunpack.c.h.b16 %v2363
    %v2754 = vunpack.c.l.b16 %v2364
    %v2755 = vunpack.c.h.b16 %v2364
    %v2756 = vunpack.c.l.b16 %v2365
    %v2757 = vunpack.c.h.b16 %v2365
    %v2758 = vunpack.c.l.b16 %v2366
    %v2759 = vunpack.c.h.b16 %v2366
    %v2760 = vunpack.c.l.b16 %v2367
    %v2761 = vunpack.c.h.b16 %v2367
    %v2762 = vunpack.c.l.b16 %v2368
    %v2763 = vunpack.c.h.b16 %v2368
    %v2764 = vunpack.c.l.b16 %v2369
    %v2765 = vunpack.c.h.b16 %v2369
    %v2766 = vunpack.c.l.b16 %v2370
    %v2767 = vunpack.c.h.b16 %v2370
    %v2768 = vunpack.c.l.b16 %v2371
    %v2769 = vunpack.c.h.b16 %v2371
    %v2770 = vunpack.c.l.b16 %v2372
    %v2771 = vunpack.c.h.b16 %v2372
    %v2772 = vunpack.c.l.b16 %v2373
    %v2773 = vunpack.c.h.b16 %v2373
    %v2774 = vunpack.c.l.b16 %v2374
    %v2775 = vunpack.c.h.b16 %v2374
    %v2776 = vunpack.c.l.b16 %v2375
    %v2777 = vunpack.c.h.b16 %v2375
    %v2778 = vunpack.c.l.b16 %v2376
    %v2779 = vunpack.c.h.b16 %v2376
    %v2780 = vunpack.c.l.b16 %v2377
    %v2781 = vunpack.c.h.b16 %v2377
    %v2782 = vunpack.c.l.b16 %v2378
    %v2783 = vunpack.c.h.b16 %v2378
    %v2784 = vunpack.c.l.b16 %v2379
    %v2785 = vunpack.c.h.b16 %v2379
    %v2786 = vunpack.c.l.b16 %v2380
    %v2787 = vunpack.c.h.b16 %v2380
    %v2788 = vunpack.c.l.b16 %v2381
    %v2789 = vunpack.c.h.b16 %v2381
    %v2790 = vunpack.c.l.b16 %v2382
    %v2791 = vunpack.c.h.b16 %v2382
    %v2792 = vunpack.c.l.b16 %v2383
    %v2793 = vunpack.c.h.b16 %v2383
    %v2794 = vunpack.c.l.b16 %v2384
    %v2795 = vunpack.c.h.b16 %v2384
    %v2796 = vunpack.c.l.b16 %v2385
    %v2797 = vunpack.c.h.b16 %v2385
    %v2798 = vunpack.c.l.b16 %v2386
    %v2799 = vunpack.c.h.b16 %v2386
    %v2800 = vunpack.c.l.b16 %v2387
    %v2801 = vunpack.c.h.b16 %v2387
    %v2802 = vunpack.c.l.b16 %v2388
    %v2803 = vunpack.c.h.b16 %v2388
    %v2804 = vunpack.c.l.b16 %v2389
    %v2805 = vunpack.c.h.b16 %v2389
    %v2806 = vunpack.c.l.b16 %v2390
    %v2807 = vunpack.c.h.b16 %v2390
    %v2808 = vunpack.c.l.b16 %v2391
    %v2809 = vunpack.c.h.b16 %v2391
    %v2810 = vunpack.c.l.b16 %v2392
    %v2811 = vunpack.c.h.b16 %v2392
    %v2812 = vunpack.c.l.b16 %v2393
    %v2813 = vunpack.c.h.b16 %v2393
    %v2814 = vunpack.c.l.b16 %v2394
    %v2815 = vunpack.c.h.b16 %v2394
    %v2816 = vunpack.c.l.b16 %v2395
    %v2817 = vunpack.c.h.b16 %v2395
    %v2818 = vunpack.c.l.b16 %v2396
    %v2819 = vunpack.c.h.b16 %v2396
    %v2820 = vpack.c.b16 %v2568, %v2564
    %v2821 = vpack.c.b16 %v2569, %v2565
    %v2822 = vpack.c.b16 %v2570, %v2566
    %v2823 = vpack.c.b16 %v2571, %v2567
    %v2824 = vpack.c.b16 %v2576, %v2572
    %v2825 = vpack.c.b16 %v2577, %v2573
    %v2826 = vpack.c.b16 %v2578, %v2574
    %v2827 = vpack.c.b16 %v2579, %v2575
    %v2828 = vpack.c.b16 %v2584, %v2580
    %v2829 = vpack.c.b16 %v2585, %v2581
    %v2830 = vpack.c.b16 %v2586, %v2582
    %v2831 = vpack.c.b16 %v2587, %v2583
    %v2832 = vpack.c.b16 %v2592, %v2588
    %v2833 = vpack.c.b16 %v2593, %v2589
    %v2834 = vpack.c.b16 %v2594, %v2590
    %v2835 = vpack.c.b16 %v2595, %v2591
    %v2836 = vpack.c.b16 %v2600, %v2596
    %v2837 = vpack.c.b16 %v2601, %v2597
    %v2838 = vpack.c.b16 %v2602, %v2598
    %v2839 = vpack.c.b16 %v2603, %v2599
    %v2840 = vpack.c.b16 %v2608, %v2604
    %v2841 = vpack.c.b16 %v2609, %v2605
    %v2842 = vpack.c.b16 %v2610, %v2606
    %v2843 = vpack.c.b16 %v2611, %v2607
    %v2844 = vpack.c.b16 %v2616, %v2612
    %v2845 = vpack.c.b16 %v2617, %v2613
    %v2846 = vpack.c.b16 %v2618, %v2614
    %v2847 = vpack.c.b16 %v2619, %v2615
    %v2848 = vpack.c.b16 %v2624, %v2620
    %v2849 = vpack.c.b16 %v2625, %v2621
    %v2850 = vpack.c.b16 %v2626, %v2622
    %v2851 = vpack.c.b16 %v2627, %v2623
    %v2852 = vpack.c.b16 %v2632, %v2628
    %v2853 = vpack.c.b16 %v2633, %v2629
    %v2854 = vpack.c.b16 %v2634, %v2630
    %v2855 = vpack.c.b16 %v2635, %v2631
    %v2856 = vpack.c.b16 %v2640, %v2636
    %v2857 = vpack.c.b16 %v2641, %v2637
    %v2858 = vpack.c.b16 %v2642, %v2638
    %v2859 = vpack.c.b16 %v2643, %v2639
    %v2860 = vpack.c.b16 %v2648, %v2644
    %v2861 = vpack.c.b16 %v2649, %v2645
    %v2862 = vpack.c.b16 %v2650, %v2646
    %v2863 = vpack.c.b16 %v2651, %v2647
    %v2864 = vpack.c.b16 %v2656, %v2652
    %v2865 = vpack.c.b16 %v2657, %v2653
    %v2866 = vpack.c.b16 %v2658, %v2654
    %v2867 = vpack.c.b16 %v2659, %v2655
    %v2868 = vpack.c.b16 %v2664, %v2660
    %v2869 = vpack.c.b16 %v2665, %v2661
    %v2870 = vpack.c.b16 %v2666, %v2662
    %v2871 = vpack.c.b16 %v2667, %v2663
    %v2872 = vpack.c.b16 %v2672, %v2668
    %v2873 = vpack.c.b16 %v2673, %v2669
    %v2874 = vpack.c.b16 %v2674, %v2670
    %v2875 = vpack.c.b16 %v2675, %v2671
    %v2876 = vpack.c.b16 %v2680, %v2676
    %v2877 = vpack.c.b16 %v2681, %v2677
    %v2878 = vpack.c.b16 %v2682, %v2678
    %v2879 = vpack.c.b16 %v2683, %v2679
    %v2880 = vpack.c.b16 %v2688, %v2684
    %v2881 = vpack.c.b16 %v2689, %v2685
    %v2882 = vpack.c.b16 %v2690, %v2686
    %v2883 = vpack.c.b16 %v2691, %v2687
    %v2884 = vpack.c.b16 %v2696, %v2692
    %v2885 = vpack.c.b16 %v2697, %v2693
    %v2886 = vpack.c.b16 %v2698, %v2694
    %v2887 = vpack.c.b16 %v2699, %v2695
    %v2888 = vpack.c.b16 %v2704, %v2700
    %v2889 = vpack.c.b16 %v2705, %v2701
    %v2890 = vpack.c.b16 %v2706, %v2702
    %v2891 = vpack.c.b16 %v2707, %v2703
    %v2892 = vpack.c.b16 %v2712, %v2708
    %v2893 = vpack.c.b16 %v2713, %v2709
    %v2894 = vpack.c.b16 %v2714, %v2710
    %v2895 = vpack.c.b16 %v2715, %v2711
    %v2896 = vpack.c.b16 %v2720, %v2716
    %v2897 = vpack.c.b16 %v2721, %v2717
    %v2898 = vpack.c.b16 %v2722, %v2718
    %v2899 = vpack.c.b16 %v2723, %v2719
    %v2900 = vpack.c.b16 %v2728, %v2724
    %v2901 = vpack.c.b16 %v2729, %v2725
    %v2902 = vpack.c.b16 %v2730, %v2726
    %v2903 = vpack.c.b16 %v2731, %v2727
    %v2904 = vpack.c.b16 %v2736, %v2732
    %v2905 = vpack.c.b16 %v2737, %v2733
    %v2906 = vpack.c.b16 %v2738, %v2734
    %v2907 = vpack.c.b16 %v2739, %v2735
    %v2908 = vpack.c.b16 %v2744, %v2740
    %v2909 = vpack.c.b16 %v2745, %v2741
    %v2910 = vpack.c.b16 %v2746, %v2742
    %v2911 = vpack.c.b16 %v2747, %v2743
    %v2912 = vpack.c.b16 %v2752, %v2748
    %v2913 = vpack.c.b16 %v2753, %v2749
    %v2914 = vpack.c.b16 %v2754, %v2750
    %v2915 = vpack.c.b16 %v2755, %v2751
    %v2916 = vpack.c.b16 %v2760, %v2756
    %v2917 = vpack.c.b16 %v2761, %v2757
    %v2918 = vpack.c.b16 %v2762, %v2758
    %v2919 = vpack.c.b16 %v2763, %v2759
    %v2920 = vpack.c.b16 %v2768, %v2764
    %v2921 = vpack.c.b16 %v2769, %v2765
    %v2922 = vpack.c.b16 %v2770, %v2766
    %v2923 = vpack.c.b16 %v2771, %v2767
    %v2924 = vpack.c.b16 %v2776, %v2772
    %v2925 = vpack.c.b16 %v2777, %v2773
    %v2926 = vpack.c.b16 %v2778, %v2774
    %v2927 = vpack.c.b16 %v2779, %v2775
    %v2928 = vpack.c.b16 %v2784, %v2780
    %v2929 = vpack.c.b16 %v2785, %v2781
    %v2930 = vpack.c.b16 %v2786, %v2782
    %v2931 = vpack.c.b16 %v2787, %v2783
    %v2932 = vpack.c.b16 %v2792, %v2788
    %v2933 = vpack.c.b16 %v2793, %v2789
    %v2934 = vpack.c.b16 %v2794, %v2790
    %v2935 = vpack.c.b16 %v2795, %v2791
    %v2936 = vpack.c.b16 %v2800, %v2796
    %v2937 = vpack.c.b16 %v2801, %v2797
    %v2938 = vpack.c.b16 %v2802, %v2798
    %v2939 = vpack.c.b16 %v2803, %v2799
    %v2940 = vpack.c.b16 %v2808, %v2804
    %v2941 = vpack.c.b16 %v2809, %v2805
    %v2942 = vpack.c.b16 %v2810, %v2806
    %v2943 = vpack.c.b16 %v2811, %v2807
    %v2944 = vpack.c.b16 %v2816, %v2812
    %v2945 = vpack.c.b16 %v2817, %v2813
    %v2946 = vpack.c.b16 %v2818, %v2814
    %v2947 = vpack.c.b16 %v2819, %v2815
    %3076 = vmatprep.subr.bf16.mxu0 %v2849
    %3077 = vmatpush1.bf16.msra.mxu0 %v2848
    %3078 = vmatprep.subr.bf16.mxu0 %v2845
    %3079 = vmatpush1.bf16.msra.mxu0 %v2844
    %3080 = vmatprep.subr.bf16.mxu0 %v2841
    %3081 = vmatpush1.bf16.msra.mxu0 %v2840
    %3082 = vmatprep.subr.bf16.mxu0 %v2837
    %3083 = vmatpush1.bf16.msra.mxu0 %v2836
    %3084 = vmatprep.subr.bf16.mxu0 %v2833
    %3085 = vmatpush1.bf16.msra.mxu0 %v2832
    %3086 = vmatprep.subr.bf16.mxu0 %v2829
    %3087 = vmatpush1.bf16.msra.mxu0 %v2828
    %3088 = vmatprep.subr.bf16.mxu0 %v2825
    %3089 = vmatpush1.bf16.msra.mxu0 %v2824
    %3090 = vmatprep.subr.bf16.mxu0 %v2821
    %3091 = vmatpush1.bf16.msra.mxu0 %v2820
    %3092 = vmatprep.subr.bf16.mxu0 %v2881
    %3093 = vmatpush2.bf16.msra.mxu0 %v2880
    %3094 = vmatprep.subr.bf16.mxu0 %v2877
    %3095 = vmatpush2.bf16.msra.mxu0 %v2876
    %3096 = vmatprep.subr.bf16.mxu0 %v2873
    %3097 = vmatpush2.bf16.msra.mxu0 %v2872
    %3098 = vmatprep.subr.bf16.mxu0 %v2869
    %3099 = vmatpush2.bf16.msra.mxu0 %v2868
    %3100 = vmatprep.subr.bf16.mxu0 %v2865
    %3101 = vmatpush2.bf16.msra.mxu0 %v2864
    %3102 = vmatprep.subr.bf16.mxu0 %v2861
    %3103 = vmatpush2.bf16.msra.mxu0 %v2860
    %3104 = vmatprep.subr.bf16.mxu0 %v2857
    %3105 = vmatpush2.bf16.msra.mxu0 %v2856
    %3106 = vmatprep.subr.bf16.mxu0 %v2853
    %3107 = vmatpush2.bf16.msra.mxu0 %v2852
    %3108 = vmatprep.mubr.bf16.mxu0 %v2266
    %3109 = vmatmul.mubr.bf16.gmra.mxu0 %v2265
    %v3110 = vpop.f32.mrf.mxu0
    %v3111 = vadd.f32 %v2423, %v3110
    %v3112 = vpop.f32.mrf.mxu0
    %v3113 = vadd.f32 %v2427, %v3112
    %v3114 = vpop.f32.mrf.mxu0
    %v3115 = vpop.f32.mrf.mxu0
    %3116 = vdwg.mxu0
    %3117 = vmatprep.subr.bf16.mxu0 %v2913
    %3118 = vmatpush1.bf16.msra.mxu0 %v2912
    %3119 = vmatprep.subr.bf16.mxu0 %v2909
    %3120 = vmatpush1.bf16.msra.mxu0 %v2908
    %3121 = vmatprep.subr.bf16.mxu0 %v2905
    %3122 = vmatpush1.bf16.msra.mxu0 %v2904
    %3123 = vmatprep.subr.bf16.mxu0 %v2901
    %3124 = vmatpush1.bf16.msra.mxu0 %v2900
    %3125 = vmatprep.subr.bf16.mxu0 %v2897
    %3126 = vmatpush1.bf16.msra.mxu0 %v2896
    %3127 = vmatprep.subr.bf16.mxu0 %v2893
    %3128 = vmatpush1.bf16.msra.mxu0 %v2892
    %3129 = vmatprep.subr.bf16.mxu0 %v2889
    %3130 = vmatpush1.bf16.msra.mxu0 %v2888
    %3131 = vmatprep.subr.bf16.mxu0 %v2885
    %3132 = vmatpush1.bf16.msra.mxu0 %v2884
    %3133 = vmatprep.subr.bf16.mxu0 %v2945
    %3134 = vmatpush2.bf16.msra.mxu0 %v2944
    %3135 = vmatprep.subr.bf16.mxu0 %v2941
    %3136 = vmatpush2.bf16.msra.mxu0 %v2940
    %3137 = vmatprep.subr.bf16.mxu0 %v2937
    %3138 = vmatpush2.bf16.msra.mxu0 %v2936
    %3139 = vmatprep.subr.bf16.mxu0 %v2933
    %3140 = vmatpush2.bf16.msra.mxu0 %v2932
    %3141 = vmatprep.subr.bf16.mxu0 %v2929
    %3142 = vmatpush2.bf16.msra.mxu0 %v2928
    %3143 = vmatprep.subr.bf16.mxu0 %v2925
    %3144 = vmatpush2.bf16.msra.mxu0 %v2924
    %3145 = vmatprep.subr.bf16.mxu0 %v2921
    %3146 = vmatpush2.bf16.msra.mxu0 %v2920
    %3147 = vmatprep.subr.bf16.mxu0 %v2917
    %3148 = vmatpush2.bf16.msra.mxu0 %v2916
    %3149 = vmatprep.mubr.bf16.mxu0 %v2268
    %3150 = vmatmul.mubr.bf16.gmra.mxu0 %v2267
    %v3151 = vpop.f32.mrf.mxu0
    %v3152 = vadd.f32 %v3111, %v3151
    %v3153 = vpop.f32.mrf.mxu0
    %v3154 = vadd.f32 %v3113, %v3153
    %v3155 = vpop.f32.mrf.mxu0
    %v3156 = vpop.f32.mrf.mxu0
    %3157 = vdwg.mxu0
    %3158 = vmatprep.subr.bf16.mxu0 %v2851
    %3159 = vmatpush1.bf16.msra.mxu0 %v2850
    %3160 = vmatprep.subr.bf16.mxu0 %v2847
    %3161 = vmatpush1.bf16.msra.mxu0 %v2846
    %3162 = vmatprep.subr.bf16.mxu0 %v2843
    %3163 = vmatpush1.bf16.msra.mxu0 %v2842
    %3164 = vmatprep.subr.bf16.mxu0 %v2839
    %3165 = vmatpush1.bf16.msra.mxu0 %v2838
    %3166 = vmatprep.subr.bf16.mxu0 %v2835
    %3167 = vmatpush1.bf16.msra.mxu0 %v2834
    %3168 = vmatprep.subr.bf16.mxu0 %v2831
    %3169 = vmatpush1.bf16.msra.mxu0 %v2830
    %3170 = vmatprep.subr.bf16.mxu0 %v2827
    %3171 = vmatpush1.bf16.msra.mxu0 %v2826
    %3172 = vmatprep.subr.bf16.mxu0 %v2823
    %3173 = vmatpush1.bf16.msra.mxu0 %v2822
    %3174 = vmatprep.subr.bf16.mxu0 %v2883
    %3175 = vmatpush2.bf16.msra.mxu0 %v2882
    %3176 = vmatprep.subr.bf16.mxu0 %v2879
    %3177 = vmatpush2.bf16.msra.mxu0 %v2878
    %3178 = vmatprep.subr.bf16.mxu0 %v2875
    %3179 = vmatpush2.bf16.msra.mxu0 %v2874
    %3180 = vmatprep.subr.bf16.mxu0 %v2871
    %3181 = vmatpush2.bf16.msra.mxu0 %v2870
    %3182 = vmatprep.subr.bf16.mxu0 %v2867
    %3183 = vmatpush2.bf16.msra.mxu0 %v2866
    %3184 = vmatprep.subr.bf16.mxu0 %v2863
    %3185 = vmatpush2.bf16.msra.mxu0 %v2862
    %3186 = vmatprep.subr.bf16.mxu0 %v2859
    %3187 = vmatpush2.bf16.msra.mxu0 %v2858
    %3188 = vmatprep.subr.bf16.mxu0 %v2855
    %3189 = vmatpush2.bf16.msra.mxu0 %v2854
    %3190 = vmatprep.mubr.bf16.mxu0 %v2266
    %3191 = vmatmul.mubr.bf16.gmra.mxu0 %v2265
    %v3192 = vpop.f32.mrf.mxu0
    %v3193 = vadd.f32 %v2431, %v3192
    %v3194 = vpop.f32.mrf.mxu0
    %v3195 = vadd.f32 %v2435, %v3194
    %v3196 = vpop.f32.mrf.mxu0
    %v3197 = vpop.f32.mrf.mxu0
    %3198 = vdwg.mxu0
    %3199 = vmatprep.subr.bf16.mxu0 %v2915
    %3200 = vmatpush1.bf16.msra.mxu0 %v2914
    %3201 = vmatprep.subr.bf16.mxu0 %v2911
    %3202 = vmatpush1.bf16.msra.mxu0 %v2910
    %3203 = vmatprep.subr.bf16.mxu0 %v2907
    %3204 = vmatpush1.bf16.msra.mxu0 %v2906
    %3205 = vmatprep.subr.bf16.mxu0 %v2903
    %3206 = vmatpush1.bf16.msra.mxu0 %v2902
    %3207 = vmatprep.subr.bf16.mxu0 %v2899
    %3208 = vmatpush1.bf16.msra.mxu0 %v2898
    %3209 = vmatprep.subr.bf16.mxu0 %v2895
    %3210 = vmatpush1.bf16.msra.mxu0 %v2894
    %3211 = vmatprep.subr.bf16.mxu0 %v2891
    %3212 = vmatpush1.bf16.msra.mxu0 %v2890
    %3213 = vmatprep.subr.bf16.mxu0 %v2887
    %3214 = vmatpush1.bf16.msra.mxu0 %v2886
    %3215 = vmatprep.subr.bf16.mxu0 %v2947
    %3216 = vmatpush2.bf16.msra.mxu0 %v2946
    %3217 = vmatprep.subr.bf16.mxu0 %v2943
    %3218 = vmatpush2.bf16.msra.mxu0 %v2942
    %3219 = vmatprep.subr.bf16.mxu0 %v2939
    %3220 = vmatpush2.bf16.msra.mxu0 %v2938
    %3221 = vmatprep.subr.bf16.mxu0 %v2935
    %3222 = vmatpush2.bf16.msra.mxu0 %v2934
    %3223 = vmatprep.subr.bf16.mxu0 %v2931
    %3224 = vmatpush2.bf16.msra.mxu0 %v2930
    %3225 = vmatprep.subr.bf16.mxu0 %v2927
    %3226 = vmatpush2.bf16.msra.mxu0 %v2926
    %3227 = vmatprep.subr.bf16.mxu0 %v2923
    %3228 = vmatpush2.bf16.msra.mxu0 %v2922
    %3229 = vmatprep.subr.bf16.mxu0 %v2919
    %3230 = vmatpush2.bf16.msra.mxu0 %v2918
    %3231 = vmatprep.mubr.bf16.mxu0 %v2268
    %3232 = vmatmul.mubr.bf16.gmra.mxu0 %v2267
    %v3233 = vpop.f32.mrf.mxu0
    %v3234 = vadd.f32 %v3193, %v3233
    %v3235 = vpop.f32.mrf.mxu0
    %v3236 = vadd.f32 %v3195, %v3235
    %v3237 = vpop.f32.mrf.mxu0
    %v3238 = vpop.f32.mrf.mxu0
    %3239 = vdwg.mxu0
    %v3240 = vadd.f32 %v3152, %v2026
    %v3241 = vadd.f32 %v3154, %v2028
    %v3242 = vadd.f32 %v3234, %v2108
    %v3243 = vadd.f32 %v3236, %v2110
    %v3244 = vpack.c.bf16 %v3240, %v3240
    %v3245 = vpack.c.bf16 %v3241, %v3241
    %v3246 = vpack.c.bf16 %v3242, %v3242
    %v3247 = vpack.c.bf16 %v3243, %v3243
    %s3248 = smul.u32 4, 64
    %s3249 = smul.u32 %s3248, 8
    %s3250 = sshll.u32 %s3249, 4
    %3251 = dma.done [#allocation4], %s3250
    %v3252 = vld [vmem:[#allocation2] sm:$0xff]
    %v3253 = vld [vmem:[#allocation2 + $0x8] sm:$0xff]
    %v3254 = vld [vmem:[#allocation2 + $0x10] sm:$0xff]
    %v3255 = vld [vmem:[#allocation2 + $0x18] sm:$0xff]
    %v3256 = vld [vmem:[#allocation2 + $0x20] sm:$0xff]
    %v3257 = vld [vmem:[#allocation2 + $0x28] sm:$0xff]
    %v3258 = vld [vmem:[#allocation2 + $0x30] sm:$0xff]
    %v3259 = vld [vmem:[#allocation2 + $0x38] sm:$0xff]
    %v3260 = vld [vmem:[#allocation2 + $0x40] sm:$0xff]
    %v3261 = vld [vmem:[#allocation2 + $0x48] sm:$0xff]
    %v3262 = vld [vmem:[#allocation2 + $0x50] sm:$0xff]
    %v3263 = vld [vmem:[#allocation2 + $0x58] sm:$0xff]
    %v3264 = vld [vmem:[#allocation2 + $0x60] sm:$0xff]
    %v3265 = vld [vmem:[#allocation2 + $0x68] sm:$0xff]
    %v3266 = vld [vmem:[#allocation2 + $0x70] sm:$0xff]
    %v3267 = vld [vmem:[#allocation2 + $0x78] sm:$0xff]
    %v3268 = vld [vmem:[#allocation2 + $0x80] sm:$0xff]
    %v3269 = vld [vmem:[#allocation2 + $0x88] sm:$0xff]
    %v3270 = vld [vmem:[#allocation2 + $0x90] sm:$0xff]
    %v3271 = vld [vmem:[#allocation2 + $0x98] sm:$0xff]
    %v3272 = vld [vmem:[#allocation2 + $0xa0] sm:$0xff]
    %v3273 = vld [vmem:[#allocation2 + $0xa8] sm:$0xff]
    %v3274 = vld [vmem:[#allocation2 + $0xb0] sm:$0xff]
    %v3275 = vld [vmem:[#allocation2 + $0xb8] sm:$0xff]
    %v3276 = vld [vmem:[#allocation2 + $0xc0] sm:$0xff]
    %v3277 = vld [vmem:[#allocation2 + $0xc8] sm:$0xff]
    %v3278 = vld [vmem:[#allocation2 + $0xd0] sm:$0xff]
    %v3279 = vld [vmem:[#allocation2 + $0xd8] sm:$0xff]
    %v3280 = vld [vmem:[#allocation2 + $0xe0] sm:$0xff]
    %v3281 = vld [vmem:[#allocation2 + $0xe8] sm:$0xff]
    %v3282 = vld [vmem:[#allocation2 + $0xf0] sm:$0xff]
    %v3283 = vld [vmem:[#allocation2 + $0xf8] sm:$0xff]
    %v3284 = vld [vmem:[#allocation2 + $0x100] sm:$0xff]
    %v3285 = vld [vmem:[#allocation2 + $0x108] sm:$0xff]
    %v3286 = vld [vmem:[#allocation2 + $0x110] sm:$0xff]
    %v3287 = vld [vmem:[#allocation2 + $0x118] sm:$0xff]
    %v3288 = vld [vmem:[#allocation2 + $0x120] sm:$0xff]
    %v3289 = vld [vmem:[#allocation2 + $0x128] sm:$0xff]
    %v3290 = vld [vmem:[#allocation2 + $0x130] sm:$0xff]
    %v3291 = vld [vmem:[#allocation2 + $0x138] sm:$0xff]
    %v3292 = vld [vmem:[#allocation2 + $0x140] sm:$0xff]
    %v3293 = vld [vmem:[#allocation2 + $0x148] sm:$0xff]
    %v3294 = vld [vmem:[#allocation2 + $0x150] sm:$0xff]
    %v3295 = vld [vmem:[#allocation2 + $0x158] sm:$0xff]
    %v3296 = vld [vmem:[#allocation2 + $0x160] sm:$0xff]
    %v3297 = vld [vmem:[#allocation2 + $0x168] sm:$0xff]
    %v3298 = vld [vmem:[#allocation2 + $0x170] sm:$0xff]
    %v3299 = vld [vmem:[#allocation2 + $0x178] sm:$0xff]
    %v3300 = vld [vmem:[#allocation2 + $0x180] sm:$0xff]
    %v3301 = vld [vmem:[#allocation2 + $0x188] sm:$0xff]
    %v3302 = vld [vmem:[#allocation2 + $0x190] sm:$0xff]
    %v3303 = vld [vmem:[#allocation2 + $0x198] sm:$0xff]
    %v3304 = vld [vmem:[#allocation2 + $0x1a0] sm:$0xff]
    %v3305 = vld [vmem:[#allocation2 + $0x1a8] sm:$0xff]
    %v3306 = vld [vmem:[#allocation2 + $0x1b0] sm:$0xff]
    %v3307 = vld [vmem:[#allocation2 + $0x1b8] sm:$0xff]
    %v3308 = vld [vmem:[#allocation2 + $0x1c0] sm:$0xff]
    %v3309 = vld [vmem:[#allocation2 + $0x1c8] sm:$0xff]
    %v3310 = vld [vmem:[#allocation2 + $0x1d0] sm:$0xff]
    %v3311 = vld [vmem:[#allocation2 + $0x1d8] sm:$0xff]
    %v3312 = vld [vmem:[#allocation2 + $0x1e0] sm:$0xff]
    %v3313 = vld [vmem:[#allocation2 + $0x1e8] sm:$0xff]
    %v3314 = vld [vmem:[#allocation2 + $0x1f0] sm:$0xff]
    %v3315 = vld [vmem:[#allocation2 + $0x1f8] sm:$0xff]
    %v3316 = vld [vmem:[#allocation2 + $0x200] sm:$0xff]
    %v3317 = vld [vmem:[#allocation2 + $0x208] sm:$0xff]
    %v3318 = vld [vmem:[#allocation2 + $0x210] sm:$0xff]
    %v3319 = vld [vmem:[#allocation2 + $0x218] sm:$0xff]
    %v3320 = vld [vmem:[#allocation2 + $0x220] sm:$0xff]
    %v3321 = vld [vmem:[#allocation2 + $0x228] sm:$0xff]
    %v3322 = vld [vmem:[#allocation2 + $0x230] sm:$0xff]
    %v3323 = vld [vmem:[#allocation2 + $0x238] sm:$0xff]
    %v3324 = vld [vmem:[#allocation2 + $0x240] sm:$0xff]
    %v3325 = vld [vmem:[#allocation2 + $0x248] sm:$0xff]
    %v3326 = vld [vmem:[#allocation2 + $0x250] sm:$0xff]
    %v3327 = vld [vmem:[#allocation2 + $0x258] sm:$0xff]
    %v3328 = vld [vmem:[#allocation2 + $0x260] sm:$0xff]
    %v3329 = vld [vmem:[#allocation2 + $0x268] sm:$0xff]
    %v3330 = vld [vmem:[#allocation2 + $0x270] sm:$0xff]
    %v3331 = vld [vmem:[#allocation2 + $0x278] sm:$0xff]
    %v3332 = vld [vmem:[#allocation2 + $0x280] sm:$0xff]
    %v3333 = vld [vmem:[#allocation2 + $0x288] sm:$0xff]
    %v3334 = vld [vmem:[#allocation2 + $0x290] sm:$0xff]
    %v3335 = vld [vmem:[#allocation2 + $0x298] sm:$0xff]
    %v3336 = vld [vmem:[#allocation2 + $0x2a0] sm:$0xff]
    %v3337 = vld [vmem:[#allocation2 + $0x2a8] sm:$0xff]
    %v3338 = vld [vmem:[#allocation2 + $0x2b0] sm:$0xff]
    %v3339 = vld [vmem:[#allocation2 + $0x2b8] sm:$0xff]
    %v3340 = vld [vmem:[#allocation2 + $0x2c0] sm:$0xff]
    %v3341 = vld [vmem:[#allocation2 + $0x2c8] sm:$0xff]
    %v3342 = vld [vmem:[#allocation2 + $0x2d0] sm:$0xff]
    %v3343 = vld [vmem:[#allocation2 + $0x2d8] sm:$0xff]
    %v3344 = vld [vmem:[#allocation2 + $0x2e0] sm:$0xff]
    %v3345 = vld [vmem:[#allocation2 + $0x2e8] sm:$0xff]
    %v3346 = vld [vmem:[#allocation2 + $0x2f0] sm:$0xff]
    %v3347 = vld [vmem:[#allocation2 + $0x2f8] sm:$0xff]
    %v3348 = vld [vmem:[#allocation2 + $0x300] sm:$0xff]
    %v3349 = vld [vmem:[#allocation2 + $0x308] sm:$0xff]
    %v3350 = vld [vmem:[#allocation2 + $0x310] sm:$0xff]
    %v3351 = vld [vmem:[#allocation2 + $0x318] sm:$0xff]
    %v3352 = vld [vmem:[#allocation2 + $0x320] sm:$0xff]
    %v3353 = vld [vmem:[#allocation2 + $0x328] sm:$0xff]
    %v3354 = vld [vmem:[#allocation2 + $0x330] sm:$0xff]
    %v3355 = vld [vmem:[#allocation2 + $0x338] sm:$0xff]
    %v3356 = vld [vmem:[#allocation2 + $0x340] sm:$0xff]
    %v3357 = vld [vmem:[#allocation2 + $0x348] sm:$0xff]
    %v3358 = vld [vmem:[#allocation2 + $0x350] sm:$0xff]
    %v3359 = vld [vmem:[#allocation2 + $0x358] sm:$0xff]
    %v3360 = vld [vmem:[#allocation2 + $0x360] sm:$0xff]
    %v3361 = vld [vmem:[#allocation2 + $0x368] sm:$0xff]
    %v3362 = vld [vmem:[#allocation2 + $0x370] sm:$0xff]
    %v3363 = vld [vmem:[#allocation2 + $0x378] sm:$0xff]
    %v3364 = vld [vmem:[#allocation2 + $0x380] sm:$0xff]
    %v3365 = vld [vmem:[#allocation2 + $0x388] sm:$0xff]
    %v3366 = vld [vmem:[#allocation2 + $0x390] sm:$0xff]
    %v3367 = vld [vmem:[#allocation2 + $0x398] sm:$0xff]
    %v3368 = vld [vmem:[#allocation2 + $0x3a0] sm:$0xff]
    %v3369 = vld [vmem:[#allocation2 + $0x3a8] sm:$0xff]
    %v3370 = vld [vmem:[#allocation2 + $0x3b0] sm:$0xff]
    %v3371 = vld [vmem:[#allocation2 + $0x3b8] sm:$0xff]
    %v3372 = vld [vmem:[#allocation2 + $0x3c0] sm:$0xff]
    %v3373 = vld [vmem:[#allocation2 + $0x3c8] sm:$0xff]
    %v3374 = vld [vmem:[#allocation2 + $0x3d0] sm:$0xff]
    %v3375 = vld [vmem:[#allocation2 + $0x3d8] sm:$0xff]
    %v3376 = vld [vmem:[#allocation2 + $0x3e0] sm:$0xff]
    %v3377 = vld [vmem:[#allocation2 + $0x3e8] sm:$0xff]
    %v3378 = vld [vmem:[#allocation2 + $0x3f0] sm:$0xff]
    %v3379 = vld [vmem:[#allocation2 + $0x3f8] sm:$0xff]
    %v3380 = vld [vmem:[#allocation2 + $0x400] sm:$0xff]
    %v3381 = vld [vmem:[#allocation2 + $0x408] sm:$0xff]
    %v3382 = vld [vmem:[#allocation2 + $0x410] sm:$0xff]
    %v3383 = vld [vmem:[#allocation2 + $0x418] sm:$0xff]
    %v3384 = vld [vmem:[#allocation2 + $0x420] sm:$0xff]
    %v3385 = vld [vmem:[#allocation2 + $0x428] sm:$0xff]
    %v3386 = vld [vmem:[#allocation2 + $0x430] sm:$0xff]
    %v3387 = vld [vmem:[#allocation2 + $0x438] sm:$0xff]
    %v3388 = vld [vmem:[#allocation2 + $0x440] sm:$0xff]
    %v3389 = vld [vmem:[#allocation2 + $0x448] sm:$0xff]
    %v3390 = vld [vmem:[#allocation2 + $0x450] sm:$0xff]
    %v3391 = vld [vmem:[#allocation2 + $0x458] sm:$0xff]
    %v3392 = vld [vmem:[#allocation2 + $0x460] sm:$0xff]
    %v3393 = vld [vmem:[#allocation2 + $0x468] sm:$0xff]
    %v3394 = vld [vmem:[#allocation2 + $0x470] sm:$0xff]
    %v3395 = vld [vmem:[#allocation2 + $0x478] sm:$0xff]
    %v3396 = vld [vmem:[#allocation2 + $0x480] sm:$0xff]
    %v3397 = vld [vmem:[#allocation2 + $0x488] sm:$0xff]
    %v3398 = vld [vmem:[#allocation2 + $0x490] sm:$0xff]
    %v3399 = vld [vmem:[#allocation2 + $0x498] sm:$0xff]
    %v3400 = vld [vmem:[#allocation2 + $0x4a0] sm:$0xff]
    %v3401 = vld [vmem:[#allocation2 + $0x4a8] sm:$0xff]
    %v3402 = vld [vmem:[#allocation2 + $0x4b0] sm:$0xff]
    %v3403 = vld [vmem:[#allocation2 + $0x4b8] sm:$0xff]
    %v3404 = vld [vmem:[#allocation2 + $0x4c0] sm:$0xff]
    %v3405 = vld [vmem:[#allocation2 + $0x4c8] sm:$0xff]
    %v3406 = vld [vmem:[#allocation2 + $0x4d0] sm:$0xff]
    %v3407 = vld [vmem:[#allocation2 + $0x4d8] sm:$0xff]
    %v3408 = vld [vmem:[#allocation2 + $0x4e0] sm:$0xff]
    %v3409 = vld [vmem:[#allocation2 + $0x4e8] sm:$0xff]
    %v3410 = vld [vmem:[#allocation2 + $0x4f0] sm:$0xff]
    %v3411 = vld [vmem:[#allocation2 + $0x4f8] sm:$0xff]
    %v3412 = vld [vmem:[#allocation2 + $0x500] sm:$0xff]
    %v3413 = vld [vmem:[#allocation2 + $0x508] sm:$0xff]
    %v3414 = vld [vmem:[#allocation2 + $0x510] sm:$0xff]
    %v3415 = vld [vmem:[#allocation2 + $0x518] sm:$0xff]
    %v3416 = vld [vmem:[#allocation2 + $0x520] sm:$0xff]
    %v3417 = vld [vmem:[#allocation2 + $0x528] sm:$0xff]
    %v3418 = vld [vmem:[#allocation2 + $0x530] sm:$0xff]
    %v3419 = vld [vmem:[#allocation2 + $0x538] sm:$0xff]
    %v3420 = vld [vmem:[#allocation2 + $0x540] sm:$0xff]
    %v3421 = vld [vmem:[#allocation2 + $0x548] sm:$0xff]
    %v3422 = vld [vmem:[#allocation2 + $0x550] sm:$0xff]
    %v3423 = vld [vmem:[#allocation2 + $0x558] sm:$0xff]
    %v3424 = vld [vmem:[#allocation2 + $0x560] sm:$0xff]
    %v3425 = vld [vmem:[#allocation2 + $0x568] sm:$0xff]
    %v3426 = vld [vmem:[#allocation2 + $0x570] sm:$0xff]
    %v3427 = vld [vmem:[#allocation2 + $0x578] sm:$0xff]
    %v3428 = vld [vmem:[#allocation2 + $0x580] sm:$0xff]
    %v3429 = vld [vmem:[#allocation2 + $0x588] sm:$0xff]
    %v3430 = vld [vmem:[#allocation2 + $0x590] sm:$0xff]
    %v3431 = vld [vmem:[#allocation2 + $0x598] sm:$0xff]
    %v3432 = vld [vmem:[#allocation2 + $0x5a0] sm:$0xff]
    %v3433 = vld [vmem:[#allocation2 + $0x5a8] sm:$0xff]
    %v3434 = vld [vmem:[#allocation2 + $0x5b0] sm:$0xff]
    %v3435 = vld [vmem:[#allocation2 + $0x5b8] sm:$0xff]
    %v3436 = vld [vmem:[#allocation2 + $0x5c0] sm:$0xff]
    %v3437 = vld [vmem:[#allocation2 + $0x5c8] sm:$0xff]
    %v3438 = vld [vmem:[#allocation2 + $0x5d0] sm:$0xff]
    %v3439 = vld [vmem:[#allocation2 + $0x5d8] sm:$0xff]
    %v3440 = vld [vmem:[#allocation2 + $0x5e0] sm:$0xff]
    %v3441 = vld [vmem:[#allocation2 + $0x5e8] sm:$0xff]
    %v3442 = vld [vmem:[#allocation2 + $0x5f0] sm:$0xff]
    %v3443 = vld [vmem:[#allocation2 + $0x5f8] sm:$0xff]
    %v3444 = vld [vmem:[#allocation2 + $0x600] sm:$0xff]
    %v3445 = vld [vmem:[#allocation2 + $0x608] sm:$0xff]
    %v3446 = vld [vmem:[#allocation2 + $0x610] sm:$0xff]
    %v3447 = vld [vmem:[#allocation2 + $0x618] sm:$0xff]
    %v3448 = vld [vmem:[#allocation2 + $0x620] sm:$0xff]
    %v3449 = vld [vmem:[#allocation2 + $0x628] sm:$0xff]
    %v3450 = vld [vmem:[#allocation2 + $0x630] sm:$0xff]
    %v3451 = vld [vmem:[#allocation2 + $0x638] sm:$0xff]
    %v3452 = vld [vmem:[#allocation2 + $0x640] sm:$0xff]
    %v3453 = vld [vmem:[#allocation2 + $0x648] sm:$0xff]
    %v3454 = vld [vmem:[#allocation2 + $0x650] sm:$0xff]
    %v3455 = vld [vmem:[#allocation2 + $0x658] sm:$0xff]
    %v3456 = vld [vmem:[#allocation2 + $0x660] sm:$0xff]
    %v3457 = vld [vmem:[#allocation2 + $0x668] sm:$0xff]
    %v3458 = vld [vmem:[#allocation2 + $0x670] sm:$0xff]
    %v3459 = vld [vmem:[#allocation2 + $0x678] sm:$0xff]
    %v3460 = vld [vmem:[#allocation2 + $0x680] sm:$0xff]
    %v3461 = vld [vmem:[#allocation2 + $0x688] sm:$0xff]
    %v3462 = vld [vmem:[#allocation2 + $0x690] sm:$0xff]
    %v3463 = vld [vmem:[#allocation2 + $0x698] sm:$0xff]
    %v3464 = vld [vmem:[#allocation2 + $0x6a0] sm:$0xff]
    %v3465 = vld [vmem:[#allocation2 + $0x6a8] sm:$0xff]
    %v3466 = vld [vmem:[#allocation2 + $0x6b0] sm:$0xff]
    %v3467 = vld [vmem:[#allocation2 + $0x6b8] sm:$0xff]
    %v3468 = vld [vmem:[#allocation2 + $0x6c0] sm:$0xff]
    %v3469 = vld [vmem:[#allocation2 + $0x6c8] sm:$0xff]
    %v3470 = vld [vmem:[#allocation2 + $0x6d0] sm:$0xff]
    %v3471 = vld [vmem:[#allocation2 + $0x6d8] sm:$0xff]
    %v3472 = vld [vmem:[#allocation2 + $0x6e0] sm:$0xff]
    %v3473 = vld [vmem:[#allocation2 + $0x6e8] sm:$0xff]
    %v3474 = vld [vmem:[#allocation2 + $0x6f0] sm:$0xff]
    %v3475 = vld [vmem:[#allocation2 + $0x6f8] sm:$0xff]
    %v3476 = vld [vmem:[#allocation2 + $0x700] sm:$0xff]
    %v3477 = vld [vmem:[#allocation2 + $0x708] sm:$0xff]
    %v3478 = vld [vmem:[#allocation2 + $0x710] sm:$0xff]
    %v3479 = vld [vmem:[#allocation2 + $0x718] sm:$0xff]
    %v3480 = vld [vmem:[#allocation2 + $0x720] sm:$0xff]
    %v3481 = vld [vmem:[#allocation2 + $0x728] sm:$0xff]
    %v3482 = vld [vmem:[#allocation2 + $0x730] sm:$0xff]
    %v3483 = vld [vmem:[#allocation2 + $0x738] sm:$0xff]
    %v3484 = vld [vmem:[#allocation2 + $0x740] sm:$0xff]
    %v3485 = vld [vmem:[#allocation2 + $0x748] sm:$0xff]
    %v3486 = vld [vmem:[#allocation2 + $0x750] sm:$0xff]
    %v3487 = vld [vmem:[#allocation2 + $0x758] sm:$0xff]
    %v3488 = vld [vmem:[#allocation2 + $0x760] sm:$0xff]
    %v3489 = vld [vmem:[#allocation2 + $0x768] sm:$0xff]
    %v3490 = vld [vmem:[#allocation2 + $0x770] sm:$0xff]
    %v3491 = vld [vmem:[#allocation2 + $0x778] sm:$0xff]
    %v3492 = vld [vmem:[#allocation2 + $0x780] sm:$0xff]
    %v3493 = vld [vmem:[#allocation2 + $0x788] sm:$0xff]
    %v3494 = vld [vmem:[#allocation2 + $0x790] sm:$0xff]
    %v3495 = vld [vmem:[#allocation2 + $0x798] sm:$0xff]
    %v3496 = vld [vmem:[#allocation2 + $0x7a0] sm:$0xff]
    %v3497 = vld [vmem:[#allocation2 + $0x7a8] sm:$0xff]
    %v3498 = vld [vmem:[#allocation2 + $0x7b0] sm:$0xff]
    %v3499 = vld [vmem:[#allocation2 + $0x7b8] sm:$0xff]
    %v3500 = vld [vmem:[#allocation2 + $0x7c0] sm:$0xff]
    %v3501 = vld [vmem:[#allocation2 + $0x7c8] sm:$0xff]
    %v3502 = vld [vmem:[#allocation2 + $0x7d0] sm:$0xff]
    %v3503 = vld [vmem:[#allocation2 + $0x7d8] sm:$0xff]
    %v3504 = vld [vmem:[#allocation2 + $0x7e0] sm:$0xff]
    %v3505 = vld [vmem:[#allocation2 + $0x7e8] sm:$0xff]
    %v3506 = vld [vmem:[#allocation2 + $0x7f0] sm:$0xff]
    %v3507 = vld [vmem:[#allocation2 + $0x7f8] sm:$0xff]
    %v3508 = vld [vmem:[#allocation22] sm:$0xff]
    %v3509 = vunpack.c.l.bf16 %v3508
    %v3510 = vunpack.c.h.bf16 %v3508
    %v3513 = vlaneseq
    %v3514 = vshrl.u32 %v3513, 7
    %v3515 = vsub.s32 0, %v3514
    %v3516 = vrot.slane %v3509, %v3515
    %v3517 = vlaneseq
    %v3518 = vshrl.u32 %v3517, 7
    %v3519 = vsub.s32 2, %v3518
    %v3520 = vrot.slane %v3509, %v3519
    %v3521 = vlaneseq
    %v3522 = vshrl.u32 %v3521, 7
    %v3523 = vsub.s32 4, %v3522
    %v3524 = vrot.slane %v3509, %v3523
    %v3525 = vlaneseq
    %v3526 = vshrl.u32 %v3525, 7
    %v3527 = vsub.s32 6, %v3526
    %v3528 = vrot.slane %v3509, %v3527
    %v3529 = vlaneseq
    %v3530 = vshrl.u32 %v3529, 7
    %v3531 = vsub.s32 0, %v3530
    %v3532 = vrot.slane %v3510, %v3531
    %v3533 = vlaneseq
    %v3534 = vshrl.u32 %v3533, 7
    %v3535 = vsub.s32 2, %v3534
    %v3536 = vrot.slane %v3510, %v3535
    %v3537 = vlaneseq
    %v3538 = vshrl.u32 %v3537, 7
    %v3539 = vsub.s32 4, %v3538
    %v3540 = vrot.slane %v3510, %v3539
    %v3541 = vlaneseq
    %v3542 = vshrl.u32 %v3541, 7
    %v3543 = vsub.s32 6, %v3542
    %v3544 = vrot.slane %v3510, %v3543
    %v3553 = vlaneseq
    %v3554 = vshrl.u32 %v3553, 7
    %v3555 = vsub.s32 0, %v3554
    %v3556 = vrot.slane %v3516, %v3555
    %v3557 = vlaneseq
    %v3558 = vshrl.u32 %v3557, 7
    %v3559 = vsub.s32 0, %v3558
    %v3560 = vrot.slane %v3520, %v3559
    %v3561 = vlaneseq
    %v3562 = vshrl.u32 %v3561, 7
    %v3563 = vsub.s32 0, %v3562
    %v3564 = vrot.slane %v3524, %v3563
    %v3565 = vlaneseq
    %v3566 = vshrl.u32 %v3565, 7
    %v3567 = vsub.s32 0, %v3566
    %v3568 = vrot.slane %v3528, %v3567
    %v3569 = vlaneseq
    %v3570 = vshrl.u32 %v3569, 7
    %v3571 = vsub.s32 0, %v3570
    %v3572 = vrot.slane %v3532, %v3571
    %v3573 = vlaneseq
    %v3574 = vshrl.u32 %v3573, 7
    %v3575 = vsub.s32 0, %v3574
    %v3576 = vrot.slane %v3536, %v3575
    %v3577 = vlaneseq
    %v3578 = vshrl.u32 %v3577, 7
    %v3579 = vsub.s32 0, %v3578
    %v3580 = vrot.slane %v3540, %v3579
    %v3581 = vlaneseq
    %v3582 = vshrl.u32 %v3581, 7
    %v3583 = vsub.s32 0, %v3582
    %v3584 = vrot.slane %v3544, %v3583
    %v3841 = vunpack.c.l.b16 %v3252
    %v3842 = vunpack.c.h.b16 %v3252
    %v3843 = vunpack.c.l.b16 %v3253
    %v3844 = vunpack.c.h.b16 %v3253
    %v3845 = vunpack.c.l.b16 %v3254
    %v3846 = vunpack.c.h.b16 %v3254
    %v3847 = vunpack.c.l.b16 %v3255
    %v3848 = vunpack.c.h.b16 %v3255
    %v3849 = vunpack.c.l.b16 %v3256
    %v3850 = vunpack.c.h.b16 %v3256
    %v3851 = vunpack.c.l.b16 %v3257
    %v3852 = vunpack.c.h.b16 %v3257
    %v3853 = vunpack.c.l.b16 %v3258
    %v3854 = vunpack.c.h.b16 %v3258
    %v3855 = vunpack.c.l.b16 %v3259
    %v3856 = vunpack.c.h.b16 %v3259
    %v3857 = vunpack.c.l.b16 %v3260
    %v3858 = vunpack.c.h.b16 %v3260
    %v3859 = vunpack.c.l.b16 %v3261
    %v3860 = vunpack.c.h.b16 %v3261
    %v3861 = vunpack.c.l.b16 %v3262
    %v3862 = vunpack.c.h.b16 %v3262
    %v3863 = vunpack.c.l.b16 %v3263
    %v3864 = vunpack.c.h.b16 %v3263
    %v3865 = vunpack.c.l.b16 %v3264
    %v3866 = vunpack.c.h.b16 %v3264
    %v3867 = vunpack.c.l.b16 %v3265
    %v3868 = vunpack.c.h.b16 %v3265
    %v3869 = vunpack.c.l.b16 %v3266
    %v3870 = vunpack.c.h.b16 %v3266
    %v3871 = vunpack.c.l.b16 %v3267
    %v3872 = vunpack.c.h.b16 %v3267
    %v3873 = vunpack.c.l.b16 %v3268
    %v3874 = vunpack.c.h.b16 %v3268
    %v3875 = vunpack.c.l.b16 %v3269
    %v3876 = vunpack.c.h.b16 %v3269
    %v3877 = vunpack.c.l.b16 %v3270
    %v3878 = vunpack.c.h.b16 %v3270
    %v3879 = vunpack.c.l.b16 %v3271
    %v3880 = vunpack.c.h.b16 %v3271
    %v3881 = vunpack.c.l.b16 %v3272
    %v3882 = vunpack.c.h.b16 %v3272
    %v3883 = vunpack.c.l.b16 %v3273
    %v3884 = vunpack.c.h.b16 %v3273
    %v3885 = vunpack.c.l.b16 %v3274
    %v3886 = vunpack.c.h.b16 %v3274
    %v3887 = vunpack.c.l.b16 %v3275
    %v3888 = vunpack.c.h.b16 %v3275
    %v3889 = vunpack.c.l.b16 %v3276
    %v3890 = vunpack.c.h.b16 %v3276
    %v3891 = vunpack.c.l.b16 %v3277
    %v3892 = vunpack.c.h.b16 %v3277
    %v3893 = vunpack.c.l.b16 %v3278
    %v3894 = vunpack.c.h.b16 %v3278
    %v3895 = vunpack.c.l.b16 %v3279
    %v3896 = vunpack.c.h.b16 %v3279
    %v3897 = vunpack.c.l.b16 %v3280
    %v3898 = vunpack.c.h.b16 %v3280
    %v3899 = vunpack.c.l.b16 %v3281
    %v3900 = vunpack.c.h.b16 %v3281
    %v3901 = vunpack.c.l.b16 %v3282
    %v3902 = vunpack.c.h.b16 %v3282
    %v3903 = vunpack.c.l.b16 %v3283
    %v3904 = vunpack.c.h.b16 %v3283
    %v3905 = vunpack.c.l.b16 %v3284
    %v3906 = vunpack.c.h.b16 %v3284
    %v3907 = vunpack.c.l.b16 %v3285
    %v3908 = vunpack.c.h.b16 %v3285
    %v3909 = vunpack.c.l.b16 %v3286
    %v3910 = vunpack.c.h.b16 %v3286
    %v3911 = vunpack.c.l.b16 %v3287
    %v3912 = vunpack.c.h.b16 %v3287
    %v3913 = vunpack.c.l.b16 %v3288
    %v3914 = vunpack.c.h.b16 %v3288
    %v3915 = vunpack.c.l.b16 %v3289
    %v3916 = vunpack.c.h.b16 %v3289
    %v3917 = vunpack.c.l.b16 %v3290
    %v3918 = vunpack.c.h.b16 %v3290
    %v3919 = vunpack.c.l.b16 %v3291
    %v3920 = vunpack.c.h.b16 %v3291
    %v3921 = vunpack.c.l.b16 %v3292
    %v3922 = vunpack.c.h.b16 %v3292
    %v3923 = vunpack.c.l.b16 %v3293
    %v3924 = vunpack.c.h.b16 %v3293
    %v3925 = vunpack.c.l.b16 %v3294
    %v3926 = vunpack.c.h.b16 %v3294
    %v3927 = vunpack.c.l.b16 %v3295
    %v3928 = vunpack.c.h.b16 %v3295
    %v3929 = vunpack.c.l.b16 %v3296
    %v3930 = vunpack.c.h.b16 %v3296
    %v3931 = vunpack.c.l.b16 %v3297
    %v3932 = vunpack.c.h.b16 %v3297
    %v3933 = vunpack.c.l.b16 %v3298
    %v3934 = vunpack.c.h.b16 %v3298
    %v3935 = vunpack.c.l.b16 %v3299
    %v3936 = vunpack.c.h.b16 %v3299
    %v3937 = vunpack.c.l.b16 %v3300
    %v3938 = vunpack.c.h.b16 %v3300
    %v3939 = vunpack.c.l.b16 %v3301
    %v3940 = vunpack.c.h.b16 %v3301
    %v3941 = vunpack.c.l.b16 %v3302
    %v3942 = vunpack.c.h.b16 %v3302
    %v3943 = vunpack.c.l.b16 %v3303
    %v3944 = vunpack.c.h.b16 %v3303
    %v3945 = vunpack.c.l.b16 %v3304
    %v3946 = vunpack.c.h.b16 %v3304
    %v3947 = vunpack.c.l.b16 %v3305
    %v3948 = vunpack.c.h.b16 %v3305
    %v3949 = vunpack.c.l.b16 %v3306
    %v3950 = vunpack.c.h.b16 %v3306
    %v3951 = vunpack.c.l.b16 %v3307
    %v3952 = vunpack.c.h.b16 %v3307
    %v3953 = vunpack.c.l.b16 %v3308
    %v3954 = vunpack.c.h.b16 %v3308
    %v3955 = vunpack.c.l.b16 %v3309
    %v3956 = vunpack.c.h.b16 %v3309
    %v3957 = vunpack.c.l.b16 %v3310
    %v3958 = vunpack.c.h.b16 %v3310
    %v3959 = vunpack.c.l.b16 %v3311
    %v3960 = vunpack.c.h.b16 %v3311
    %v3961 = vunpack.c.l.b16 %v3312
    %v3962 = vunpack.c.h.b16 %v3312
    %v3963 = vunpack.c.l.b16 %v3313
    %v3964 = vunpack.c.h.b16 %v3313
    %v3965 = vunpack.c.l.b16 %v3314
    %v3966 = vunpack.c.h.b16 %v3314
    %v3967 = vunpack.c.l.b16 %v3315
    %v3968 = vunpack.c.h.b16 %v3315
    %v3969 = vunpack.c.l.b16 %v3316
    %v3970 = vunpack.c.h.b16 %v3316
    %v3971 = vunpack.c.l.b16 %v3317
    %v3972 = vunpack.c.h.b16 %v3317
    %v3973 = vunpack.c.l.b16 %v3318
    %v3974 = vunpack.c.h.b16 %v3318
    %v3975 = vunpack.c.l.b16 %v3319
    %v3976 = vunpack.c.h.b16 %v3319
    %v3977 = vunpack.c.l.b16 %v3320
    %v3978 = vunpack.c.h.b16 %v3320
    %v3979 = vunpack.c.l.b16 %v3321
    %v3980 = vunpack.c.h.b16 %v3321
    %v3981 = vunpack.c.l.b16 %v3322
    %v3982 = vunpack.c.h.b16 %v3322
    %v3983 = vunpack.c.l.b16 %v3323
    %v3984 = vunpack.c.h.b16 %v3323
    %v3985 = vunpack.c.l.b16 %v3324
    %v3986 = vunpack.c.h.b16 %v3324
    %v3987 = vunpack.c.l.b16 %v3325
    %v3988 = vunpack.c.h.b16 %v3325
    %v3989 = vunpack.c.l.b16 %v3326
    %v3990 = vunpack.c.h.b16 %v3326
    %v3991 = vunpack.c.l.b16 %v3327
    %v3992 = vunpack.c.h.b16 %v3327
    %v3993 = vunpack.c.l.b16 %v3328
    %v3994 = vunpack.c.h.b16 %v3328
    %v3995 = vunpack.c.l.b16 %v3329
    %v3996 = vunpack.c.h.b16 %v3329
    %v3997 = vunpack.c.l.b16 %v3330
    %v3998 = vunpack.c.h.b16 %v3330
    %v3999 = vunpack.c.l.b16 %v3331
    %v4000 = vunpack.c.h.b16 %v3331
    %v4001 = vunpack.c.l.b16 %v3332
    %v4002 = vunpack.c.h.b16 %v3332
    %v4003 = vunpack.c.l.b16 %v3333
    %v4004 = vunpack.c.h.b16 %v3333
    %v4005 = vunpack.c.l.b16 %v3334
    %v4006 = vunpack.c.h.b16 %v3334
    %v4007 = vunpack.c.l.b16 %v3335
    %v4008 = vunpack.c.h.b16 %v3335
    %v4009 = vunpack.c.l.b16 %v3336
    %v4010 = vunpack.c.h.b16 %v3336
    %v4011 = vunpack.c.l.b16 %v3337
    %v4012 = vunpack.c.h.b16 %v3337
    %v4013 = vunpack.c.l.b16 %v3338
    %v4014 = vunpack.c.h.b16 %v3338
    %v4015 = vunpack.c.l.b16 %v3339
    %v4016 = vunpack.c.h.b16 %v3339
    %v4017 = vunpack.c.l.b16 %v3340
    %v4018 = vunpack.c.h.b16 %v3340
    %v4019 = vunpack.c.l.b16 %v3341
    %v4020 = vunpack.c.h.b16 %v3341
    %v4021 = vunpack.c.l.b16 %v3342
    %v4022 = vunpack.c.h.b16 %v3342
    %v4023 = vunpack.c.l.b16 %v3343
    %v4024 = vunpack.c.h.b16 %v3343
    %v4025 = vunpack.c.l.b16 %v3344
    %v4026 = vunpack.c.h.b16 %v3344
    %v4027 = vunpack.c.l.b16 %v3345
    %v4028 = vunpack.c.h.b16 %v3345
    %v4029 = vunpack.c.l.b16 %v3346
    %v4030 = vunpack.c.h.b16 %v3346
    %v4031 = vunpack.c.l.b16 %v3347
    %v4032 = vunpack.c.h.b16 %v3347
    %v4033 = vunpack.c.l.b16 %v3348
    %v4034 = vunpack.c.h.b16 %v3348
    %v4035 = vunpack.c.l.b16 %v3349
    %v4036 = vunpack.c.h.b16 %v3349
    %v4037 = vunpack.c.l.b16 %v3350
    %v4038 = vunpack.c.h.b16 %v3350
    %v4039 = vunpack.c.l.b16 %v3351
    %v4040 = vunpack.c.h.b16 %v3351
    %v4041 = vunpack.c.l.b16 %v3352
    %v4042 = vunpack.c.h.b16 %v3352
    %v4043 = vunpack.c.l.b16 %v3353
    %v4044 = vunpack.c.h.b16 %v3353
    %v4045 = vunpack.c.l.b16 %v3354
    %v4046 = vunpack.c.h.b16 %v3354
    %v4047 = vunpack.c.l.b16 %v3355
    %v4048 = vunpack.c.h.b16 %v3355
    %v4049 = vunpack.c.l.b16 %v3356
    %v4050 = vunpack.c.h.b16 %v3356
    %v4051 = vunpack.c.l.b16 %v3357
    %v4052 = vunpack.c.h.b16 %v3357
    %v4053 = vunpack.c.l.b16 %v3358
    %v4054 = vunpack.c.h.b16 %v3358
    %v4055 = vunpack.c.l.b16 %v3359
    %v4056 = vunpack.c.h.b16 %v3359
    %v4057 = vunpack.c.l.b16 %v3360
    %v4058 = vunpack.c.h.b16 %v3360
    %v4059 = vunpack.c.l.b16 %v3361
    %v4060 = vunpack.c.h.b16 %v3361
    %v4061 = vunpack.c.l.b16 %v3362
    %v4062 = vunpack.c.h.b16 %v3362
    %v4063 = vunpack.c.l.b16 %v3363
    %v4064 = vunpack.c.h.b16 %v3363
    %v4065 = vunpack.c.l.b16 %v3364
    %v4066 = vunpack.c.h.b16 %v3364
    %v4067 = vunpack.c.l.b16 %v3365
    %v4068 = vunpack.c.h.b16 %v3365
    %v4069 = vunpack.c.l.b16 %v3366
    %v4070 = vunpack.c.h.b16 %v3366
    %v4071 = vunpack.c.l.b16 %v3367
    %v4072 = vunpack.c.h.b16 %v3367
    %v4073 = vunpack.c.l.b16 %v3368
    %v4074 = vunpack.c.h.b16 %v3368
    %v4075 = vunpack.c.l.b16 %v3369
    %v4076 = vunpack.c.h.b16 %v3369
    %v4077 = vunpack.c.l.b16 %v3370
    %v4078 = vunpack.c.h.b16 %v3370
    %v4079 = vunpack.c.l.b16 %v3371
    %v4080 = vunpack.c.h.b16 %v3371
    %v4081 = vunpack.c.l.b16 %v3372
    %v4082 = vunpack.c.h.b16 %v3372
    %v4083 = vunpack.c.l.b16 %v3373
    %v4084 = vunpack.c.h.b16 %v3373
    %v4085 = vunpack.c.l.b16 %v3374
    %v4086 = vunpack.c.h.b16 %v3374
    %v4087 = vunpack.c.l.b16 %v3375
    %v4088 = vunpack.c.h.b16 %v3375
    %v4089 = vunpack.c.l.b16 %v3376
    %v4090 = vunpack.c.h.b16 %v3376
    %v4091 = vunpack.c.l.b16 %v3377
    %v4092 = vunpack.c.h.b16 %v3377
    %v4093 = vunpack.c.l.b16 %v3378
    %v4094 = vunpack.c.h.b16 %v3378
    %v4095 = vunpack.c.l.b16 %v3379
    %v4096 = vunpack.c.h.b16 %v3379
    %v4097 = vunpack.c.l.b16 %v3380
    %v4098 = vunpack.c.h.b16 %v3380
    %v4099 = vunpack.c.l.b16 %v3381
    %v4100 = vunpack.c.h.b16 %v3381
    %v4101 = vunpack.c.l.b16 %v3382
    %v4102 = vunpack.c.h.b16 %v3382
    %v4103 = vunpack.c.l.b16 %v3383
    %v4104 = vunpack.c.h.b16 %v3383
    %v4105 = vunpack.c.l.b16 %v3384
    %v4106 = vunpack.c.h.b16 %v3384
    %v4107 = vunpack.c.l.b16 %v3385
    %v4108 = vunpack.c.h.b16 %v3385
    %v4109 = vunpack.c.l.b16 %v3386
    %v4110 = vunpack.c.h.b16 %v3386
    %v4111 = vunpack.c.l.b16 %v3387
    %v4112 = vunpack.c.h.b16 %v3387
    %v4113 = vunpack.c.l.b16 %v3388
    %v4114 = vunpack.c.h.b16 %v3388
    %v4115 = vunpack.c.l.b16 %v3389
    %v4116 = vunpack.c.h.b16 %v3389
    %v4117 = vunpack.c.l.b16 %v3390
    %v4118 = vunpack.c.h.b16 %v3390
    %v4119 = vunpack.c.l.b16 %v3391
    %v4120 = vunpack.c.h.b16 %v3391
    %v4121 = vunpack.c.l.b16 %v3392
    %v4122 = vunpack.c.h.b16 %v3392
    %v4123 = vunpack.c.l.b16 %v3393
    %v4124 = vunpack.c.h.b16 %v3393
    %v4125 = vunpack.c.l.b16 %v3394
    %v4126 = vunpack.c.h.b16 %v3394
    %v4127 = vunpack.c.l.b16 %v3395
    %v4128 = vunpack.c.h.b16 %v3395
    %v4129 = vunpack.c.l.b16 %v3396
    %v4130 = vunpack.c.h.b16 %v3396
    %v4131 = vunpack.c.l.b16 %v3397
    %v4132 = vunpack.c.h.b16 %v3397
    %v4133 = vunpack.c.l.b16 %v3398
    %v4134 = vunpack.c.h.b16 %v3398
    %v4135 = vunpack.c.l.b16 %v3399
    %v4136 = vunpack.c.h.b16 %v3399
    %v4137 = vunpack.c.l.b16 %v3400
    %v4138 = vunpack.c.h.b16 %v3400
    %v4139 = vunpack.c.l.b16 %v3401
    %v4140 = vunpack.c.h.b16 %v3401
    %v4141 = vunpack.c.l.b16 %v3402
    %v4142 = vunpack.c.h.b16 %v3402
    %v4143 = vunpack.c.l.b16 %v3403
    %v4144 = vunpack.c.h.b16 %v3403
    %v4145 = vunpack.c.l.b16 %v3404
    %v4146 = vunpack.c.h.b16 %v3404
    %v4147 = vunpack.c.l.b16 %v3405
    %v4148 = vunpack.c.h.b16 %v3405
    %v4149 = vunpack.c.l.b16 %v3406
    %v4150 = vunpack.c.h.b16 %v3406
    %v4151 = vunpack.c.l.b16 %v3407
    %v4152 = vunpack.c.h.b16 %v3407
    %v4153 = vunpack.c.l.b16 %v3408
    %v4154 = vunpack.c.h.b16 %v3408
    %v4155 = vunpack.c.l.b16 %v3409
    %v4156 = vunpack.c.h.b16 %v3409
    %v4157 = vunpack.c.l.b16 %v3410
    %v4158 = vunpack.c.h.b16 %v3410
    %v4159 = vunpack.c.l.b16 %v3411
    %v4160 = vunpack.c.h.b16 %v3411
    %v4161 = vunpack.c.l.b16 %v3412
    %v4162 = vunpack.c.h.b16 %v3412
    %v4163 = vunpack.c.l.b16 %v3413
    %v4164 = vunpack.c.h.b16 %v3413
    %v4165 = vunpack.c.l.b16 %v3414
    %v4166 = vunpack.c.h.b16 %v3414
    %v4167 = vunpack.c.l.b16 %v3415
    %v4168 = vunpack.c.h.b16 %v3415
    %v4169 = vunpack.c.l.b16 %v3416
    %v4170 = vunpack.c.h.b16 %v3416
    %v4171 = vunpack.c.l.b16 %v3417
    %v4172 = vunpack.c.h.b16 %v3417
    %v4173 = vunpack.c.l.b16 %v3418
    %v4174 = vunpack.c.h.b16 %v3418
    %v4175 = vunpack.c.l.b16 %v3419
    %v4176 = vunpack.c.h.b16 %v3419
    %v4177 = vunpack.c.l.b16 %v3420
    %v4178 = vunpack.c.h.b16 %v3420
    %v4179 = vunpack.c.l.b16 %v3421
    %v4180 = vunpack.c.h.b16 %v3421
    %v4181 = vunpack.c.l.b16 %v3422
    %v4182 = vunpack.c.h.b16 %v3422
    %v4183 = vunpack.c.l.b16 %v3423
    %v4184 = vunpack.c.h.b16 %v3423
    %v4185 = vunpack.c.l.b16 %v3424
    %v4186 = vunpack.c.h.b16 %v3424
    %v4187 = vunpack.c.l.b16 %v3425
    %v4188 = vunpack.c.h.b16 %v3425
    %v4189 = vunpack.c.l.b16 %v3426
    %v4190 = vunpack.c.h.b16 %v3426
    %v4191 = vunpack.c.l.b16 %v3427
    %v4192 = vunpack.c.h.b16 %v3427
    %v4193 = vunpack.c.l.b16 %v3428
    %v4194 = vunpack.c.h.b16 %v3428
    %v4195 = vunpack.c.l.b16 %v3429
    %v4196 = vunpack.c.h.b16 %v3429
    %v4197 = vunpack.c.l.b16 %v3430
    %v4198 = vunpack.c.h.b16 %v3430
    %v4199 = vunpack.c.l.b16 %v3431
    %v4200 = vunpack.c.h.b16 %v3431
    %v4201 = vunpack.c.l.b16 %v3432
    %v4202 = vunpack.c.h.b16 %v3432
    %v4203 = vunpack.c.l.b16 %v3433
    %v4204 = vunpack.c.h.b16 %v3433
    %v4205 = vunpack.c.l.b16 %v3434
    %v4206 = vunpack.c.h.b16 %v3434
    %v4207 = vunpack.c.l.b16 %v3435
    %v4208 = vunpack.c.h.b16 %v3435
    %v4209 = vunpack.c.l.b16 %v3436
    %v4210 = vunpack.c.h.b16 %v3436
    %v4211 = vunpack.c.l.b16 %v3437
    %v4212 = vunpack.c.h.b16 %v3437
    %v4213 = vunpack.c.l.b16 %v3438
    %v4214 = vunpack.c.h.b16 %v3438
    %v4215 = vunpack.c.l.b16 %v3439
    %v4216 = vunpack.c.h.b16 %v3439
    %v4217 = vunpack.c.l.b16 %v3440
    %v4218 = vunpack.c.h.b16 %v3440
    %v4219 = vunpack.c.l.b16 %v3441
    %v4220 = vunpack.c.h.b16 %v3441
    %v4221 = vunpack.c.l.b16 %v3442
    %v4222 = vunpack.c.h.b16 %v3442
    %v4223 = vunpack.c.l.b16 %v3443
    %v4224 = vunpack.c.h.b16 %v3443
    %v4225 = vunpack.c.l.b16 %v3444
    %v4226 = vunpack.c.h.b16 %v3444
    %v4227 = vunpack.c.l.b16 %v3445
    %v4228 = vunpack.c.h.b16 %v3445
    %v4229 = vunpack.c.l.b16 %v3446
    %v4230 = vunpack.c.h.b16 %v3446
    %v4231 = vunpack.c.l.b16 %v3447
    %v4232 = vunpack.c.h.b16 %v3447
    %v4233 = vunpack.c.l.b16 %v3448
    %v4234 = vunpack.c.h.b16 %v3448
    %v4235 = vunpack.c.l.b16 %v3449
    %v4236 = vunpack.c.h.b16 %v3449
    %v4237 = vunpack.c.l.b16 %v3450
    %v4238 = vunpack.c.h.b16 %v3450
    %v4239 = vunpack.c.l.b16 %v3451
    %v4240 = vunpack.c.h.b16 %v3451
    %v4241 = vunpack.c.l.b16 %v3452
    %v4242 = vunpack.c.h.b16 %v3452
    %v4243 = vunpack.c.l.b16 %v3453
    %v4244 = vunpack.c.h.b16 %v3453
    %v4245 = vunpack.c.l.b16 %v3454
    %v4246 = vunpack.c.h.b16 %v3454
    %v4247 = vunpack.c.l.b16 %v3455
    %v4248 = vunpack.c.h.b16 %v3455
    %v4249 = vunpack.c.l.b16 %v3456
    %v4250 = vunpack.c.h.b16 %v3456
    %v4251 = vunpack.c.l.b16 %v3457
    %v4252 = vunpack.c.h.b16 %v3457
    %v4253 = vunpack.c.l.b16 %v3458
    %v4254 = vunpack.c.h.b16 %v3458
    %v4255 = vunpack.c.l.b16 %v3459
    %v4256 = vunpack.c.h.b16 %v3459
    %v4257 = vunpack.c.l.b16 %v3460
    %v4258 = vunpack.c.h.b16 %v3460
    %v4259 = vunpack.c.l.b16 %v3461
    %v4260 = vunpack.c.h.b16 %v3461
    %v4261 = vunpack.c.l.b16 %v3462
    %v4262 = vunpack.c.h.b16 %v3462
    %v4263 = vunpack.c.l.b16 %v3463
    %v4264 = vunpack.c.h.b16 %v3463
    %v4265 = vunpack.c.l.b16 %v3464
    %v4266 = vunpack.c.h.b16 %v3464
    %v4267 = vunpack.c.l.b16 %v3465
    %v4268 = vunpack.c.h.b16 %v3465
    %v4269 = vunpack.c.l.b16 %v3466
    %v4270 = vunpack.c.h.b16 %v3466
    %v4271 = vunpack.c.l.b16 %v3467
    %v4272 = vunpack.c.h.b16 %v3467
    %v4273 = vunpack.c.l.b16 %v3468
    %v4274 = vunpack.c.h.b16 %v3468
    %v4275 = vunpack.c.l.b16 %v3469
    %v4276 = vunpack.c.h.b16 %v3469
    %v4277 = vunpack.c.l.b16 %v3470
    %v4278 = vunpack.c.h.b16 %v3470
    %v4279 = vunpack.c.l.b16 %v3471
    %v4280 = vunpack.c.h.b16 %v3471
    %v4281 = vunpack.c.l.b16 %v3472
    %v4282 = vunpack.c.h.b16 %v3472
    %v4283 = vunpack.c.l.b16 %v3473
    %v4284 = vunpack.c.h.b16 %v3473
    %v4285 = vunpack.c.l.b16 %v3474
    %v4286 = vunpack.c.h.b16 %v3474
    %v4287 = vunpack.c.l.b16 %v3475
    %v4288 = vunpack.c.h.b16 %v3475
    %v4289 = vunpack.c.l.b16 %v3476
    %v4290 = vunpack.c.h.b16 %v3476
    %v4291 = vunpack.c.l.b16 %v3477
    %v4292 = vunpack.c.h.b16 %v3477
    %v4293 = vunpack.c.l.b16 %v3478
    %v4294 = vunpack.c.h.b16 %v3478
    %v4295 = vunpack.c.l.b16 %v3479
    %v4296 = vunpack.c.h.b16 %v3479
    %v4297 = vunpack.c.l.b16 %v3480
    %v4298 = vunpack.c.h.b16 %v3480
    %v4299 = vunpack.c.l.b16 %v3481
    %v4300 = vunpack.c.h.b16 %v3481
    %v4301 = vunpack.c.l.b16 %v3482
    %v4302 = vunpack.c.h.b16 %v3482
    %v4303 = vunpack.c.l.b16 %v3483
    %v4304 = vunpack.c.h.b16 %v3483
    %v4305 = vunpack.c.l.b16 %v3484
    %v4306 = vunpack.c.h.b16 %v3484
    %v4307 = vunpack.c.l.b16 %v3485
    %v4308 = vunpack.c.h.b16 %v3485
    %v4309 = vunpack.c.l.b16 %v3486
    %v4310 = vunpack.c.h.b16 %v3486
    %v4311 = vunpack.c.l.b16 %v3487
    %v4312 = vunpack.c.h.b16 %v3487
    %v4313 = vunpack.c.l.b16 %v3488
    %v4314 = vunpack.c.h.b16 %v3488
    %v4315 = vunpack.c.l.b16 %v3489
    %v4316 = vunpack.c.h.b16 %v3489
    %v4317 = vunpack.c.l.b16 %v3490
    %v4318 = vunpack.c.h.b16 %v3490
    %v4319 = vunpack.c.l.b16 %v3491
    %v4320 = vunpack.c.h.b16 %v3491
    %v4321 = vunpack.c.l.b16 %v3492
    %v4322 = vunpack.c.h.b16 %v3492
    %v4323 = vunpack.c.l.b16 %v3493
    %v4324 = vunpack.c.h.b16 %v3493
    %v4325 = vunpack.c.l.b16 %v3494
    %v4326 = vunpack.c.h.b16 %v3494
    %v4327 = vunpack.c.l.b16 %v3495
    %v4328 = vunpack.c.h.b16 %v3495
    %v4329 = vunpack.c.l.b16 %v3496
    %v4330 = vunpack.c.h.b16 %v3496
    %v4331 = vunpack.c.l.b16 %v3497
    %v4332 = vunpack.c.h.b16 %v3497
    %v4333 = vunpack.c.l.b16 %v3498
    %v4334 = vunpack.c.h.b16 %v3498
    %v4335 = vunpack.c.l.b16 %v3499
    %v4336 = vunpack.c.h.b16 %v3499
    %v4337 = vunpack.c.l.b16 %v3500
    %v4338 = vunpack.c.h.b16 %v3500
    %v4339 = vunpack.c.l.b16 %v3501
    %v4340 = vunpack.c.h.b16 %v3501
    %v4341 = vunpack.c.l.b16 %v3502
    %v4342 = vunpack.c.h.b16 %v3502
    %v4343 = vunpack.c.l.b16 %v3503
    %v4344 = vunpack.c.h.b16 %v3503
    %v4345 = vunpack.c.l.b16 %v3504
    %v4346 = vunpack.c.h.b16 %v3504
    %v4347 = vunpack.c.l.b16 %v3505
    %v4348 = vunpack.c.h.b16 %v3505
    %v4349 = vunpack.c.l.b16 %v3506
    %v4350 = vunpack.c.h.b16 %v3506
    %v4351 = vunpack.c.l.b16 %v3507
    %v4352 = vunpack.c.h.b16 %v3507
    %v4353 = vpack.c.b16 %v3849, %v3841
    %v4354 = vpack.c.b16 %v3850, %v3842
    %v4355 = vpack.c.b16 %v3851, %v3843
    %v4356 = vpack.c.b16 %v3852, %v3844
    %v4357 = vpack.c.b16 %v3853, %v3845
    %v4358 = vpack.c.b16 %v3854, %v3846
    %v4359 = vpack.c.b16 %v3855, %v3847
    %v4360 = vpack.c.b16 %v3856, %v3848
    %v4361 = vpack.c.b16 %v3865, %v3857
    %v4362 = vpack.c.b16 %v3866, %v3858
    %v4363 = vpack.c.b16 %v3867, %v3859
    %v4364 = vpack.c.b16 %v3868, %v3860
    %v4365 = vpack.c.b16 %v3869, %v3861
    %v4366 = vpack.c.b16 %v3870, %v3862
    %v4367 = vpack.c.b16 %v3871, %v3863
    %v4368 = vpack.c.b16 %v3872, %v3864
    %v4369 = vpack.c.b16 %v3881, %v3873
    %v4370 = vpack.c.b16 %v3882, %v3874
    %v4371 = vpack.c.b16 %v3883, %v3875
    %v4372 = vpack.c.b16 %v3884, %v3876
    %v4373 = vpack.c.b16 %v3885, %v3877
    %v4374 = vpack.c.b16 %v3886, %v3878
    %v4375 = vpack.c.b16 %v3887, %v3879
    %v4376 = vpack.c.b16 %v3888, %v3880
    %v4377 = vpack.c.b16 %v3897, %v3889
    %v4378 = vpack.c.b16 %v3898, %v3890
    %v4379 = vpack.c.b16 %v3899, %v3891
    %v4380 = vpack.c.b16 %v3900, %v3892
    %v4381 = vpack.c.b16 %v3901, %v3893
    %v4382 = vpack.c.b16 %v3902, %v3894
    %v4383 = vpack.c.b16 %v3903, %v3895
    %v4384 = vpack.c.b16 %v3904, %v3896
    %v4385 = vpack.c.b16 %v3913, %v3905
    %v4386 = vpack.c.b16 %v3914, %v3906
    %v4387 = vpack.c.b16 %v3915, %v3907
    %v4388 = vpack.c.b16 %v3916, %v3908
    %v4389 = vpack.c.b16 %v3917, %v3909
    %v4390 = vpack.c.b16 %v3918, %v3910
    %v4391 = vpack.c.b16 %v3919, %v3911
    %v4392 = vpack.c.b16 %v3920, %v3912
    %v4393 = vpack.c.b16 %v3929, %v3921
    %v4394 = vpack.c.b16 %v3930, %v3922
    %v4395 = vpack.c.b16 %v3931, %v3923
    %v4396 = vpack.c.b16 %v3932, %v3924
    %v4397 = vpack.c.b16 %v3933, %v3925
    %v4398 = vpack.c.b16 %v3934, %v3926
    %v4399 = vpack.c.b16 %v3935, %v3927
    %v4400 = vpack.c.b16 %v3936, %v3928
    %v4401 = vpack.c.b16 %v3945, %v3937
    %v4402 = vpack.c.b16 %v3946, %v3938
    %v4403 = vpack.c.b16 %v3947, %v3939
    %v4404 = vpack.c.b16 %v3948, %v3940
    %v4405 = vpack.c.b16 %v3949, %v3941
    %v4406 = vpack.c.b16 %v3950, %v3942
    %v4407 = vpack.c.b16 %v3951, %v3943
    %v4408 = vpack.c.b16 %v3952, %v3944
    %v4409 = vpack.c.b16 %v3961, %v3953
    %v4410 = vpack.c.b16 %v3962, %v3954
    %v4411 = vpack.c.b16 %v3963, %v3955
    %v4412 = vpack.c.b16 %v3964, %v3956
    %v4413 = vpack.c.b16 %v3965, %v3957
    %v4414 = vpack.c.b16 %v3966, %v3958
    %v4415 = vpack.c.b16 %v3967, %v3959
    %v4416 = vpack.c.b16 %v3968, %v3960
    %v4417 = vpack.c.b16 %v3977, %v3969
    %v4418 = vpack.c.b16 %v3978, %v3970
    %v4419 = vpack.c.b16 %v3979, %v3971
    %v4420 = vpack.c.b16 %v3980, %v3972
    %v4421 = vpack.c.b16 %v3981, %v3973
    %v4422 = vpack.c.b16 %v3982, %v3974
    %v4423 = vpack.c.b16 %v3983, %v3975
    %v4424 = vpack.c.b16 %v3984, %v3976
    %v4425 = vpack.c.b16 %v3993, %v3985
    %v4426 = vpack.c.b16 %v3994, %v3986
    %v4427 = vpack.c.b16 %v3995, %v3987
    %v4428 = vpack.c.b16 %v3996, %v3988
    %v4429 = vpack.c.b16 %v3997, %v3989
    %v4430 = vpack.c.b16 %v3998, %v3990
    %v4431 = vpack.c.b16 %v3999, %v3991
    %v4432 = vpack.c.b16 %v4000, %v3992
    %v4433 = vpack.c.b16 %v4009, %v4001
    %v4434 = vpack.c.b16 %v4010, %v4002
    %v4435 = vpack.c.b16 %v4011, %v4003
    %v4436 = vpack.c.b16 %v4012, %v4004
    %v4437 = vpack.c.b16 %v4013, %v4005
    %v4438 = vpack.c.b16 %v4014, %v4006
    %v4439 = vpack.c.b16 %v4015, %v4007
    %v4440 = vpack.c.b16 %v4016, %v4008
    %v4441 = vpack.c.b16 %v4025, %v4017
    %v4442 = vpack.c.b16 %v4026, %v4018
    %v4443 = vpack.c.b16 %v4027, %v4019
    %v4444 = vpack.c.b16 %v4028, %v4020
    %v4445 = vpack.c.b16 %v4029, %v4021
    %v4446 = vpack.c.b16 %v4030, %v4022
    %v4447 = vpack.c.b16 %v4031, %v4023
    %v4448 = vpack.c.b16 %v4032, %v4024
    %v4449 = vpack.c.b16 %v4041, %v4033
    %v4450 = vpack.c.b16 %v4042, %v4034
    %v4451 = vpack.c.b16 %v4043, %v4035
    %v4452 = vpack.c.b16 %v4044, %v4036
    %v4453 = vpack.c.b16 %v4045, %v4037
    %v4454 = vpack.c.b16 %v4046, %v4038
    %v4455 = vpack.c.b16 %v4047, %v4039
    %v4456 = vpack.c.b16 %v4048, %v4040
    %v4457 = vpack.c.b16 %v4057, %v4049
    %v4458 = vpack.c.b16 %v4058, %v4050
    %v4459 = vpack.c.b16 %v4059, %v4051
    %v4460 = vpack.c.b16 %v4060, %v4052
    %v4461 = vpack.c.b16 %v4061, %v4053
    %v4462 = vpack.c.b16 %v4062, %v4054
    %v4463 = vpack.c.b16 %v4063, %v4055
    %v4464 = vpack.c.b16 %v4064, %v4056
    %v4465 = vpack.c.b16 %v4073, %v4065
    %v4466 = vpack.c.b16 %v4074, %v4066
    %v4467 = vpack.c.b16 %v4075, %v4067
    %v4468 = vpack.c.b16 %v4076, %v4068
    %v4469 = vpack.c.b16 %v4077, %v4069
    %v4470 = vpack.c.b16 %v4078, %v4070
    %v4471 = vpack.c.b16 %v4079, %v4071
    %v4472 = vpack.c.b16 %v4080, %v4072
    %v4473 = vpack.c.b16 %v4089, %v4081
    %v4474 = vpack.c.b16 %v4090, %v4082
    %v4475 = vpack.c.b16 %v4091, %v4083
    %v4476 = vpack.c.b16 %v4092, %v4084
    %v4477 = vpack.c.b16 %v4093, %v4085
    %v4478 = vpack.c.b16 %v4094, %v4086
    %v4479 = vpack.c.b16 %v4095, %v4087
    %v4480 = vpack.c.b16 %v4096, %v4088
    %v4481 = vpack.c.b16 %v4105, %v4097
    %v4482 = vpack.c.b16 %v4106, %v4098
    %v4483 = vpack.c.b16 %v4107, %v4099
    %v4484 = vpack.c.b16 %v4108, %v4100
    %v4485 = vpack.c.b16 %v4109, %v4101
    %v4486 = vpack.c.b16 %v4110, %v4102
    %v4487 = vpack.c.b16 %v4111, %v4103
    %v4488 = vpack.c.b16 %v4112, %v4104
    %v4489 = vpack.c.b16 %v4121, %v4113
    %v4490 = vpack.c.b16 %v4122, %v4114
    %v4491 = vpack.c.b16 %v4123, %v4115
    %v4492 = vpack.c.b16 %v4124, %v4116
    %v4493 = vpack.c.b16 %v4125, %v4117
    %v4494 = vpack.c.b16 %v4126, %v4118
    %v4495 = vpack.c.b16 %v4127, %v4119
    %v4496 = vpack.c.b16 %v4128, %v4120
    %v4497 = vpack.c.b16 %v4137, %v4129
    %v4498 = vpack.c.b16 %v4138, %v4130
    %v4499 = vpack.c.b16 %v4139, %v4131
    %v4500 = vpack.c.b16 %v4140, %v4132
    %v4501 = vpack.c.b16 %v4141, %v4133
    %v4502 = vpack.c.b16 %v4142, %v4134
    %v4503 = vpack.c.b16 %v4143, %v4135
    %v4504 = vpack.c.b16 %v4144, %v4136
    %v4505 = vpack.c.b16 %v4153, %v4145
    %v4506 = vpack.c.b16 %v4154, %v4146
    %v4507 = vpack.c.b16 %v4155, %v4147
    %v4508 = vpack.c.b16 %v4156, %v4148
    %v4509 = vpack.c.b16 %v4157, %v4149
    %v4510 = vpack.c.b16 %v4158, %v4150
    %v4511 = vpack.c.b16 %v4159, %v4151
    %v4512 = vpack.c.b16 %v4160, %v4152
    %v4513 = vpack.c.b16 %v4169, %v4161
    %v4514 = vpack.c.b16 %v4170, %v4162
    %v4515 = vpack.c.b16 %v4171, %v4163
    %v4516 = vpack.c.b16 %v4172, %v4164
    %v4517 = vpack.c.b16 %v4173, %v4165
    %v4518 = vpack.c.b16 %v4174, %v4166
    %v4519 = vpack.c.b16 %v4175, %v4167
    %v4520 = vpack.c.b16 %v4176, %v4168
    %v4521 = vpack.c.b16 %v4185, %v4177
    %v4522 = vpack.c.b16 %v4186, %v4178
    %v4523 = vpack.c.b16 %v4187, %v4179
    %v4524 = vpack.c.b16 %v4188, %v4180
    %v4525 = vpack.c.b16 %v4189, %v4181
    %v4526 = vpack.c.b16 %v4190, %v4182
    %v4527 = vpack.c.b16 %v4191, %v4183
    %v4528 = vpack.c.b16 %v4192, %v4184
    %v4529 = vpack.c.b16 %v4201, %v4193
    %v4530 = vpack.c.b16 %v4202, %v4194
    %v4531 = vpack.c.b16 %v4203, %v4195
    %v4532 = vpack.c.b16 %v4204, %v4196
    %v4533 = vpack.c.b16 %v4205, %v4197
    %v4534 = vpack.c.b16 %v4206, %v4198
    %v4535 = vpack.c.b16 %v4207, %v4199
    %v4536 = vpack.c.b16 %v4208, %v4200
    %v4537 = vpack.c.b16 %v4217, %v4209
    %v4538 = vpack.c.b16 %v4218, %v4210
    %v4539 = vpack.c.b16 %v4219, %v4211
    %v4540 = vpack.c.b16 %v4220, %v4212
    %v4541 = vpack.c.b16 %v4221, %v4213
    %v4542 = vpack.c.b16 %v4222, %v4214
    %v4543 = vpack.c.b16 %v4223, %v4215
    %v4544 = vpack.c.b16 %v4224, %v4216
    %v4545 = vpack.c.b16 %v4233, %v4225
    %v4546 = vpack.c.b16 %v4234, %v4226
    %v4547 = vpack.c.b16 %v4235, %v4227
    %v4548 = vpack.c.b16 %v4236, %v4228
    %v4549 = vpack.c.b16 %v4237, %v4229
    %v4550 = vpack.c.b16 %v4238, %v4230
    %v4551 = vpack.c.b16 %v4239, %v4231
    %v4552 = vpack.c.b16 %v4240, %v4232
    %v4553 = vpack.c.b16 %v4249, %v4241
    %v4554 = vpack.c.b16 %v4250, %v4242
    %v4555 = vpack.c.b16 %v4251, %v4243
    %v4556 = vpack.c.b16 %v4252, %v4244
    %v4557 = vpack.c.b16 %v4253, %v4245
    %v4558 = vpack.c.b16 %v4254, %v4246
    %v4559 = vpack.c.b16 %v4255, %v4247
    %v4560 = vpack.c.b16 %v4256, %v4248
    %v4561 = vpack.c.b16 %v4265, %v4257
    %v4562 = vpack.c.b16 %v4266, %v4258
    %v4563 = vpack.c.b16 %v4267, %v4259
    %v4564 = vpack.c.b16 %v4268, %v4260
    %v4565 = vpack.c.b16 %v4269, %v4261
    %v4566 = vpack.c.b16 %v4270, %v4262
    %v4567 = vpack.c.b16 %v4271, %v4263
    %v4568 = vpack.c.b16 %v4272, %v4264
    %v4569 = vpack.c.b16 %v4281, %v4273
    %v4570 = vpack.c.b16 %v4282, %v4274
    %v4571 = vpack.c.b16 %v4283, %v4275
    %v4572 = vpack.c.b16 %v4284, %v4276
    %v4573 = vpack.c.b16 %v4285, %v4277
    %v4574 = vpack.c.b16 %v4286, %v4278
    %v4575 = vpack.c.b16 %v4287, %v4279
    %v4576 = vpack.c.b16 %v4288, %v4280
    %v4577 = vpack.c.b16 %v4297, %v4289
    %v4578 = vpack.c.b16 %v4298, %v4290
    %v4579 = vpack.c.b16 %v4299, %v4291
    %v4580 = vpack.c.b16 %v4300, %v4292
    %v4581 = vpack.c.b16 %v4301, %v4293
    %v4582 = vpack.c.b16 %v4302, %v4294
    %v4583 = vpack.c.b16 %v4303, %v4295
    %v4584 = vpack.c.b16 %v4304, %v4296
    %v4585 = vpack.c.b16 %v4313, %v4305
    %v4586 = vpack.c.b16 %v4314, %v4306
    %v4587 = vpack.c.b16 %v4315, %v4307
    %v4588 = vpack.c.b16 %v4316, %v4308
    %v4589 = vpack.c.b16 %v4317, %v4309
    %v4590 = vpack.c.b16 %v4318, %v4310
    %v4591 = vpack.c.b16 %v4319, %v4311
    %v4592 = vpack.c.b16 %v4320, %v4312
    %v4593 = vpack.c.b16 %v4329, %v4321
    %v4594 = vpack.c.b16 %v4330, %v4322
    %v4595 = vpack.c.b16 %v4331, %v4323
    %v4596 = vpack.c.b16 %v4332, %v4324
    %v4597 = vpack.c.b16 %v4333, %v4325
    %v4598 = vpack.c.b16 %v4334, %v4326
    %v4599 = vpack.c.b16 %v4335, %v4327
    %v4600 = vpack.c.b16 %v4336, %v4328
    %v4601 = vpack.c.b16 %v4345, %v4337
    %v4602 = vpack.c.b16 %v4346, %v4338
    %v4603 = vpack.c.b16 %v4347, %v4339
    %v4604 = vpack.c.b16 %v4348, %v4340
    %v4605 = vpack.c.b16 %v4349, %v4341
    %v4606 = vpack.c.b16 %v4350, %v4342
    %v4607 = vpack.c.b16 %v4351, %v4343
    %v4608 = vpack.c.b16 %v4352, %v4344
    %4865 = vmatprep.subr.bf16.mxu0 %v4410
    %4866 = vmatpush1.bf16.msra.mxu0 %v4409
    %4867 = vmatprep.subr.bf16.mxu0 %v4402
    %4868 = vmatpush1.bf16.msra.mxu0 %v4401
    %4869 = vmatprep.subr.bf16.mxu0 %v4394
    %4870 = vmatpush1.bf16.msra.mxu0 %v4393
    %4871 = vmatprep.subr.bf16.mxu0 %v4386
    %4872 = vmatpush1.bf16.msra.mxu0 %v4385
    %4873 = vmatprep.subr.bf16.mxu0 %v4378
    %4874 = vmatpush1.bf16.msra.mxu0 %v4377
    %4875 = vmatprep.subr.bf16.mxu0 %v4370
    %4876 = vmatpush1.bf16.msra.mxu0 %v4369
    %4877 = vmatprep.subr.bf16.mxu0 %v4362
    %4878 = vmatpush1.bf16.msra.mxu0 %v4361
    %4879 = vmatprep.subr.bf16.mxu0 %v4354
    %4880 = vmatpush1.bf16.msra.mxu0 %v4353
    %4881 = vmatprep.subr.bf16.mxu0 %v4474
    %4882 = vmatpush2.bf16.msra.mxu0 %v4473
    %4883 = vmatprep.subr.bf16.mxu0 %v4466
    %4884 = vmatpush2.bf16.msra.mxu0 %v4465
    %4885 = vmatprep.subr.bf16.mxu0 %v4458
    %4886 = vmatpush2.bf16.msra.mxu0 %v4457
    %4887 = vmatprep.subr.bf16.mxu0 %v4450
    %4888 = vmatpush2.bf16.msra.mxu0 %v4449
    %4889 = vmatprep.subr.bf16.mxu0 %v4442
    %4890 = vmatpush2.bf16.msra.mxu0 %v4441
    %4891 = vmatprep.subr.bf16.mxu0 %v4434
    %4892 = vmatpush2.bf16.msra.mxu0 %v4433
    %4893 = vmatprep.subr.bf16.mxu0 %v4426
    %4894 = vmatpush2.bf16.msra.mxu0 %v4425
    %4895 = vmatprep.subr.bf16.mxu0 %v4418
    %4896 = vmatpush2.bf16.msra.mxu0 %v4417
    %4897 = vmatprep.mubr.bf16.mxu0 %v3245
    %4898 = vmatmul.mubr.bf16.gmra.mxu0 %v3244
    %v4899 = vpop.f32.mrf.mxu0
    %v4900 = vadd.f32 %v3556, %v4899
    %v4901 = vpop.f32.mrf.mxu0
    %v4902 = vadd.f32 %v3560, %v4901
    %v4903 = vpop.f32.mrf.mxu0
    %v4904 = vpop.f32.mrf.mxu0
    %4905 = vdwg.mxu0
    %4906 = vmatprep.subr.bf16.mxu0 %v4538
    %4907 = vmatpush1.bf16.msra.mxu0 %v4537
    %4908 = vmatprep.subr.bf16.mxu0 %v4530
    %4909 = vmatpush1.bf16.msra.mxu0 %v4529
    %4910 = vmatprep.subr.bf16.mxu0 %v4522
    %4911 = vmatpush1.bf16.msra.mxu0 %v4521
    %4912 = vmatprep.subr.bf16.mxu0 %v4514
    %4913 = vmatpush1.bf16.msra.mxu0 %v4513
    %4914 = vmatprep.subr.bf16.mxu0 %v4506
    %4915 = vmatpush1.bf16.msra.mxu0 %v4505
    %4916 = vmatprep.subr.bf16.mxu0 %v4498
    %4917 = vmatpush1.bf16.msra.mxu0 %v4497
    %4918 = vmatprep.subr.bf16.mxu0 %v4490
    %4919 = vmatpush1.bf16.msra.mxu0 %v4489
    %4920 = vmatprep.subr.bf16.mxu0 %v4482
    %4921 = vmatpush1.bf16.msra.mxu0 %v4481
    %4922 = vmatprep.subr.bf16.mxu0 %v4602
    %4923 = vmatpush2.bf16.msra.mxu0 %v4601
    %4924 = vmatprep.subr.bf16.mxu0 %v4594
    %4925 = vmatpush2.bf16.msra.mxu0 %v4593
    %4926 = vmatprep.subr.bf16.mxu0 %v4586
    %4927 = vmatpush2.bf16.msra.mxu0 %v4585
    %4928 = vmatprep.subr.bf16.mxu0 %v4578
    %4929 = vmatpush2.bf16.msra.mxu0 %v4577
    %4930 = vmatprep.subr.bf16.mxu0 %v4570
    %4931 = vmatpush2.bf16.msra.mxu0 %v4569
    %4932 = vmatprep.subr.bf16.mxu0 %v4562
    %4933 = vmatpush2.bf16.msra.mxu0 %v4561
    %4934 = vmatprep.subr.bf16.mxu0 %v4554
    %4935 = vmatpush2.bf16.msra.mxu0 %v4553
    %4936 = vmatprep.subr.bf16.mxu0 %v4546
    %4937 = vmatpush2.bf16.msra.mxu0 %v4545
    %4938 = vmatprep.mubr.bf16.mxu0 %v3247
    %4939 = vmatmul.mubr.bf16.gmra.mxu0 %v3246
    %v4940 = vpop.f32.mrf.mxu0
    %v4941 = vadd.f32 %v4900, %v4940
    %v4942 = vpop.f32.mrf.mxu0
    %v4943 = vadd.f32 %v4902, %v4942
    %v4944 = vpop.f32.mrf.mxu0
    %v4945 = vpop.f32.mrf.mxu0
    %4946 = vdwg.mxu0
    %4947 = vmatprep.subr.bf16.mxu0 %v4412
    %4948 = vmatpush1.bf16.msra.mxu0 %v4411
    %4949 = vmatprep.subr.bf16.mxu0 %v4404
    %4950 = vmatpush1.bf16.msra.mxu0 %v4403
    %4951 = vmatprep.subr.bf16.mxu0 %v4396
    %4952 = vmatpush1.bf16.msra.mxu0 %v4395
    %4953 = vmatprep.subr.bf16.mxu0 %v4388
    %4954 = vmatpush1.bf16.msra.mxu0 %v4387
    %4955 = vmatprep.subr.bf16.mxu0 %v4380
    %4956 = vmatpush1.bf16.msra.mxu0 %v4379
    %4957 = vmatprep.subr.bf16.mxu0 %v4372
    %4958 = vmatpush1.bf16.msra.mxu0 %v4371
    %4959 = vmatprep.subr.bf16.mxu0 %v4364
    %4960 = vmatpush1.bf16.msra.mxu0 %v4363
    %4961 = vmatprep.subr.bf16.mxu0 %v4356
    %4962 = vmatpush1.bf16.msra.mxu0 %v4355
    %4963 = vmatprep.subr.bf16.mxu0 %v4476
    %4964 = vmatpush2.bf16.msra.mxu0 %v4475
    %4965 = vmatprep.subr.bf16.mxu0 %v4468
    %4966 = vmatpush2.bf16.msra.mxu0 %v4467
    %4967 = vmatprep.subr.bf16.mxu0 %v4460
    %4968 = vmatpush2.bf16.msra.mxu0 %v4459
    %4969 = vmatprep.subr.bf16.mxu0 %v4452
    %4970 = vmatpush2.bf16.msra.mxu0 %v4451
    %4971 = vmatprep.subr.bf16.mxu0 %v4444
    %4972 = vmatpush2.bf16.msra.mxu0 %v4443
    %4973 = vmatprep.subr.bf16.mxu0 %v4436
    %4974 = vmatpush2.bf16.msra.mxu0 %v4435
    %4975 = vmatprep.subr.bf16.mxu0 %v4428
    %4976 = vmatpush2.bf16.msra.mxu0 %v4427
    %4977 = vmatprep.subr.bf16.mxu0 %v4420
    %4978 = vmatpush2.bf16.msra.mxu0 %v4419
    %4979 = vmatprep.mubr.bf16.mxu0 %v3245
    %4980 = vmatmul.mubr.bf16.gmra.mxu0 %v3244
    %v4981 = vpop.f32.mrf.mxu0
    %v4982 = vadd.f32 %v3564, %v4981
    %v4983 = vpop.f32.mrf.mxu0
    %v4984 = vadd.f32 %v3568, %v4983
    %v4985 = vpop.f32.mrf.mxu0
    %v4986 = vpop.f32.mrf.mxu0
    %4987 = vdwg.mxu0
    %4988 = vmatprep.subr.bf16.mxu0 %v4540
    %4989 = vmatpush1.bf16.msra.mxu0 %v4539
    %4990 = vmatprep.subr.bf16.mxu0 %v4532
    %4991 = vmatpush1.bf16.msra.mxu0 %v4531
    %4992 = vmatprep.subr.bf16.mxu0 %v4524
    %4993 = vmatpush1.bf16.msra.mxu0 %v4523
    %4994 = vmatprep.subr.bf16.mxu0 %v4516
    %4995 = vmatpush1.bf16.msra.mxu0 %v4515
    %4996 = vmatprep.subr.bf16.mxu0 %v4508
    %4997 = vmatpush1.bf16.msra.mxu0 %v4507
    %4998 = vmatprep.subr.bf16.mxu0 %v4500
    %4999 = vmatpush1.bf16.msra.mxu0 %v4499
    %5000 = vmatprep.subr.bf16.mxu0 %v4492
    %5001 = vmatpush1.bf16.msra.mxu0 %v4491
    %5002 = vmatprep.subr.bf16.mxu0 %v4484
    %5003 = vmatpush1.bf16.msra.mxu0 %v4483
    %5004 = vmatprep.subr.bf16.mxu0 %v4604
    %5005 = vmatpush2.bf16.msra.mxu0 %v4603
    %5006 = vmatprep.subr.bf16.mxu0 %v4596
    %5007 = vmatpush2.bf16.msra.mxu0 %v4595
    %5008 = vmatprep.subr.bf16.mxu0 %v4588
    %5009 = vmatpush2.bf16.msra.mxu0 %v4587
    %5010 = vmatprep.subr.bf16.mxu0 %v4580
    %5011 = vmatpush2.bf16.msra.mxu0 %v4579
    %5012 = vmatprep.subr.bf16.mxu0 %v4572
    %5013 = vmatpush2.bf16.msra.mxu0 %v4571
    %5014 = vmatprep.subr.bf16.mxu0 %v4564
    %5015 = vmatpush2.bf16.msra.mxu0 %v4563
    %5016 = vmatprep.subr.bf16.mxu0 %v4556
    %5017 = vmatpush2.bf16.msra.mxu0 %v4555
    %5018 = vmatprep.subr.bf16.mxu0 %v4548
    %5019 = vmatpush2.bf16.msra.mxu0 %v4547
    %5020 = vmatprep.mubr.bf16.mxu0 %v3247
    %5021 = vmatmul.mubr.bf16.gmra.mxu0 %v3246
    %v5022 = vpop.f32.mrf.mxu0
    %v5023 = vadd.f32 %v4982, %v5022
    %v5024 = vpop.f32.mrf.mxu0
    %v5025 = vadd.f32 %v4984, %v5024
    %v5026 = vpop.f32.mrf.mxu0
    %v5027 = vpop.f32.mrf.mxu0
    %5028 = vdwg.mxu0
    %5029 = vmatprep.subr.bf16.mxu0 %v4414
    %5030 = vmatpush1.bf16.msra.mxu0 %v4413
    %5031 = vmatprep.subr.bf16.mxu0 %v4406
    %5032 = vmatpush1.bf16.msra.mxu0 %v4405
    %5033 = vmatprep.subr.bf16.mxu0 %v4398
    %5034 = vmatpush1.bf16.msra.mxu0 %v4397
    %5035 = vmatprep.subr.bf16.mxu0 %v4390
    %5036 = vmatpush1.bf16.msra.mxu0 %v4389
    %5037 = vmatprep.subr.bf16.mxu0 %v4382
    %5038 = vmatpush1.bf16.msra.mxu0 %v4381
    %5039 = vmatprep.subr.bf16.mxu0 %v4374
    %5040 = vmatpush1.bf16.msra.mxu0 %v4373
    %5041 = vmatprep.subr.bf16.mxu0 %v4366
    %5042 = vmatpush1.bf16.msra.mxu0 %v4365
    %5043 = vmatprep.subr.bf16.mxu0 %v4358
    %5044 = vmatpush1.bf16.msra.mxu0 %v4357
    %5045 = vmatprep.subr.bf16.mxu0 %v4478
    %5046 = vmatpush2.bf16.msra.mxu0 %v4477
    %5047 = vmatprep.subr.bf16.mxu0 %v4470
    %5048 = vmatpush2.bf16.msra.mxu0 %v4469
    %5049 = vmatprep.subr.bf16.mxu0 %v4462
    %5050 = vmatpush2.bf16.msra.mxu0 %v4461
    %5051 = vmatprep.subr.bf16.mxu0 %v4454
    %5052 = vmatpush2.bf16.msra.mxu0 %v4453
    %5053 = vmatprep.subr.bf16.mxu0 %v4446
    %5054 = vmatpush2.bf16.msra.mxu0 %v4445
    %5055 = vmatprep.subr.bf16.mxu0 %v4438
    %5056 = vmatpush2.bf16.msra.mxu0 %v4437
    %5057 = vmatprep.subr.bf16.mxu0 %v4430
    %5058 = vmatpush2.bf16.msra.mxu0 %v4429
    %5059 = vmatprep.subr.bf16.mxu0 %v4422
    %5060 = vmatpush2.bf16.msra.mxu0 %v4421
    %5061 = vmatprep.mubr.bf16.mxu0 %v3245
    %5062 = vmatmul.mubr.bf16.gmra.mxu0 %v3244
    %v5063 = vpop.f32.mrf.mxu0
    %v5064 = vadd.f32 %v3572, %v5063
    %v5065 = vpop.f32.mrf.mxu0
    %v5066 = vadd.f32 %v3576, %v5065
    %v5067 = vpop.f32.mrf.mxu0
    %v5068 = vpop.f32.mrf.mxu0
    %5069 = vdwg.mxu0
    %5070 = vmatprep.subr.bf16.mxu0 %v4542
    %5071 = vmatpush1.bf16.msra.mxu0 %v4541
    %5072 = vmatprep.subr.bf16.mxu0 %v4534
    %5073 = vmatpush1.bf16.msra.mxu0 %v4533
    %5074 = vmatprep.subr.bf16.mxu0 %v4526
    %5075 = vmatpush1.bf16.msra.mxu0 %v4525
    %5076 = vmatprep.subr.bf16.mxu0 %v4518
    %5077 = vmatpush1.bf16.msra.mxu0 %v4517
    %5078 = vmatprep.subr.bf16.mxu0 %v4510
    %5079 = vmatpush1.bf16.msra.mxu0 %v4509
    %5080 = vmatprep.subr.bf16.mxu0 %v4502
    %5081 = vmatpush1.bf16.msra.mxu0 %v4501
    %5082 = vmatprep.subr.bf16.mxu0 %v4494
    %5083 = vmatpush1.bf16.msra.mxu0 %v4493
    %5084 = vmatprep.subr.bf16.mxu0 %v4486
    %5085 = vmatpush1.bf16.msra.mxu0 %v4485
    %5086 = vmatprep.subr.bf16.mxu0 %v4606
    %5087 = vmatpush2.bf16.msra.mxu0 %v4605
    %5088 = vmatprep.subr.bf16.mxu0 %v4598
    %5089 = vmatpush2.bf16.msra.mxu0 %v4597
    %5090 = vmatprep.subr.bf16.mxu0 %v4590
    %5091 = vmatpush2.bf16.msra.mxu0 %v4589
    %5092 = vmatprep.subr.bf16.mxu0 %v4582
    %5093 = vmatpush2.bf16.msra.mxu0 %v4581
    %5094 = vmatprep.subr.bf16.mxu0 %v4574
    %5095 = vmatpush2.bf16.msra.mxu0 %v4573
    %5096 = vmatprep.subr.bf16.mxu0 %v4566
    %5097 = vmatpush2.bf16.msra.mxu0 %v4565
    %5098 = vmatprep.subr.bf16.mxu0 %v4558
    %5099 = vmatpush2.bf16.msra.mxu0 %v4557
    %5100 = vmatprep.subr.bf16.mxu0 %v4550
    %5101 = vmatpush2.bf16.msra.mxu0 %v4549
    %5102 = vmatprep.mubr.bf16.mxu0 %v3247
    %5103 = vmatmul.mubr.bf16.gmra.mxu0 %v3246
    %v5104 = vpop.f32.mrf.mxu0
    %v5105 = vadd.f32 %v5064, %v5104
    %v5106 = vpop.f32.mrf.mxu0
    %v5107 = vadd.f32 %v5066, %v5106
    %v5108 = vpop.f32.mrf.mxu0
    %v5109 = vpop.f32.mrf.mxu0
    %5110 = vdwg.mxu0
    %5111 = vmatprep.subr.bf16.mxu0 %v4416
    %5112 = vmatpush1.bf16.msra.mxu0 %v4415
    %5113 = vmatprep.subr.bf16.mxu0 %v4408
    %5114 = vmatpush1.bf16.msra.mxu0 %v4407
    %5115 = vmatprep.subr.bf16.mxu0 %v4400
    %5116 = vmatpush1.bf16.msra.mxu0 %v4399
    %5117 = vmatprep.subr.bf16.mxu0 %v4392
    %5118 = vmatpush1.bf16.msra.mxu0 %v4391
    %5119 = vmatprep.subr.bf16.mxu0 %v4384
    %5120 = vmatpush1.bf16.msra.mxu0 %v4383
    %5121 = vmatprep.subr.bf16.mxu0 %v4376
    %5122 = vmatpush1.bf16.msra.mxu0 %v4375
    %5123 = vmatprep.subr.bf16.mxu0 %v4368
    %5124 = vmatpush1.bf16.msra.mxu0 %v4367
    %5125 = vmatprep.subr.bf16.mxu0 %v4360
    %5126 = vmatpush1.bf16.msra.mxu0 %v4359
    %5127 = vmatprep.subr.bf16.mxu0 %v4480
    %5128 = vmatpush2.bf16.msra.mxu0 %v4479
    %5129 = vmatprep.subr.bf16.mxu0 %v4472
    %5130 = vmatpush2.bf16.msra.mxu0 %v4471
    %5131 = vmatprep.subr.bf16.mxu0 %v4464
    %5132 = vmatpush2.bf16.msra.mxu0 %v4463
    %5133 = vmatprep.subr.bf16.mxu0 %v4456
    %5134 = vmatpush2.bf16.msra.mxu0 %v4455
    %5135 = vmatprep.subr.bf16.mxu0 %v4448
    %5136 = vmatpush2.bf16.msra.mxu0 %v4447
    %5137 = vmatprep.subr.bf16.mxu0 %v4440
    %5138 = vmatpush2.bf16.msra.mxu0 %v4439
    %5139 = vmatprep.subr.bf16.mxu0 %v4432
    %5140 = vmatpush2.bf16.msra.mxu0 %v4431
    %5141 = vmatprep.subr.bf16.mxu0 %v4424
    %5142 = vmatpush2.bf16.msra.mxu0 %v4423
    %5143 = vmatprep.mubr.bf16.mxu0 %v3245
    %5144 = vmatmul.mubr.bf16.gmra.mxu0 %v3244
    %v5145 = vpop.f32.mrf.mxu0
    %v5146 = vadd.f32 %v3580, %v5145
    %v5147 = vpop.f32.mrf.mxu0
    %v5148 = vadd.f32 %v3584, %v5147
    %v5149 = vpop.f32.mrf.mxu0
    %v5150 = vpop.f32.mrf.mxu0
    %5151 = vdwg.mxu0
    %5152 = vmatprep.subr.bf16.mxu0 %v4544
    %5153 = vmatpush1.bf16.msra.mxu0 %v4543
    %5154 = vmatprep.subr.bf16.mxu0 %v4536
    %5155 = vmatpush1.bf16.msra.mxu0 %v4535
    %5156 = vmatprep.subr.bf16.mxu0 %v4528
    %5157 = vmatpush1.bf16.msra.mxu0 %v4527
    %5158 = vmatprep.subr.bf16.mxu0 %v4520
    %5159 = vmatpush1.bf16.msra.mxu0 %v4519
    %5160 = vmatprep.subr.bf16.mxu0 %v4512
    %5161 = vmatpush1.bf16.msra.mxu0 %v4511
    %5162 = vmatprep.subr.bf16.mxu0 %v4504
    %5163 = vmatpush1.bf16.msra.mxu0 %v4503
    %5164 = vmatprep.subr.bf16.mxu0 %v4496
    %5165 = vmatpush1.bf16.msra.mxu0 %v4495
    %5166 = vmatprep.subr.bf16.mxu0 %v4488
    %5167 = vmatpush1.bf16.msra.mxu0 %v4487
    %5168 = vmatprep.subr.bf16.mxu0 %v4608
    %5169 = vmatpush2.bf16.msra.mxu0 %v4607
    %5170 = vmatprep.subr.bf16.mxu0 %v4600
    %5171 = vmatpush2.bf16.msra.mxu0 %v4599
    %5172 = vmatprep.subr.bf16.mxu0 %v4592
    %5173 = vmatpush2.bf16.msra.mxu0 %v4591
    %5174 = vmatprep.subr.bf16.mxu0 %v4584
    %5175 = vmatpush2.bf16.msra.mxu0 %v4583
    %5176 = vmatprep.subr.bf16.mxu0 %v4576
    %5177 = vmatpush2.bf16.msra.mxu0 %v4575
    %5178 = vmatprep.subr.bf16.mxu0 %v4568
    %5179 = vmatpush2.bf16.msra.mxu0 %v4567
    %5180 = vmatprep.subr.bf16.mxu0 %v4560
    %5181 = vmatpush2.bf16.msra.mxu0 %v4559
    %5182 = vmatprep.subr.bf16.mxu0 %v4552
    %5183 = vmatpush2.bf16.msra.mxu0 %v4551
    %5184 = vmatprep.mubr.bf16.mxu0 %v3247
    %5185 = vmatmul.mubr.bf16.gmra.mxu0 %v3246
    %v5186 = vpop.f32.mrf.mxu0
    %v5187 = vadd.f32 %v5146, %v5186
    %v5188 = vpop.f32.mrf.mxu0
    %v5189 = vadd.f32 %v5148, %v5188
    %v5190 = vpop.f32.mrf.mxu0
    %v5191 = vpop.f32.mrf.mxu0
    %5192 = vdwg.mxu0
    %v5193 = vxor.u32 %v4941, 2147483648
    %v5194 = vxor.u32 %v4943, 2147483648
    %v5195 = vxor.u32 %v5023, 2147483648
    %v5196 = vxor.u32 %v5025, 2147483648
    %v5197 = vxor.u32 %v5105, 2147483648
    %v5198 = vxor.u32 %v5107, 2147483648
    %v5199 = vxor.u32 %v5187, 2147483648
    %v5200 = vxor.u32 %v5189, 2147483648
    %v5201 = vmul.f32 %v5193, 1.442695
    %v5202 = vpow.pop %v5201
    %v5203 = vmul.f32 %v5194, 1.442695
    %v5204 = vpow.pop %v5203
    %v5205 = vmul.f32 %v5195, 1.442695
    %v5206 = vpow.pop %v5205
    %v5207 = vmul.f32 %v5196, 1.442695
    %v5208 = vpow.pop %v5207
    %v5209 = vmul.f32 %v5197, 1.442695
    %v5210 = vpow.pop %v5209
    %v5211 = vmul.f32 %v5198, 1.442695
    %v5212 = vpow.pop %v5211
    %v5213 = vmul.f32 %v5199, 1.442695
    %v5214 = vpow.pop %v5213
    %v5215 = vmul.f32 %v5200, 1.442695
    %v5216 = vpow.pop %v5215
    %v5217 = vadd.f32 %v5202, 1.0
    %v5218 = vadd.f32 %v5204, 1.0
    %v5219 = vadd.f32 %v5206, 1.0
    %v5220 = vadd.f32 %v5208, 1.0
    %v5221 = vadd.f32 %v5210, 1.0
    %v5222 = vadd.f32 %v5212, 1.0
    %v5223 = vadd.f32 %v5214, 1.0
    %v5224 = vadd.f32 %v5216, 1.0
    %v5225 = vrcp.pop %v5217
    %v5226 = vmul.f32 1.0, %v5225
    %v5227 = vrcp.pop %v5218
    %v5228 = vmul.f32 1.0, %v5227
    %v5229 = vrcp.pop %v5219
    %v5230 = vmul.f32 1.0, %v5229
    %v5231 = vrcp.pop %v5220
    %v5232 = vmul.f32 1.0, %v5231
    %v5233 = vrcp.pop %v5221
    %v5234 = vmul.f32 1.0, %v5233
    %v5235 = vrcp.pop %v5222
    %v5236 = vmul.f32 1.0, %v5235
    %v5237 = vrcp.pop %v5223
    %v5238 = vmul.f32 1.0, %v5237
    %v5239 = vrcp.pop %v5224
    %v5240 = vmul.f32 1.0, %v5239
    %v5241 = vmul.f32 %v4941, %v5226
    %v5242 = vmul.f32 %v4943, %v5228
    %v5243 = vmul.f32 %v5023, %v5230
    %v5244 = vmul.f32 %v5025, %v5232
    %v5245 = vmul.f32 %v5105, %v5234
    %v5246 = vmul.f32 %v5107, %v5236
    %v5247 = vmul.f32 %v5187, %v5238
    %v5248 = vmul.f32 %v5189, %v5240
    %s5249 = smul.u32 4, 128
    %s5250 = smul.u32 %s5249, 8
    %s5251 = sshll.u32 %s5250, 4
    %5252 = dma.done %s285, %s5251
    %v5253 = vpack.c.bf16 %v5241, %v5241
    %v5254 = vpack.c.bf16 %v5242, %v5242
    %v5255 = vpack.c.bf16 %v5243, %v5243
    %v5256 = vpack.c.bf16 %v5244, %v5244
    %v5257 = vpack.c.bf16 %v5245, %v5245
    %v5258 = vpack.c.bf16 %v5246, %v5246
    %v5259 = vpack.c.bf16 %v5247, %v5247
    %v5260 = vpack.c.bf16 %v5248, %v5248
    %v5261 = vld [vmem:[#allocation3] sm:$0xff]
    %v5262 = vld [vmem:[#allocation3 + $0x8] sm:$0xff]
    %v5263 = vld [vmem:[#allocation3 + $0x10] sm:$0xff]
    %v5264 = vld [vmem:[#allocation3 + $0x18] sm:$0xff]
    %v5265 = vld [vmem:[#allocation3 + $0x20] sm:$0xff]
    %v5266 = vld [vmem:[#allocation3 + $0x28] sm:$0xff]
    %v5267 = vld [vmem:[#allocation3 + $0x30] sm:$0xff]
    %v5268 = vld [vmem:[#allocation3 + $0x38] sm:$0xff]
    %v5269 = vld [vmem:[#allocation3 + $0x40] sm:$0xff]
    %v5270 = vld [vmem:[#allocation3 + $0x48] sm:$0xff]
    %v5271 = vld [vmem:[#allocation3 + $0x50] sm:$0xff]
    %v5272 = vld [vmem:[#allocation3 + $0x58] sm:$0xff]
    %v5273 = vld [vmem:[#allocation3 + $0x60] sm:$0xff]
    %v5274 = vld [vmem:[#allocation3 + $0x68] sm:$0xff]
    %v5275 = vld [vmem:[#allocation3 + $0x70] sm:$0xff]
    %v5276 = vld [vmem:[#allocation3 + $0x78] sm:$0xff]
    %v5277 = vld [vmem:[#allocation3 + $0x80] sm:$0xff]
    %v5278 = vld [vmem:[#allocation3 + $0x88] sm:$0xff]
    %v5279 = vld [vmem:[#allocation3 + $0x90] sm:$0xff]
    %v5280 = vld [vmem:[#allocation3 + $0x98] sm:$0xff]
    %v5281 = vld [vmem:[#allocation3 + $0xa0] sm:$0xff]
    %v5282 = vld [vmem:[#allocation3 + $0xa8] sm:$0xff]
    %v5283 = vld [vmem:[#allocation3 + $0xb0] sm:$0xff]
    %v5284 = vld [vmem:[#allocation3 + $0xb8] sm:$0xff]
    %v5285 = vld [vmem:[#allocation3 + $0xc0] sm:$0xff]
    %v5286 = vld [vmem:[#allocation3 + $0xc8] sm:$0xff]
    %v5287 = vld [vmem:[#allocation3 + $0xd0] sm:$0xff]
    %v5288 = vld [vmem:[#allocation3 + $0xd8] sm:$0xff]
    %v5289 = vld [vmem:[#allocation3 + $0xe0] sm:$0xff]
    %v5290 = vld [vmem:[#allocation3 + $0xe8] sm:$0xff]
    %v5291 = vld [vmem:[#allocation3 + $0xf0] sm:$0xff]
    %v5292 = vld [vmem:[#allocation3 + $0xf8] sm:$0xff]
    %v5293 = vld [vmem:[#allocation3 + $0x100] sm:$0xff]
    %v5294 = vld [vmem:[#allocation3 + $0x108] sm:$0xff]
    %v5295 = vld [vmem:[#allocation3 + $0x110] sm:$0xff]
    %v5296 = vld [vmem:[#allocation3 + $0x118] sm:$0xff]
    %v5297 = vld [vmem:[#allocation3 + $0x120] sm:$0xff]
    %v5298 = vld [vmem:[#allocation3 + $0x128] sm:$0xff]
    %v5299 = vld [vmem:[#allocation3 + $0x130] sm:$0xff]
    %v5300 = vld [vmem:[#allocation3 + $0x138] sm:$0xff]
    %v5301 = vld [vmem:[#allocation3 + $0x140] sm:$0xff]
    %v5302 = vld [vmem:[#allocation3 + $0x148] sm:$0xff]
    %v5303 = vld [vmem:[#allocation3 + $0x150] sm:$0xff]
    %v5304 = vld [vmem:[#allocation3 + $0x158] sm:$0xff]
    %v5305 = vld [vmem:[#allocation3 + $0x160] sm:$0xff]
    %v5306 = vld [vmem:[#allocation3 + $0x168] sm:$0xff]
    %v5307 = vld [vmem:[#allocation3 + $0x170] sm:$0xff]
    %v5308 = vld [vmem:[#allocation3 + $0x178] sm:$0xff]
    %v5309 = vld [vmem:[#allocation3 + $0x180] sm:$0xff]
    %v5310 = vld [vmem:[#allocation3 + $0x188] sm:$0xff]
    %v5311 = vld [vmem:[#allocation3 + $0x190] sm:$0xff]
    %v5312 = vld [vmem:[#allocation3 + $0x198] sm:$0xff]
    %v5313 = vld [vmem:[#allocation3 + $0x1a0] sm:$0xff]
    %v5314 = vld [vmem:[#allocation3 + $0x1a8] sm:$0xff]
    %v5315 = vld [vmem:[#allocation3 + $0x1b0] sm:$0xff]
    %v5316 = vld [vmem:[#allocation3 + $0x1b8] sm:$0xff]
    %v5317 = vld [vmem:[#allocation3 + $0x1c0] sm:$0xff]
    %v5318 = vld [vmem:[#allocation3 + $0x1c8] sm:$0xff]
    %v5319 = vld [vmem:[#allocation3 + $0x1d0] sm:$0xff]
    %v5320 = vld [vmem:[#allocation3 + $0x1d8] sm:$0xff]
    %v5321 = vld [vmem:[#allocation3 + $0x1e0] sm:$0xff]
    %v5322 = vld [vmem:[#allocation3 + $0x1e8] sm:$0xff]
    %v5323 = vld [vmem:[#allocation3 + $0x1f0] sm:$0xff]
    %v5324 = vld [vmem:[#allocation3 + $0x1f8] sm:$0xff]
    %v5325 = vld [vmem:[#allocation3 + $0x200] sm:$0xff]
    %v5326 = vld [vmem:[#allocation3 + $0x208] sm:$0xff]
    %v5327 = vld [vmem:[#allocation3 + $0x210] sm:$0xff]
    %v5328 = vld [vmem:[#allocation3 + $0x218] sm:$0xff]
    %v5329 = vld [vmem:[#allocation3 + $0x220] sm:$0xff]
    %v5330 = vld [vmem:[#allocation3 + $0x228] sm:$0xff]
    %v5331 = vld [vmem:[#allocation3 + $0x230] sm:$0xff]
    %v5332 = vld [vmem:[#allocation3 + $0x238] sm:$0xff]
    %v5333 = vld [vmem:[#allocation3 + $0x240] sm:$0xff]
    %v5334 = vld [vmem:[#allocation3 + $0x248] sm:$0xff]
    %v5335 = vld [vmem:[#allocation3 + $0x250] sm:$0xff]
    %v5336 = vld [vmem:[#allocation3 + $0x258] sm:$0xff]
    %v5337 = vld [vmem:[#allocation3 + $0x260] sm:$0xff]
    %v5338 = vld [vmem:[#allocation3 + $0x268] sm:$0xff]
    %v5339 = vld [vmem:[#allocation3 + $0x270] sm:$0xff]
    %v5340 = vld [vmem:[#allocation3 + $0x278] sm:$0xff]
    %v5341 = vld [vmem:[#allocation3 + $0x280] sm:$0xff]
    %v5342 = vld [vmem:[#allocation3 + $0x288] sm:$0xff]
    %v5343 = vld [vmem:[#allocation3 + $0x290] sm:$0xff]
    %v5344 = vld [vmem:[#allocation3 + $0x298] sm:$0xff]
    %v5345 = vld [vmem:[#allocation3 + $0x2a0] sm:$0xff]
    %v5346 = vld [vmem:[#allocation3 + $0x2a8] sm:$0xff]
    %v5347 = vld [vmem:[#allocation3 + $0x2b0] sm:$0xff]
    %v5348 = vld [vmem:[#allocation3 + $0x2b8] sm:$0xff]
    %v5349 = vld [vmem:[#allocation3 + $0x2c0] sm:$0xff]
    %v5350 = vld [vmem:[#allocation3 + $0x2c8] sm:$0xff]
    %v5351 = vld [vmem:[#allocation3 + $0x2d0] sm:$0xff]
    %v5352 = vld [vmem:[#allocation3 + $0x2d8] sm:$0xff]
    %v5353 = vld [vmem:[#allocation3 + $0x2e0] sm:$0xff]
    %v5354 = vld [vmem:[#allocation3 + $0x2e8] sm:$0xff]
    %v5355 = vld [vmem:[#allocation3 + $0x2f0] sm:$0xff]
    %v5356 = vld [vmem:[#allocation3 + $0x2f8] sm:$0xff]
    %v5357 = vld [vmem:[#allocation3 + $0x300] sm:$0xff]
    %v5358 = vld [vmem:[#allocation3 + $0x308] sm:$0xff]
    %v5359 = vld [vmem:[#allocation3 + $0x310] sm:$0xff]
    %v5360 = vld [vmem:[#allocation3 + $0x318] sm:$0xff]
    %v5361 = vld [vmem:[#allocation3 + $0x320] sm:$0xff]
    %v5362 = vld [vmem:[#allocation3 + $0x328] sm:$0xff]
    %v5363 = vld [vmem:[#allocation3 + $0x330] sm:$0xff]
    %v5364 = vld [vmem:[#allocation3 + $0x338] sm:$0xff]
    %v5365 = vld [vmem:[#allocation3 + $0x340] sm:$0xff]
    %v5366 = vld [vmem:[#allocation3 + $0x348] sm:$0xff]
    %v5367 = vld [vmem:[#allocation3 + $0x350] sm:$0xff]
    %v5368 = vld [vmem:[#allocation3 + $0x358] sm:$0xff]
    %v5369 = vld [vmem:[#allocation3 + $0x360] sm:$0xff]
    %v5370 = vld [vmem:[#allocation3 + $0x368] sm:$0xff]
    %v5371 = vld [vmem:[#allocation3 + $0x370] sm:$0xff]
    %v5372 = vld [vmem:[#allocation3 + $0x378] sm:$0xff]
    %v5373 = vld [vmem:[#allocation3 + $0x380] sm:$0xff]
    %v5374 = vld [vmem:[#allocation3 + $0x388] sm:$0xff]
    %v5375 = vld [vmem:[#allocation3 + $0x390] sm:$0xff]
    %v5376 = vld [vmem:[#allocation3 + $0x398] sm:$0xff]
    %v5377 = vld [vmem:[#allocation3 + $0x3a0] sm:$0xff]
    %v5378 = vld [vmem:[#allocation3 + $0x3a8] sm:$0xff]
    %v5379 = vld [vmem:[#allocation3 + $0x3b0] sm:$0xff]
    %v5380 = vld [vmem:[#allocation3 + $0x3b8] sm:$0xff]
    %v5381 = vld [vmem:[#allocation3 + $0x3c0] sm:$0xff]
    %v5382 = vld [vmem:[#allocation3 + $0x3c8] sm:$0xff]
    %v5383 = vld [vmem:[#allocation3 + $0x3d0] sm:$0xff]
    %v5384 = vld [vmem:[#allocation3 + $0x3d8] sm:$0xff]
    %v5385 = vld [vmem:[#allocation3 + $0x3e0] sm:$0xff]
    %v5386 = vld [vmem:[#allocation3 + $0x3e8] sm:$0xff]
    %v5387 = vld [vmem:[#allocation3 + $0x3f0] sm:$0xff]
    %v5388 = vld [vmem:[#allocation3 + $0x3f8] sm:$0xff]
    %v5389 = vld [vmem:[#allocation3 + $0x400] sm:$0xff]
    %v5390 = vld [vmem:[#allocation3 + $0x408] sm:$0xff]
    %v5391 = vld [vmem:[#allocation3 + $0x410] sm:$0xff]
    %v5392 = vld [vmem:[#allocation3 + $0x418] sm:$0xff]
    %v5393 = vld [vmem:[#allocation3 + $0x420] sm:$0xff]
    %v5394 = vld [vmem:[#allocation3 + $0x428] sm:$0xff]
    %v5395 = vld [vmem:[#allocation3 + $0x430] sm:$0xff]
    %v5396 = vld [vmem:[#allocation3 + $0x438] sm:$0xff]
    %v5397 = vld [vmem:[#allocation3 + $0x440] sm:$0xff]
    %v5398 = vld [vmem:[#allocation3 + $0x448] sm:$0xff]
    %v5399 = vld [vmem:[#allocation3 + $0x450] sm:$0xff]
    %v5400 = vld [vmem:[#allocation3 + $0x458] sm:$0xff]
    %v5401 = vld [vmem:[#allocation3 + $0x460] sm:$0xff]
    %v5402 = vld [vmem:[#allocation3 + $0x468] sm:$0xff]
    %v5403 = vld [vmem:[#allocation3 + $0x470] sm:$0xff]
    %v5404 = vld [vmem:[#allocation3 + $0x478] sm:$0xff]
    %v5405 = vld [vmem:[#allocation3 + $0x480] sm:$0xff]
    %v5406 = vld [vmem:[#allocation3 + $0x488] sm:$0xff]
    %v5407 = vld [vmem:[#allocation3 + $0x490] sm:$0xff]
    %v5408 = vld [vmem:[#allocation3 + $0x498] sm:$0xff]
    %v5409 = vld [vmem:[#allocation3 + $0x4a0] sm:$0xff]
    %v5410 = vld [vmem:[#allocation3 + $0x4a8] sm:$0xff]
    %v5411 = vld [vmem:[#allocation3 + $0x4b0] sm:$0xff]
    %v5412 = vld [vmem:[#allocation3 + $0x4b8] sm:$0xff]
    %v5413 = vld [vmem:[#allocation3 + $0x4c0] sm:$0xff]
    %v5414 = vld [vmem:[#allocation3 + $0x4c8] sm:$0xff]
    %v5415 = vld [vmem:[#allocation3 + $0x4d0] sm:$0xff]
    %v5416 = vld [vmem:[#allocation3 + $0x4d8] sm:$0xff]
    %v5417 = vld [vmem:[#allocation3 + $0x4e0] sm:$0xff]
    %v5418 = vld [vmem:[#allocation3 + $0x4e8] sm:$0xff]
    %v5419 = vld [vmem:[#allocation3 + $0x4f0] sm:$0xff]
    %v5420 = vld [vmem:[#allocation3 + $0x4f8] sm:$0xff]
    %v5421 = vld [vmem:[#allocation3 + $0x500] sm:$0xff]
    %v5422 = vld [vmem:[#allocation3 + $0x508] sm:$0xff]
    %v5423 = vld [vmem:[#allocation3 + $0x510] sm:$0xff]
    %v5424 = vld [vmem:[#allocation3 + $0x518] sm:$0xff]
    %v5425 = vld [vmem:[#allocation3 + $0x520] sm:$0xff]
    %v5426 = vld [vmem:[#allocation3 + $0x528] sm:$0xff]
    %v5427 = vld [vmem:[#allocation3 + $0x530] sm:$0xff]
    %v5428 = vld [vmem:[#allocation3 + $0x538] sm:$0xff]
    %v5429 = vld [vmem:[#allocation3 + $0x540] sm:$0xff]
    %v5430 = vld [vmem:[#allocation3 + $0x548] sm:$0xff]
    %v5431 = vld [vmem:[#allocation3 + $0x550] sm:$0xff]
    %v5432 = vld [vmem:[#allocation3 + $0x558] sm:$0xff]
    %v5433 = vld [vmem:[#allocation3 + $0x560] sm:$0xff]
    %v5434 = vld [vmem:[#allocation3 + $0x568] sm:$0xff]
    %v5435 = vld [vmem:[#allocation3 + $0x570] sm:$0xff]
    %v5436 = vld [vmem:[#allocation3 + $0x578] sm:$0xff]
    %v5437 = vld [vmem:[#allocation3 + $0x580] sm:$0xff]
    %v5438 = vld [vmem:[#allocation3 + $0x588] sm:$0xff]
    %v5439 = vld [vmem:[#allocation3 + $0x590] sm:$0xff]
    %v5440 = vld [vmem:[#allocation3 + $0x598] sm:$0xff]
    %v5441 = vld [vmem:[#allocation3 + $0x5a0] sm:$0xff]
    %v5442 = vld [vmem:[#allocation3 + $0x5a8] sm:$0xff]
    %v5443 = vld [vmem:[#allocation3 + $0x5b0] sm:$0xff]
    %v5444 = vld [vmem:[#allocation3 + $0x5b8] sm:$0xff]
    %v5445 = vld [vmem:[#allocation3 + $0x5c0] sm:$0xff]
    %v5446 = vld [vmem:[#allocation3 + $0x5c8] sm:$0xff]
    %v5447 = vld [vmem:[#allocation3 + $0x5d0] sm:$0xff]
    %v5448 = vld [vmem:[#allocation3 + $0x5d8] sm:$0xff]
    %v5449 = vld [vmem:[#allocation3 + $0x5e0] sm:$0xff]
    %v5450 = vld [vmem:[#allocation3 + $0x5e8] sm:$0xff]
    %v5451 = vld [vmem:[#allocation3 + $0x5f0] sm:$0xff]
    %v5452 = vld [vmem:[#allocation3 + $0x5f8] sm:$0xff]
    %v5453 = vld [vmem:[#allocation3 + $0x600] sm:$0xff]
    %v5454 = vld [vmem:[#allocation3 + $0x608] sm:$0xff]
    %v5455 = vld [vmem:[#allocation3 + $0x610] sm:$0xff]
    %v5456 = vld [vmem:[#allocation3 + $0x618] sm:$0xff]
    %v5457 = vld [vmem:[#allocation3 + $0x620] sm:$0xff]
    %v5458 = vld [vmem:[#allocation3 + $0x628] sm:$0xff]
    %v5459 = vld [vmem:[#allocation3 + $0x630] sm:$0xff]
    %v5460 = vld [vmem:[#allocation3 + $0x638] sm:$0xff]
    %v5461 = vld [vmem:[#allocation3 + $0x640] sm:$0xff]
    %v5462 = vld [vmem:[#allocation3 + $0x648] sm:$0xff]
    %v5463 = vld [vmem:[#allocation3 + $0x650] sm:$0xff]
    %v5464 = vld [vmem:[#allocation3 + $0x658] sm:$0xff]
    %v5465 = vld [vmem:[#allocation3 + $0x660] sm:$0xff]
    %v5466 = vld [vmem:[#allocation3 + $0x668] sm:$0xff]
    %v5467 = vld [vmem:[#allocation3 + $0x670] sm:$0xff]
    %v5468 = vld [vmem:[#allocation3 + $0x678] sm:$0xff]
    %v5469 = vld [vmem:[#allocation3 + $0x680] sm:$0xff]
    %v5470 = vld [vmem:[#allocation3 + $0x688] sm:$0xff]
    %v5471 = vld [vmem:[#allocation3 + $0x690] sm:$0xff]
    %v5472 = vld [vmem:[#allocation3 + $0x698] sm:$0xff]
    %v5473 = vld [vmem:[#allocation3 + $0x6a0] sm:$0xff]
    %v5474 = vld [vmem:[#allocation3 + $0x6a8] sm:$0xff]
    %v5475 = vld [vmem:[#allocation3 + $0x6b0] sm:$0xff]
    %v5476 = vld [vmem:[#allocation3 + $0x6b8] sm:$0xff]
    %v5477 = vld [vmem:[#allocation3 + $0x6c0] sm:$0xff]
    %v5478 = vld [vmem:[#allocation3 + $0x6c8] sm:$0xff]
    %v5479 = vld [vmem:[#allocation3 + $0x6d0] sm:$0xff]
    %v5480 = vld [vmem:[#allocation3 + $0x6d8] sm:$0xff]
    %v5481 = vld [vmem:[#allocation3 + $0x6e0] sm:$0xff]
    %v5482 = vld [vmem:[#allocation3 + $0x6e8] sm:$0xff]
    %v5483 = vld [vmem:[#allocation3 + $0x6f0] sm:$0xff]
    %v5484 = vld [vmem:[#allocation3 + $0x6f8] sm:$0xff]
    %v5485 = vld [vmem:[#allocation3 + $0x700] sm:$0xff]
    %v5486 = vld [vmem:[#allocation3 + $0x708] sm:$0xff]
    %v5487 = vld [vmem:[#allocation3 + $0x710] sm:$0xff]
    %v5488 = vld [vmem:[#allocation3 + $0x718] sm:$0xff]
    %v5489 = vld [vmem:[#allocation3 + $0x720] sm:$0xff]
    %v5490 = vld [vmem:[#allocation3 + $0x728] sm:$0xff]
    %v5491 = vld [vmem:[#allocation3 + $0x730] sm:$0xff]
    %v5492 = vld [vmem:[#allocation3 + $0x738] sm:$0xff]
    %v5493 = vld [vmem:[#allocation3 + $0x740] sm:$0xff]
    %v5494 = vld [vmem:[#allocation3 + $0x748] sm:$0xff]
    %v5495 = vld [vmem:[#allocation3 + $0x750] sm:$0xff]
    %v5496 = vld [vmem:[#allocation3 + $0x758] sm:$0xff]
    %v5497 = vld [vmem:[#allocation3 + $0x760] sm:$0xff]
    %v5498 = vld [vmem:[#allocation3 + $0x768] sm:$0xff]
    %v5499 = vld [vmem:[#allocation3 + $0x770] sm:$0xff]
    %v5500 = vld [vmem:[#allocation3 + $0x778] sm:$0xff]
    %v5501 = vld [vmem:[#allocation3 + $0x780] sm:$0xff]
    %v5502 = vld [vmem:[#allocation3 + $0x788] sm:$0xff]
    %v5503 = vld [vmem:[#allocation3 + $0x790] sm:$0xff]
    %v5504 = vld [vmem:[#allocation3 + $0x798] sm:$0xff]
    %v5505 = vld [vmem:[#allocation3 + $0x7a0] sm:$0xff]
    %v5506 = vld [vmem:[#allocation3 + $0x7a8] sm:$0xff]
    %v5507 = vld [vmem:[#allocation3 + $0x7b0] sm:$0xff]
    %v5508 = vld [vmem:[#allocation3 + $0x7b8] sm:$0xff]
    %v5509 = vld [vmem:[#allocation3 + $0x7c0] sm:$0xff]
    %v5510 = vld [vmem:[#allocation3 + $0x7c8] sm:$0xff]
    %v5511 = vld [vmem:[#allocation3 + $0x7d0] sm:$0xff]
    %v5512 = vld [vmem:[#allocation3 + $0x7d8] sm:$0xff]
    %v5513 = vld [vmem:[#allocation3 + $0x7e0] sm:$0xff]
    %v5514 = vld [vmem:[#allocation3 + $0x7e8] sm:$0xff]
    %v5515 = vld [vmem:[#allocation3 + $0x7f0] sm:$0xff]
    %v5516 = vld [vmem:[#allocation3 + $0x7f8] sm:$0xff]
    %v5517 = vld [vmem:[#allocation3 + $0x800] sm:$0xff]
    %v5518 = vld [vmem:[#allocation3 + $0x808] sm:$0xff]
    %v5519 = vld [vmem:[#allocation3 + $0x810] sm:$0xff]
    %v5520 = vld [vmem:[#allocation3 + $0x818] sm:$0xff]
    %v5521 = vld [vmem:[#allocation3 + $0x820] sm:$0xff]
    %v5522 = vld [vmem:[#allocation3 + $0x828] sm:$0xff]
    %v5523 = vld [vmem:[#allocation3 + $0x830] sm:$0xff]
    %v5524 = vld [vmem:[#allocation3 + $0x838] sm:$0xff]
    %v5525 = vld [vmem:[#allocation3 + $0x840] sm:$0xff]
    %v5526 = vld [vmem:[#allocation3 + $0x848] sm:$0xff]
    %v5527 = vld [vmem:[#allocation3 + $0x850] sm:$0xff]
    %v5528 = vld [vmem:[#allocation3 + $0x858] sm:$0xff]
    %v5529 = vld [vmem:[#allocation3 + $0x860] sm:$0xff]
    %v5530 = vld [vmem:[#allocation3 + $0x868] sm:$0xff]
    %v5531 = vld [vmem:[#allocation3 + $0x870] sm:$0xff]
    %v5532 = vld [vmem:[#allocation3 + $0x878] sm:$0xff]
    %v5533 = vld [vmem:[#allocation3 + $0x880] sm:$0xff]
    %v5534 = vld [vmem:[#allocation3 + $0x888] sm:$0xff]
    %v5535 = vld [vmem:[#allocation3 + $0x890] sm:$0xff]
    %v5536 = vld [vmem:[#allocation3 + $0x898] sm:$0xff]
    %v5537 = vld [vmem:[#allocation3 + $0x8a0] sm:$0xff]
    %v5538 = vld [vmem:[#allocation3 + $0x8a8] sm:$0xff]
    %v5539 = vld [vmem:[#allocation3 + $0x8b0] sm:$0xff]
    %v5540 = vld [vmem:[#allocation3 + $0x8b8] sm:$0xff]
    %v5541 = vld [vmem:[#allocation3 + $0x8c0] sm:$0xff]
    %v5542 = vld [vmem:[#allocation3 + $0x8c8] sm:$0xff]
    %v5543 = vld [vmem:[#allocation3 + $0x8d0] sm:$0xff]
    %v5544 = vld [vmem:[#allocation3 + $0x8d8] sm:$0xff]
    %v5545 = vld [vmem:[#allocation3 + $0x8e0] sm:$0xff]
    %v5546 = vld [vmem:[#allocation3 + $0x8e8] sm:$0xff]
    %v5547 = vld [vmem:[#allocation3 + $0x8f0] sm:$0xff]
    %v5548 = vld [vmem:[#allocation3 + $0x8f8] sm:$0xff]
    %v5549 = vld [vmem:[#allocation3 + $0x900] sm:$0xff]
    %v5550 = vld [vmem:[#allocation3 + $0x908] sm:$0xff]
    %v5551 = vld [vmem:[#allocation3 + $0x910] sm:$0xff]
    %v5552 = vld [vmem:[#allocation3 + $0x918] sm:$0xff]
    %v5553 = vld [vmem:[#allocation3 + $0x920] sm:$0xff]
    %v5554 = vld [vmem:[#allocation3 + $0x928] sm:$0xff]
    %v5555 = vld [vmem:[#allocation3 + $0x930] sm:$0xff]
    %v5556 = vld [vmem:[#allocation3 + $0x938] sm:$0xff]
    %v5557 = vld [vmem:[#allocation3 + $0x940] sm:$0xff]
    %v5558 = vld [vmem:[#allocation3 + $0x948] sm:$0xff]
    %v5559 = vld [vmem:[#allocation3 + $0x950] sm:$0xff]
    %v5560 = vld [vmem:[#allocation3 + $0x958] sm:$0xff]
    %v5561 = vld [vmem:[#allocation3 + $0x960] sm:$0xff]
    %v5562 = vld [vmem:[#allocation3 + $0x968] sm:$0xff]
    %v5563 = vld [vmem:[#allocation3 + $0x970] sm:$0xff]
    %v5564 = vld [vmem:[#allocation3 + $0x978] sm:$0xff]
    %v5565 = vld [vmem:[#allocation3 + $0x980] sm:$0xff]
    %v5566 = vld [vmem:[#allocation3 + $0x988] sm:$0xff]
    %v5567 = vld [vmem:[#allocation3 + $0x990] sm:$0xff]
    %v5568 = vld [vmem:[#allocation3 + $0x998] sm:$0xff]
    %v5569 = vld [vmem:[#allocation3 + $0x9a0] sm:$0xff]
    %v5570 = vld [vmem:[#allocation3 + $0x9a8] sm:$0xff]
    %v5571 = vld [vmem:[#allocation3 + $0x9b0] sm:$0xff]
    %v5572 = vld [vmem:[#allocation3 + $0x9b8] sm:$0xff]
    %v5573 = vld [vmem:[#allocation3 + $0x9c0] sm:$0xff]
    %v5574 = vld [vmem:[#allocation3 + $0x9c8] sm:$0xff]
    %v5575 = vld [vmem:[#allocation3 + $0x9d0] sm:$0xff]
    %v5576 = vld [vmem:[#allocation3 + $0x9d8] sm:$0xff]
    %v5577 = vld [vmem:[#allocation3 + $0x9e0] sm:$0xff]
    %v5578 = vld [vmem:[#allocation3 + $0x9e8] sm:$0xff]
    %v5579 = vld [vmem:[#allocation3 + $0x9f0] sm:$0xff]
    %v5580 = vld [vmem:[#allocation3 + $0x9f8] sm:$0xff]
    %v5581 = vld [vmem:[#allocation3 + $0xa00] sm:$0xff]
    %v5582 = vld [vmem:[#allocation3 + $0xa08] sm:$0xff]
    %v5583 = vld [vmem:[#allocation3 + $0xa10] sm:$0xff]
    %v5584 = vld [vmem:[#allocation3 + $0xa18] sm:$0xff]
    %v5585 = vld [vmem:[#allocation3 + $0xa20] sm:$0xff]
    %v5586 = vld [vmem:[#allocation3 + $0xa28] sm:$0xff]
    %v5587 = vld [vmem:[#allocation3 + $0xa30] sm:$0xff]
    %v5588 = vld [vmem:[#allocation3 + $0xa38] sm:$0xff]
    %v5589 = vld [vmem:[#allocation3 + $0xa40] sm:$0xff]
    %v5590 = vld [vmem:[#allocation3 + $0xa48] sm:$0xff]
    %v5591 = vld [vmem:[#allocation3 + $0xa50] sm:$0xff]
    %v5592 = vld [vmem:[#allocation3 + $0xa58] sm:$0xff]
    %v5593 = vld [vmem:[#allocation3 + $0xa60] sm:$0xff]
    %v5594 = vld [vmem:[#allocation3 + $0xa68] sm:$0xff]
    %v5595 = vld [vmem:[#allocation3 + $0xa70] sm:$0xff]
    %v5596 = vld [vmem:[#allocation3 + $0xa78] sm:$0xff]
    %v5597 = vld [vmem:[#allocation3 + $0xa80] sm:$0xff]
    %v5598 = vld [vmem:[#allocation3 + $0xa88] sm:$0xff]
    %v5599 = vld [vmem:[#allocation3 + $0xa90] sm:$0xff]
    %v5600 = vld [vmem:[#allocation3 + $0xa98] sm:$0xff]
    %v5601 = vld [vmem:[#allocation3 + $0xaa0] sm:$0xff]
    %v5602 = vld [vmem:[#allocation3 + $0xaa8] sm:$0xff]
    %v5603 = vld [vmem:[#allocation3 + $0xab0] sm:$0xff]
    %v5604 = vld [vmem:[#allocation3 + $0xab8] sm:$0xff]
    %v5605 = vld [vmem:[#allocation3 + $0xac0] sm:$0xff]
    %v5606 = vld [vmem:[#allocation3 + $0xac8] sm:$0xff]
    %v5607 = vld [vmem:[#allocation3 + $0xad0] sm:$0xff]
    %v5608 = vld [vmem:[#allocation3 + $0xad8] sm:$0xff]
    %v5609 = vld [vmem:[#allocation3 + $0xae0] sm:$0xff]
    %v5610 = vld [vmem:[#allocation3 + $0xae8] sm:$0xff]
    %v5611 = vld [vmem:[#allocation3 + $0xaf0] sm:$0xff]
    %v5612 = vld [vmem:[#allocation3 + $0xaf8] sm:$0xff]
    %v5613 = vld [vmem:[#allocation3 + $0xb00] sm:$0xff]
    %v5614 = vld [vmem:[#allocation3 + $0xb08] sm:$0xff]
    %v5615 = vld [vmem:[#allocation3 + $0xb10] sm:$0xff]
    %v5616 = vld [vmem:[#allocation3 + $0xb18] sm:$0xff]
    %v5617 = vld [vmem:[#allocation3 + $0xb20] sm:$0xff]
    %v5618 = vld [vmem:[#allocation3 + $0xb28] sm:$0xff]
    %v5619 = vld [vmem:[#allocation3 + $0xb30] sm:$0xff]
    %v5620 = vld [vmem:[#allocation3 + $0xb38] sm:$0xff]
    %v5621 = vld [vmem:[#allocation3 + $0xb40] sm:$0xff]
    %v5622 = vld [vmem:[#allocation3 + $0xb48] sm:$0xff]
    %v5623 = vld [vmem:[#allocation3 + $0xb50] sm:$0xff]
    %v5624 = vld [vmem:[#allocation3 + $0xb58] sm:$0xff]
    %v5625 = vld [vmem:[#allocation3 + $0xb60] sm:$0xff]
    %v5626 = vld [vmem:[#allocation3 + $0xb68] sm:$0xff]
    %v5627 = vld [vmem:[#allocation3 + $0xb70] sm:$0xff]
    %v5628 = vld [vmem:[#allocation3 + $0xb78] sm:$0xff]
    %v5629 = vld [vmem:[#allocation3 + $0xb80] sm:$0xff]
    %v5630 = vld [vmem:[#allocation3 + $0xb88] sm:$0xff]
    %v5631 = vld [vmem:[#allocation3 + $0xb90] sm:$0xff]
    %v5632 = vld [vmem:[#allocation3 + $0xb98] sm:$0xff]
    %v5633 = vld [vmem:[#allocation3 + $0xba0] sm:$0xff]
    %v5634 = vld [vmem:[#allocation3 + $0xba8] sm:$0xff]
    %v5635 = vld [vmem:[#allocation3 + $0xbb0] sm:$0xff]
    %v5636 = vld [vmem:[#allocation3 + $0xbb8] sm:$0xff]
    %v5637 = vld [vmem:[#allocation3 + $0xbc0] sm:$0xff]
    %v5638 = vld [vmem:[#allocation3 + $0xbc8] sm:$0xff]
    %v5639 = vld [vmem:[#allocation3 + $0xbd0] sm:$0xff]
    %v5640 = vld [vmem:[#allocation3 + $0xbd8] sm:$0xff]
    %v5641 = vld [vmem:[#allocation3 + $0xbe0] sm:$0xff]
    %v5642 = vld [vmem:[#allocation3 + $0xbe8] sm:$0xff]
    %v5643 = vld [vmem:[#allocation3 + $0xbf0] sm:$0xff]
    %v5644 = vld [vmem:[#allocation3 + $0xbf8] sm:$0xff]
    %v5645 = vld [vmem:[#allocation3 + $0xc00] sm:$0xff]
    %v5646 = vld [vmem:[#allocation3 + $0xc08] sm:$0xff]
    %v5647 = vld [vmem:[#allocation3 + $0xc10] sm:$0xff]
    %v5648 = vld [vmem:[#allocation3 + $0xc18] sm:$0xff]
    %v5649 = vld [vmem:[#allocation3 + $0xc20] sm:$0xff]
    %v5650 = vld [vmem:[#allocation3 + $0xc28] sm:$0xff]
    %v5651 = vld [vmem:[#allocation3 + $0xc30] sm:$0xff]
    %v5652 = vld [vmem:[#allocation3 + $0xc38] sm:$0xff]
    %v5653 = vld [vmem:[#allocation3 + $0xc40] sm:$0xff]
    %v5654 = vld [vmem:[#allocation3 + $0xc48] sm:$0xff]
    %v5655 = vld [vmem:[#allocation3 + $0xc50] sm:$0xff]
    %v5656 = vld [vmem:[#allocation3 + $0xc58] sm:$0xff]
    %v5657 = vld [vmem:[#allocation3 + $0xc60] sm:$0xff]
    %v5658 = vld [vmem:[#allocation3 + $0xc68] sm:$0xff]
    %v5659 = vld [vmem:[#allocation3 + $0xc70] sm:$0xff]
    %v5660 = vld [vmem:[#allocation3 + $0xc78] sm:$0xff]
    %v5661 = vld [vmem:[#allocation3 + $0xc80] sm:$0xff]
    %v5662 = vld [vmem:[#allocation3 + $0xc88] sm:$0xff]
    %v5663 = vld [vmem:[#allocation3 + $0xc90] sm:$0xff]
    %v5664 = vld [vmem:[#allocation3 + $0xc98] sm:$0xff]
    %v5665 = vld [vmem:[#allocation3 + $0xca0] sm:$0xff]
    %v5666 = vld [vmem:[#allocation3 + $0xca8] sm:$0xff]
    %v5667 = vld [vmem:[#allocation3 + $0xcb0] sm:$0xff]
    %v5668 = vld [vmem:[#allocation3 + $0xcb8] sm:$0xff]
    %v5669 = vld [vmem:[#allocation3 + $0xcc0] sm:$0xff]
    %v5670 = vld [vmem:[#allocation3 + $0xcc8] sm:$0xff]
    %v5671 = vld [vmem:[#allocation3 + $0xcd0] sm:$0xff]
    %v5672 = vld [vmem:[#allocation3 + $0xcd8] sm:$0xff]
    %v5673 = vld [vmem:[#allocation3 + $0xce0] sm:$0xff]
    %v5674 = vld [vmem:[#allocation3 + $0xce8] sm:$0xff]
    %v5675 = vld [vmem:[#allocation3 + $0xcf0] sm:$0xff]
    %v5676 = vld [vmem:[#allocation3 + $0xcf8] sm:$0xff]
    %v5677 = vld [vmem:[#allocation3 + $0xd00] sm:$0xff]
    %v5678 = vld [vmem:[#allocation3 + $0xd08] sm:$0xff]
    %v5679 = vld [vmem:[#allocation3 + $0xd10] sm:$0xff]
    %v5680 = vld [vmem:[#allocation3 + $0xd18] sm:$0xff]
    %v5681 = vld [vmem:[#allocation3 + $0xd20] sm:$0xff]
    %v5682 = vld [vmem:[#allocation3 + $0xd28] sm:$0xff]
    %v5683 = vld [vmem:[#allocation3 + $0xd30] sm:$0xff]
    %v5684 = vld [vmem:[#allocation3 + $0xd38] sm:$0xff]
    %v5685 = vld [vmem:[#allocation3 + $0xd40] sm:$0xff]
    %v5686 = vld [vmem:[#allocation3 + $0xd48] sm:$0xff]
    %v5687 = vld [vmem:[#allocation3 + $0xd50] sm:$0xff]
    %v5688 = vld [vmem:[#allocation3 + $0xd58] sm:$0xff]
    %v5689 = vld [vmem:[#allocation3 + $0xd60] sm:$0xff]
    %v5690 = vld [vmem:[#allocation3 + $0xd68] sm:$0xff]
    %v5691 = vld [vmem:[#allocation3 + $0xd70] sm:$0xff]
    %v5692 = vld [vmem:[#allocation3 + $0xd78] sm:$0xff]
    %v5693 = vld [vmem:[#allocation3 + $0xd80] sm:$0xff]
    %v5694 = vld [vmem:[#allocation3 + $0xd88] sm:$0xff]
    %v5695 = vld [vmem:[#allocation3 + $0xd90] sm:$0xff]
    %v5696 = vld [vmem:[#allocation3 + $0xd98] sm:$0xff]
    %v5697 = vld [vmem:[#allocation3 + $0xda0] sm:$0xff]
    %v5698 = vld [vmem:[#allocation3 + $0xda8] sm:$0xff]
    %v5699 = vld [vmem:[#allocation3 + $0xdb0] sm:$0xff]
    %v5700 = vld [vmem:[#allocation3 + $0xdb8] sm:$0xff]
    %v5701 = vld [vmem:[#allocation3 + $0xdc0] sm:$0xff]
    %v5702 = vld [vmem:[#allocation3 + $0xdc8] sm:$0xff]
    %v5703 = vld [vmem:[#allocation3 + $0xdd0] sm:$0xff]
    %v5704 = vld [vmem:[#allocation3 + $0xdd8] sm:$0xff]
    %v5705 = vld [vmem:[#allocation3 + $0xde0] sm:$0xff]
    %v5706 = vld [vmem:[#allocation3 + $0xde8] sm:$0xff]
    %v5707 = vld [vmem:[#allocation3 + $0xdf0] sm:$0xff]
    %v5708 = vld [vmem:[#allocation3 + $0xdf8] sm:$0xff]
    %v5709 = vld [vmem:[#allocation3 + $0xe00] sm:$0xff]
    %v5710 = vld [vmem:[#allocation3 + $0xe08] sm:$0xff]
    %v5711 = vld [vmem:[#allocation3 + $0xe10] sm:$0xff]
    %v5712 = vld [vmem:[#allocation3 + $0xe18] sm:$0xff]
    %v5713 = vld [vmem:[#allocation3 + $0xe20] sm:$0xff]
    %v5714 = vld [vmem:[#allocation3 + $0xe28] sm:$0xff]
    %v5715 = vld [vmem:[#allocation3 + $0xe30] sm:$0xff]
    %v5716 = vld [vmem:[#allocation3 + $0xe38] sm:$0xff]
    %v5717 = vld [vmem:[#allocation3 + $0xe40] sm:$0xff]
    %v5718 = vld [vmem:[#allocation3 + $0xe48] sm:$0xff]
    %v5719 = vld [vmem:[#allocation3 + $0xe50] sm:$0xff]
    %v5720 = vld [vmem:[#allocation3 + $0xe58] sm:$0xff]
    %v5721 = vld [vmem:[#allocation3 + $0xe60] sm:$0xff]
    %v5722 = vld [vmem:[#allocation3 + $0xe68] sm:$0xff]
    %v5723 = vld [vmem:[#allocation3 + $0xe70] sm:$0xff]
    %v5724 = vld [vmem:[#allocation3 + $0xe78] sm:$0xff]
    %v5725 = vld [vmem:[#allocation3 + $0xe80] sm:$0xff]
    %v5726 = vld [vmem:[#allocation3 + $0xe88] sm:$0xff]
    %v5727 = vld [vmem:[#allocation3 + $0xe90] sm:$0xff]
    %v5728 = vld [vmem:[#allocation3 + $0xe98] sm:$0xff]
    %v5729 = vld [vmem:[#allocation3 + $0xea0] sm:$0xff]
    %v5730 = vld [vmem:[#allocation3 + $0xea8] sm:$0xff]
    %v5731 = vld [vmem:[#allocation3 + $0xeb0] sm:$0xff]
    %v5732 = vld [vmem:[#allocation3 + $0xeb8] sm:$0xff]
    %v5733 = vld [vmem:[#allocation3 + $0xec0] sm:$0xff]
    %v5734 = vld [vmem:[#allocation3 + $0xec8] sm:$0xff]
    %v5735 = vld [vmem:[#allocation3 + $0xed0] sm:$0xff]
    %v5736 = vld [vmem:[#allocation3 + $0xed8] sm:$0xff]
    %v5737 = vld [vmem:[#allocation3 + $0xee0] sm:$0xff]
    %v5738 = vld [vmem:[#allocation3 + $0xee8] sm:$0xff]
    %v5739 = vld [vmem:[#allocation3 + $0xef0] sm:$0xff]
    %v5740 = vld [vmem:[#allocation3 + $0xef8] sm:$0xff]
    %v5741 = vld [vmem:[#allocation3 + $0xf00] sm:$0xff]
    %v5742 = vld [vmem:[#allocation3 + $0xf08] sm:$0xff]
    %v5743 = vld [vmem:[#allocation3 + $0xf10] sm:$0xff]
    %v5744 = vld [vmem:[#allocation3 + $0xf18] sm:$0xff]
    %v5745 = vld [vmem:[#allocation3 + $0xf20] sm:$0xff]
    %v5746 = vld [vmem:[#allocation3 + $0xf28] sm:$0xff]
    %v5747 = vld [vmem:[#allocation3 + $0xf30] sm:$0xff]
    %v5748 = vld [vmem:[#allocation3 + $0xf38] sm:$0xff]
    %v5749 = vld [vmem:[#allocation3 + $0xf40] sm:$0xff]
    %v5750 = vld [vmem:[#allocation3 + $0xf48] sm:$0xff]
    %v5751 = vld [vmem:[#allocation3 + $0xf50] sm:$0xff]
    %v5752 = vld [vmem:[#allocation3 + $0xf58] sm:$0xff]
    %v5753 = vld [vmem:[#allocation3 + $0xf60] sm:$0xff]
    %v5754 = vld [vmem:[#allocation3 + $0xf68] sm:$0xff]
    %v5755 = vld [vmem:[#allocation3 + $0xf70] sm:$0xff]
    %v5756 = vld [vmem:[#allocation3 + $0xf78] sm:$0xff]
    %v5757 = vld [vmem:[#allocation3 + $0xf80] sm:$0xff]
    %v5758 = vld [vmem:[#allocation3 + $0xf88] sm:$0xff]
    %v5759 = vld [vmem:[#allocation3 + $0xf90] sm:$0xff]
    %v5760 = vld [vmem:[#allocation3 + $0xf98] sm:$0xff]
    %v5761 = vld [vmem:[#allocation3 + $0xfa0] sm:$0xff]
    %v5762 = vld [vmem:[#allocation3 + $0xfa8] sm:$0xff]
    %v5763 = vld [vmem:[#allocation3 + $0xfb0] sm:$0xff]
    %v5764 = vld [vmem:[#allocation3 + $0xfb8] sm:$0xff]
    %v5765 = vld [vmem:[#allocation3 + $0xfc0] sm:$0xff]
    %v5766 = vld [vmem:[#allocation3 + $0xfc8] sm:$0xff]
    %v5767 = vld [vmem:[#allocation3 + $0xfd0] sm:$0xff]
    %v5768 = vld [vmem:[#allocation3 + $0xfd8] sm:$0xff]
    %v5769 = vld [vmem:[#allocation3 + $0xfe0] sm:$0xff]
    %v5770 = vld [vmem:[#allocation3 + $0xfe8] sm:$0xff]
    %v5771 = vld [vmem:[#allocation3 + $0xff0] sm:$0xff]
    %v5772 = vld [vmem:[#allocation3 + $0xff8] sm:$0xff]
    %v5773 = vld [vmem:[#allocation23] sm:$0xff]
    %v5774 = vunpack.c.l.bf16 %v5773
    %v5775 = vunpack.c.h.bf16 %v5773
    %v5778 = vlaneseq
    %v5779 = vshrl.u32 %v5778, 7
    %v5780 = vsub.s32 0, %v5779
    %v5781 = vrot.slane %v5774, %v5780
    %v5782 = vlaneseq
    %v5783 = vshrl.u32 %v5782, 7
    %v5784 = vsub.s32 2, %v5783
    %v5785 = vrot.slane %v5774, %v5784
    %v5786 = vlaneseq
    %v5787 = vshrl.u32 %v5786, 7
    %v5788 = vsub.s32 4, %v5787
    %v5789 = vrot.slane %v5774, %v5788
    %v5790 = vlaneseq
    %v5791 = vshrl.u32 %v5790, 7
    %v5792 = vsub.s32 6, %v5791
    %v5793 = vrot.slane %v5774, %v5792
    %v5794 = vlaneseq
    %v5795 = vshrl.u32 %v5794, 7
    %v5796 = vsub.s32 0, %v5795
    %v5797 = vrot.slane %v5775, %v5796
    %v5798 = vlaneseq
    %v5799 = vshrl.u32 %v5798, 7
    %v5800 = vsub.s32 2, %v5799
    %v5801 = vrot.slane %v5775, %v5800
    %v5802 = vlaneseq
    %v5803 = vshrl.u32 %v5802, 7
    %v5804 = vsub.s32 4, %v5803
    %v5805 = vrot.slane %v5775, %v5804
    %v5806 = vlaneseq
    %v5807 = vshrl.u32 %v5806, 7
    %v5808 = vsub.s32 6, %v5807
    %v5809 = vrot.slane %v5775, %v5808
    %v5818 = vlaneseq
    %v5819 = vshrl.u32 %v5818, 7
    %v5820 = vsub.s32 0, %v5819
    %v5821 = vrot.slane %v5781, %v5820
    %v5822 = vlaneseq
    %v5823 = vshrl.u32 %v5822, 7
    %v5824 = vsub.s32 0, %v5823
    %v5825 = vrot.slane %v5785, %v5824
    %v5826 = vlaneseq
    %v5827 = vshrl.u32 %v5826, 7
    %v5828 = vsub.s32 0, %v5827
    %v5829 = vrot.slane %v5789, %v5828
    %v5830 = vlaneseq
    %v5831 = vshrl.u32 %v5830, 7
    %v5832 = vsub.s32 0, %v5831
    %v5833 = vrot.slane %v5793, %v5832
    %v5834 = vlaneseq
    %v5835 = vshrl.u32 %v5834, 7
    %v5836 = vsub.s32 0, %v5835
    %v5837 = vrot.slane %v5797, %v5836
    %v5838 = vlaneseq
    %v5839 = vshrl.u32 %v5838, 7
    %v5840 = vsub.s32 0, %v5839
    %v5841 = vrot.slane %v5801, %v5840
    %v5842 = vlaneseq
    %v5843 = vshrl.u32 %v5842, 7
    %v5844 = vsub.s32 0, %v5843
    %v5845 = vrot.slane %v5805, %v5844
    %v5846 = vlaneseq
    %v5847 = vshrl.u32 %v5846, 7
    %v5848 = vsub.s32 0, %v5847
    %v5849 = vrot.slane %v5809, %v5848
    %v6362 = vunpack.c.l.b16 %v5261
    %v6363 = vunpack.c.h.b16 %v5261
    %v6364 = vunpack.c.l.b16 %v5262
    %v6365 = vunpack.c.h.b16 %v5262
    %v6366 = vunpack.c.l.b16 %v5263
    %v6367 = vunpack.c.h.b16 %v5263
    %v6368 = vunpack.c.l.b16 %v5264
    %v6369 = vunpack.c.h.b16 %v5264
    %v6370 = vunpack.c.l.b16 %v5265
    %v6371 = vunpack.c.h.b16 %v5265
    %v6372 = vunpack.c.l.b16 %v5266
    %v6373 = vunpack.c.h.b16 %v5266
    %v6374 = vunpack.c.l.b16 %v5267
    %v6375 = vunpack.c.h.b16 %v5267
    %v6376 = vunpack.c.l.b16 %v5268
    %v6377 = vunpack.c.h.b16 %v5268
    %v6378 = vunpack.c.l.b16 %v5269
    %v6379 = vunpack.c.h.b16 %v5269
    %v6380 = vunpack.c.l.b16 %v5270
    %v6381 = vunpack.c.h.b16 %v5270
    %v6382 = vunpack.c.l.b16 %v5271
    %v6383 = vunpack.c.h.b16 %v5271
    %v6384 = vunpack.c.l.b16 %v5272
    %v6385 = vunpack.c.h.b16 %v5272
    %v6386 = vunpack.c.l.b16 %v5273
    %v6387 = vunpack.c.h.b16 %v5273
    %v6388 = vunpack.c.l.b16 %v5274
    %v6389 = vunpack.c.h.b16 %v5274
    %v6390 = vunpack.c.l.b16 %v5275
    %v6391 = vunpack.c.h.b16 %v5275
    %v6392 = vunpack.c.l.b16 %v5276
    %v6393 = vunpack.c.h.b16 %v5276
    %v6394 = vunpack.c.l.b16 %v5277
    %v6395 = vunpack.c.h.b16 %v5277
    %v6396 = vunpack.c.l.b16 %v5278
    %v6397 = vunpack.c.h.b16 %v5278
    %v6398 = vunpack.c.l.b16 %v5279
    %v6399 = vunpack.c.h.b16 %v5279
    %v6400 = vunpack.c.l.b16 %v5280
    %v6401 = vunpack.c.h.b16 %v5280
    %v6402 = vunpack.c.l.b16 %v5281
    %v6403 = vunpack.c.h.b16 %v5281
    %v6404 = vunpack.c.l.b16 %v5282
    %v6405 = vunpack.c.h.b16 %v5282
    %v6406 = vunpack.c.l.b16 %v5283
    %v6407 = vunpack.c.h.b16 %v5283
    %v6408 = vunpack.c.l.b16 %v5284
    %v6409 = vunpack.c.h.b16 %v5284
    %v6410 = vunpack.c.l.b16 %v5285
    %v6411 = vunpack.c.h.b16 %v5285
    %v6412 = vunpack.c.l.b16 %v5286
    %v6413 = vunpack.c.h.b16 %v5286
    %v6414 = vunpack.c.l.b16 %v5287
    %v6415 = vunpack.c.h.b16 %v5287
    %v6416 = vunpack.c.l.b16 %v5288
    %v6417 = vunpack.c.h.b16 %v5288
    %v6418 = vunpack.c.l.b16 %v5289
    %v6419 = vunpack.c.h.b16 %v5289
    %v6420 = vunpack.c.l.b16 %v5290
    %v6421 = vunpack.c.h.b16 %v5290
    %v6422 = vunpack.c.l.b16 %v5291
    %v6423 = vunpack.c.h.b16 %v5291
    %v6424 = vunpack.c.l.b16 %v5292
    %v6425 = vunpack.c.h.b16 %v5292
    %v6426 = vunpack.c.l.b16 %v5293
    %v6427 = vunpack.c.h.b16 %v5293
    %v6428 = vunpack.c.l.b16 %v5294
    %v6429 = vunpack.c.h.b16 %v5294
    %v6430 = vunpack.c.l.b16 %v5295
    %v6431 = vunpack.c.h.b16 %v5295
    %v6432 = vunpack.c.l.b16 %v5296
    %v6433 = vunpack.c.h.b16 %v5296
    %v6434 = vunpack.c.l.b16 %v5297
    %v6435 = vunpack.c.h.b16 %v5297
    %v6436 = vunpack.c.l.b16 %v5298
    %v6437 = vunpack.c.h.b16 %v5298
    %v6438 = vunpack.c.l.b16 %v5299
    %v6439 = vunpack.c.h.b16 %v5299
    %v6440 = vunpack.c.l.b16 %v5300
    %v6441 = vunpack.c.h.b16 %v5300
    %v6442 = vunpack.c.l.b16 %v5301
    %v6443 = vunpack.c.h.b16 %v5301
    %v6444 = vunpack.c.l.b16 %v5302
    %v6445 = vunpack.c.h.b16 %v5302
    %v6446 = vunpack.c.l.b16 %v5303
    %v6447 = vunpack.c.h.b16 %v5303
    %v6448 = vunpack.c.l.b16 %v5304
    %v6449 = vunpack.c.h.b16 %v5304
    %v6450 = vunpack.c.l.b16 %v5305
    %v6451 = vunpack.c.h.b16 %v5305
    %v6452 = vunpack.c.l.b16 %v5306
    %v6453 = vunpack.c.h.b16 %v5306
    %v6454 = vunpack.c.l.b16 %v5307
    %v6455 = vunpack.c.h.b16 %v5307
    %v6456 = vunpack.c.l.b16 %v5308
    %v6457 = vunpack.c.h.b16 %v5308
    %v6458 = vunpack.c.l.b16 %v5309
    %v6459 = vunpack.c.h.b16 %v5309
    %v6460 = vunpack.c.l.b16 %v5310
    %v6461 = vunpack.c.h.b16 %v5310
    %v6462 = vunpack.c.l.b16 %v5311
    %v6463 = vunpack.c.h.b16 %v5311
    %v6464 = vunpack.c.l.b16 %v5312
    %v6465 = vunpack.c.h.b16 %v5312
    %v6466 = vunpack.c.l.b16 %v5313
    %v6467 = vunpack.c.h.b16 %v5313
    %v6468 = vunpack.c.l.b16 %v5314
    %v6469 = vunpack.c.h.b16 %v5314
    %v6470 = vunpack.c.l.b16 %v5315
    %v6471 = vunpack.c.h.b16 %v5315
    %v6472 = vunpack.c.l.b16 %v5316
    %v6473 = vunpack.c.h.b16 %v5316
    %v6474 = vunpack.c.l.b16 %v5317
    %v6475 = vunpack.c.h.b16 %v5317
    %v6476 = vunpack.c.l.b16 %v5318
    %v6477 = vunpack.c.h.b16 %v5318
    %v6478 = vunpack.c.l.b16 %v5319
    %v6479 = vunpack.c.h.b16 %v5319
    %v6480 = vunpack.c.l.b16 %v5320
    %v6481 = vunpack.c.h.b16 %v5320
    %v6482 = vunpack.c.l.b16 %v5321
    %v6483 = vunpack.c.h.b16 %v5321
    %v6484 = vunpack.c.l.b16 %v5322
    %v6485 = vunpack.c.h.b16 %v5322
    %v6486 = vunpack.c.l.b16 %v5323
    %v6487 = vunpack.c.h.b16 %v5323
    %v6488 = vunpack.c.l.b16 %v5324
    %v6489 = vunpack.c.h.b16 %v5324
    %v6490 = vunpack.c.l.b16 %v5325
    %v6491 = vunpack.c.h.b16 %v5325
    %v6492 = vunpack.c.l.b16 %v5326
    %v6493 = vunpack.c.h.b16 %v5326
    %v6494 = vunpack.c.l.b16 %v5327
    %v6495 = vunpack.c.h.b16 %v5327
    %v6496 = vunpack.c.l.b16 %v5328
    %v6497 = vunpack.c.h.b16 %v5328
    %v6498 = vunpack.c.l.b16 %v5329
    %v6499 = vunpack.c.h.b16 %v5329
    %v6500 = vunpack.c.l.b16 %v5330
    %v6501 = vunpack.c.h.b16 %v5330
    %v6502 = vunpack.c.l.b16 %v5331
    %v6503 = vunpack.c.h.b16 %v5331
    %v6504 = vunpack.c.l.b16 %v5332
    %v6505 = vunpack.c.h.b16 %v5332
    %v6506 = vunpack.c.l.b16 %v5333
    %v6507 = vunpack.c.h.b16 %v5333
    %v6508 = vunpack.c.l.b16 %v5334
    %v6509 = vunpack.c.h.b16 %v5334
    %v6510 = vunpack.c.l.b16 %v5335
    %v6511 = vunpack.c.h.b16 %v5335
    %v6512 = vunpack.c.l.b16 %v5336
    %v6513 = vunpack.c.h.b16 %v5336
    %v6514 = vunpack.c.l.b16 %v5337
    %v6515 = vunpack.c.h.b16 %v5337
    %v6516 = vunpack.c.l.b16 %v5338
    %v6517 = vunpack.c.h.b16 %v5338
    %v6518 = vunpack.c.l.b16 %v5339
    %v6519 = vunpack.c.h.b16 %v5339
    %v6520 = vunpack.c.l.b16 %v5340
    %v6521 = vunpack.c.h.b16 %v5340
    %v6522 = vunpack.c.l.b16 %v5341
    %v6523 = vunpack.c.h.b16 %v5341
    %v6524 = vunpack.c.l.b16 %v5342
    %v6525 = vunpack.c.h.b16 %v5342
    %v6526 = vunpack.c.l.b16 %v5343
    %v6527 = vunpack.c.h.b16 %v5343
    %v6528 = vunpack.c.l.b16 %v5344
    %v6529 = vunpack.c.h.b16 %v5344
    %v6530 = vunpack.c.l.b16 %v5345
    %v6531 = vunpack.c.h.b16 %v5345
    %v6532 = vunpack.c.l.b16 %v5346
    %v6533 = vunpack.c.h.b16 %v5346
    %v6534 = vunpack.c.l.b16 %v5347
    %v6535 = vunpack.c.h.b16 %v5347
    %v6536 = vunpack.c.l.b16 %v5348
    %v6537 = vunpack.c.h.b16 %v5348
    %v6538 = vunpack.c.l.b16 %v5349
    %v6539 = vunpack.c.h.b16 %v5349
    %v6540 = vunpack.c.l.b16 %v5350
    %v6541 = vunpack.c.h.b16 %v5350
    %v6542 = vunpack.c.l.b16 %v5351
    %v6543 = vunpack.c.h.b16 %v5351
    %v6544 = vunpack.c.l.b16 %v5352
    %v6545 = vunpack.c.h.b16 %v5352
    %v6546 = vunpack.c.l.b16 %v5353
    %v6547 = vunpack.c.h.b16 %v5353
    %v6548 = vunpack.c.l.b16 %v5354
    %v6549 = vunpack.c.h.b16 %v5354
    %v6550 = vunpack.c.l.b16 %v5355
    %v6551 = vunpack.c.h.b16 %v5355
    %v6552 = vunpack.c.l.b16 %v5356
    %v6553 = vunpack.c.h.b16 %v5356
    %v6554 = vunpack.c.l.b16 %v5357
    %v6555 = vunpack.c.h.b16 %v5357
    %v6556 = vunpack.c.l.b16 %v5358
    %v6557 = vunpack.c.h.b16 %v5358
    %v6558 = vunpack.c.l.b16 %v5359
    %v6559 = vunpack.c.h.b16 %v5359
    %v6560 = vunpack.c.l.b16 %v5360
    %v6561 = vunpack.c.h.b16 %v5360
    %v6562 = vunpack.c.l.b16 %v5361
    %v6563 = vunpack.c.h.b16 %v5361
    %v6564 = vunpack.c.l.b16 %v5362
    %v6565 = vunpack.c.h.b16 %v5362
    %v6566 = vunpack.c.l.b16 %v5363
    %v6567 = vunpack.c.h.b16 %v5363
    %v6568 = vunpack.c.l.b16 %v5364
    %v6569 = vunpack.c.h.b16 %v5364
    %v6570 = vunpack.c.l.b16 %v5365
    %v6571 = vunpack.c.h.b16 %v5365
    %v6572 = vunpack.c.l.b16 %v5366
    %v6573 = vunpack.c.h.b16 %v5366
    %v6574 = vunpack.c.l.b16 %v5367
    %v6575 = vunpack.c.h.b16 %v5367
    %v6576 = vunpack.c.l.b16 %v5368
    %v6577 = vunpack.c.h.b16 %v5368
    %v6578 = vunpack.c.l.b16 %v5369
    %v6579 = vunpack.c.h.b16 %v5369
    %v6580 = vunpack.c.l.b16 %v5370
    %v6581 = vunpack.c.h.b16 %v5370
    %v6582 = vunpack.c.l.b16 %v5371
    %v6583 = vunpack.c.h.b16 %v5371
    %v6584 = vunpack.c.l.b16 %v5372
    %v6585 = vunpack.c.h.b16 %v5372
    %v6586 = vunpack.c.l.b16 %v5373
    %v6587 = vunpack.c.h.b16 %v5373
    %v6588 = vunpack.c.l.b16 %v5374
    %v6589 = vunpack.c.h.b16 %v5374
    %v6590 = vunpack.c.l.b16 %v5375
    %v6591 = vunpack.c.h.b16 %v5375
    %v6592 = vunpack.c.l.b16 %v5376
    %v6593 = vunpack.c.h.b16 %v5376
    %v6594 = vunpack.c.l.b16 %v5377
    %v6595 = vunpack.c.h.b16 %v5377
    %v6596 = vunpack.c.l.b16 %v5378
    %v6597 = vunpack.c.h.b16 %v5378
    %v6598 = vunpack.c.l.b16 %v5379
    %v6599 = vunpack.c.h.b16 %v5379
    %v6600 = vunpack.c.l.b16 %v5380
    %v6601 = vunpack.c.h.b16 %v5380
    %v6602 = vunpack.c.l.b16 %v5381
    %v6603 = vunpack.c.h.b16 %v5381
    %v6604 = vunpack.c.l.b16 %v5382
    %v6605 = vunpack.c.h.b16 %v5382
    %v6606 = vunpack.c.l.b16 %v5383
    %v6607 = vunpack.c.h.b16 %v5383
    %v6608 = vunpack.c.l.b16 %v5384
    %v6609 = vunpack.c.h.b16 %v5384
    %v6610 = vunpack.c.l.b16 %v5385
    %v6611 = vunpack.c.h.b16 %v5385
    %v6612 = vunpack.c.l.b16 %v5386
    %v6613 = vunpack.c.h.b16 %v5386
    %v6614 = vunpack.c.l.b16 %v5387
    %v6615 = vunpack.c.h.b16 %v5387
    %v6616 = vunpack.c.l.b16 %v5388
    %v6617 = vunpack.c.h.b16 %v5388
    %v6618 = vunpack.c.l.b16 %v5389
    %v6619 = vunpack.c.h.b16 %v5389
    %v6620 = vunpack.c.l.b16 %v5390
    %v6621 = vunpack.c.h.b16 %v5390
    %v6622 = vunpack.c.l.b16 %v5391
    %v6623 = vunpack.c.h.b16 %v5391
    %v6624 = vunpack.c.l.b16 %v5392
    %v6625 = vunpack.c.h.b16 %v5392
    %v6626 = vunpack.c.l.b16 %v5393
    %v6627 = vunpack.c.h.b16 %v5393
    %v6628 = vunpack.c.l.b16 %v5394
    %v6629 = vunpack.c.h.b16 %v5394
    %v6630 = vunpack.c.l.b16 %v5395
    %v6631 = vunpack.c.h.b16 %v5395
    %v6632 = vunpack.c.l.b16 %v5396
    %v6633 = vunpack.c.h.b16 %v5396
    %v6634 = vunpack.c.l.b16 %v5397
    %v6635 = vunpack.c.h.b16 %v5397
    %v6636 = vunpack.c.l.b16 %v5398
    %v6637 = vunpack.c.h.b16 %v5398
    %v6638 = vunpack.c.l.b16 %v5399
    %v6639 = vunpack.c.h.b16 %v5399
    %v6640 = vunpack.c.l.b16 %v5400
    %v6641 = vunpack.c.h.b16 %v5400
    %v6642 = vunpack.c.l.b16 %v5401
    %v6643 = vunpack.c.h.b16 %v5401
    %v6644 = vunpack.c.l.b16 %v5402
    %v6645 = vunpack.c.h.b16 %v5402
    %v6646 = vunpack.c.l.b16 %v5403
    %v6647 = vunpack.c.h.b16 %v5403
    %v6648 = vunpack.c.l.b16 %v5404
    %v6649 = vunpack.c.h.b16 %v5404
    %v6650 = vunpack.c.l.b16 %v5405
    %v6651 = vunpack.c.h.b16 %v5405
    %v6652 = vunpack.c.l.b16 %v5406
    %v6653 = vunpack.c.h.b16 %v5406
    %v6654 = vunpack.c.l.b16 %v5407
    %v6655 = vunpack.c.h.b16 %v5407
    %v6656 = vunpack.c.l.b16 %v5408
    %v6657 = vunpack.c.h.b16 %v5408
    %v6658 = vunpack.c.l.b16 %v5409
    %v6659 = vunpack.c.h.b16 %v5409
    %v6660 = vunpack.c.l.b16 %v5410
    %v6661 = vunpack.c.h.b16 %v5410
    %v6662 = vunpack.c.l.b16 %v5411
    %v6663 = vunpack.c.h.b16 %v5411
    %v6664 = vunpack.c.l.b16 %v5412
    %v6665 = vunpack.c.h.b16 %v5412
    %v6666 = vunpack.c.l.b16 %v5413
    %v6667 = vunpack.c.h.b16 %v5413
    %v6668 = vunpack.c.l.b16 %v5414
    %v6669 = vunpack.c.h.b16 %v5414
    %v6670 = vunpack.c.l.b16 %v5415
    %v6671 = vunpack.c.h.b16 %v5415
    %v6672 = vunpack.c.l.b16 %v5416
    %v6673 = vunpack.c.h.b16 %v5416
    %v6674 = vunpack.c.l.b16 %v5417
    %v6675 = vunpack.c.h.b16 %v5417
    %v6676 = vunpack.c.l.b16 %v5418
    %v6677 = vunpack.c.h.b16 %v5418
    %v6678 = vunpack.c.l.b16 %v5419
    %v6679 = vunpack.c.h.b16 %v5419
    %v6680 = vunpack.c.l.b16 %v5420
    %v6681 = vunpack.c.h.b16 %v5420
    %v6682 = vunpack.c.l.b16 %v5421
    %v6683 = vunpack.c.h.b16 %v5421
    %v6684 = vunpack.c.l.b16 %v5422
    %v6685 = vunpack.c.h.b16 %v5422
    %v6686 = vunpack.c.l.b16 %v5423
    %v6687 = vunpack.c.h.b16 %v5423
    %v6688 = vunpack.c.l.b16 %v5424
    %v6689 = vunpack.c.h.b16 %v5424
    %v6690 = vunpack.c.l.b16 %v5425
    %v6691 = vunpack.c.h.b16 %v5425
    %v6692 = vunpack.c.l.b16 %v5426
    %v6693 = vunpack.c.h.b16 %v5426
    %v6694 = vunpack.c.l.b16 %v5427
    %v6695 = vunpack.c.h.b16 %v5427
    %v6696 = vunpack.c.l.b16 %v5428
    %v6697 = vunpack.c.h.b16 %v5428
    %v6698 = vunpack.c.l.b16 %v5429
    %v6699 = vunpack.c.h.b16 %v5429
    %v6700 = vunpack.c.l.b16 %v5430
    %v6701 = vunpack.c.h.b16 %v5430
    %v6702 = vunpack.c.l.b16 %v5431
    %v6703 = vunpack.c.h.b16 %v5431
    %v6704 = vunpack.c.l.b16 %v5432
    %v6705 = vunpack.c.h.b16 %v5432
    %v6706 = vunpack.c.l.b16 %v5433
    %v6707 = vunpack.c.h.b16 %v5433
    %v6708 = vunpack.c.l.b16 %v5434
    %v6709 = vunpack.c.h.b16 %v5434
    %v6710 = vunpack.c.l.b16 %v5435
    %v6711 = vunpack.c.h.b16 %v5435
    %v6712 = vunpack.c.l.b16 %v5436
    %v6713 = vunpack.c.h.b16 %v5436
    %v6714 = vunpack.c.l.b16 %v5437
    %v6715 = vunpack.c.h.b16 %v5437
    %v6716 = vunpack.c.l.b16 %v5438
    %v6717 = vunpack.c.h.b16 %v5438
    %v6718 = vunpack.c.l.b16 %v5439
    %v6719 = vunpack.c.h.b16 %v5439
    %v6720 = vunpack.c.l.b16 %v5440
    %v6721 = vunpack.c.h.b16 %v5440
    %v6722 = vunpack.c.l.b16 %v5441
    %v6723 = vunpack.c.h.b16 %v5441
    %v6724 = vunpack.c.l.b16 %v5442
    %v6725 = vunpack.c.h.b16 %v5442
    %v6726 = vunpack.c.l.b16 %v5443
    %v6727 = vunpack.c.h.b16 %v5443
    %v6728 = vunpack.c.l.b16 %v5444
    %v6729 = vunpack.c.h.b16 %v5444
    %v6730 = vunpack.c.l.b16 %v5445
    %v6731 = vunpack.c.h.b16 %v5445
    %v6732 = vunpack.c.l.b16 %v5446
    %v6733 = vunpack.c.h.b16 %v5446
    %v6734 = vunpack.c.l.b16 %v5447
    %v6735 = vunpack.c.h.b16 %v5447
    %v6736 = vunpack.c.l.b16 %v5448
    %v6737 = vunpack.c.h.b16 %v5448
    %v6738 = vunpack.c.l.b16 %v5449
    %v6739 = vunpack.c.h.b16 %v5449
    %v6740 = vunpack.c.l.b16 %v5450
    %v6741 = vunpack.c.h.b16 %v5450
    %v6742 = vunpack.c.l.b16 %v5451
    %v6743 = vunpack.c.h.b16 %v5451
    %v6744 = vunpack.c.l.b16 %v5452
    %v6745 = vunpack.c.h.b16 %v5452
    %v6746 = vunpack.c.l.b16 %v5453
    %v6747 = vunpack.c.h.b16 %v5453
    %v6748 = vunpack.c.l.b16 %v5454
    %v6749 = vunpack.c.h.b16 %v5454
    %v6750 = vunpack.c.l.b16 %v5455
    %v6751 = vunpack.c.h.b16 %v5455
    %v6752 = vunpack.c.l.b16 %v5456
    %v6753 = vunpack.c.h.b16 %v5456
    %v6754 = vunpack.c.l.b16 %v5457
    %v6755 = vunpack.c.h.b16 %v5457
    %v6756 = vunpack.c.l.b16 %v5458
    %v6757 = vunpack.c.h.b16 %v5458
    %v6758 = vunpack.c.l.b16 %v5459
    %v6759 = vunpack.c.h.b16 %v5459
    %v6760 = vunpack.c.l.b16 %v5460
    %v6761 = vunpack.c.h.b16 %v5460
    %v6762 = vunpack.c.l.b16 %v5461
    %v6763 = vunpack.c.h.b16 %v5461
    %v6764 = vunpack.c.l.b16 %v5462
    %v6765 = vunpack.c.h.b16 %v5462
    %v6766 = vunpack.c.l.b16 %v5463
    %v6767 = vunpack.c.h.b16 %v5463
    %v6768 = vunpack.c.l.b16 %v5464
    %v6769 = vunpack.c.h.b16 %v5464
    %v6770 = vunpack.c.l.b16 %v5465
    %v6771 = vunpack.c.h.b16 %v5465
    %v6772 = vunpack.c.l.b16 %v5466
    %v6773 = vunpack.c.h.b16 %v5466
    %v6774 = vunpack.c.l.b16 %v5467
    %v6775 = vunpack.c.h.b16 %v5467
    %v6776 = vunpack.c.l.b16 %v5468
    %v6777 = vunpack.c.h.b16 %v5468
    %v6778 = vunpack.c.l.b16 %v5469
    %v6779 = vunpack.c.h.b16 %v5469
    %v6780 = vunpack.c.l.b16 %v5470
    %v6781 = vunpack.c.h.b16 %v5470
    %v6782 = vunpack.c.l.b16 %v5471
    %v6783 = vunpack.c.h.b16 %v5471
    %v6784 = vunpack.c.l.b16 %v5472
    %v6785 = vunpack.c.h.b16 %v5472
    %v6786 = vunpack.c.l.b16 %v5473
    %v6787 = vunpack.c.h.b16 %v5473
    %v6788 = vunpack.c.l.b16 %v5474
    %v6789 = vunpack.c.h.b16 %v5474
    %v6790 = vunpack.c.l.b16 %v5475
    %v6791 = vunpack.c.h.b16 %v5475
    %v6792 = vunpack.c.l.b16 %v5476
    %v6793 = vunpack.c.h.b16 %v5476
    %v6794 = vunpack.c.l.b16 %v5477
    %v6795 = vunpack.c.h.b16 %v5477
    %v6796 = vunpack.c.l.b16 %v5478
    %v6797 = vunpack.c.h.b16 %v5478
    %v6798 = vunpack.c.l.b16 %v5479
    %v6799 = vunpack.c.h.b16 %v5479
    %v6800 = vunpack.c.l.b16 %v5480
    %v6801 = vunpack.c.h.b16 %v5480
    %v6802 = vunpack.c.l.b16 %v5481
    %v6803 = vunpack.c.h.b16 %v5481
    %v6804 = vunpack.c.l.b16 %v5482
    %v6805 = vunpack.c.h.b16 %v5482
    %v6806 = vunpack.c.l.b16 %v5483
    %v6807 = vunpack.c.h.b16 %v5483
    %v6808 = vunpack.c.l.b16 %v5484
    %v6809 = vunpack.c.h.b16 %v5484
    %v6810 = vunpack.c.l.b16 %v5485
    %v6811 = vunpack.c.h.b16 %v5485
    %v6812 = vunpack.c.l.b16 %v5486
    %v6813 = vunpack.c.h.b16 %v5486
    %v6814 = vunpack.c.l.b16 %v5487
    %v6815 = vunpack.c.h.b16 %v5487
    %v6816 = vunpack.c.l.b16 %v5488
    %v6817 = vunpack.c.h.b16 %v5488
    %v6818 = vunpack.c.l.b16 %v5489
    %v6819 = vunpack.c.h.b16 %v5489
    %v6820 = vunpack.c.l.b16 %v5490
    %v6821 = vunpack.c.h.b16 %v5490
    %v6822 = vunpack.c.l.b16 %v5491
    %v6823 = vunpack.c.h.b16 %v5491
    %v6824 = vunpack.c.l.b16 %v5492
    %v6825 = vunpack.c.h.b16 %v5492
    %v6826 = vunpack.c.l.b16 %v5493
    %v6827 = vunpack.c.h.b16 %v5493
    %v6828 = vunpack.c.l.b16 %v5494
    %v6829 = vunpack.c.h.b16 %v5494
    %v6830 = vunpack.c.l.b16 %v5495
    %v6831 = vunpack.c.h.b16 %v5495
    %v6832 = vunpack.c.l.b16 %v5496
    %v6833 = vunpack.c.h.b16 %v5496
    %v6834 = vunpack.c.l.b16 %v5497
    %v6835 = vunpack.c.h.b16 %v5497
    %v6836 = vunpack.c.l.b16 %v5498
    %v6837 = vunpack.c.h.b16 %v5498
    %v6838 = vunpack.c.l.b16 %v5499
    %v6839 = vunpack.c.h.b16 %v5499
    %v6840 = vunpack.c.l.b16 %v5500
    %v6841 = vunpack.c.h.b16 %v5500
    %v6842 = vunpack.c.l.b16 %v5501
    %v6843 = vunpack.c.h.b16 %v5501
    %v6844 = vunpack.c.l.b16 %v5502
    %v6845 = vunpack.c.h.b16 %v5502
    %v6846 = vunpack.c.l.b16 %v5503
    %v6847 = vunpack.c.h.b16 %v5503
    %v6848 = vunpack.c.l.b16 %v5504
    %v6849 = vunpack.c.h.b16 %v5504
    %v6850 = vunpack.c.l.b16 %v5505
    %v6851 = vunpack.c.h.b16 %v5505
    %v6852 = vunpack.c.l.b16 %v5506
    %v6853 = vunpack.c.h.b16 %v5506
    %v6854 = vunpack.c.l.b16 %v5507
    %v6855 = vunpack.c.h.b16 %v5507
    %v6856 = vunpack.c.l.b16 %v5508
    %v6857 = vunpack.c.h.b16 %v5508
    %v6858 = vunpack.c.l.b16 %v5509
    %v6859 = vunpack.c.h.b16 %v5509
    %v6860 = vunpack.c.l.b16 %v5510
    %v6861 = vunpack.c.h.b16 %v5510
    %v6862 = vunpack.c.l.b16 %v5511
    %v6863 = vunpack.c.h.b16 %v5511
    %v6864 = vunpack.c.l.b16 %v5512
    %v6865 = vunpack.c.h.b16 %v5512
    %v6866 = vunpack.c.l.b16 %v5513
    %v6867 = vunpack.c.h.b16 %v5513
    %v6868 = vunpack.c.l.b16 %v5514
    %v6869 = vunpack.c.h.b16 %v5514
    %v6870 = vunpack.c.l.b16 %v5515
    %v6871 = vunpack.c.h.b16 %v5515
    %v6872 = vunpack.c.l.b16 %v5516
    %v6873 = vunpack.c.h.b16 %v5516
    %v6874 = vunpack.c.l.b16 %v5517
    %v6875 = vunpack.c.h.b16 %v5517
    %v6876 = vunpack.c.l.b16 %v5518
    %v6877 = vunpack.c.h.b16 %v5518
    %v6878 = vunpack.c.l.b16 %v5519
    %v6879 = vunpack.c.h.b16 %v5519
    %v6880 = vunpack.c.l.b16 %v5520
    %v6881 = vunpack.c.h.b16 %v5520
    %v6882 = vunpack.c.l.b16 %v5521
    %v6883 = vunpack.c.h.b16 %v5521
    %v6884 = vunpack.c.l.b16 %v5522
    %v6885 = vunpack.c.h.b16 %v5522
    %v6886 = vunpack.c.l.b16 %v5523
    %v6887 = vunpack.c.h.b16 %v5523
    %v6888 = vunpack.c.l.b16 %v5524
    %v6889 = vunpack.c.h.b16 %v5524
    %v6890 = vunpack.c.l.b16 %v5525
    %v6891 = vunpack.c.h.b16 %v5525
    %v6892 = vunpack.c.l.b16 %v5526
    %v6893 = vunpack.c.h.b16 %v5526
    %v6894 = vunpack.c.l.b16 %v5527
    %v6895 = vunpack.c.h.b16 %v5527
    %v6896 = vunpack.c.l.b16 %v5528
    %v6897 = vunpack.c.h.b16 %v5528
    %v6898 = vunpack.c.l.b16 %v5529
    %v6899 = vunpack.c.h.b16 %v5529
    %v6900 = vunpack.c.l.b16 %v5530
    %v6901 = vunpack.c.h.b16 %v5530
    %v6902 = vunpack.c.l.b16 %v5531
    %v6903 = vunpack.c.h.b16 %v5531
    %v6904 = vunpack.c.l.b16 %v5532
    %v6905 = vunpack.c.h.b16 %v5532
    %v6906 = vunpack.c.l.b16 %v5533
    %v6907 = vunpack.c.h.b16 %v5533
    %v6908 = vunpack.c.l.b16 %v5534
    %v6909 = vunpack.c.h.b16 %v5534
    %v6910 = vunpack.c.l.b16 %v5535
    %v6911 = vunpack.c.h.b16 %v5535
    %v6912 = vunpack.c.l.b16 %v5536
    %v6913 = vunpack.c.h.b16 %v5536
    %v6914 = vunpack.c.l.b16 %v5537
    %v6915 = vunpack.c.h.b16 %v5537
    %v6916 = vunpack.c.l.b16 %v5538
    %v6917 = vunpack.c.h.b16 %v5538
    %v6918 = vunpack.c.l.b16 %v5539
    %v6919 = vunpack.c.h.b16 %v5539
    %v6920 = vunpack.c.l.b16 %v5540
    %v6921 = vunpack.c.h.b16 %v5540
    %v6922 = vunpack.c.l.b16 %v5541
    %v6923 = vunpack.c.h.b16 %v5541
    %v6924 = vunpack.c.l.b16 %v5542
    %v6925 = vunpack.c.h.b16 %v5542
    %v6926 = vunpack.c.l.b16 %v5543
    %v6927 = vunpack.c.h.b16 %v5543
    %v6928 = vunpack.c.l.b16 %v5544
    %v6929 = vunpack.c.h.b16 %v5544
    %v6930 = vunpack.c.l.b16 %v5545
    %v6931 = vunpack.c.h.b16 %v5545
    %v6932 = vunpack.c.l.b16 %v5546
    %v6933 = vunpack.c.h.b16 %v5546
    %v6934 = vunpack.c.l.b16 %v5547
    %v6935 = vunpack.c.h.b16 %v5547
    %v6936 = vunpack.c.l.b16 %v5548
    %v6937 = vunpack.c.h.b16 %v5548
    %v6938 = vunpack.c.l.b16 %v5549
    %v6939 = vunpack.c.h.b16 %v5549
    %v6940 = vunpack.c.l.b16 %v5550
    %v6941 = vunpack.c.h.b16 %v5550
    %v6942 = vunpack.c.l.b16 %v5551
    %v6943 = vunpack.c.h.b16 %v5551
    %v6944 = vunpack.c.l.b16 %v5552
    %v6945 = vunpack.c.h.b16 %v5552
    %v6946 = vunpack.c.l.b16 %v5553
    %v6947 = vunpack.c.h.b16 %v5553
    %v6948 = vunpack.c.l.b16 %v5554
    %v6949 = vunpack.c.h.b16 %v5554
    %v6950 = vunpack.c.l.b16 %v5555
    %v6951 = vunpack.c.h.b16 %v5555
    %v6952 = vunpack.c.l.b16 %v5556
    %v6953 = vunpack.c.h.b16 %v5556
    %v6954 = vunpack.c.l.b16 %v5557
    %v6955 = vunpack.c.h.b16 %v5557
    %v6956 = vunpack.c.l.b16 %v5558
    %v6957 = vunpack.c.h.b16 %v5558
    %v6958 = vunpack.c.l.b16 %v5559
    %v6959 = vunpack.c.h.b16 %v5559
    %v6960 = vunpack.c.l.b16 %v5560
    %v6961 = vunpack.c.h.b16 %v5560
    %v6962 = vunpack.c.l.b16 %v5561
    %v6963 = vunpack.c.h.b16 %v5561
    %v6964 = vunpack.c.l.b16 %v5562
    %v6965 = vunpack.c.h.b16 %v5562
    %v6966 = vunpack.c.l.b16 %v5563
    %v6967 = vunpack.c.h.b16 %v5563
    %v6968 = vunpack.c.l.b16 %v5564
    %v6969 = vunpack.c.h.b16 %v5564
    %v6970 = vunpack.c.l.b16 %v5565
    %v6971 = vunpack.c.h.b16 %v5565
    %v6972 = vunpack.c.l.b16 %v5566
    %v6973 = vunpack.c.h.b16 %v5566
    %v6974 = vunpack.c.l.b16 %v5567
    %v6975 = vunpack.c.h.b16 %v5567
    %v6976 = vunpack.c.l.b16 %v5568
    %v6977 = vunpack.c.h.b16 %v5568
    %v6978 = vunpack.c.l.b16 %v5569
    %v6979 = vunpack.c.h.b16 %v5569
    %v6980 = vunpack.c.l.b16 %v5570
    %v6981 = vunpack.c.h.b16 %v5570
    %v6982 = vunpack.c.l.b16 %v5571
    %v6983 = vunpack.c.h.b16 %v5571
    %v6984 = vunpack.c.l.b16 %v5572
    %v6985 = vunpack.c.h.b16 %v5572
    %v6986 = vunpack.c.l.b16 %v5573
    %v6987 = vunpack.c.h.b16 %v5573
    %v6988 = vunpack.c.l.b16 %v5574
    %v6989 = vunpack.c.h.b16 %v5574
    %v6990 = vunpack.c.l.b16 %v5575
    %v6991 = vunpack.c.h.b16 %v5575
    %v6992 = vunpack.c.l.b16 %v5576
    %v6993 = vunpack.c.h.b16 %v5576
    %v6994 = vunpack.c.l.b16 %v5577
    %v6995 = vunpack.c.h.b16 %v5577
    %v6996 = vunpack.c.l.b16 %v5578
    %v6997 = vunpack.c.h.b16 %v5578
    %v6998 = vunpack.c.l.b16 %v5579
    %v6999 = vunpack.c.h.b16 %v5579
    %v7000 = vunpack.c.l.b16 %v5580
    %v7001 = vunpack.c.h.b16 %v5580
    %v7002 = vunpack.c.l.b16 %v5581
    %v7003 = vunpack.c.h.b16 %v5581
    %v7004 = vunpack.c.l.b16 %v5582
    %v7005 = vunpack.c.h.b16 %v5582
    %v7006 = vunpack.c.l.b16 %v5583
    %v7007 = vunpack.c.h.b16 %v5583
    %v7008 = vunpack.c.l.b16 %v5584
    %v7009 = vunpack.c.h.b16 %v5584
    %v7010 = vunpack.c.l.b16 %v5585
    %v7011 = vunpack.c.h.b16 %v5585
    %v7012 = vunpack.c.l.b16 %v5586
    %v7013 = vunpack.c.h.b16 %v5586
    %v7014 = vunpack.c.l.b16 %v5587
    %v7015 = vunpack.c.h.b16 %v5587
    %v7016 = vunpack.c.l.b16 %v5588
    %v7017 = vunpack.c.h.b16 %v5588
    %v7018 = vunpack.c.l.b16 %v5589
    %v7019 = vunpack.c.h.b16 %v5589
    %v7020 = vunpack.c.l.b16 %v5590
    %v7021 = vunpack.c.h.b16 %v5590
    %v7022 = vunpack.c.l.b16 %v5591
    %v7023 = vunpack.c.h.b16 %v5591
    %v7024 = vunpack.c.l.b16 %v5592
    %v7025 = vunpack.c.h.b16 %v5592
    %v7026 = vunpack.c.l.b16 %v5593
    %v7027 = vunpack.c.h.b16 %v5593
    %v7028 = vunpack.c.l.b16 %v5594
    %v7029 = vunpack.c.h.b16 %v5594
    %v7030 = vunpack.c.l.b16 %v5595
    %v7031 = vunpack.c.h.b16 %v5595
    %v7032 = vunpack.c.l.b16 %v5596
    %v7033 = vunpack.c.h.b16 %v5596
    %v7034 = vunpack.c.l.b16 %v5597
    %v7035 = vunpack.c.h.b16 %v5597
    %v7036 = vunpack.c.l.b16 %v5598
    %v7037 = vunpack.c.h.b16 %v5598
    %v7038 = vunpack.c.l.b16 %v5599
    %v7039 = vunpack.c.h.b16 %v5599
    %v7040 = vunpack.c.l.b16 %v5600
    %v7041 = vunpack.c.h.b16 %v5600
    %v7042 = vunpack.c.l.b16 %v5601
    %v7043 = vunpack.c.h.b16 %v5601
    %v7044 = vunpack.c.l.b16 %v5602
    %v7045 = vunpack.c.h.b16 %v5602
    %v7046 = vunpack.c.l.b16 %v5603
    %v7047 = vunpack.c.h.b16 %v5603
    %v7048 = vunpack.c.l.b16 %v5604
    %v7049 = vunpack.c.h.b16 %v5604
    %v7050 = vunpack.c.l.b16 %v5605
    %v7051 = vunpack.c.h.b16 %v5605
    %v7052 = vunpack.c.l.b16 %v5606
    %v7053 = vunpack.c.h.b16 %v5606
    %v7054 = vunpack.c.l.b16 %v5607
    %v7055 = vunpack.c.h.b16 %v5607
    %v7056 = vunpack.c.l.b16 %v5608
    %v7057 = vunpack.c.h.b16 %v5608
    %v7058 = vunpack.c.l.b16 %v5609
    %v7059 = vunpack.c.h.b16 %v5609
    %v7060 = vunpack.c.l.b16 %v5610
    %v7061 = vunpack.c.h.b16 %v5610
    %v7062 = vunpack.c.l.b16 %v5611
    %v7063 = vunpack.c.h.b16 %v5611
    %v7064 = vunpack.c.l.b16 %v5612
    %v7065 = vunpack.c.h.b16 %v5612
    %v7066 = vunpack.c.l.b16 %v5613
    %v7067 = vunpack.c.h.b16 %v5613
    %v7068 = vunpack.c.l.b16 %v5614
    %v7069 = vunpack.c.h.b16 %v5614
    %v7070 = vunpack.c.l.b16 %v5615
    %v7071 = vunpack.c.h.b16 %v5615
    %v7072 = vunpack.c.l.b16 %v5616
    %v7073 = vunpack.c.h.b16 %v5616
    %v7074 = vunpack.c.l.b16 %v5617
    %v7075 = vunpack.c.h.b16 %v5617
    %v7076 = vunpack.c.l.b16 %v5618
    %v7077 = vunpack.c.h.b16 %v5618
    %v7078 = vunpack.c.l.b16 %v5619
    %v7079 = vunpack.c.h.b16 %v5619
    %v7080 = vunpack.c.l.b16 %v5620
    %v7081 = vunpack.c.h.b16 %v5620
    %v7082 = vunpack.c.l.b16 %v5621
    %v7083 = vunpack.c.h.b16 %v5621
    %v7084 = vunpack.c.l.b16 %v5622
    %v7085 = vunpack.c.h.b16 %v5622
    %v7086 = vunpack.c.l.b16 %v5623
    %v7087 = vunpack.c.h.b16 %v5623
    %v7088 = vunpack.c.l.b16 %v5624
    %v7089 = vunpack.c.h.b16 %v5624
    %v7090 = vunpack.c.l.b16 %v5625
    %v7091 = vunpack.c.h.b16 %v5625
    %v7092 = vunpack.c.l.b16 %v5626
    %v7093 = vunpack.c.h.b16 %v5626
    %v7094 = vunpack.c.l.b16 %v5627
    %v7095 = vunpack.c.h.b16 %v5627
    %v7096 = vunpack.c.l.b16 %v5628
    %v7097 = vunpack.c.h.b16 %v5628
    %v7098 = vunpack.c.l.b16 %v5629
    %v7099 = vunpack.c.h.b16 %v5629
    %v7100 = vunpack.c.l.b16 %v5630
    %v7101 = vunpack.c.h.b16 %v5630
    %v7102 = vunpack.c.l.b16 %v5631
    %v7103 = vunpack.c.h.b16 %v5631
    %v7104 = vunpack.c.l.b16 %v5632
    %v7105 = vunpack.c.h.b16 %v5632
    %v7106 = vunpack.c.l.b16 %v5633
    %v7107 = vunpack.c.h.b16 %v5633
    %v7108 = vunpack.c.l.b16 %v5634
    %v7109 = vunpack.c.h.b16 %v5634
    %v7110 = vunpack.c.l.b16 %v5635
    %v7111 = vunpack.c.h.b16 %v5635
    %v7112 = vunpack.c.l.b16 %v5636
    %v7113 = vunpack.c.h.b16 %v5636
    %v7114 = vunpack.c.l.b16 %v5637
    %v7115 = vunpack.c.h.b16 %v5637
    %v7116 = vunpack.c.l.b16 %v5638
    %v7117 = vunpack.c.h.b16 %v5638
    %v7118 = vunpack.c.l.b16 %v5639
    %v7119 = vunpack.c.h.b16 %v5639
    %v7120 = vunpack.c.l.b16 %v5640
    %v7121 = vunpack.c.h.b16 %v5640
    %v7122 = vunpack.c.l.b16 %v5641
    %v7123 = vunpack.c.h.b16 %v5641
    %v7124 = vunpack.c.l.b16 %v5642
    %v7125 = vunpack.c.h.b16 %v5642
    %v7126 = vunpack.c.l.b16 %v5643
    %v7127 = vunpack.c.h.b16 %v5643
    %v7128 = vunpack.c.l.b16 %v5644
    %v7129 = vunpack.c.h.b16 %v5644
    %v7130 = vunpack.c.l.b16 %v5645
    %v7131 = vunpack.c.h.b16 %v5645
    %v7132 = vunpack.c.l.b16 %v5646
    %v7133 = vunpack.c.h.b16 %v5646
    %v7134 = vunpack.c.l.b16 %v5647
    %v7135 = vunpack.c.h.b16 %v5647
    %v7136 = vunpack.c.l.b16 %v5648
    %v7137 = vunpack.c.h.b16 %v5648
    %v7138 = vunpack.c.l.b16 %v5649
    %v7139 = vunpack.c.h.b16 %v5649
    %v7140 = vunpack.c.l.b16 %v5650
    %v7141 = vunpack.c.h.b16 %v5650
    %v7142 = vunpack.c.l.b16 %v5651
    %v7143 = vunpack.c.h.b16 %v5651
    %v7144 = vunpack.c.l.b16 %v5652
    %v7145 = vunpack.c.h.b16 %v5652
    %v7146 = vunpack.c.l.b16 %v5653
    %v7147 = vunpack.c.h.b16 %v5653
    %v7148 = vunpack.c.l.b16 %v5654
    %v7149 = vunpack.c.h.b16 %v5654
    %v7150 = vunpack.c.l.b16 %v5655
    %v7151 = vunpack.c.h.b16 %v5655
    %v7152 = vunpack.c.l.b16 %v5656
    %v7153 = vunpack.c.h.b16 %v5656
    %v7154 = vunpack.c.l.b16 %v5657
    %v7155 = vunpack.c.h.b16 %v5657
    %v7156 = vunpack.c.l.b16 %v5658
    %v7157 = vunpack.c.h.b16 %v5658
    %v7158 = vunpack.c.l.b16 %v5659
    %v7159 = vunpack.c.h.b16 %v5659
    %v7160 = vunpack.c.l.b16 %v5660
    %v7161 = vunpack.c.h.b16 %v5660
    %v7162 = vunpack.c.l.b16 %v5661
    %v7163 = vunpack.c.h.b16 %v5661
    %v7164 = vunpack.c.l.b16 %v5662
    %v7165 = vunpack.c.h.b16 %v5662
    %v7166 = vunpack.c.l.b16 %v5663
    %v7167 = vunpack.c.h.b16 %v5663
    %v7168 = vunpack.c.l.b16 %v5664
    %v7169 = vunpack.c.h.b16 %v5664
    %v7170 = vunpack.c.l.b16 %v5665
    %v7171 = vunpack.c.h.b16 %v5665
    %v7172 = vunpack.c.l.b16 %v5666
    %v7173 = vunpack.c.h.b16 %v5666
    %v7174 = vunpack.c.l.b16 %v5667
    %v7175 = vunpack.c.h.b16 %v5667
    %v7176 = vunpack.c.l.b16 %v5668
    %v7177 = vunpack.c.h.b16 %v5668
    %v7178 = vunpack.c.l.b16 %v5669
    %v7179 = vunpack.c.h.b16 %v5669
    %v7180 = vunpack.c.l.b16 %v5670
    %v7181 = vunpack.c.h.b16 %v5670
    %v7182 = vunpack.c.l.b16 %v5671
    %v7183 = vunpack.c.h.b16 %v5671
    %v7184 = vunpack.c.l.b16 %v5672
    %v7185 = vunpack.c.h.b16 %v5672
    %v7186 = vunpack.c.l.b16 %v5673
    %v7187 = vunpack.c.h.b16 %v5673
    %v7188 = vunpack.c.l.b16 %v5674
    %v7189 = vunpack.c.h.b16 %v5674
    %v7190 = vunpack.c.l.b16 %v5675
    %v7191 = vunpack.c.h.b16 %v5675
    %v7192 = vunpack.c.l.b16 %v5676
    %v7193 = vunpack.c.h.b16 %v5676
    %v7194 = vunpack.c.l.b16 %v5677
    %v7195 = vunpack.c.h.b16 %v5677
    %v7196 = vunpack.c.l.b16 %v5678
    %v7197 = vunpack.c.h.b16 %v5678
    %v7198 = vunpack.c.l.b16 %v5679
    %v7199 = vunpack.c.h.b16 %v5679
    %v7200 = vunpack.c.l.b16 %v5680
    %v7201 = vunpack.c.h.b16 %v5680
    %v7202 = vunpack.c.l.b16 %v5681
    %v7203 = vunpack.c.h.b16 %v5681
    %v7204 = vunpack.c.l.b16 %v5682
    %v7205 = vunpack.c.h.b16 %v5682
    %v7206 = vunpack.c.l.b16 %v5683
    %v7207 = vunpack.c.h.b16 %v5683
    %v7208 = vunpack.c.l.b16 %v5684
    %v7209 = vunpack.c.h.b16 %v5684
    %v7210 = vunpack.c.l.b16 %v5685
    %v7211 = vunpack.c.h.b16 %v5685
    %v7212 = vunpack.c.l.b16 %v5686
    %v7213 = vunpack.c.h.b16 %v5686
    %v7214 = vunpack.c.l.b16 %v5687
    %v7215 = vunpack.c.h.b16 %v5687
    %v7216 = vunpack.c.l.b16 %v5688
    %v7217 = vunpack.c.h.b16 %v5688
    %v7218 = vunpack.c.l.b16 %v5689
    %v7219 = vunpack.c.h.b16 %v5689
    %v7220 = vunpack.c.l.b16 %v5690
    %v7221 = vunpack.c.h.b16 %v5690
    %v7222 = vunpack.c.l.b16 %v5691
    %v7223 = vunpack.c.h.b16 %v5691
    %v7224 = vunpack.c.l.b16 %v5692
    %v7225 = vunpack.c.h.b16 %v5692
    %v7226 = vunpack.c.l.b16 %v5693
    %v7227 = vunpack.c.h.b16 %v5693
    %v7228 = vunpack.c.l.b16 %v5694
    %v7229 = vunpack.c.h.b16 %v5694
    %v7230 = vunpack.c.l.b16 %v5695
    %v7231 = vunpack.c.h.b16 %v5695
    %v7232 = vunpack.c.l.b16 %v5696
    %v7233 = vunpack.c.h.b16 %v5696
    %v7234 = vunpack.c.l.b16 %v5697
    %v7235 = vunpack.c.h.b16 %v5697
    %v7236 = vunpack.c.l.b16 %v5698
    %v7237 = vunpack.c.h.b16 %v5698
    %v7238 = vunpack.c.l.b16 %v5699
    %v7239 = vunpack.c.h.b16 %v5699
    %v7240 = vunpack.c.l.b16 %v5700
    %v7241 = vunpack.c.h.b16 %v5700
    %v7242 = vunpack.c.l.b16 %v5701
    %v7243 = vunpack.c.h.b16 %v5701
    %v7244 = vunpack.c.l.b16 %v5702
    %v7245 = vunpack.c.h.b16 %v5702
    %v7246 = vunpack.c.l.b16 %v5703
    %v7247 = vunpack.c.h.b16 %v5703
    %v7248 = vunpack.c.l.b16 %v5704
    %v7249 = vunpack.c.h.b16 %v5704
    %v7250 = vunpack.c.l.b16 %v5705
    %v7251 = vunpack.c.h.b16 %v5705
    %v7252 = vunpack.c.l.b16 %v5706
    %v7253 = vunpack.c.h.b16 %v5706
    %v7254 = vunpack.c.l.b16 %v5707
    %v7255 = vunpack.c.h.b16 %v5707
    %v7256 = vunpack.c.l.b16 %v5708
    %v7257 = vunpack.c.h.b16 %v5708
    %v7258 = vunpack.c.l.b16 %v5709
    %v7259 = vunpack.c.h.b16 %v5709
    %v7260 = vunpack.c.l.b16 %v5710
    %v7261 = vunpack.c.h.b16 %v5710
    %v7262 = vunpack.c.l.b16 %v5711
    %v7263 = vunpack.c.h.b16 %v5711
    %v7264 = vunpack.c.l.b16 %v5712
    %v7265 = vunpack.c.h.b16 %v5712
    %v7266 = vunpack.c.l.b16 %v5713
    %v7267 = vunpack.c.h.b16 %v5713
    %v7268 = vunpack.c.l.b16 %v5714
    %v7269 = vunpack.c.h.b16 %v5714
    %v7270 = vunpack.c.l.b16 %v5715
    %v7271 = vunpack.c.h.b16 %v5715
    %v7272 = vunpack.c.l.b16 %v5716
    %v7273 = vunpack.c.h.b16 %v5716
    %v7274 = vunpack.c.l.b16 %v5717
    %v7275 = vunpack.c.h.b16 %v5717
    %v7276 = vunpack.c.l.b16 %v5718
    %v7277 = vunpack.c.h.b16 %v5718
    %v7278 = vunpack.c.l.b16 %v5719
    %v7279 = vunpack.c.h.b16 %v5719
    %v7280 = vunpack.c.l.b16 %v5720
    %v7281 = vunpack.c.h.b16 %v5720
    %v7282 = vunpack.c.l.b16 %v5721
    %v7283 = vunpack.c.h.b16 %v5721
    %v7284 = vunpack.c.l.b16 %v5722
    %v7285 = vunpack.c.h.b16 %v5722
    %v7286 = vunpack.c.l.b16 %v5723
    %v7287 = vunpack.c.h.b16 %v5723
    %v7288 = vunpack.c.l.b16 %v5724
    %v7289 = vunpack.c.h.b16 %v5724
    %v7290 = vunpack.c.l.b16 %v5725
    %v7291 = vunpack.c.h.b16 %v5725
    %v7292 = vunpack.c.l.b16 %v5726
    %v7293 = vunpack.c.h.b16 %v5726
    %v7294 = vunpack.c.l.b16 %v5727
    %v7295 = vunpack.c.h.b16 %v5727
    %v7296 = vunpack.c.l.b16 %v5728
    %v7297 = vunpack.c.h.b16 %v5728
    %v7298 = vunpack.c.l.b16 %v5729
    %v7299 = vunpack.c.h.b16 %v5729
    %v7300 = vunpack.c.l.b16 %v5730
    %v7301 = vunpack.c.h.b16 %v5730
    %v7302 = vunpack.c.l.b16 %v5731
    %v7303 = vunpack.c.h.b16 %v5731
    %v7304 = vunpack.c.l.b16 %v5732
    %v7305 = vunpack.c.h.b16 %v5732
    %v7306 = vunpack.c.l.b16 %v5733
    %v7307 = vunpack.c.h.b16 %v5733
    %v7308 = vunpack.c.l.b16 %v5734
    %v7309 = vunpack.c.h.b16 %v5734
    %v7310 = vunpack.c.l.b16 %v5735
    %v7311 = vunpack.c.h.b16 %v5735
    %v7312 = vunpack.c.l.b16 %v5736
    %v7313 = vunpack.c.h.b16 %v5736
    %v7314 = vunpack.c.l.b16 %v5737
    %v7315 = vunpack.c.h.b16 %v5737
    %v7316 = vunpack.c.l.b16 %v5738
    %v7317 = vunpack.c.h.b16 %v5738
    %v7318 = vunpack.c.l.b16 %v5739
    %v7319 = vunpack.c.h.b16 %v5739
    %v7320 = vunpack.c.l.b16 %v5740
    %v7321 = vunpack.c.h.b16 %v5740
    %v7322 = vunpack.c.l.b16 %v5741
    %v7323 = vunpack.c.h.b16 %v5741
    %v7324 = vunpack.c.l.b16 %v5742
    %v7325 = vunpack.c.h.b16 %v5742
    %v7326 = vunpack.c.l.b16 %v5743
    %v7327 = vunpack.c.h.b16 %v5743
    %v7328 = vunpack.c.l.b16 %v5744
    %v7329 = vunpack.c.h.b16 %v5744
    %v7330 = vunpack.c.l.b16 %v5745
    %v7331 = vunpack.c.h.b16 %v5745
    %v7332 = vunpack.c.l.b16 %v5746
    %v7333 = vunpack.c.h.b16 %v5746
    %v7334 = vunpack.c.l.b16 %v5747
    %v7335 = vunpack.c.h.b16 %v5747
    %v7336 = vunpack.c.l.b16 %v5748
    %v7337 = vunpack.c.h.b16 %v5748
    %v7338 = vunpack.c.l.b16 %v5749
    %v7339 = vunpack.c.h.b16 %v5749
    %v7340 = vunpack.c.l.b16 %v5750
    %v7341 = vunpack.c.h.b16 %v5750
    %v7342 = vunpack.c.l.b16 %v5751
    %v7343 = vunpack.c.h.b16 %v5751
    %v7344 = vunpack.c.l.b16 %v5752
    %v7345 = vunpack.c.h.b16 %v5752
    %v7346 = vunpack.c.l.b16 %v5753
    %v7347 = vunpack.c.h.b16 %v5753
    %v7348 = vunpack.c.l.b16 %v5754
    %v7349 = vunpack.c.h.b16 %v5754
    %v7350 = vunpack.c.l.b16 %v5755
    %v7351 = vunpack.c.h.b16 %v5755
    %v7352 = vunpack.c.l.b16 %v5756
    %v7353 = vunpack.c.h.b16 %v5756
    %v7354 = vunpack.c.l.b16 %v5757
    %v7355 = vunpack.c.h.b16 %v5757
    %v7356 = vunpack.c.l.b16 %v5758
    %v7357 = vunpack.c.h.b16 %v5758
    %v7358 = vunpack.c.l.b16 %v5759
    %v7359 = vunpack.c.h.b16 %v5759
    %v7360 = vunpack.c.l.b16 %v5760
    %v7361 = vunpack.c.h.b16 %v5760
    %v7362 = vunpack.c.l.b16 %v5761
    %v7363 = vunpack.c.h.b16 %v5761
    %v7364 = vunpack.c.l.b16 %v5762
    %v7365 = vunpack.c.h.b16 %v5762
    %v7366 = vunpack.c.l.b16 %v5763
    %v7367 = vunpack.c.h.b16 %v5763
    %v7368 = vunpack.c.l.b16 %v5764
    %v7369 = vunpack.c.h.b16 %v5764
    %v7370 = vunpack.c.l.b16 %v5765
    %v7371 = vunpack.c.h.b16 %v5765
    %v7372 = vunpack.c.l.b16 %v5766
    %v7373 = vunpack.c.h.b16 %v5766
    %v7374 = vunpack.c.l.b16 %v5767
    %v7375 = vunpack.c.h.b16 %v5767
    %v7376 = vunpack.c.l.b16 %v5768
    %v7377 = vunpack.c.h.b16 %v5768
    %v7378 = vunpack.c.l.b16 %v5769
    %v7379 = vunpack.c.h.b16 %v5769
    %v7380 = vunpack.c.l.b16 %v5770
    %v7381 = vunpack.c.h.b16 %v5770
    %v7382 = vunpack.c.l.b16 %v5771
    %v7383 = vunpack.c.h.b16 %v5771
    %v7384 = vunpack.c.l.b16 %v5772
    %v7385 = vunpack.c.h.b16 %v5772
    %v7386 = vpack.c.b16 %v6370, %v6362
    %v7387 = vpack.c.b16 %v6371, %v6363
    %v7388 = vpack.c.b16 %v6372, %v6364
    %v7389 = vpack.c.b16 %v6373, %v6365
    %v7390 = vpack.c.b16 %v6374, %v6366
    %v7391 = vpack.c.b16 %v6375, %v6367
    %v7392 = vpack.c.b16 %v6376, %v6368
    %v7393 = vpack.c.b16 %v6377, %v6369
    %v7394 = vpack.c.b16 %v6386, %v6378
    %v7395 = vpack.c.b16 %v6387, %v6379
    %v7396 = vpack.c.b16 %v6388, %v6380
    %v7397 = vpack.c.b16 %v6389, %v6381
    %v7398 = vpack.c.b16 %v6390, %v6382
    %v7399 = vpack.c.b16 %v6391, %v6383
    %v7400 = vpack.c.b16 %v6392, %v6384
    %v7401 = vpack.c.b16 %v6393, %v6385
    %v7402 = vpack.c.b16 %v6402, %v6394
    %v7403 = vpack.c.b16 %v6403, %v6395
    %v7404 = vpack.c.b16 %v6404, %v6396
    %v7405 = vpack.c.b16 %v6405, %v6397
    %v7406 = vpack.c.b16 %v6406, %v6398
    %v7407 = vpack.c.b16 %v6407, %v6399
    %v7408 = vpack.c.b16 %v6408, %v6400
    %v7409 = vpack.c.b16 %v6409, %v6401
    %v7410 = vpack.c.b16 %v6418, %v6410
    %v7411 = vpack.c.b16 %v6419, %v6411
    %v7412 = vpack.c.b16 %v6420, %v6412
    %v7413 = vpack.c.b16 %v6421, %v6413
    %v7414 = vpack.c.b16 %v6422, %v6414
    %v7415 = vpack.c.b16 %v6423, %v6415
    %v7416 = vpack.c.b16 %v6424, %v6416
    %v7417 = vpack.c.b16 %v6425, %v6417
    %v7418 = vpack.c.b16 %v6434, %v6426
    %v7419 = vpack.c.b16 %v6435, %v6427
    %v7420 = vpack.c.b16 %v6436, %v6428
    %v7421 = vpack.c.b16 %v6437, %v6429
    %v7422 = vpack.c.b16 %v6438, %v6430
    %v7423 = vpack.c.b16 %v6439, %v6431
    %v7424 = vpack.c.b16 %v6440, %v6432
    %v7425 = vpack.c.b16 %v6441, %v6433
    %v7426 = vpack.c.b16 %v6450, %v6442
    %v7427 = vpack.c.b16 %v6451, %v6443
    %v7428 = vpack.c.b16 %v6452, %v6444
    %v7429 = vpack.c.b16 %v6453, %v6445
    %v7430 = vpack.c.b16 %v6454, %v6446
    %v7431 = vpack.c.b16 %v6455, %v6447
    %v7432 = vpack.c.b16 %v6456, %v6448
    %v7433 = vpack.c.b16 %v6457, %v6449
    %v7434 = vpack.c.b16 %v6466, %v6458
    %v7435 = vpack.c.b16 %v6467, %v6459
    %v7436 = vpack.c.b16 %v6468, %v6460
    %v7437 = vpack.c.b16 %v6469, %v6461
    %v7438 = vpack.c.b16 %v6470, %v6462
    %v7439 = vpack.c.b16 %v6471, %v6463
    %v7440 = vpack.c.b16 %v6472, %v6464
    %v7441 = vpack.c.b16 %v6473, %v6465
    %v7442 = vpack.c.b16 %v6482, %v6474
    %v7443 = vpack.c.b16 %v6483, %v6475
    %v7444 = vpack.c.b16 %v6484, %v6476
    %v7445 = vpack.c.b16 %v6485, %v6477
    %v7446 = vpack.c.b16 %v6486, %v6478
    %v7447 = vpack.c.b16 %v6487, %v6479
    %v7448 = vpack.c.b16 %v6488, %v6480
    %v7449 = vpack.c.b16 %v6489, %v6481
    %v7450 = vpack.c.b16 %v6498, %v6490
    %v7451 = vpack.c.b16 %v6499, %v6491
    %v7452 = vpack.c.b16 %v6500, %v6492
    %v7453 = vpack.c.b16 %v6501, %v6493
    %v7454 = vpack.c.b16 %v6502, %v6494
    %v7455 = vpack.c.b16 %v6503, %v6495
    %v7456 = vpack.c.b16 %v6504, %v6496
    %v7457 = vpack.c.b16 %v6505, %v6497
    %v7458 = vpack.c.b16 %v6514, %v6506
    %v7459 = vpack.c.b16 %v6515, %v6507
    %v7460 = vpack.c.b16 %v6516, %v6508
    %v7461 = vpack.c.b16 %v6517, %v6509
    %v7462 = vpack.c.b16 %v6518, %v6510
    %v7463 = vpack.c.b16 %v6519, %v6511
    %v7464 = vpack.c.b16 %v6520, %v6512
    %v7465 = vpack.c.b16 %v6521, %v6513
    %v7466 = vpack.c.b16 %v6530, %v6522
    %v7467 = vpack.c.b16 %v6531, %v6523
    %v7468 = vpack.c.b16 %v6532, %v6524
    %v7469 = vpack.c.b16 %v6533, %v6525
    %v7470 = vpack.c.b16 %v6534, %v6526
    %v7471 = vpack.c.b16 %v6535, %v6527
    %v7472 = vpack.c.b16 %v6536, %v6528
    %v7473 = vpack.c.b16 %v6537, %v6529
    %v7474 = vpack.c.b16 %v6546, %v6538
    %v7475 = vpack.c.b16 %v6547, %v6539
    %v7476 = vpack.c.b16 %v6548, %v6540
    %v7477 = vpack.c.b16 %v6549, %v6541
    %v7478 = vpack.c.b16 %v6550, %v6542
    %v7479 = vpack.c.b16 %v6551, %v6543
    %v7480 = vpack.c.b16 %v6552, %v6544
    %v7481 = vpack.c.b16 %v6553, %v6545
    %v7482 = vpack.c.b16 %v6562, %v6554
    %v7483 = vpack.c.b16 %v6563, %v6555
    %v7484 = vpack.c.b16 %v6564, %v6556
    %v7485 = vpack.c.b16 %v6565, %v6557
    %v7486 = vpack.c.b16 %v6566, %v6558
    %v7487 = vpack.c.b16 %v6567, %v6559
    %v7488 = vpack.c.b16 %v6568, %v6560
    %v7489 = vpack.c.b16 %v6569, %v6561
    %v7490 = vpack.c.b16 %v6578, %v6570
    %v7491 = vpack.c.b16 %v6579, %v6571
    %v7492 = vpack.c.b16 %v6580, %v6572
    %v7493 = vpack.c.b16 %v6581, %v6573
    %v7494 = vpack.c.b16 %v6582, %v6574
    %v7495 = vpack.c.b16 %v6583, %v6575
    %v7496 = vpack.c.b16 %v6584, %v6576
    %v7497 = vpack.c.b16 %v6585, %v6577
    %v7498 = vpack.c.b16 %v6594, %v6586
    %v7499 = vpack.c.b16 %v6595, %v6587
    %v7500 = vpack.c.b16 %v6596, %v6588
    %v7501 = vpack.c.b16 %v6597, %v6589
    %v7502 = vpack.c.b16 %v6598, %v6590
    %v7503 = vpack.c.b16 %v6599, %v6591
    %v7504 = vpack.c.b16 %v6600, %v6592
    %v7505 = vpack.c.b16 %v6601, %v6593
    %v7506 = vpack.c.b16 %v6610, %v6602
    %v7507 = vpack.c.b16 %v6611, %v6603
    %v7508 = vpack.c.b16 %v6612, %v6604
    %v7509 = vpack.c.b16 %v6613, %v6605
    %v7510 = vpack.c.b16 %v6614, %v6606
    %v7511 = vpack.c.b16 %v6615, %v6607
    %v7512 = vpack.c.b16 %v6616, %v6608
    %v7513 = vpack.c.b16 %v6617, %v6609
    %v7514 = vpack.c.b16 %v6626, %v6618
    %v7515 = vpack.c.b16 %v6627, %v6619
    %v7516 = vpack.c.b16 %v6628, %v6620
    %v7517 = vpack.c.b16 %v6629, %v6621
    %v7518 = vpack.c.b16 %v6630, %v6622
    %v7519 = vpack.c.b16 %v6631, %v6623
    %v7520 = vpack.c.b16 %v6632, %v6624
    %v7521 = vpack.c.b16 %v6633, %v6625
    %v7522 = vpack.c.b16 %v6642, %v6634
    %v7523 = vpack.c.b16 %v6643, %v6635
    %v7524 = vpack.c.b16 %v6644, %v6636
    %v7525 = vpack.c.b16 %v6645, %v6637
    %v7526 = vpack.c.b16 %v6646, %v6638
    %v7527 = vpack.c.b16 %v6647, %v6639
    %v7528 = vpack.c.b16 %v6648, %v6640
    %v7529 = vpack.c.b16 %v6649, %v6641
    %v7530 = vpack.c.b16 %v6658, %v6650
    %v7531 = vpack.c.b16 %v6659, %v6651
    %v7532 = vpack.c.b16 %v6660, %v6652
    %v7533 = vpack.c.b16 %v6661, %v6653
    %v7534 = vpack.c.b16 %v6662, %v6654
    %v7535 = vpack.c.b16 %v6663, %v6655
    %v7536 = vpack.c.b16 %v6664, %v6656
    %v7537 = vpack.c.b16 %v6665, %v6657
    %v7538 = vpack.c.b16 %v6674, %v6666
    %v7539 = vpack.c.b16 %v6675, %v6667
    %v7540 = vpack.c.b16 %v6676, %v6668
    %v7541 = vpack.c.b16 %v6677, %v6669
    %v7542 = vpack.c.b16 %v6678, %v6670
    %v7543 = vpack.c.b16 %v6679, %v6671
    %v7544 = vpack.c.b16 %v6680, %v6672
    %v7545 = vpack.c.b16 %v6681, %v6673
    %v7546 = vpack.c.b16 %v6690, %v6682
    %v7547 = vpack.c.b16 %v6691, %v6683
    %v7548 = vpack.c.b16 %v6692, %v6684
    %v7549 = vpack.c.b16 %v6693, %v6685
    %v7550 = vpack.c.b16 %v6694, %v6686
    %v7551 = vpack.c.b16 %v6695, %v6687
    %v7552 = vpack.c.b16 %v6696, %v6688
    %v7553 = vpack.c.b16 %v6697, %v6689
    %v7554 = vpack.c.b16 %v6706, %v6698
    %v7555 = vpack.c.b16 %v6707, %v6699
    %v7556 = vpack.c.b16 %v6708, %v6700
    %v7557 = vpack.c.b16 %v6709, %v6701
    %v7558 = vpack.c.b16 %v6710, %v6702
    %v7559 = vpack.c.b16 %v6711, %v6703
    %v7560 = vpack.c.b16 %v6712, %v6704
    %v7561 = vpack.c.b16 %v6713, %v6705
    %v7562 = vpack.c.b16 %v6722, %v6714
    %v7563 = vpack.c.b16 %v6723, %v6715
    %v7564 = vpack.c.b16 %v6724, %v6716
    %v7565 = vpack.c.b16 %v6725, %v6717
    %v7566 = vpack.c.b16 %v6726, %v6718
    %v7567 = vpack.c.b16 %v6727, %v6719
    %v7568 = vpack.c.b16 %v6728, %v6720
    %v7569 = vpack.c.b16 %v6729, %v6721
    %v7570 = vpack.c.b16 %v6738, %v6730
    %v7571 = vpack.c.b16 %v6739, %v6731
    %v7572 = vpack.c.b16 %v6740, %v6732
    %v7573 = vpack.c.b16 %v6741, %v6733
    %v7574 = vpack.c.b16 %v6742, %v6734
    %v7575 = vpack.c.b16 %v6743, %v6735
    %v7576 = vpack.c.b16 %v6744, %v6736
    %v7577 = vpack.c.b16 %v6745, %v6737
    %v7578 = vpack.c.b16 %v6754, %v6746
    %v7579 = vpack.c.b16 %v6755, %v6747
    %v7580 = vpack.c.b16 %v6756, %v6748
    %v7581 = vpack.c.b16 %v6757, %v6749
    %v7582 = vpack.c.b16 %v6758, %v6750
    %v7583 = vpack.c.b16 %v6759, %v6751
    %v7584 = vpack.c.b16 %v6760, %v6752
    %v7585 = vpack.c.b16 %v6761, %v6753
    %v7586 = vpack.c.b16 %v6770, %v6762
    %v7587 = vpack.c.b16 %v6771, %v6763
    %v7588 = vpack.c.b16 %v6772, %v6764
    %v7589 = vpack.c.b16 %v6773, %v6765
    %v7590 = vpack.c.b16 %v6774, %v6766
    %v7591 = vpack.c.b16 %v6775, %v6767
    %v7592 = vpack.c.b16 %v6776, %v6768
    %v7593 = vpack.c.b16 %v6777, %v6769
    %v7594 = vpack.c.b16 %v6786, %v6778
    %v7595 = vpack.c.b16 %v6787, %v6779
    %v7596 = vpack.c.b16 %v6788, %v6780
    %v7597 = vpack.c.b16 %v6789, %v6781
    %v7598 = vpack.c.b16 %v6790, %v6782
    %v7599 = vpack.c.b16 %v6791, %v6783
    %v7600 = vpack.c.b16 %v6792, %v6784
    %v7601 = vpack.c.b16 %v6793, %v6785
    %v7602 = vpack.c.b16 %v6802, %v6794
    %v7603 = vpack.c.b16 %v6803, %v6795
    %v7604 = vpack.c.b16 %v6804, %v6796
    %v7605 = vpack.c.b16 %v6805, %v6797
    %v7606 = vpack.c.b16 %v6806, %v6798
    %v7607 = vpack.c.b16 %v6807, %v6799
    %v7608 = vpack.c.b16 %v6808, %v6800
    %v7609 = vpack.c.b16 %v6809, %v6801
    %v7610 = vpack.c.b16 %v6818, %v6810
    %v7611 = vpack.c.b16 %v6819, %v6811
    %v7612 = vpack.c.b16 %v6820, %v6812
    %v7613 = vpack.c.b16 %v6821, %v6813
    %v7614 = vpack.c.b16 %v6822, %v6814
    %v7615 = vpack.c.b16 %v6823, %v6815
    %v7616 = vpack.c.b16 %v6824, %v6816
    %v7617 = vpack.c.b16 %v6825, %v6817
    %v7618 = vpack.c.b16 %v6834, %v6826
    %v7619 = vpack.c.b16 %v6835, %v6827
    %v7620 = vpack.c.b16 %v6836, %v6828
    %v7621 = vpack.c.b16 %v6837, %v6829
    %v7622 = vpack.c.b16 %v6838, %v6830
    %v7623 = vpack.c.b16 %v6839, %v6831
    %v7624 = vpack.c.b16 %v6840, %v6832
    %v7625 = vpack.c.b16 %v6841, %v6833
    %v7626 = vpack.c.b16 %v6850, %v6842
    %v7627 = vpack.c.b16 %v6851, %v6843
    %v7628 = vpack.c.b16 %v6852, %v6844
    %v7629 = vpack.c.b16 %v6853, %v6845
    %v7630 = vpack.c.b16 %v6854, %v6846
    %v7631 = vpack.c.b16 %v6855, %v6847
    %v7632 = vpack.c.b16 %v6856, %v6848
    %v7633 = vpack.c.b16 %v6857, %v6849
    %v7634 = vpack.c.b16 %v6866, %v6858
    %v7635 = vpack.c.b16 %v6867, %v6859
    %v7636 = vpack.c.b16 %v6868, %v6860
    %v7637 = vpack.c.b16 %v6869, %v6861
    %v7638 = vpack.c.b16 %v6870, %v6862
    %v7639 = vpack.c.b16 %v6871, %v6863
    %v7640 = vpack.c.b16 %v6872, %v6864
    %v7641 = vpack.c.b16 %v6873, %v6865
    %v7642 = vpack.c.b16 %v6882, %v6874
    %v7643 = vpack.c.b16 %v6883, %v6875
    %v7644 = vpack.c.b16 %v6884, %v6876
    %v7645 = vpack.c.b16 %v6885, %v6877
    %v7646 = vpack.c.b16 %v6886, %v6878
    %v7647 = vpack.c.b16 %v6887, %v6879
    %v7648 = vpack.c.b16 %v6888, %v6880
    %v7649 = vpack.c.b16 %v6889, %v6881
    %v7650 = vpack.c.b16 %v6898, %v6890
    %v7651 = vpack.c.b16 %v6899, %v6891
    %v7652 = vpack.c.b16 %v6900, %v6892
    %v7653 = vpack.c.b16 %v6901, %v6893
    %v7654 = vpack.c.b16 %v6902, %v6894
    %v7655 = vpack.c.b16 %v6903, %v6895
    %v7656 = vpack.c.b16 %v6904, %v6896
    %v7657 = vpack.c.b16 %v6905, %v6897
    %v7658 = vpack.c.b16 %v6914, %v6906
    %v7659 = vpack.c.b16 %v6915, %v6907
    %v7660 = vpack.c.b16 %v6916, %v6908
    %v7661 = vpack.c.b16 %v6917, %v6909
    %v7662 = vpack.c.b16 %v6918, %v6910
    %v7663 = vpack.c.b16 %v6919, %v6911
    %v7664 = vpack.c.b16 %v6920, %v6912
    %v7665 = vpack.c.b16 %v6921, %v6913
    %v7666 = vpack.c.b16 %v6930, %v6922
    %v7667 = vpack.c.b16 %v6931, %v6923
    %v7668 = vpack.c.b16 %v6932, %v6924
    %v7669 = vpack.c.b16 %v6933, %v6925
    %v7670 = vpack.c.b16 %v6934, %v6926
    %v7671 = vpack.c.b16 %v6935, %v6927
    %v7672 = vpack.c.b16 %v6936, %v6928
    %v7673 = vpack.c.b16 %v6937, %v6929
    %v7674 = vpack.c.b16 %v6946, %v6938
    %v7675 = vpack.c.b16 %v6947, %v6939
    %v7676 = vpack.c.b16 %v6948, %v6940
    %v7677 = vpack.c.b16 %v6949, %v6941
    %v7678 = vpack.c.b16 %v6950, %v6942
    %v7679 = vpack.c.b16 %v6951, %v6943
    %v7680 = vpack.c.b16 %v6952, %v6944
    %v7681 = vpack.c.b16 %v6953, %v6945
    %v7682 = vpack.c.b16 %v6962, %v6954
    %v7683 = vpack.c.b16 %v6963, %v6955
    %v7684 = vpack.c.b16 %v6964, %v6956
    %v7685 = vpack.c.b16 %v6965, %v6957
    %v7686 = vpack.c.b16 %v6966, %v6958
    %v7687 = vpack.c.b16 %v6967, %v6959
    %v7688 = vpack.c.b16 %v6968, %v6960
    %v7689 = vpack.c.b16 %v6969, %v6961
    %v7690 = vpack.c.b16 %v6978, %v6970
    %v7691 = vpack.c.b16 %v6979, %v6971
    %v7692 = vpack.c.b16 %v6980, %v6972
    %v7693 = vpack.c.b16 %v6981, %v6973
    %v7694 = vpack.c.b16 %v6982, %v6974
    %v7695 = vpack.c.b16 %v6983, %v6975
    %v7696 = vpack.c.b16 %v6984, %v6976
    %v7697 = vpack.c.b16 %v6985, %v6977
    %v7698 = vpack.c.b16 %v6994, %v6986
    %v7699 = vpack.c.b16 %v6995, %v6987
    %v7700 = vpack.c.b16 %v6996, %v6988
    %v7701 = vpack.c.b16 %v6997, %v6989
    %v7702 = vpack.c.b16 %v6998, %v6990
    %v7703 = vpack.c.b16 %v6999, %v6991
    %v7704 = vpack.c.b16 %v7000, %v6992
    %v7705 = vpack.c.b16 %v7001, %v6993
    %v7706 = vpack.c.b16 %v7010, %v7002
    %v7707 = vpack.c.b16 %v7011, %v7003
    %v7708 = vpack.c.b16 %v7012, %v7004
    %v7709 = vpack.c.b16 %v7013, %v7005
    %v7710 = vpack.c.b16 %v7014, %v7006
    %v7711 = vpack.c.b16 %v7015, %v7007
    %v7712 = vpack.c.b16 %v7016, %v7008
    %v7713 = vpack.c.b16 %v7017, %v7009
    %v7714 = vpack.c.b16 %v7026, %v7018
    %v7715 = vpack.c.b16 %v7027, %v7019
    %v7716 = vpack.c.b16 %v7028, %v7020
    %v7717 = vpack.c.b16 %v7029, %v7021
    %v7718 = vpack.c.b16 %v7030, %v7022
    %v7719 = vpack.c.b16 %v7031, %v7023
    %v7720 = vpack.c.b16 %v7032, %v7024
    %v7721 = vpack.c.b16 %v7033, %v7025
    %v7722 = vpack.c.b16 %v7042, %v7034
    %v7723 = vpack.c.b16 %v7043, %v7035
    %v7724 = vpack.c.b16 %v7044, %v7036
    %v7725 = vpack.c.b16 %v7045, %v7037
    %v7726 = vpack.c.b16 %v7046, %v7038
    %v7727 = vpack.c.b16 %v7047, %v7039
    %v7728 = vpack.c.b16 %v7048, %v7040
    %v7729 = vpack.c.b16 %v7049, %v7041
    %v7730 = vpack.c.b16 %v7058, %v7050
    %v7731 = vpack.c.b16 %v7059, %v7051
    %v7732 = vpack.c.b16 %v7060, %v7052
    %v7733 = vpack.c.b16 %v7061, %v7053
    %v7734 = vpack.c.b16 %v7062, %v7054
    %v7735 = vpack.c.b16 %v7063, %v7055
    %v7736 = vpack.c.b16 %v7064, %v7056
    %v7737 = vpack.c.b16 %v7065, %v7057
    %v7738 = vpack.c.b16 %v7074, %v7066
    %v7739 = vpack.c.b16 %v7075, %v7067
    %v7740 = vpack.c.b16 %v7076, %v7068
    %v7741 = vpack.c.b16 %v7077, %v7069
    %v7742 = vpack.c.b16 %v7078, %v7070
    %v7743 = vpack.c.b16 %v7079, %v7071
    %v7744 = vpack.c.b16 %v7080, %v7072
    %v7745 = vpack.c.b16 %v7081, %v7073
    %v7746 = vpack.c.b16 %v7090, %v7082
    %v7747 = vpack.c.b16 %v7091, %v7083
    %v7748 = vpack.c.b16 %v7092, %v7084
    %v7749 = vpack.c.b16 %v7093, %v7085
    %v7750 = vpack.c.b16 %v7094, %v7086
    %v7751 = vpack.c.b16 %v7095, %v7087
    %v7752 = vpack.c.b16 %v7096, %v7088
    %v7753 = vpack.c.b16 %v7097, %v7089
    %v7754 = vpack.c.b16 %v7106, %v7098
    %v7755 = vpack.c.b16 %v7107, %v7099
    %v7756 = vpack.c.b16 %v7108, %v7100
    %v7757 = vpack.c.b16 %v7109, %v7101
    %v7758 = vpack.c.b16 %v7110, %v7102
    %v7759 = vpack.c.b16 %v7111, %v7103
    %v7760 = vpack.c.b16 %v7112, %v7104
    %v7761 = vpack.c.b16 %v7113, %v7105
    %v7762 = vpack.c.b16 %v7122, %v7114
    %v7763 = vpack.c.b16 %v7123, %v7115
    %v7764 = vpack.c.b16 %v7124, %v7116
    %v7765 = vpack.c.b16 %v7125, %v7117
    %v7766 = vpack.c.b16 %v7126, %v7118
    %v7767 = vpack.c.b16 %v7127, %v7119
    %v7768 = vpack.c.b16 %v7128, %v7120
    %v7769 = vpack.c.b16 %v7129, %v7121
    %v7770 = vpack.c.b16 %v7138, %v7130
    %v7771 = vpack.c.b16 %v7139, %v7131
    %v7772 = vpack.c.b16 %v7140, %v7132
    %v7773 = vpack.c.b16 %v7141, %v7133
    %v7774 = vpack.c.b16 %v7142, %v7134
    %v7775 = vpack.c.b16 %v7143, %v7135
    %v7776 = vpack.c.b16 %v7144, %v7136
    %v7777 = vpack.c.b16 %v7145, %v7137
    %v7778 = vpack.c.b16 %v7154, %v7146
    %v7779 = vpack.c.b16 %v7155, %v7147
    %v7780 = vpack.c.b16 %v7156, %v7148
    %v7781 = vpack.c.b16 %v7157, %v7149
    %v7782 = vpack.c.b16 %v7158, %v7150
    %v7783 = vpack.c.b16 %v7159, %v7151
    %v7784 = vpack.c.b16 %v7160, %v7152
    %v7785 = vpack.c.b16 %v7161, %v7153
    %v7786 = vpack.c.b16 %v7170, %v7162
    %v7787 = vpack.c.b16 %v7171, %v7163
    %v7788 = vpack.c.b16 %v7172, %v7164
    %v7789 = vpack.c.b16 %v7173, %v7165
    %v7790 = vpack.c.b16 %v7174, %v7166
    %v7791 = vpack.c.b16 %v7175, %v7167
    %v7792 = vpack.c.b16 %v7176, %v7168
    %v7793 = vpack.c.b16 %v7177, %v7169
    %v7794 = vpack.c.b16 %v7186, %v7178
    %v7795 = vpack.c.b16 %v7187, %v7179
    %v7796 = vpack.c.b16 %v7188, %v7180
    %v7797 = vpack.c.b16 %v7189, %v7181
    %v7798 = vpack.c.b16 %v7190, %v7182
    %v7799 = vpack.c.b16 %v7191, %v7183
    %v7800 = vpack.c.b16 %v7192, %v7184
    %v7801 = vpack.c.b16 %v7193, %v7185
    %v7802 = vpack.c.b16 %v7202, %v7194
    %v7803 = vpack.c.b16 %v7203, %v7195
    %v7804 = vpack.c.b16 %v7204, %v7196
    %v7805 = vpack.c.b16 %v7205, %v7197
    %v7806 = vpack.c.b16 %v7206, %v7198
    %v7807 = vpack.c.b16 %v7207, %v7199
    %v7808 = vpack.c.b16 %v7208, %v7200
    %v7809 = vpack.c.b16 %v7209, %v7201
    %v7810 = vpack.c.b16 %v7218, %v7210
    %v7811 = vpack.c.b16 %v7219, %v7211
    %v7812 = vpack.c.b16 %v7220, %v7212
    %v7813 = vpack.c.b16 %v7221, %v7213
    %v7814 = vpack.c.b16 %v7222, %v7214
    %v7815 = vpack.c.b16 %v7223, %v7215
    %v7816 = vpack.c.b16 %v7224, %v7216
    %v7817 = vpack.c.b16 %v7225, %v7217
    %v7818 = vpack.c.b16 %v7234, %v7226
    %v7819 = vpack.c.b16 %v7235, %v7227
    %v7820 = vpack.c.b16 %v7236, %v7228
    %v7821 = vpack.c.b16 %v7237, %v7229
    %v7822 = vpack.c.b16 %v7238, %v7230
    %v7823 = vpack.c.b16 %v7239, %v7231
    %v7824 = vpack.c.b16 %v7240, %v7232
    %v7825 = vpack.c.b16 %v7241, %v7233
    %v7826 = vpack.c.b16 %v7250, %v7242
    %v7827 = vpack.c.b16 %v7251, %v7243
    %v7828 = vpack.c.b16 %v7252, %v7244
    %v7829 = vpack.c.b16 %v7253, %v7245
    %v7830 = vpack.c.b16 %v7254, %v7246
    %v7831 = vpack.c.b16 %v7255, %v7247
    %v7832 = vpack.c.b16 %v7256, %v7248
    %v7833 = vpack.c.b16 %v7257, %v7249
    %v7834 = vpack.c.b16 %v7266, %v7258
    %v7835 = vpack.c.b16 %v7267, %v7259
    %v7836 = vpack.c.b16 %v7268, %v7260
    %v7837 = vpack.c.b16 %v7269, %v7261
    %v7838 = vpack.c.b16 %v7270, %v7262
    %v7839 = vpack.c.b16 %v7271, %v7263
    %v7840 = vpack.c.b16 %v7272, %v7264
    %v7841 = vpack.c.b16 %v7273, %v7265
    %v7842 = vpack.c.b16 %v7282, %v7274
    %v7843 = vpack.c.b16 %v7283, %v7275
    %v7844 = vpack.c.b16 %v7284, %v7276
    %v7845 = vpack.c.b16 %v7285, %v7277
    %v7846 = vpack.c.b16 %v7286, %v7278
    %v7847 = vpack.c.b16 %v7287, %v7279
    %v7848 = vpack.c.b16 %v7288, %v7280
    %v7849 = vpack.c.b16 %v7289, %v7281
    %v7850 = vpack.c.b16 %v7298, %v7290
    %v7851 = vpack.c.b16 %v7299, %v7291
    %v7852 = vpack.c.b16 %v7300, %v7292
    %v7853 = vpack.c.b16 %v7301, %v7293
    %v7854 = vpack.c.b16 %v7302, %v7294
    %v7855 = vpack.c.b16 %v7303, %v7295
    %v7856 = vpack.c.b16 %v7304, %v7296
    %v7857 = vpack.c.b16 %v7305, %v7297
    %v7858 = vpack.c.b16 %v7314, %v7306
    %v7859 = vpack.c.b16 %v7315, %v7307
    %v7860 = vpack.c.b16 %v7316, %v7308
    %v7861 = vpack.c.b16 %v7317, %v7309
    %v7862 = vpack.c.b16 %v7318, %v7310
    %v7863 = vpack.c.b16 %v7319, %v7311
    %v7864 = vpack.c.b16 %v7320, %v7312
    %v7865 = vpack.c.b16 %v7321, %v7313
    %v7866 = vpack.c.b16 %v7330, %v7322
    %v7867 = vpack.c.b16 %v7331, %v7323
    %v7868 = vpack.c.b16 %v7332, %v7324
    %v7869 = vpack.c.b16 %v7333, %v7325
    %v7870 = vpack.c.b16 %v7334, %v7326
    %v7871 = vpack.c.b16 %v7335, %v7327
    %v7872 = vpack.c.b16 %v7336, %v7328
    %v7873 = vpack.c.b16 %v7337, %v7329
    %v7874 = vpack.c.b16 %v7346, %v7338
    %v7875 = vpack.c.b16 %v7347, %v7339
    %v7876 = vpack.c.b16 %v7348, %v7340
    %v7877 = vpack.c.b16 %v7349, %v7341
    %v7878 = vpack.c.b16 %v7350, %v7342
    %v7879 = vpack.c.b16 %v7351, %v7343
    %v7880 = vpack.c.b16 %v7352, %v7344
    %v7881 = vpack.c.b16 %v7353, %v7345
    %v7882 = vpack.c.b16 %v7362, %v7354
    %v7883 = vpack.c.b16 %v7363, %v7355
    %v7884 = vpack.c.b16 %v7364, %v7356
    %v7885 = vpack.c.b16 %v7365, %v7357
    %v7886 = vpack.c.b16 %v7366, %v7358
    %v7887 = vpack.c.b16 %v7367, %v7359
    %v7888 = vpack.c.b16 %v7368, %v7360
    %v7889 = vpack.c.b16 %v7369, %v7361
    %v7890 = vpack.c.b16 %v7378, %v7370
    %v7891 = vpack.c.b16 %v7379, %v7371
    %v7892 = vpack.c.b16 %v7380, %v7372
    %v7893 = vpack.c.b16 %v7381, %v7373
    %v7894 = vpack.c.b16 %v7382, %v7374
    %v7895 = vpack.c.b16 %v7383, %v7375
    %v7896 = vpack.c.b16 %v7384, %v7376
    %v7897 = vpack.c.b16 %v7385, %v7377
    %8410 = vmatprep.subr.bf16.mxu0 %v7443
    %8411 = vmatpush1.bf16.msra.mxu0 %v7442
    %8412 = vmatprep.subr.bf16.mxu0 %v7435
    %8413 = vmatpush1.bf16.msra.mxu0 %v7434
    %8414 = vmatprep.subr.bf16.mxu0 %v7427
    %8415 = vmatpush1.bf16.msra.mxu0 %v7426
    %8416 = vmatprep.subr.bf16.mxu0 %v7419
    %8417 = vmatpush1.bf16.msra.mxu0 %v7418
    %8418 = vmatprep.subr.bf16.mxu0 %v7411
    %8419 = vmatpush1.bf16.msra.mxu0 %v7410
    %8420 = vmatprep.subr.bf16.mxu0 %v7403
    %8421 = vmatpush1.bf16.msra.mxu0 %v7402
    %8422 = vmatprep.subr.bf16.mxu0 %v7395
    %8423 = vmatpush1.bf16.msra.mxu0 %v7394
    %8424 = vmatprep.subr.bf16.mxu0 %v7387
    %8425 = vmatpush1.bf16.msra.mxu0 %v7386
    %8426 = vmatprep.subr.bf16.mxu0 %v7507
    %8427 = vmatpush2.bf16.msra.mxu0 %v7506
    %8428 = vmatprep.subr.bf16.mxu0 %v7499
    %8429 = vmatpush2.bf16.msra.mxu0 %v7498
    %8430 = vmatprep.subr.bf16.mxu0 %v7491
    %8431 = vmatpush2.bf16.msra.mxu0 %v7490
    %8432 = vmatprep.subr.bf16.mxu0 %v7483
    %8433 = vmatpush2.bf16.msra.mxu0 %v7482
    %8434 = vmatprep.subr.bf16.mxu0 %v7475
    %8435 = vmatpush2.bf16.msra.mxu0 %v7474
    %8436 = vmatprep.subr.bf16.mxu0 %v7467
    %8437 = vmatpush2.bf16.msra.mxu0 %v7466
    %8438 = vmatprep.subr.bf16.mxu0 %v7459
    %8439 = vmatpush2.bf16.msra.mxu0 %v7458
    %8440 = vmatprep.subr.bf16.mxu0 %v7451
    %8441 = vmatpush2.bf16.msra.mxu0 %v7450
    %8442 = vmatprep.mubr.bf16.mxu0 %v5254
    %8443 = vmatmul.mubr.bf16.gmra.mxu0 %v5253
    %v8444 = vpop.f32.mrf.mxu0
    %v8445 = vadd.f32 %v5821, %v8444
    %v8446 = vpop.f32.mrf.mxu0
    %v8447 = vadd.f32 %v5825, %v8446
    %v8448 = vpop.f32.mrf.mxu0
    %v8449 = vpop.f32.mrf.mxu0
    %8450 = vdwg.mxu0
    %8451 = vmatprep.subr.bf16.mxu0 %v7571
    %8452 = vmatpush1.bf16.msra.mxu0 %v7570
    %8453 = vmatprep.subr.bf16.mxu0 %v7563
    %8454 = vmatpush1.bf16.msra.mxu0 %v7562
    %8455 = vmatprep.subr.bf16.mxu0 %v7555
    %8456 = vmatpush1.bf16.msra.mxu0 %v7554
    %8457 = vmatprep.subr.bf16.mxu0 %v7547
    %8458 = vmatpush1.bf16.msra.mxu0 %v7546
    %8459 = vmatprep.subr.bf16.mxu0 %v7539
    %8460 = vmatpush1.bf16.msra.mxu0 %v7538
    %8461 = vmatprep.subr.bf16.mxu0 %v7531
    %8462 = vmatpush1.bf16.msra.mxu0 %v7530
    %8463 = vmatprep.subr.bf16.mxu0 %v7523
    %8464 = vmatpush1.bf16.msra.mxu0 %v7522
    %8465 = vmatprep.subr.bf16.mxu0 %v7515
    %8466 = vmatpush1.bf16.msra.mxu0 %v7514
    %8467 = vmatprep.subr.bf16.mxu0 %v7635
    %8468 = vmatpush2.bf16.msra.mxu0 %v7634
    %8469 = vmatprep.subr.bf16.mxu0 %v7627
    %8470 = vmatpush2.bf16.msra.mxu0 %v7626
    %8471 = vmatprep.subr.bf16.mxu0 %v7619
    %8472 = vmatpush2.bf16.msra.mxu0 %v7618
    %8473 = vmatprep.subr.bf16.mxu0 %v7611
    %8474 = vmatpush2.bf16.msra.mxu0 %v7610
    %8475 = vmatprep.subr.bf16.mxu0 %v7603
    %8476 = vmatpush2.bf16.msra.mxu0 %v7602
    %8477 = vmatprep.subr.bf16.mxu0 %v7595
    %8478 = vmatpush2.bf16.msra.mxu0 %v7594
    %8479 = vmatprep.subr.bf16.mxu0 %v7587
    %8480 = vmatpush2.bf16.msra.mxu0 %v7586
    %8481 = vmatprep.subr.bf16.mxu0 %v7579
    %8482 = vmatpush2.bf16.msra.mxu0 %v7578
    %8483 = vmatprep.mubr.bf16.mxu0 %v5256
    %8484 = vmatmul.mubr.bf16.gmra.mxu0 %v5255
    %v8485 = vpop.f32.mrf.mxu0
    %v8486 = vadd.f32 %v8445, %v8485
    %v8487 = vpop.f32.mrf.mxu0
    %v8488 = vadd.f32 %v8447, %v8487
    %v8489 = vpop.f32.mrf.mxu0
    %v8490 = vpop.f32.mrf.mxu0
    %8491 = vdwg.mxu0
    %8492 = vmatprep.subr.bf16.mxu0 %v7699
    %8493 = vmatpush1.bf16.msra.mxu0 %v7698
    %8494 = vmatprep.subr.bf16.mxu0 %v7691
    %8495 = vmatpush1.bf16.msra.mxu0 %v7690
    %8496 = vmatprep.subr.bf16.mxu0 %v7683
    %8497 = vmatpush1.bf16.msra.mxu0 %v7682
    %8498 = vmatprep.subr.bf16.mxu0 %v7675
    %8499 = vmatpush1.bf16.msra.mxu0 %v7674
    %8500 = vmatprep.subr.bf16.mxu0 %v7667
    %8501 = vmatpush1.bf16.msra.mxu0 %v7666
    %8502 = vmatprep.subr.bf16.mxu0 %v7659
    %8503 = vmatpush1.bf16.msra.mxu0 %v7658
    %8504 = vmatprep.subr.bf16.mxu0 %v7651
    %8505 = vmatpush1.bf16.msra.mxu0 %v7650
    %8506 = vmatprep.subr.bf16.mxu0 %v7643
    %8507 = vmatpush1.bf16.msra.mxu0 %v7642
    %8508 = vmatprep.subr.bf16.mxu0 %v7763
    %8509 = vmatpush2.bf16.msra.mxu0 %v7762
    %8510 = vmatprep.subr.bf16.mxu0 %v7755
    %8511 = vmatpush2.bf16.msra.mxu0 %v7754
    %8512 = vmatprep.subr.bf16.mxu0 %v7747
    %8513 = vmatpush2.bf16.msra.mxu0 %v7746
    %8514 = vmatprep.subr.bf16.mxu0 %v7739
    %8515 = vmatpush2.bf16.msra.mxu0 %v7738
    %8516 = vmatprep.subr.bf16.mxu0 %v7731
    %8517 = vmatpush2.bf16.msra.mxu0 %v7730
    %8518 = vmatprep.subr.bf16.mxu0 %v7723
    %8519 = vmatpush2.bf16.msra.mxu0 %v7722
    %8520 = vmatprep.subr.bf16.mxu0 %v7715
    %8521 = vmatpush2.bf16.msra.mxu0 %v7714
    %8522 = vmatprep.subr.bf16.mxu0 %v7707
    %8523 = vmatpush2.bf16.msra.mxu0 %v7706
    %8524 = vmatprep.mubr.bf16.mxu0 %v5258
    %8525 = vmatmul.mubr.bf16.gmra.mxu0 %v5257
    %v8526 = vpop.f32.mrf.mxu0
    %v8527 = vadd.f32 %v8486, %v8526
    %v8528 = vpop.f32.mrf.mxu0
    %v8529 = vadd.f32 %v8488, %v8528
    %v8530 = vpop.f32.mrf.mxu0
    %v8531 = vpop.f32.mrf.mxu0
    %8532 = vdwg.mxu0
    %8533 = vmatprep.subr.bf16.mxu0 %v7827
    %8534 = vmatpush1.bf16.msra.mxu0 %v7826
    %8535 = vmatprep.subr.bf16.mxu0 %v7819
    %8536 = vmatpush1.bf16.msra.mxu0 %v7818
    %8537 = vmatprep.subr.bf16.mxu0 %v7811
    %8538 = vmatpush1.bf16.msra.mxu0 %v7810
    %8539 = vmatprep.subr.bf16.mxu0 %v7803
    %8540 = vmatpush1.bf16.msra.mxu0 %v7802
    %8541 = vmatprep.subr.bf16.mxu0 %v7795
    %8542 = vmatpush1.bf16.msra.mxu0 %v7794
    %8543 = vmatprep.subr.bf16.mxu0 %v7787
    %8544 = vmatpush1.bf16.msra.mxu0 %v7786
    %8545 = vmatprep.subr.bf16.mxu0 %v7779
    %8546 = vmatpush1.bf16.msra.mxu0 %v7778
    %8547 = vmatprep.subr.bf16.mxu0 %v7771
    %8548 = vmatpush1.bf16.msra.mxu0 %v7770
    %8549 = vmatprep.subr.bf16.mxu0 %v7891
    %8550 = vmatpush2.bf16.msra.mxu0 %v7890
    %8551 = vmatprep.subr.bf16.mxu0 %v7883
    %8552 = vmatpush2.bf16.msra.mxu0 %v7882
    %8553 = vmatprep.subr.bf16.mxu0 %v7875
    %8554 = vmatpush2.bf16.msra.mxu0 %v7874
    %8555 = vmatprep.subr.bf16.mxu0 %v7867
    %8556 = vmatpush2.bf16.msra.mxu0 %v7866
    %8557 = vmatprep.subr.bf16.mxu0 %v7859
    %8558 = vmatpush2.bf16.msra.mxu0 %v7858
    %8559 = vmatprep.subr.bf16.mxu0 %v7851
    %8560 = vmatpush2.bf16.msra.mxu0 %v7850
    %8561 = vmatprep.subr.bf16.mxu0 %v7843
    %8562 = vmatpush2.bf16.msra.mxu0 %v7842
    %8563 = vmatprep.subr.bf16.mxu0 %v7835
    %8564 = vmatpush2.bf16.msra.mxu0 %v7834
    %8565 = vmatprep.mubr.bf16.mxu0 %v5260
    %8566 = vmatmul.mubr.bf16.gmra.mxu0 %v5259
    %v8567 = vpop.f32.mrf.mxu0
    %v8568 = vadd.f32 %v8527, %v8567
    %v8569 = vpop.f32.mrf.mxu0
    %v8570 = vadd.f32 %v8529, %v8569
    %v8571 = vpop.f32.mrf.mxu0
    %v8572 = vpop.f32.mrf.mxu0
    %8573 = vdwg.mxu0
    %8574 = vmatprep.subr.bf16.mxu0 %v7445
    %8575 = vmatpush1.bf16.msra.mxu0 %v7444
    %8576 = vmatprep.subr.bf16.mxu0 %v7437
    %8577 = vmatpush1.bf16.msra.mxu0 %v7436
    %8578 = vmatprep.subr.bf16.mxu0 %v7429
    %8579 = vmatpush1.bf16.msra.mxu0 %v7428
    %8580 = vmatprep.subr.bf16.mxu0 %v7421
    %8581 = vmatpush1.bf16.msra.mxu0 %v7420
    %8582 = vmatprep.subr.bf16.mxu0 %v7413
    %8583 = vmatpush1.bf16.msra.mxu0 %v7412
    %8584 = vmatprep.subr.bf16.mxu0 %v7405
    %8585 = vmatpush1.bf16.msra.mxu0 %v7404
    %8586 = vmatprep.subr.bf16.mxu0 %v7397
    %8587 = vmatpush1.bf16.msra.mxu0 %v7396
    %8588 = vmatprep.subr.bf16.mxu0 %v7389
    %8589 = vmatpush1.bf16.msra.mxu0 %v7388
    %8590 = vmatprep.subr.bf16.mxu0 %v7509
    %8591 = vmatpush2.bf16.msra.mxu0 %v7508
    %8592 = vmatprep.subr.bf16.mxu0 %v7501
    %8593 = vmatpush2.bf16.msra.mxu0 %v7500
    %8594 = vmatprep.subr.bf16.mxu0 %v7493
    %8595 = vmatpush2.bf16.msra.mxu0 %v7492
    %8596 = vmatprep.subr.bf16.mxu0 %v7485
    %8597 = vmatpush2.bf16.msra.mxu0 %v7484
    %8598 = vmatprep.subr.bf16.mxu0 %v7477
    %8599 = vmatpush2.bf16.msra.mxu0 %v7476
    %8600 = vmatprep.subr.bf16.mxu0 %v7469
    %8601 = vmatpush2.bf16.msra.mxu0 %v7468
    %8602 = vmatprep.subr.bf16.mxu0 %v7461
    %8603 = vmatpush2.bf16.msra.mxu0 %v7460
    %8604 = vmatprep.subr.bf16.mxu0 %v7453
    %8605 = vmatpush2.bf16.msra.mxu0 %v7452
    %8606 = vmatprep.mubr.bf16.mxu0 %v5254
    %8607 = vmatmul.mubr.bf16.gmra.mxu0 %v5253
    %v8608 = vpop.f32.mrf.mxu0
    %v8609 = vadd.f32 %v5829, %v8608
    %v8610 = vpop.f32.mrf.mxu0
    %v8611 = vadd.f32 %v5833, %v8610
    %v8612 = vpop.f32.mrf.mxu0
    %v8613 = vpop.f32.mrf.mxu0
    %8614 = vdwg.mxu0
    %8615 = vmatprep.subr.bf16.mxu0 %v7573
    %8616 = vmatpush1.bf16.msra.mxu0 %v7572
    %8617 = vmatprep.subr.bf16.mxu0 %v7565
    %8618 = vmatpush1.bf16.msra.mxu0 %v7564
    %8619 = vmatprep.subr.bf16.mxu0 %v7557
    %8620 = vmatpush1.bf16.msra.mxu0 %v7556
    %8621 = vmatprep.subr.bf16.mxu0 %v7549
    %8622 = vmatpush1.bf16.msra.mxu0 %v7548
    %8623 = vmatprep.subr.bf16.mxu0 %v7541
    %8624 = vmatpush1.bf16.msra.mxu0 %v7540
    %8625 = vmatprep.subr.bf16.mxu0 %v7533
    %8626 = vmatpush1.bf16.msra.mxu0 %v7532
    %8627 = vmatprep.subr.bf16.mxu0 %v7525
    %8628 = vmatpush1.bf16.msra.mxu0 %v7524
    %8629 = vmatprep.subr.bf16.mxu0 %v7517
    %8630 = vmatpush1.bf16.msra.mxu0 %v7516
    %8631 = vmatprep.subr.bf16.mxu0 %v7637
    %8632 = vmatpush2.bf16.msra.mxu0 %v7636
    %8633 = vmatprep.subr.bf16.mxu0 %v7629
    %8634 = vmatpush2.bf16.msra.mxu0 %v7628
    %8635 = vmatprep.subr.bf16.mxu0 %v7621
    %8636 = vmatpush2.bf16.msra.mxu0 %v7620
    %8637 = vmatprep.subr.bf16.mxu0 %v7613
    %8638 = vmatpush2.bf16.msra.mxu0 %v7612
    %8639 = vmatprep.subr.bf16.mxu0 %v7605
    %8640 = vmatpush2.bf16.msra.mxu0 %v7604
    %8641 = vmatprep.subr.bf16.mxu0 %v7597
    %8642 = vmatpush2.bf16.msra.mxu0 %v7596
    %8643 = vmatprep.subr.bf16.mxu0 %v7589
    %8644 = vmatpush2.bf16.msra.mxu0 %v7588
    %8645 = vmatprep.subr.bf16.mxu0 %v7581
    %8646 = vmatpush2.bf16.msra.mxu0 %v7580
    %8647 = vmatprep.mubr.bf16.mxu0 %v5256
    %8648 = vmatmul.mubr.bf16.gmra.mxu0 %v5255
    %v8649 = vpop.f32.mrf.mxu0
    %v8650 = vadd.f32 %v8609, %v8649
    %v8651 = vpop.f32.mrf.mxu0
    %v8652 = vadd.f32 %v8611, %v8651
    %v8653 = vpop.f32.mrf.mxu0
    %v8654 = vpop.f32.mrf.mxu0
    %8655 = vdwg.mxu0
    %8656 = vmatprep.subr.bf16.mxu0 %v7701
    %8657 = vmatpush1.bf16.msra.mxu0 %v7700
    %8658 = vmatprep.subr.bf16.mxu0 %v7693
    %8659 = vmatpush1.bf16.msra.mxu0 %v7692
    %8660 = vmatprep.subr.bf16.mxu0 %v7685
    %8661 = vmatpush1.bf16.msra.mxu0 %v7684
    %8662 = vmatprep.subr.bf16.mxu0 %v7677
    %8663 = vmatpush1.bf16.msra.mxu0 %v7676
    %8664 = vmatprep.subr.bf16.mxu0 %v7669
    %8665 = vmatpush1.bf16.msra.mxu0 %v7668
    %8666 = vmatprep.subr.bf16.mxu0 %v7661
    %8667 = vmatpush1.bf16.msra.mxu0 %v7660
    %8668 = vmatprep.subr.bf16.mxu0 %v7653
    %8669 = vmatpush1.bf16.msra.mxu0 %v7652
    %8670 = vmatprep.subr.bf16.mxu0 %v7645
    %8671 = vmatpush1.bf16.msra.mxu0 %v7644
    %8672 = vmatprep.subr.bf16.mxu0 %v7765
    %8673 = vmatpush2.bf16.msra.mxu0 %v7764
    %8674 = vmatprep.subr.bf16.mxu0 %v7757
    %8675 = vmatpush2.bf16.msra.mxu0 %v7756
    %8676 = vmatprep.subr.bf16.mxu0 %v7749
    %8677 = vmatpush2.bf16.msra.mxu0 %v7748
    %8678 = vmatprep.subr.bf16.mxu0 %v7741
    %8679 = vmatpush2.bf16.msra.mxu0 %v7740
    %8680 = vmatprep.subr.bf16.mxu0 %v7733
    %8681 = vmatpush2.bf16.msra.mxu0 %v7732
    %8682 = vmatprep.subr.bf16.mxu0 %v7725
    %8683 = vmatpush2.bf16.msra.mxu0 %v7724
    %8684 = vmatprep.subr.bf16.mxu0 %v7717
    %8685 = vmatpush2.bf16.msra.mxu0 %v7716
    %8686 = vmatprep.subr.bf16.mxu0 %v7709
    %8687 = vmatpush2.bf16.msra.mxu0 %v7708
    %8688 = vmatprep.mubr.bf16.mxu0 %v5258
    %8689 = vmatmul.mubr.bf16.gmra.mxu0 %v5257
    %v8690 = vpop.f32.mrf.mxu0
    %v8691 = vadd.f32 %v8650, %v8690
    %v8692 = vpop.f32.mrf.mxu0
    %v8693 = vadd.f32 %v8652, %v8692
    %v8694 = vpop.f32.mrf.mxu0
    %v8695 = vpop.f32.mrf.mxu0
    %8696 = vdwg.mxu0
    %8697 = vmatprep.subr.bf16.mxu0 %v7829
    %8698 = vmatpush1.bf16.msra.mxu0 %v7828
    %8699 = vmatprep.subr.bf16.mxu0 %v7821
    %8700 = vmatpush1.bf16.msra.mxu0 %v7820
    %8701 = vmatprep.subr.bf16.mxu0 %v7813
    %8702 = vmatpush1.bf16.msra.mxu0 %v7812
    %8703 = vmatprep.subr.bf16.mxu0 %v7805
    %8704 = vmatpush1.bf16.msra.mxu0 %v7804
    %8705 = vmatprep.subr.bf16.mxu0 %v7797
    %8706 = vmatpush1.bf16.msra.mxu0 %v7796
    %8707 = vmatprep.subr.bf16.mxu0 %v7789
    %8708 = vmatpush1.bf16.msra.mxu0 %v7788
    %8709 = vmatprep.subr.bf16.mxu0 %v7781
    %8710 = vmatpush1.bf16.msra.mxu0 %v7780
    %8711 = vmatprep.subr.bf16.mxu0 %v7773
    %8712 = vmatpush1.bf16.msra.mxu0 %v7772
    %8713 = vmatprep.subr.bf16.mxu0 %v7893
    %8714 = vmatpush2.bf16.msra.mxu0 %v7892
    %8715 = vmatprep.subr.bf16.mxu0 %v7885
    %8716 = vmatpush2.bf16.msra.mxu0 %v7884
    %8717 = vmatprep.subr.bf16.mxu0 %v7877
    %8718 = vmatpush2.bf16.msra.mxu0 %v7876
    %8719 = vmatprep.subr.bf16.mxu0 %v7869
    %8720 = vmatpush2.bf16.msra.mxu0 %v7868
    %8721 = vmatprep.subr.bf16.mxu0 %v7861
    %8722 = vmatpush2.bf16.msra.mxu0 %v7860
    %8723 = vmatprep.subr.bf16.mxu0 %v7853
    %8724 = vmatpush2.bf16.msra.mxu0 %v7852
    %8725 = vmatprep.subr.bf16.mxu0 %v7845
    %8726 = vmatpush2.bf16.msra.mxu0 %v7844
    %8727 = vmatprep.subr.bf16.mxu0 %v7837
    %8728 = vmatpush2.bf16.msra.mxu0 %v7836
    %8729 = vmatprep.mubr.bf16.mxu0 %v5260
    %8730 = vmatmul.mubr.bf16.gmra.mxu0 %v5259
    %v8731 = vpop.f32.mrf.mxu0
    %v8732 = vadd.f32 %v8691, %v8731
    %v8733 = vpop.f32.mrf.mxu0
    %v8734 = vadd.f32 %v8693, %v8733
    %v8735 = vpop.f32.mrf.mxu0
    %v8736 = vpop.f32.mrf.mxu0
    %8737 = vdwg.mxu0
    %8738 = vmatprep.subr.bf16.mxu0 %v7447
    %8739 = vmatpush1.bf16.msra.mxu0 %v7446
    %8740 = vmatprep.subr.bf16.mxu0 %v7439
    %8741 = vmatpush1.bf16.msra.mxu0 %v7438
    %8742 = vmatprep.subr.bf16.mxu0 %v7431
    %8743 = vmatpush1.bf16.msra.mxu0 %v7430
    %8744 = vmatprep.subr.bf16.mxu0 %v7423
    %8745 = vmatpush1.bf16.msra.mxu0 %v7422
    %8746 = vmatprep.subr.bf16.mxu0 %v7415
    %8747 = vmatpush1.bf16.msra.mxu0 %v7414
    %8748 = vmatprep.subr.bf16.mxu0 %v7407
    %8749 = vmatpush1.bf16.msra.mxu0 %v7406
    %8750 = vmatprep.subr.bf16.mxu0 %v7399
    %8751 = vmatpush1.bf16.msra.mxu0 %v7398
    %8752 = vmatprep.subr.bf16.mxu0 %v7391
    %8753 = vmatpush1.bf16.msra.mxu0 %v7390
    %8754 = vmatprep.subr.bf16.mxu0 %v7511
    %8755 = vmatpush2.bf16.msra.mxu0 %v7510
    %8756 = vmatprep.subr.bf16.mxu0 %v7503
    %8757 = vmatpush2.bf16.msra.mxu0 %v7502
    %8758 = vmatprep.subr.bf16.mxu0 %v7495
    %8759 = vmatpush2.bf16.msra.mxu0 %v7494
    %8760 = vmatprep.subr.bf16.mxu0 %v7487
    %8761 = vmatpush2.bf16.msra.mxu0 %v7486
    %8762 = vmatprep.subr.bf16.mxu0 %v7479
    %8763 = vmatpush2.bf16.msra.mxu0 %v7478
    %8764 = vmatprep.subr.bf16.mxu0 %v7471
    %8765 = vmatpush2.bf16.msra.mxu0 %v7470
    %8766 = vmatprep.subr.bf16.mxu0 %v7463
    %8767 = vmatpush2.bf16.msra.mxu0 %v7462
    %8768 = vmatprep.subr.bf16.mxu0 %v7455
    %8769 = vmatpush2.bf16.msra.mxu0 %v7454
    %8770 = vmatprep.mubr.bf16.mxu0 %v5254
    %8771 = vmatmul.mubr.bf16.gmra.mxu0 %v5253
    %v8772 = vpop.f32.mrf.mxu0
    %v8773 = vadd.f32 %v5837, %v8772
    %v8774 = vpop.f32.mrf.mxu0
    %v8775 = vadd.f32 %v5841, %v8774
    %v8776 = vpop.f32.mrf.mxu0
    %v8777 = vpop.f32.mrf.mxu0
    %8778 = vdwg.mxu0
    %8779 = vmatprep.subr.bf16.mxu0 %v7575
    %8780 = vmatpush1.bf16.msra.mxu0 %v7574
    %8781 = vmatprep.subr.bf16.mxu0 %v7567
    %8782 = vmatpush1.bf16.msra.mxu0 %v7566
    %8783 = vmatprep.subr.bf16.mxu0 %v7559
    %8784 = vmatpush1.bf16.msra.mxu0 %v7558
    %8785 = vmatprep.subr.bf16.mxu0 %v7551
    %8786 = vmatpush1.bf16.msra.mxu0 %v7550
    %8787 = vmatprep.subr.bf16.mxu0 %v7543
    %8788 = vmatpush1.bf16.msra.mxu0 %v7542
    %8789 = vmatprep.subr.bf16.mxu0 %v7535
    %8790 = vmatpush1.bf16.msra.mxu0 %v7534
    %8791 = vmatprep.subr.bf16.mxu0 %v7527
    %8792 = vmatpush1.bf16.msra.mxu0 %v7526
    %8793 = vmatprep.subr.bf16.mxu0 %v7519
    %8794 = vmatpush1.bf16.msra.mxu0 %v7518
    %8795 = vmatprep.subr.bf16.mxu0 %v7639
    %8796 = vmatpush2.bf16.msra.mxu0 %v7638
    %8797 = vmatprep.subr.bf16.mxu0 %v7631
    %8798 = vmatpush2.bf16.msra.mxu0 %v7630
    %8799 = vmatprep.subr.bf16.mxu0 %v7623
    %8800 = vmatpush2.bf16.msra.mxu0 %v7622
    %8801 = vmatprep.subr.bf16.mxu0 %v7615
    %8802 = vmatpush2.bf16.msra.mxu0 %v7614
    %8803 = vmatprep.subr.bf16.mxu0 %v7607
    %8804 = vmatpush2.bf16.msra.mxu0 %v7606
    %8805 = vmatprep.subr.bf16.mxu0 %v7599
    %8806 = vmatpush2.bf16.msra.mxu0 %v7598
    %8807 = vmatprep.subr.bf16.mxu0 %v7591
    %8808 = vmatpush2.bf16.msra.mxu0 %v7590
    %8809 = vmatprep.subr.bf16.mxu0 %v7583
    %8810 = vmatpush2.bf16.msra.mxu0 %v7582
    %8811 = vmatprep.mubr.bf16.mxu0 %v5256
    %8812 = vmatmul.mubr.bf16.gmra.mxu0 %v5255
    %v8813 = vpop.f32.mrf.mxu0
    %v8814 = vadd.f32 %v8773, %v8813
    %v8815 = vpop.f32.mrf.mxu0
    %v8816 = vadd.f32 %v8775, %v8815
    %v8817 = vpop.f32.mrf.mxu0
    %v8818 = vpop.f32.mrf.mxu0
    %8819 = vdwg.mxu0
    %8820 = vmatprep.subr.bf16.mxu0 %v7703
    %8821 = vmatpush1.bf16.msra.mxu0 %v7702
    %8822 = vmatprep.subr.bf16.mxu0 %v7695
    %8823 = vmatpush1.bf16.msra.mxu0 %v7694
    %8824 = vmatprep.subr.bf16.mxu0 %v7687
    %8825 = vmatpush1.bf16.msra.mxu0 %v7686
    %8826 = vmatprep.subr.bf16.mxu0 %v7679
    %8827 = vmatpush1.bf16.msra.mxu0 %v7678
    %8828 = vmatprep.subr.bf16.mxu0 %v7671
    %8829 = vmatpush1.bf16.msra.mxu0 %v7670
    %8830 = vmatprep.subr.bf16.mxu0 %v7663
    %8831 = vmatpush1.bf16.msra.mxu0 %v7662
    %8832 = vmatprep.subr.bf16.mxu0 %v7655
    %8833 = vmatpush1.bf16.msra.mxu0 %v7654
    %8834 = vmatprep.subr.bf16.mxu0 %v7647
    %8835 = vmatpush1.bf16.msra.mxu0 %v7646
    %8836 = vmatprep.subr.bf16.mxu0 %v7767
    %8837 = vmatpush2.bf16.msra.mxu0 %v7766
    %8838 = vmatprep.subr.bf16.mxu0 %v7759
    %8839 = vmatpush2.bf16.msra.mxu0 %v7758
    %8840 = vmatprep.subr.bf16.mxu0 %v7751
    %8841 = vmatpush2.bf16.msra.mxu0 %v7750
    %8842 = vmatprep.subr.bf16.mxu0 %v7743
    %8843 = vmatpush2.bf16.msra.mxu0 %v7742
    %8844 = vmatprep.subr.bf16.mxu0 %v7735
    %8845 = vmatpush2.bf16.msra.mxu0 %v7734
    %8846 = vmatprep.subr.bf16.mxu0 %v7727
    %8847 = vmatpush2.bf16.msra.mxu0 %v7726
    %8848 = vmatprep.subr.bf16.mxu0 %v7719
    %8849 = vmatpush2.bf16.msra.mxu0 %v7718
    %8850 = vmatprep.subr.bf16.mxu0 %v7711
    %8851 = vmatpush2.bf16.msra.mxu0 %v7710
    %8852 = vmatprep.mubr.bf16.mxu0 %v5258
    %8853 = vmatmul.mubr.bf16.gmra.mxu0 %v5257
    %v8854 = vpop.f32.mrf.mxu0
    %v8855 = vadd.f32 %v8814, %v8854
    %v8856 = vpop.f32.mrf.mxu0
    %v8857 = vadd.f32 %v8816, %v8856
    %v8858 = vpop.f32.mrf.mxu0
    %v8859 = vpop.f32.mrf.mxu0
    %8860 = vdwg.mxu0
    %8861 = vmatprep.subr.bf16.mxu0 %v7831
    %8862 = vmatpush1.bf16.msra.mxu0 %v7830
    %8863 = vmatprep.subr.bf16.mxu0 %v7823
    %8864 = vmatpush1.bf16.msra.mxu0 %v7822
    %8865 = vmatprep.subr.bf16.mxu0 %v7815
    %8866 = vmatpush1.bf16.msra.mxu0 %v7814
    %8867 = vmatprep.subr.bf16.mxu0 %v7807
    %8868 = vmatpush1.bf16.msra.mxu0 %v7806
    %8869 = vmatprep.subr.bf16.mxu0 %v7799
    %8870 = vmatpush1.bf16.msra.mxu0 %v7798
    %8871 = vmatprep.subr.bf16.mxu0 %v7791
    %8872 = vmatpush1.bf16.msra.mxu0 %v7790
    %8873 = vmatprep.subr.bf16.mxu0 %v7783
    %8874 = vmatpush1.bf16.msra.mxu0 %v7782
    %8875 = vmatprep.subr.bf16.mxu0 %v7775
    %8876 = vmatpush1.bf16.msra.mxu0 %v7774
    %8877 = vmatprep.subr.bf16.mxu0 %v7895
    %8878 = vmatpush2.bf16.msra.mxu0 %v7894
    %8879 = vmatprep.subr.bf16.mxu0 %v7887
    %8880 = vmatpush2.bf16.msra.mxu0 %v7886
    %8881 = vmatprep.subr.bf16.mxu0 %v7879
    %8882 = vmatpush2.bf16.msra.mxu0 %v7878
    %8883 = vmatprep.subr.bf16.mxu0 %v7871
    %8884 = vmatpush2.bf16.msra.mxu0 %v7870
    %8885 = vmatprep.subr.bf16.mxu0 %v7863
    %8886 = vmatpush2.bf16.msra.mxu0 %v7862
    %8887 = vmatprep.subr.bf16.mxu0 %v7855
    %8888 = vmatpush2.bf16.msra.mxu0 %v7854
    %8889 = vmatprep.subr.bf16.mxu0 %v7847
    %8890 = vmatpush2.bf16.msra.mxu0 %v7846
    %8891 = vmatprep.subr.bf16.mxu0 %v7839
    %8892 = vmatpush2.bf16.msra.mxu0 %v7838
    %8893 = vmatprep.mubr.bf16.mxu0 %v5260
    %8894 = vmatmul.mubr.bf16.gmra.mxu0 %v5259
    %v8895 = vpop.f32.mrf.mxu0
    %v8896 = vadd.f32 %v8855, %v8895
    %v8897 = vpop.f32.mrf.mxu0
    %v8898 = vadd.f32 %v8857, %v8897
    %v8899 = vpop.f32.mrf.mxu0
    %v8900 = vpop.f32.mrf.mxu0
    %8901 = vdwg.mxu0
    %8902 = vmatprep.subr.bf16.mxu0 %v7449
    %8903 = vmatpush1.bf16.msra.mxu0 %v7448
    %8904 = vmatprep.subr.bf16.mxu0 %v7441
    %8905 = vmatpush1.bf16.msra.mxu0 %v7440
    %8906 = vmatprep.subr.bf16.mxu0 %v7433
    %8907 = vmatpush1.bf16.msra.mxu0 %v7432
    %8908 = vmatprep.subr.bf16.mxu0 %v7425
    %8909 = vmatpush1.bf16.msra.mxu0 %v7424
    %8910 = vmatprep.subr.bf16.mxu0 %v7417
    %8911 = vmatpush1.bf16.msra.mxu0 %v7416
    %8912 = vmatprep.subr.bf16.mxu0 %v7409
    %8913 = vmatpush1.bf16.msra.mxu0 %v7408
    %8914 = vmatprep.subr.bf16.mxu0 %v7401
    %8915 = vmatpush1.bf16.msra.mxu0 %v7400
    %8916 = vmatprep.subr.bf16.mxu0 %v7393
    %8917 = vmatpush1.bf16.msra.mxu0 %v7392
    %8918 = vmatprep.subr.bf16.mxu0 %v7513
    %8919 = vmatpush2.bf16.msra.mxu0 %v7512
    %8920 = vmatprep.subr.bf16.mxu0 %v7505
    %8921 = vmatpush2.bf16.msra.mxu0 %v7504
    %8922 = vmatprep.subr.bf16.mxu0 %v7497
    %8923 = vmatpush2.bf16.msra.mxu0 %v7496
    %8924 = vmatprep.subr.bf16.mxu0 %v7489
    %8925 = vmatpush2.bf16.msra.mxu0 %v7488
    %8926 = vmatprep.subr.bf16.mxu0 %v7481
    %8927 = vmatpush2.bf16.msra.mxu0 %v7480
    %8928 = vmatprep.subr.bf16.mxu0 %v7473
    %8929 = vmatpush2.bf16.msra.mxu0 %v7472
    %8930 = vmatprep.subr.bf16.mxu0 %v7465
    %8931 = vmatpush2.bf16.msra.mxu0 %v7464
    %8932 = vmatprep.subr.bf16.mxu0 %v7457
    %8933 = vmatpush2.bf16.msra.mxu0 %v7456
    %8934 = vmatprep.mubr.bf16.mxu0 %v5254
    %8935 = vmatmul.mubr.bf16.gmra.mxu0 %v5253
    %v8936 = vpop.f32.mrf.mxu0
    %v8937 = vadd.f32 %v5845, %v8936
    %v8938 = vpop.f32.mrf.mxu0
    %v8939 = vadd.f32 %v5849, %v8938
    %v8940 = vpop.f32.mrf.mxu0
    %v8941 = vpop.f32.mrf.mxu0
    %8942 = vdwg.mxu0
    %8943 = vmatprep.subr.bf16.mxu0 %v7577
    %8944 = vmatpush1.bf16.msra.mxu0 %v7576
    %8945 = vmatprep.subr.bf16.mxu0 %v7569
    %8946 = vmatpush1.bf16.msra.mxu0 %v7568
    %8947 = vmatprep.subr.bf16.mxu0 %v7561
    %8948 = vmatpush1.bf16.msra.mxu0 %v7560
    %8949 = vmatprep.subr.bf16.mxu0 %v7553
    %8950 = vmatpush1.bf16.msra.mxu0 %v7552
    %8951 = vmatprep.subr.bf16.mxu0 %v7545
    %8952 = vmatpush1.bf16.msra.mxu0 %v7544
    %8953 = vmatprep.subr.bf16.mxu0 %v7537
    %8954 = vmatpush1.bf16.msra.mxu0 %v7536
    %8955 = vmatprep.subr.bf16.mxu0 %v7529
    %8956 = vmatpush1.bf16.msra.mxu0 %v7528
    %8957 = vmatprep.subr.bf16.mxu0 %v7521
    %8958 = vmatpush1.bf16.msra.mxu0 %v7520
    %8959 = vmatprep.subr.bf16.mxu0 %v7641
    %8960 = vmatpush2.bf16.msra.mxu0 %v7640
    %8961 = vmatprep.subr.bf16.mxu0 %v7633
    %8962 = vmatpush2.bf16.msra.mxu0 %v7632
    %8963 = vmatprep.subr.bf16.mxu0 %v7625
    %8964 = vmatpush2.bf16.msra.mxu0 %v7624
    %8965 = vmatprep.subr.bf16.mxu0 %v7617
    %8966 = vmatpush2.bf16.msra.mxu0 %v7616
    %8967 = vmatprep.subr.bf16.mxu0 %v7609
    %8968 = vmatpush2.bf16.msra.mxu0 %v7608
    %8969 = vmatprep.subr.bf16.mxu0 %v7601
    %8970 = vmatpush2.bf16.msra.mxu0 %v7600
    %8971 = vmatprep.subr.bf16.mxu0 %v7593
    %8972 = vmatpush2.bf16.msra.mxu0 %v7592
    %8973 = vmatprep.subr.bf16.mxu0 %v7585
    %8974 = vmatpush2.bf16.msra.mxu0 %v7584
    %8975 = vmatprep.mubr.bf16.mxu0 %v5256
    %8976 = vmatmul.mubr.bf16.gmra.mxu0 %v5255
    %v8977 = vpop.f32.mrf.mxu0
    %v8978 = vadd.f32 %v8937, %v8977
    %v8979 = vpop.f32.mrf.mxu0
    %v8980 = vadd.f32 %v8939, %v8979
    %v8981 = vpop.f32.mrf.mxu0
    %v8982 = vpop.f32.mrf.mxu0
    %8983 = vdwg.mxu0
    %8984 = vmatprep.subr.bf16.mxu0 %v7705
    %8985 = vmatpush1.bf16.msra.mxu0 %v7704
    %8986 = vmatprep.subr.bf16.mxu0 %v7697
    %8987 = vmatpush1.bf16.msra.mxu0 %v7696
    %8988 = vmatprep.subr.bf16.mxu0 %v7689
    %8989 = vmatpush1.bf16.msra.mxu0 %v7688
    %8990 = vmatprep.subr.bf16.mxu0 %v7681
    %8991 = vmatpush1.bf16.msra.mxu0 %v7680
    %8992 = vmatprep.subr.bf16.mxu0 %v7673
    %8993 = vmatpush1.bf16.msra.mxu0 %v7672
    %8994 = vmatprep.subr.bf16.mxu0 %v7665
    %8995 = vmatpush1.bf16.msra.mxu0 %v7664
    %8996 = vmatprep.subr.bf16.mxu0 %v7657
    %8997 = vmatpush1.bf16.msra.mxu0 %v7656
    %8998 = vmatprep.subr.bf16.mxu0 %v7649
    %8999 = vmatpush1.bf16.msra.mxu0 %v7648
    %9000 = vmatprep.subr.bf16.mxu0 %v7769
    %9001 = vmatpush2.bf16.msra.mxu0 %v7768
    %9002 = vmatprep.subr.bf16.mxu0 %v7761
    %9003 = vmatpush2.bf16.msra.mxu0 %v7760
    %9004 = vmatprep.subr.bf16.mxu0 %v7753
    %9005 = vmatpush2.bf16.msra.mxu0 %v7752
    %9006 = vmatprep.subr.bf16.mxu0 %v7745
    %9007 = vmatpush2.bf16.msra.mxu0 %v7744
    %9008 = vmatprep.subr.bf16.mxu0 %v7737
    %9009 = vmatpush2.bf16.msra.mxu0 %v7736
    %9010 = vmatprep.subr.bf16.mxu0 %v7729
    %9011 = vmatpush2.bf16.msra.mxu0 %v7728
    %9012 = vmatprep.subr.bf16.mxu0 %v7721
    %9013 = vmatpush2.bf16.msra.mxu0 %v7720
    %9014 = vmatprep.subr.bf16.mxu0 %v7713
    %9015 = vmatpush2.bf16.msra.mxu0 %v7712
    %9016 = vmatprep.mubr.bf16.mxu0 %v5258
    %9017 = vmatmul.mubr.bf16.gmra.mxu0 %v5257
    %v9018 = vpop.f32.mrf.mxu0
    %v9019 = vadd.f32 %v8978, %v9018
    %v9020 = vpop.f32.mrf.mxu0
    %v9021 = vadd.f32 %v8980, %v9020
    %v9022 = vpop.f32.mrf.mxu0
    %v9023 = vpop.f32.mrf.mxu0
    %9024 = vdwg.mxu0
    %9025 = vmatprep.subr.bf16.mxu0 %v7833
    %9026 = vmatpush1.bf16.msra.mxu0 %v7832
    %9027 = vmatprep.subr.bf16.mxu0 %v7825
    %9028 = vmatpush1.bf16.msra.mxu0 %v7824
    %9029 = vmatprep.subr.bf16.mxu0 %v7817
    %9030 = vmatpush1.bf16.msra.mxu0 %v7816
    %9031 = vmatprep.subr.bf16.mxu0 %v7809
    %9032 = vmatpush1.bf16.msra.mxu0 %v7808
    %9033 = vmatprep.subr.bf16.mxu0 %v7801
    %9034 = vmatpush1.bf16.msra.mxu0 %v7800
    %9035 = vmatprep.subr.bf16.mxu0 %v7793
    %9036 = vmatpush1.bf16.msra.mxu0 %v7792
    %9037 = vmatprep.subr.bf16.mxu0 %v7785
    %9038 = vmatpush1.bf16.msra.mxu0 %v7784
    %9039 = vmatprep.subr.bf16.mxu0 %v7777
    %9040 = vmatpush1.bf16.msra.mxu0 %v7776
    %9041 = vmatprep.subr.bf16.mxu0 %v7897
    %9042 = vmatpush2.bf16.msra.mxu0 %v7896
    %9043 = vmatprep.subr.bf16.mxu0 %v7889
    %9044 = vmatpush2.bf16.msra.mxu0 %v7888
    %9045 = vmatprep.subr.bf16.mxu0 %v7881
    %9046 = vmatpush2.bf16.msra.mxu0 %v7880
    %9047 = vmatprep.subr.bf16.mxu0 %v7873
    %9048 = vmatpush2.bf16.msra.mxu0 %v7872
    %9049 = vmatprep.subr.bf16.mxu0 %v7865
    %9050 = vmatpush2.bf16.msra.mxu0 %v7864
    %9051 = vmatprep.subr.bf16.mxu0 %v7857
    %9052 = vmatpush2.bf16.msra.mxu0 %v7856
    %9053 = vmatprep.subr.bf16.mxu0 %v7849
    %9054 = vmatpush2.bf16.msra.mxu0 %v7848
    %9055 = vmatprep.subr.bf16.mxu0 %v7841
    %9056 = vmatpush2.bf16.msra.mxu0 %v7840
    %9057 = vmatprep.mubr.bf16.mxu0 %v5260
    %9058 = vmatmul.mubr.bf16.gmra.mxu0 %v5259
    %v9059 = vpop.f32.mrf.mxu0
    %v9060 = vadd.f32 %v9019, %v9059
    %v9061 = vpop.f32.mrf.mxu0
    %v9062 = vadd.f32 %v9021, %v9061
    %v9063 = vpop.f32.mrf.mxu0
    %v9064 = vpop.f32.mrf.mxu0
    %9065 = vdwg.mxu0
    %v9066 = vxor.u32 %v8568, 2147483648
    %v9067 = vxor.u32 %v8570, 2147483648
    %v9068 = vxor.u32 %v8732, 2147483648
    %v9069 = vxor.u32 %v8734, 2147483648
    %v9070 = vxor.u32 %v8896, 2147483648
    %v9071 = vxor.u32 %v8898, 2147483648
    %v9072 = vxor.u32 %v9060, 2147483648
    %v9073 = vxor.u32 %v9062, 2147483648
    %v9074 = vmul.f32 %v9066, 1.442695
    %v9075 = vpow.pop %v9074
    %v9076 = vmul.f32 %v9067, 1.442695
    %v9077 = vpow.pop %v9076
    %v9078 = vmul.f32 %v9068, 1.442695
    %v9079 = vpow.pop %v9078
    %v9080 = vmul.f32 %v9069, 1.442695
    %v9081 = vpow.pop %v9080
    %v9082 = vmul.f32 %v9070, 1.442695
    %v9083 = vpow.pop %v9082
    %v9084 = vmul.f32 %v9071, 1.442695
    %v9085 = vpow.pop %v9084
    %v9086 = vmul.f32 %v9072, 1.442695
    %v9087 = vpow.pop %v9086
    %v9088 = vmul.f32 %v9073, 1.442695
    %v9089 = vpow.pop %v9088
    %v9090 = vadd.f32 %v9075, 1.0
    %v9091 = vadd.f32 %v9077, 1.0
    %v9092 = vadd.f32 %v9079, 1.0
    %v9093 = vadd.f32 %v9081, 1.0
    %v9094 = vadd.f32 %v9083, 1.0
    %v9095 = vadd.f32 %v9085, 1.0
    %v9096 = vadd.f32 %v9087, 1.0
    %v9097 = vadd.f32 %v9089, 1.0
    %v9098 = vrcp.pop %v9090
    %v9099 = vmul.f32 1.0, %v9098
    %v9100 = vrcp.pop %v9091
    %v9101 = vmul.f32 1.0, %v9100
    %v9102 = vrcp.pop %v9092
    %v9103 = vmul.f32 1.0, %v9102
    %v9104 = vrcp.pop %v9093
    %v9105 = vmul.f32 1.0, %v9104
    %v9106 = vrcp.pop %v9094
    %v9107 = vmul.f32 1.0, %v9106
    %v9108 = vrcp.pop %v9095
    %v9109 = vmul.f32 1.0, %v9108
    %v9110 = vrcp.pop %v9096
    %v9111 = vmul.f32 1.0, %v9110
    %v9112 = vrcp.pop %v9097
    %v9113 = vmul.f32 1.0, %v9112
    %v9114 = vmul.f32 %v8568, %v9099
    %v9115 = vmul.f32 %v8570, %v9101
    %v9116 = vmul.f32 %v8732, %v9103
    %v9117 = vmul.f32 %v8734, %v9105
    %v9118 = vmul.f32 %v8896, %v9107
    %v9119 = vmul.f32 %v8898, %v9109
    %v9120 = vmul.f32 %v9060, %v9111
    %v9121 = vmul.f32 %v9062, %v9113
    %v9122 = vpack.c.bf16 %v9114, %v9114
    %v9123 = vpack.c.bf16 %v9115, %v9115
    %v9124 = vpack.c.bf16 %v9116, %v9116
    %v9125 = vpack.c.bf16 %v9117, %v9117
    %v9126 = vpack.c.bf16 %v9118, %v9118
    %v9127 = vpack.c.bf16 %v9119, %v9119
    %v9128 = vpack.c.bf16 %v9120, %v9120
    %v9129 = vpack.c.bf16 %v9121, %v9121
    %v9130 = vld [vmem:[#allocation25] sm:$0xf]
    %v9131 = vld [vmem:[#allocation25 + $0x4] sm:$0xf]
    %v9132 = vld [vmem:[#allocation25 + $0x8] sm:$0xf]
    %v9133 = vld [vmem:[#allocation25 + $0xc] sm:$0xf]
    %v9134 = vld [vmem:[#allocation25 + $0x10] sm:$0xf]
    %v9135 = vld [vmem:[#allocation25 + $0x14] sm:$0xf]
    %v9136 = vld [vmem:[#allocation25 + $0x18] sm:$0xf]
    %v9137 = vld [vmem:[#allocation25 + $0x1c] sm:$0xf]
    %v9138 = vld [vmem:[#allocation25 + $0x20] sm:$0xf]
    %v9139 = vld [vmem:[#allocation25 + $0x24] sm:$0xf]
    %v9140 = vld [vmem:[#allocation25 + $0x28] sm:$0xf]
    %v9141 = vld [vmem:[#allocation25 + $0x2c] sm:$0xf]
    %v9142 = vld [vmem:[#allocation25 + $0x30] sm:$0xf]
    %v9143 = vld [vmem:[#allocation25 + $0x34] sm:$0xf]
    %v9144 = vld [vmem:[#allocation25 + $0x38] sm:$0xf]
    %v9145 = vld [vmem:[#allocation25 + $0x3c] sm:$0xf]
    %v9146 = vld [vmem:[#allocation25 + $0x40] sm:$0xf]
    %v9147 = vld [vmem:[#allocation25 + $0x44] sm:$0xf]
    %v9148 = vld [vmem:[#allocation25 + $0x48] sm:$0xf]
    %v9149 = vld [vmem:[#allocation25 + $0x4c] sm:$0xf]
    %v9150 = vld [vmem:[#allocation25 + $0x50] sm:$0xf]
    %v9151 = vld [vmem:[#allocation25 + $0x54] sm:$0xf]
    %v9152 = vld [vmem:[#allocation25 + $0x58] sm:$0xf]
    %v9153 = vld [vmem:[#allocation25 + $0x5c] sm:$0xf]
    %v9154 = vld [vmem:[#allocation25 + $0x60] sm:$0xf]
    %v9155 = vld [vmem:[#allocation25 + $0x64] sm:$0xf]
    %v9156 = vld [vmem:[#allocation25 + $0x68] sm:$0xf]
    %v9157 = vld [vmem:[#allocation25 + $0x6c] sm:$0xf]
    %v9158 = vld [vmem:[#allocation25 + $0x70] sm:$0xf]
    %v9159 = vld [vmem:[#allocation25 + $0x74] sm:$0xf]
    %v9160 = vld [vmem:[#allocation25 + $0x78] sm:$0xf]
    %v9161 = vld [vmem:[#allocation25 + $0x7c] sm:$0xf]
    %v9162 = vld [vmem:[#allocation25 + $0x80] sm:$0xf]
    %v9163 = vld [vmem:[#allocation25 + $0x84] sm:$0xf]
    %v9164 = vld [vmem:[#allocation25 + $0x88] sm:$0xf]
    %v9165 = vld [vmem:[#allocation25 + $0x8c] sm:$0xf]
    %v9166 = vld [vmem:[#allocation25 + $0x90] sm:$0xf]
    %v9167 = vld [vmem:[#allocation25 + $0x94] sm:$0xf]
    %v9168 = vld [vmem:[#allocation25 + $0x98] sm:$0xf]
    %v9169 = vld [vmem:[#allocation25 + $0x9c] sm:$0xf]
    %v9170 = vld [vmem:[#allocation25 + $0xa0] sm:$0xf]
    %v9171 = vld [vmem:[#allocation25 + $0xa4] sm:$0xf]
    %v9172 = vld [vmem:[#allocation25 + $0xa8] sm:$0xf]
    %v9173 = vld [vmem:[#allocation25 + $0xac] sm:$0xf]
    %v9174 = vld [vmem:[#allocation25 + $0xb0] sm:$0xf]
    %v9175 = vld [vmem:[#allocation25 + $0xb4] sm:$0xf]
    %v9176 = vld [vmem:[#allocation25 + $0xb8] sm:$0xf]
    %v9177 = vld [vmem:[#allocation25 + $0xbc] sm:$0xf]
    %v9178 = vld [vmem:[#allocation25 + $0xc0] sm:$0xf]
    %v9179 = vld [vmem:[#allocation25 + $0xc4] sm:$0xf]
    %v9180 = vld [vmem:[#allocation25 + $0xc8] sm:$0xf]
    %v9181 = vld [vmem:[#allocation25 + $0xcc] sm:$0xf]
    %v9182 = vld [vmem:[#allocation25 + $0xd0] sm:$0xf]
    %v9183 = vld [vmem:[#allocation25 + $0xd4] sm:$0xf]
    %v9184 = vld [vmem:[#allocation25 + $0xd8] sm:$0xf]
    %v9185 = vld [vmem:[#allocation25 + $0xdc] sm:$0xf]
    %v9186 = vld [vmem:[#allocation25 + $0xe0] sm:$0xf]
    %v9187 = vld [vmem:[#allocation25 + $0xe4] sm:$0xf]
    %v9188 = vld [vmem:[#allocation25 + $0xe8] sm:$0xf]
    %v9189 = vld [vmem:[#allocation25 + $0xec] sm:$0xf]
    %v9190 = vld [vmem:[#allocation25 + $0xf0] sm:$0xf]
    %v9191 = vld [vmem:[#allocation25 + $0xf4] sm:$0xf]
    %v9192 = vld [vmem:[#allocation25 + $0xf8] sm:$0xf]
    %v9193 = vld [vmem:[#allocation25 + $0xfc] sm:$0xf]
    %v9194 = vld [vmem:[#allocation25 + $0x100] sm:$0xf]
    %v9195 = vld [vmem:[#allocation25 + $0x104] sm:$0xf]
    %v9196 = vld [vmem:[#allocation25 + $0x108] sm:$0xf]
    %v9197 = vld [vmem:[#allocation25 + $0x10c] sm:$0xf]
    %v9198 = vld [vmem:[#allocation25 + $0x110] sm:$0xf]
    %v9199 = vld [vmem:[#allocation25 + $0x114] sm:$0xf]
    %v9200 = vld [vmem:[#allocation25 + $0x118] sm:$0xf]
    %v9201 = vld [vmem:[#allocation25 + $0x11c] sm:$0xf]
    %v9202 = vld [vmem:[#allocation25 + $0x120] sm:$0xf]
    %v9203 = vld [vmem:[#allocation25 + $0x124] sm:$0xf]
    %v9204 = vld [vmem:[#allocation25 + $0x128] sm:$0xf]
    %v9205 = vld [vmem:[#allocation25 + $0x12c] sm:$0xf]
    %v9206 = vld [vmem:[#allocation25 + $0x130] sm:$0xf]
    %v9207 = vld [vmem:[#allocation25 + $0x134] sm:$0xf]
    %v9208 = vld [vmem:[#allocation25 + $0x138] sm:$0xf]
    %v9209 = vld [vmem:[#allocation25 + $0x13c] sm:$0xf]
    %v9210 = vld [vmem:[#allocation25 + $0x140] sm:$0xf]
    %v9211 = vld [vmem:[#allocation25 + $0x144] sm:$0xf]
    %v9212 = vld [vmem:[#allocation25 + $0x148] sm:$0xf]
    %v9213 = vld [vmem:[#allocation25 + $0x14c] sm:$0xf]
    %v9214 = vld [vmem:[#allocation25 + $0x150] sm:$0xf]
    %v9215 = vld [vmem:[#allocation25 + $0x154] sm:$0xf]
    %v9216 = vld [vmem:[#allocation25 + $0x158] sm:$0xf]
    %v9217 = vld [vmem:[#allocation25 + $0x15c] sm:$0xf]
    %v9218 = vld [vmem:[#allocation25 + $0x160] sm:$0xf]
    %v9219 = vld [vmem:[#allocation25 + $0x164] sm:$0xf]
    %v9220 = vld [vmem:[#allocation25 + $0x168] sm:$0xf]
    %v9221 = vld [vmem:[#allocation25 + $0x16c] sm:$0xf]
    %v9222 = vld [vmem:[#allocation25 + $0x170] sm:$0xf]
    %v9223 = vld [vmem:[#allocation25 + $0x174] sm:$0xf]
    %v9224 = vld [vmem:[#allocation25 + $0x178] sm:$0xf]
    %v9225 = vld [vmem:[#allocation25 + $0x17c] sm:$0xf]
    %v9226 = vld [vmem:[#allocation25 + $0x180] sm:$0xf]
    %v9227 = vld [vmem:[#allocation25 + $0x184] sm:$0xf]
    %v9228 = vld [vmem:[#allocation25 + $0x188] sm:$0xf]
    %v9229 = vld [vmem:[#allocation25 + $0x18c] sm:$0xf]
    %v9230 = vld [vmem:[#allocation25 + $0x190] sm:$0xf]
    %v9231 = vld [vmem:[#allocation25 + $0x194] sm:$0xf]
    %v9232 = vld [vmem:[#allocation25 + $0x198] sm:$0xf]
    %v9233 = vld [vmem:[#allocation25 + $0x19c] sm:$0xf]
    %v9234 = vld [vmem:[#allocation25 + $0x1a0] sm:$0xf]
    %v9235 = vld [vmem:[#allocation25 + $0x1a4] sm:$0xf]
    %v9236 = vld [vmem:[#allocation25 + $0x1a8] sm:$0xf]
    %v9237 = vld [vmem:[#allocation25 + $0x1ac] sm:$0xf]
    %v9238 = vld [vmem:[#allocation25 + $0x1b0] sm:$0xf]
    %v9239 = vld [vmem:[#allocation25 + $0x1b4] sm:$0xf]
    %v9240 = vld [vmem:[#allocation25 + $0x1b8] sm:$0xf]
    %v9241 = vld [vmem:[#allocation25 + $0x1bc] sm:$0xf]
    %v9242 = vld [vmem:[#allocation25 + $0x1c0] sm:$0xf]
    %v9243 = vld [vmem:[#allocation25 + $0x1c4] sm:$0xf]
    %v9244 = vld [vmem:[#allocation25 + $0x1c8] sm:$0xf]
    %v9245 = vld [vmem:[#allocation25 + $0x1cc] sm:$0xf]
    %v9246 = vld [vmem:[#allocation25 + $0x1d0] sm:$0xf]
    %v9247 = vld [vmem:[#allocation25 + $0x1d4] sm:$0xf]
    %v9248 = vld [vmem:[#allocation25 + $0x1d8] sm:$0xf]
    %v9249 = vld [vmem:[#allocation25 + $0x1dc] sm:$0xf]
    %v9250 = vld [vmem:[#allocation25 + $0x1e0] sm:$0xf]
    %v9251 = vld [vmem:[#allocation25 + $0x1e4] sm:$0xf]
    %v9252 = vld [vmem:[#allocation25 + $0x1e8] sm:$0xf]
    %v9253 = vld [vmem:[#allocation25 + $0x1ec] sm:$0xf]
    %v9254 = vld [vmem:[#allocation25 + $0x1f0] sm:$0xf]
    %v9255 = vld [vmem:[#allocation25 + $0x1f4] sm:$0xf]
    %v9256 = vld [vmem:[#allocation25 + $0x1f8] sm:$0xf]
    %v9257 = vld [vmem:[#allocation25 + $0x1fc] sm:$0xf]
    %v9258 = vld [vmem:[#allocation26] sm:$0x1]
    %v9259 = vunpack.c.l.bf16 %v9258
    %v9260 = vlaneseq
    %v9261 = vshrl.u32 %v9260, 7
    %v9262 = vsub.s32 0, %v9261
    %v9263 = vrot.slane %v9259, %v9262
    %v9392 = vunpack.c.l.b16 %v9130
    %v9393 = vunpack.c.l.b16 %v9131
    %v9394 = vunpack.c.l.b16 %v9132
    %v9395 = vunpack.c.l.b16 %v9133
    %v9396 = vunpack.c.l.b16 %v9134
    %v9397 = vunpack.c.l.b16 %v9135
    %v9398 = vunpack.c.l.b16 %v9136
    %v9399 = vunpack.c.l.b16 %v9137
    %v9400 = vunpack.c.l.b16 %v9138
    %v9401 = vunpack.c.l.b16 %v9139
    %v9402 = vunpack.c.l.b16 %v9140
    %v9403 = vunpack.c.l.b16 %v9141
    %v9404 = vunpack.c.l.b16 %v9142
    %v9405 = vunpack.c.l.b16 %v9143
    %v9406 = vunpack.c.l.b16 %v9144
    %v9407 = vunpack.c.l.b16 %v9145
    %v9408 = vunpack.c.l.b16 %v9146
    %v9409 = vunpack.c.l.b16 %v9147
    %v9410 = vunpack.c.l.b16 %v9148
    %v9411 = vunpack.c.l.b16 %v9149
    %v9412 = vunpack.c.l.b16 %v9150
    %v9413 = vunpack.c.l.b16 %v9151
    %v9414 = vunpack.c.l.b16 %v9152
    %v9415 = vunpack.c.l.b16 %v9153
    %v9416 = vunpack.c.l.b16 %v9154
    %v9417 = vunpack.c.l.b16 %v9155
    %v9418 = vunpack.c.l.b16 %v9156
    %v9419 = vunpack.c.l.b16 %v9157
    %v9420 = vunpack.c.l.b16 %v9158
    %v9421 = vunpack.c.l.b16 %v9159
    %v9422 = vunpack.c.l.b16 %v9160
    %v9423 = vunpack.c.l.b16 %v9161
    %v9424 = vunpack.c.l.b16 %v9162
    %v9425 = vunpack.c.l.b16 %v9163
    %v9426 = vunpack.c.l.b16 %v9164
    %v9427 = vunpack.c.l.b16 %v9165
    %v9428 = vunpack.c.l.b16 %v9166
    %v9429 = vunpack.c.l.b16 %v9167
    %v9430 = vunpack.c.l.b16 %v9168
    %v9431 = vunpack.c.l.b16 %v9169
    %v9432 = vunpack.c.l.b16 %v9170
    %v9433 = vunpack.c.l.b16 %v9171
    %v9434 = vunpack.c.l.b16 %v9172
    %v9435 = vunpack.c.l.b16 %v9173
    %v9436 = vunpack.c.l.b16 %v9174
    %v9437 = vunpack.c.l.b16 %v9175
    %v9438 = vunpack.c.l.b16 %v9176
    %v9439 = vunpack.c.l.b16 %v9177
    %v9440 = vunpack.c.l.b16 %v9178
    %v9441 = vunpack.c.l.b16 %v9179
    %v9442 = vunpack.c.l.b16 %v9180
    %v9443 = vunpack.c.l.b16 %v9181
    %v9444 = vunpack.c.l.b16 %v9182
    %v9445 = vunpack.c.l.b16 %v9183
    %v9446 = vunpack.c.l.b16 %v9184
    %v9447 = vunpack.c.l.b16 %v9185
    %v9448 = vunpack.c.l.b16 %v9186
    %v9449 = vunpack.c.l.b16 %v9187
    %v9450 = vunpack.c.l.b16 %v9188
    %v9451 = vunpack.c.l.b16 %v9189
    %v9452 = vunpack.c.l.b16 %v9190
    %v9453 = vunpack.c.l.b16 %v9191
    %v9454 = vunpack.c.l.b16 %v9192
    %v9455 = vunpack.c.l.b16 %v9193
    %v9456 = vunpack.c.l.b16 %v9194
    %v9457 = vunpack.c.l.b16 %v9195
    %v9458 = vunpack.c.l.b16 %v9196
    %v9459 = vunpack.c.l.b16 %v9197
    %v9460 = vunpack.c.l.b16 %v9198
    %v9461 = vunpack.c.l.b16 %v9199
    %v9462 = vunpack.c.l.b16 %v9200
    %v9463 = vunpack.c.l.b16 %v9201
    %v9464 = vunpack.c.l.b16 %v9202
    %v9465 = vunpack.c.l.b16 %v9203
    %v9466 = vunpack.c.l.b16 %v9204
    %v9467 = vunpack.c.l.b16 %v9205
    %v9468 = vunpack.c.l.b16 %v9206
    %v9469 = vunpack.c.l.b16 %v9207
    %v9470 = vunpack.c.l.b16 %v9208
    %v9471 = vunpack.c.l.b16 %v9209
    %v9472 = vunpack.c.l.b16 %v9210
    %v9473 = vunpack.c.l.b16 %v9211
    %v9474 = vunpack.c.l.b16 %v9212
    %v9475 = vunpack.c.l.b16 %v9213
    %v9476 = vunpack.c.l.b16 %v9214
    %v9477 = vunpack.c.l.b16 %v9215
    %v9478 = vunpack.c.l.b16 %v9216
    %v9479 = vunpack.c.l.b16 %v9217
    %v9480 = vunpack.c.l.b16 %v9218
    %v9481 = vunpack.c.l.b16 %v9219
    %v9482 = vunpack.c.l.b16 %v9220
    %v9483 = vunpack.c.l.b16 %v9221
    %v9484 = vunpack.c.l.b16 %v9222
    %v9485 = vunpack.c.l.b16 %v9223
    %v9486 = vunpack.c.l.b16 %v9224
    %v9487 = vunpack.c.l.b16 %v9225
    %v9488 = vunpack.c.l.b16 %v9226
    %v9489 = vunpack.c.l.b16 %v9227
    %v9490 = vunpack.c.l.b16 %v9228
    %v9491 = vunpack.c.l.b16 %v9229
    %v9492 = vunpack.c.l.b16 %v9230
    %v9493 = vunpack.c.l.b16 %v9231
    %v9494 = vunpack.c.l.b16 %v9232
    %v9495 = vunpack.c.l.b16 %v9233
    %v9496 = vunpack.c.l.b16 %v9234
    %v9497 = vunpack.c.l.b16 %v9235
    %v9498 = vunpack.c.l.b16 %v9236
    %v9499 = vunpack.c.l.b16 %v9237
    %v9500 = vunpack.c.l.b16 %v9238
    %v9501 = vunpack.c.l.b16 %v9239
    %v9502 = vunpack.c.l.b16 %v9240
    %v9503 = vunpack.c.l.b16 %v9241
    %v9504 = vunpack.c.l.b16 %v9242
    %v9505 = vunpack.c.l.b16 %v9243
    %v9506 = vunpack.c.l.b16 %v9244
    %v9507 = vunpack.c.l.b16 %v9245
    %v9508 = vunpack.c.l.b16 %v9246
    %v9509 = vunpack.c.l.b16 %v9247
    %v9510 = vunpack.c.l.b16 %v9248
    %v9511 = vunpack.c.l.b16 %v9249
    %v9512 = vunpack.c.l.b16 %v9250
    %v9513 = vunpack.c.l.b16 %v9251
    %v9514 = vunpack.c.l.b16 %v9252
    %v9515 = vunpack.c.l.b16 %v9253
    %v9516 = vunpack.c.l.b16 %v9254
    %v9517 = vunpack.c.l.b16 %v9255
    %v9518 = vunpack.c.l.b16 %v9256
    %v9519 = vunpack.c.l.b16 %v9257
    %v9520 = vpack.c.b16 %v9393, %v9392
    %v9521 = vpack.c.b16 %v9395, %v9394
    %v9522 = vpack.c.b16 %v9397, %v9396
    %v9523 = vpack.c.b16 %v9399, %v9398
    %v9524 = vpack.c.b16 %v9401, %v9400
    %v9525 = vpack.c.b16 %v9403, %v9402
    %v9526 = vpack.c.b16 %v9405, %v9404
    %v9527 = vpack.c.b16 %v9407, %v9406
    %v9528 = vpack.c.b16 %v9409, %v9408
    %v9529 = vpack.c.b16 %v9411, %v9410
    %v9530 = vpack.c.b16 %v9413, %v9412
    %v9531 = vpack.c.b16 %v9415, %v9414
    %v9532 = vpack.c.b16 %v9417, %v9416
    %v9533 = vpack.c.b16 %v9419, %v9418
    %v9534 = vpack.c.b16 %v9421, %v9420
    %v9535 = vpack.c.b16 %v9423, %v9422
    %v9536 = vpack.c.b16 %v9425, %v9424
    %v9537 = vpack.c.b16 %v9427, %v9426
    %v9538 = vpack.c.b16 %v9429, %v9428
    %v9539 = vpack.c.b16 %v9431, %v9430
    %v9540 = vpack.c.b16 %v9433, %v9432
    %v9541 = vpack.c.b16 %v9435, %v9434
    %v9542 = vpack.c.b16 %v9437, %v9436
    %v9543 = vpack.c.b16 %v9439, %v9438
    %v9544 = vpack.c.b16 %v9441, %v9440
    %v9545 = vpack.c.b16 %v9443, %v9442
    %v9546 = vpack.c.b16 %v9445, %v9444
    %v9547 = vpack.c.b16 %v9447, %v9446
    %v9548 = vpack.c.b16 %v9449, %v9448
    %v9549 = vpack.c.b16 %v9451, %v9450
    %v9550 = vpack.c.b16 %v9453, %v9452
    %v9551 = vpack.c.b16 %v9455, %v9454
    %v9552 = vpack.c.b16 %v9457, %v9456
    %v9553 = vpack.c.b16 %v9459, %v9458
    %v9554 = vpack.c.b16 %v9461, %v9460
    %v9555 = vpack.c.b16 %v9463, %v9462
    %v9556 = vpack.c.b16 %v9465, %v9464
    %v9557 = vpack.c.b16 %v9467, %v9466
    %v9558 = vpack.c.b16 %v9469, %v9468
    %v9559 = vpack.c.b16 %v9471, %v9470
    %v9560 = vpack.c.b16 %v9473, %v9472
    %v9561 = vpack.c.b16 %v9475, %v9474
    %v9562 = vpack.c.b16 %v9477, %v9476
    %v9563 = vpack.c.b16 %v9479, %v9478
    %v9564 = vpack.c.b16 %v9481, %v9480
    %v9565 = vpack.c.b16 %v9483, %v9482
    %v9566 = vpack.c.b16 %v9485, %v9484
    %v9567 = vpack.c.b16 %v9487, %v9486
    %v9568 = vpack.c.b16 %v9489, %v9488
    %v9569 = vpack.c.b16 %v9491, %v9490
    %v9570 = vpack.c.b16 %v9493, %v9492
    %v9571 = vpack.c.b16 %v9495, %v9494
    %v9572 = vpack.c.b16 %v9497, %v9496
    %v9573 = vpack.c.b16 %v9499, %v9498
    %v9574 = vpack.c.b16 %v9501, %v9500
    %v9575 = vpack.c.b16 %v9503, %v9502
    %v9576 = vpack.c.b16 %v9505, %v9504
    %v9577 = vpack.c.b16 %v9507, %v9506
    %v9578 = vpack.c.b16 %v9509, %v9508
    %v9579 = vpack.c.b16 %v9511, %v9510
    %v9580 = vpack.c.b16 %v9513, %v9512
    %v9581 = vpack.c.b16 %v9515, %v9514
    %v9582 = vpack.c.b16 %v9517, %v9516
    %v9583 = vpack.c.b16 %v9519, %v9518
    %9648 = vmatprep.subr.bf16.mxu0 0
    %9649 = vmatpush1.bf16.msra.mxu0 %v9527
    %9650 = vmatprep.subr.bf16.mxu0 0
    %9651 = vmatpush1.bf16.msra.mxu0 %v9526
    %9652 = vmatprep.subr.bf16.mxu0 0
    %9653 = vmatpush1.bf16.msra.mxu0 %v9525
    %9654 = vmatprep.subr.bf16.mxu0 0
    %9655 = vmatpush1.bf16.msra.mxu0 %v9524
    %9656 = vmatprep.subr.bf16.mxu0 0
    %9657 = vmatpush1.bf16.msra.mxu0 %v9523
    %9658 = vmatprep.subr.bf16.mxu0 0
    %9659 = vmatpush1.bf16.msra.mxu0 %v9522
    %9660 = vmatprep.subr.bf16.mxu0 0
    %9661 = vmatpush1.bf16.msra.mxu0 %v9521
    %9662 = vmatprep.subr.bf16.mxu0 0
    %9663 = vmatpush1.bf16.msra.mxu0 %v9520
    %9664 = vmatprep.subr.bf16.mxu0 0
    %9665 = vmatpush2.bf16.msra.mxu0 %v9535
    %9666 = vmatprep.subr.bf16.mxu0 0
    %9667 = vmatpush2.bf16.msra.mxu0 %v9534
    %9668 = vmatprep.subr.bf16.mxu0 0
    %9669 = vmatpush2.bf16.msra.mxu0 %v9533
    %9670 = vmatprep.subr.bf16.mxu0 0
    %9671 = vmatpush2.bf16.msra.mxu0 %v9532
    %9672 = vmatprep.subr.bf16.mxu0 0
    %9673 = vmatpush2.bf16.msra.mxu0 %v9531
    %9674 = vmatprep.subr.bf16.mxu0 0
    %9675 = vmatpush2.bf16.msra.mxu0 %v9530
    %9676 = vmatprep.subr.bf16.mxu0 0
    %9677 = vmatpush2.bf16.msra.mxu0 %v9529
    %9678 = vmatprep.subr.bf16.mxu0 0
    %9679 = vmatpush2.bf16.msra.mxu0 %v9528
    %9680 = vmatprep.mubr.bf16.mxu0 %v9123
    %9681 = vmatmul.mubr.bf16.gmra.mxu0 %v9122
    %v9682 = vpop.f32.mrf.mxu0
    %v9683 = vadd.f32 %v9263, %v9682
    %v9684 = vpop.f32.mrf.mxu0
    %v9685 = vpop.f32.mrf.mxu0
    %v9686 = vpop.f32.mrf.mxu0
    %9687 = vdwg.mxu0
    %9688 = vmatprep.subr.bf16.mxu0 0
    %9689 = vmatpush1.bf16.msra.mxu0 %v9543
    %9690 = vmatprep.subr.bf16.mxu0 0
    %9691 = vmatpush1.bf16.msra.mxu0 %v9542
    %9692 = vmatprep.subr.bf16.mxu0 0
    %9693 = vmatpush1.bf16.msra.mxu0 %v9541
    %9694 = vmatprep.subr.bf16.mxu0 0
    %9695 = vmatpush1.bf16.msra.mxu0 %v9540
    %9696 = vmatprep.subr.bf16.mxu0 0
    %9697 = vmatpush1.bf16.msra.mxu0 %v9539
    %9698 = vmatprep.subr.bf16.mxu0 0
    %9699 = vmatpush1.bf16.msra.mxu0 %v9538
    %9700 = vmatprep.subr.bf16.mxu0 0
    %9701 = vmatpush1.bf16.msra.mxu0 %v9537
    %9702 = vmatprep.subr.bf16.mxu0 0
    %9703 = vmatpush1.bf16.msra.mxu0 %v9536
    %9704 = vmatprep.subr.bf16.mxu0 0
    %9705 = vmatpush2.bf16.msra.mxu0 %v9551
    %9706 = vmatprep.subr.bf16.mxu0 0
    %9707 = vmatpush2.bf16.msra.mxu0 %v9550
    %9708 = vmatprep.subr.bf16.mxu0 0
    %9709 = vmatpush2.bf16.msra.mxu0 %v9549
    %9710 = vmatprep.subr.bf16.mxu0 0
    %9711 = vmatpush2.bf16.msra.mxu0 %v9548
    %9712 = vmatprep.subr.bf16.mxu0 0
    %9713 = vmatpush2.bf16.msra.mxu0 %v9547
    %9714 = vmatprep.subr.bf16.mxu0 0
    %9715 = vmatpush2.bf16.msra.mxu0 %v9546
    %9716 = vmatprep.subr.bf16.mxu0 0
    %9717 = vmatpush2.bf16.msra.mxu0 %v9545
    %9718 = vmatprep.subr.bf16.mxu0 0
    %9719 = vmatpush2.bf16.msra.mxu0 %v9544
    %9720 = vmatprep.mubr.bf16.mxu0 %v9125
    %9721 = vmatmul.mubr.bf16.gmra.mxu0 %v9124
    %v9722 = vpop.f32.mrf.mxu0
    %v9723 = vadd.f32 %v9683, %v9722
    %v9724 = vpop.f32.mrf.mxu0
    %v9725 = vpop.f32.mrf.mxu0
    %v9726 = vpop.f32.mrf.mxu0
    %9727 = vdwg.mxu0
    %9728 = vmatprep.subr.bf16.mxu0 0
    %9729 = vmatpush1.bf16.msra.mxu0 %v9559
    %9730 = vmatprep.subr.bf16.mxu0 0
    %9731 = vmatpush1.bf16.msra.mxu0 %v9558
    %9732 = vmatprep.subr.bf16.mxu0 0
    %9733 = vmatpush1.bf16.msra.mxu0 %v9557
    %9734 = vmatprep.subr.bf16.mxu0 0
    %9735 = vmatpush1.bf16.msra.mxu0 %v9556
    %9736 = vmatprep.subr.bf16.mxu0 0
    %9737 = vmatpush1.bf16.msra.mxu0 %v9555
    %9738 = vmatprep.subr.bf16.mxu0 0
    %9739 = vmatpush1.bf16.msra.mxu0 %v9554
    %9740 = vmatprep.subr.bf16.mxu0 0
    %9741 = vmatpush1.bf16.msra.mxu0 %v9553
    %9742 = vmatprep.subr.bf16.mxu0 0
    %9743 = vmatpush1.bf16.msra.mxu0 %v9552
    %9744 = vmatprep.subr.bf16.mxu0 0
    %9745 = vmatpush2.bf16.msra.mxu0 %v9567
    %9746 = vmatprep.subr.bf16.mxu0 0
    %9747 = vmatpush2.bf16.msra.mxu0 %v9566
    %9748 = vmatprep.subr.bf16.mxu0 0
    %9749 = vmatpush2.bf16.msra.mxu0 %v9565
    %9750 = vmatprep.subr.bf16.mxu0 0
    %9751 = vmatpush2.bf16.msra.mxu0 %v9564
    %9752 = vmatprep.subr.bf16.mxu0 0
    %9753 = vmatpush2.bf16.msra.mxu0 %v9563
    %9754 = vmatprep.subr.bf16.mxu0 0
    %9755 = vmatpush2.bf16.msra.mxu0 %v9562
    %9756 = vmatprep.subr.bf16.mxu0 0
    %9757 = vmatpush2.bf16.msra.mxu0 %v9561
    %9758 = vmatprep.subr.bf16.mxu0 0
    %9759 = vmatpush2.bf16.msra.mxu0 %v9560
    %9760 = vmatprep.mubr.bf16.mxu0 %v9127
    %9761 = vmatmul.mubr.bf16.gmra.mxu0 %v9126
    %v9762 = vpop.f32.mrf.mxu0
    %v9763 = vadd.f32 %v9723, %v9762
    %v9764 = vpop.f32.mrf.mxu0
    %v9765 = vpop.f32.mrf.mxu0
    %v9766 = vpop.f32.mrf.mxu0
    %9767 = vdwg.mxu0
    %9768 = vmatprep.subr.bf16.mxu0 0
    %9769 = vmatpush1.bf16.msra.mxu0 %v9575
    %9770 = vmatprep.subr.bf16.mxu0 0
    %9771 = vmatpush1.bf16.msra.mxu0 %v9574
    %9772 = vmatprep.subr.bf16.mxu0 0
    %9773 = vmatpush1.bf16.msra.mxu0 %v9573
    %9774 = vmatprep.subr.bf16.mxu0 0
    %9775 = vmatpush1.bf16.msra.mxu0 %v9572
    %9776 = vmatprep.subr.bf16.mxu0 0
    %9777 = vmatpush1.bf16.msra.mxu0 %v9571
    %9778 = vmatprep.subr.bf16.mxu0 0
    %9779 = vmatpush1.bf16.msra.mxu0 %v9570
    %9780 = vmatprep.subr.bf16.mxu0 0
    %9781 = vmatpush1.bf16.msra.mxu0 %v9569
    %9782 = vmatprep.subr.bf16.mxu0 0
    %9783 = vmatpush1.bf16.msra.mxu0 %v9568
    %9784 = vmatprep.subr.bf16.mxu0 0
    %9785 = vmatpush2.bf16.msra.mxu0 %v9583
    %9786 = vmatprep.subr.bf16.mxu0 0
    %9787 = vmatpush2.bf16.msra.mxu0 %v9582
    %9788 = vmatprep.subr.bf16.mxu0 0
    %9789 = vmatpush2.bf16.msra.mxu0 %v9581
    %9790 = vmatprep.subr.bf16.mxu0 0
    %9791 = vmatpush2.bf16.msra.mxu0 %v9580
    %9792 = vmatprep.subr.bf16.mxu0 0
    %9793 = vmatpush2.bf16.msra.mxu0 %v9579
    %9794 = vmatprep.subr.bf16.mxu0 0
    %9795 = vmatpush2.bf16.msra.mxu0 %v9578
    %9796 = vmatprep.subr.bf16.mxu0 0
    %9797 = vmatpush2.bf16.msra.mxu0 %v9577
    %9798 = vmatprep.subr.bf16.mxu0 0
    %9799 = vmatpush2.bf16.msra.mxu0 %v9576
    %9800 = vmatprep.mubr.bf16.mxu0 %v9129
    %9801 = vmatmul.mubr.bf16.gmra.mxu0 %v9128
    %v9802 = vpop.f32.mrf.mxu0
    %v9803 = vadd.f32 %v9763, %v9802
    %v9804 = vpop.f32.mrf.mxu0
    %v9805 = vpop.f32.mrf.mxu0
    %v9806 = vpop.f32.mrf.mxu0
    %9807 = vdwg.mxu0
    %v9808 = vpack.c.bf16 %v9803, %v9803
    %v9809 = vld [vmem:[#allocation28] sm:$0xf]
    %v9810 = vld [vmem:[#allocation28 + $0x4] sm:$0xf]
    %v9811 = vld [vmem:[#allocation28 + $0x8] sm:$0xf]
    %v9812 = vld [vmem:[#allocation28 + $0xc] sm:$0xf]
    %v9813 = vld [vmem:[#allocation28 + $0x10] sm:$0xf]
    %v9814 = vld [vmem:[#allocation28 + $0x14] sm:$0xf]
    %v9815 = vld [vmem:[#allocation28 + $0x18] sm:$0xf]
    %v9816 = vld [vmem:[#allocation28 + $0x1c] sm:$0xf]
    %v9817 = vld [vmem:[#allocation28 + $0x20] sm:$0xf]
    %v9818 = vld [vmem:[#allocation28 + $0x24] sm:$0xf]
    %v9819 = vld [vmem:[#allocation28 + $0x28] sm:$0xf]
    %v9820 = vld [vmem:[#allocation28 + $0x2c] sm:$0xf]
    %v9821 = vld [vmem:[#allocation28 + $0x30] sm:$0xf]
    %v9822 = vld [vmem:[#allocation28 + $0x34] sm:$0xf]
    %v9823 = vld [vmem:[#allocation28 + $0x38] sm:$0xf]
    %v9824 = vld [vmem:[#allocation28 + $0x3c] sm:$0xf]
    %v9825 = vld [vmem:[#allocation29] sm:$0x1]
    %v9826 = vunpack.c.l.bf16 %v9825
    %v9827 = vlaneseq
    %v9828 = vshrl.u32 %v9827, 7
    %v9829 = vsub.s32 0, %v9828
    %v9830 = vrot.slane %v9826, %v9829
    %v9847 = vunpack.c.l.b16 %v9809
    %v9848 = vunpack.c.l.b16 %v9810
    %v9849 = vunpack.c.l.b16 %v9811
    %v9850 = vunpack.c.l.b16 %v9812
    %v9851 = vunpack.c.l.b16 %v9813
    %v9852 = vunpack.c.l.b16 %v9814
    %v9853 = vunpack.c.l.b16 %v9815
    %v9854 = vunpack.c.l.b16 %v9816
    %v9855 = vunpack.c.l.b16 %v9817
    %v9856 = vunpack.c.l.b16 %v9818
    %v9857 = vunpack.c.l.b16 %v9819
    %v9858 = vunpack.c.l.b16 %v9820
    %v9859 = vunpack.c.l.b16 %v9821
    %v9860 = vunpack.c.l.b16 %v9822
    %v9861 = vunpack.c.l.b16 %v9823
    %v9862 = vunpack.c.l.b16 %v9824
    %v9863 = vpack.c.b16 %v9848, %v9847
    %v9864 = vpack.c.b16 %v9850, %v9849
    %v9865 = vpack.c.b16 %v9852, %v9851
    %v9866 = vpack.c.b16 %v9854, %v9853
    %v9867 = vpack.c.b16 %v9856, %v9855
    %v9868 = vpack.c.b16 %v9858, %v9857
    %v9869 = vpack.c.b16 %v9860, %v9859
    %v9870 = vpack.c.b16 %v9862, %v9861
    %9879 = vmatprep.subr.bf16.mxu0 0
    %9880 = vmatpush1.bf16.msra.mxu0 %v9870
    %9881 = vmatprep.subr.bf16.mxu0 0
    %9882 = vmatpush1.bf16.msra.mxu0 %v9869
    %9883 = vmatprep.subr.bf16.mxu0 0
    %9884 = vmatpush1.bf16.msra.mxu0 %v9868
    %9885 = vmatprep.subr.bf16.mxu0 0
    %9886 = vmatpush1.bf16.msra.mxu0 %v9867
    %9887 = vmatprep.subr.bf16.mxu0 0
    %9888 = vmatpush1.bf16.msra.mxu0 %v9866
    %9889 = vmatprep.subr.bf16.mxu0 0
    %9890 = vmatpush1.bf16.msra.mxu0 %v9865
    %9891 = vmatprep.subr.bf16.mxu0 0
    %9892 = vmatpush1.bf16.msra.mxu0 %v9864
    %9893 = vmatprep.subr.bf16.mxu0 0
    %9894 = vmatpush1.bf16.msra.mxu0 %v9863
    %9895 = vmatprep.subr.bf16.mxu0 0
    %9896 = vmatpush2.bf16.msra.mxu0 0
    %9897 = vmatprep.subr.bf16.mxu0 0
    %9898 = vmatpush2.bf16.msra.mxu0 0
    %9899 = vmatprep.subr.bf16.mxu0 0
    %9900 = vmatpush2.bf16.msra.mxu0 0
    %9901 = vmatprep.subr.bf16.mxu0 0
    %9902 = vmatpush2.bf16.msra.mxu0 0
    %9903 = vmatprep.subr.bf16.mxu0 0
    %9904 = vmatpush2.bf16.msra.mxu0 0
    %9905 = vmatprep.subr.bf16.mxu0 0
    %9906 = vmatpush2.bf16.msra.mxu0 0
    %9907 = vmatprep.subr.bf16.mxu0 0
    %9908 = vmatpush2.bf16.msra.mxu0 0
    %9909 = vmatprep.subr.bf16.mxu0 0
    %9910 = vmatpush2.bf16.msra.mxu0 0
    %9911 = vmatprep.mubr.bf16.mxu0 0
    %9912 = vmatmul.mubr.bf16.gmra.mxu0 %v9808
    %v9913 = vpop.f32.mrf.mxu0
    %v9914 = vadd.f32 %v9830, %v9913
    %v9915 = vpop.f32.mrf.mxu0
    %v9916 = vpop.f32.mrf.mxu0
    %v9917 = vpop.f32.mrf.mxu0
    %9918 = vdwg.mxu0
    %v9919 = vpack.c.bf16 %v9914, %v9914
    %v9920 = vld [vmem:[%s19] sm:$0xf]
    %v9921 = vld [vmem:[%s19 + $0x4] sm:$0xf]
    %v9922 = vld [vmem:[%s19 + $0x8] sm:$0xf]
    %v9923 = vld [vmem:[%s19 + $0xc] sm:$0xf]
    %v9924 = vld [vmem:[%s19 + $0x10] sm:$0xf]
    %v9925 = vld [vmem:[%s19 + $0x14] sm:$0xf]
    %v9926 = vld [vmem:[%s19 + $0x18] sm:$0xf]
    %v9927 = vld [vmem:[%s19 + $0x1c] sm:$0xf]
    %v9928 = vld [vmem:[%s19 + $0x20] sm:$0xf]
    %v9929 = vld [vmem:[%s19 + $0x24] sm:$0xf]
    %v9930 = vld [vmem:[%s19 + $0x28] sm:$0xf]
    %v9931 = vld [vmem:[%s19 + $0x2c] sm:$0xf]
    %v9932 = vld [vmem:[%s19 + $0x30] sm:$0xf]
    %v9933 = vld [vmem:[%s19 + $0x34] sm:$0xf]
    %v9934 = vld [vmem:[%s19 + $0x38] sm:$0xf]
    %v9935 = vld [vmem:[%s19 + $0x3c] sm:$0xf]
    %v9936 = vld [vmem:[#allocation31] sm:$0x1]
    %v9937 = vunpack.c.l.bf16 %v9936
    %v9938 = vlaneseq
    %v9939 = vshrl.u32 %v9938, 7
    %v9940 = vsub.s32 0, %v9939
    %v9941 = vrot.slane %v9937, %v9940
    %v9958 = vunpack.c.l.b16 %v9920
    %v9959 = vunpack.c.l.b16 %v9921
    %v9960 = vunpack.c.l.b16 %v9922
    %v9961 = vunpack.c.l.b16 %v9923
    %v9962 = vunpack.c.l.b16 %v9924
    %v9963 = vunpack.c.l.b16 %v9925
    %v9964 = vunpack.c.l.b16 %v9926
    %v9965 = vunpack.c.l.b16 %v9927
    %v9966 = vunpack.c.l.b16 %v9928
    %v9967 = vunpack.c.l.b16 %v9929
    %v9968 = vunpack.c.l.b16 %v9930
    %v9969 = vunpack.c.l.b16 %v9931
    %v9970 = vunpack.c.l.b16 %v9932
    %v9971 = vunpack.c.l.b16 %v9933
    %v9972 = vunpack.c.l.b16 %v9934
    %v9973 = vunpack.c.l.b16 %v9935
    %v9974 = vpack.c.b16 %v9959, %v9958
    %v9975 = vpack.c.b16 %v9961, %v9960
    %v9976 = vpack.c.b16 %v9963, %v9962
    %v9977 = vpack.c.b16 %v9965, %v9964
    %v9978 = vpack.c.b16 %v9967, %v9966
    %v9979 = vpack.c.b16 %v9969, %v9968
    %v9980 = vpack.c.b16 %v9971, %v9970
    %v9981 = vpack.c.b16 %v9973, %v9972
    %9990 = vmatprep.subr.bf16.mxu0 0
    %9991 = vmatpush1.bf16.msra.mxu0 %v9981
    %9992 = vmatprep.subr.bf16.mxu0 0
    %9993 = vmatpush1.bf16.msra.mxu0 %v9980
    %9994 = vmatprep.subr.bf16.mxu0 0
    %9995 = vmatpush1.bf16.msra.mxu0 %v9979
    %9996 = vmatprep.subr.bf16.mxu0 0
    %9997 = vmatpush1.bf16.msra.mxu0 %v9978
    %9998 = vmatprep.subr.bf16.mxu0 0
    %9999 = vmatpush1.bf16.msra.mxu0 %v9977
    %10000 = vmatprep.subr.bf16.mxu0 0
    %10001 = vmatpush1.bf16.msra.mxu0 %v9976
    %10002 = vmatprep.subr.bf16.mxu0 0
    %10003 = vmatpush1.bf16.msra.mxu0 %v9975
    %10004 = vmatprep.subr.bf16.mxu0 0
    %10005 = vmatpush1.bf16.msra.mxu0 %v9974
    %10006 = vmatprep.subr.bf16.mxu0 0
    %10007 = vmatpush2.bf16.msra.mxu0 0
    %10008 = vmatprep.subr.bf16.mxu0 0
    %10009 = vmatpush2.bf16.msra.mxu0 0
    %10010 = vmatprep.subr.bf16.mxu0 0
    %10011 = vmatpush2.bf16.msra.mxu0 0
    %10012 = vmatprep.subr.bf16.mxu0 0
    %10013 = vmatpush2.bf16.msra.mxu0 0
    %10014 = vmatprep.subr.bf16.mxu0 0
    %10015 = vmatpush2.bf16.msra.mxu0 0
    %10016 = vmatprep.subr.bf16.mxu0 0
    %10017 = vmatpush2.bf16.msra.mxu0 0
    %10018 = vmatprep.subr.bf16.mxu0 0
    %10019 = vmatpush2.bf16.msra.mxu0 0
    %10020 = vmatprep.subr.bf16.mxu0 0
    %10021 = vmatpush2.bf16.msra.mxu0 0
    %10022 = vmatprep.mubr.bf16.mxu0 0
    %10023 = vmatmul.mubr.bf16.gmra.mxu0 %v9919
    %v10024 = vpop.f32.mrf.mxu0
    %v10025 = vadd.f32 %v9941, %v10024
    %v10026 = vpop.f32.mrf.mxu0
    %v10027 = vpop.f32.mrf.mxu0
    %v10028 = vpop.f32.mrf.mxu0
    %10029 = vdwg.mxu0
    %vm10030 = vcmask 125952
    %10031 = vst.msk [vmem:[#allocation32] sm:$0xf] %vm10030, %v10025
    // Predicated region
    $region154: #{tpu_custom_call.1} parent=1 // pred_check
      _
    $region155: #{tpu_custom_call.1} parent=1 // pred_check_branch
      %10033 = sbr.rel (0) target = $region157
    $region156: #{tpu_custom_call.1} parent=1 // pred_region
      %s10035 = ssub.s32 64, 64
      %10036 = vsyncadd [#allocation7], %s10035
      %s10038 = sshll.u32 [#allocation32], 4
      %s10039 = int_to_ptr.vmem [resolvable:$true] %s10038
      %10041 = dma.vmem_to_hbm [thread:$0]  %s10039, 64, %s21, [#allocation7]
    $region157: #{tpu_custom_call.1} parent=1 // pred_fallthru
      _
    // Predicated region
    $region158: #{tpu_custom_call.1} parent=1 // pred_check
      _
    $region159: #{tpu_custom_call.1} parent=1 // pred_check_branch
      %10043 = sbr.rel (0) target = $region161
    $region160: #{tpu_custom_call.1} parent=1 // pred_region
      %10044 = dma.done [#allocation7], 64
    $region161: #{tpu_custom_call.1} parent=1 // pred_fallthru
      _
    %10045 = vsyncpa [#allocation6], 1
    %10046 = vsyncpa [#allocation9], 1
    %10047 = vsyncpa [#allocation12], 1
    %10048 = vsyncpa [#allocation15], 1
    %10049 = vsyncpa [#allocation18], 1
    %10050 = vsyncpa [#allocation21], 1
    %10051 = vsyncpa [#allocation24], 1
    %10052 = vsyncpa [#allocation27], 1
    %10053 = vsyncpa [#allocation30], 1
    %10054 = vsyncpa [#allocation7], 1
  %10055 = vsyncmov [#allocation4]
  %s10056 = vpop.sfrf %10055
  %p10057 = scmp.eq.s32.totalorder %s10056, 0
  %p10058 = pneg %p10057
  %10060 = shalt.err (%p10058)
  %s10061 = scalar_lea.sflag [#allocation4], 1
  %10062 = vsyncmov %s10061
  %s10063 = vpop.sfrf %10062
  %p10064 = scmp.eq.s32.totalorder %s10063, 0
  %p10065 = pneg %p10064
  %10067 = shalt.err (%p10065)

</llo_original>
